<compile_context>
chip_gen: v5e
topology: v5e:2x2
jax: 0.10.0
libtpu: 0.0.40
codegen_flags: <defaults>
</compile_context>

<pallas_src>
import functools

import jax
import jax.numpy as jnp
from jax import lax
from jax.experimental import pallas as pl
from jax.experimental.pallas import tpu as pltpu


_HALO = 6      # receptive field of the deepest path (conv31 d2 -> conv32 d3 -> conv_optimize d1)
_CIN_PAD = 8   # input channels padded 3 -> 8 so im2col sublane concats stay 8-aligned


# ----------------------------------------------------------------------------
# Fused network kernel: one row-band of the sigmoid map per grid step.
# ----------------------------------------------------------------------------
def _fused_net_kernel(x_ref, cm_ref, wa_ref, ba_ref, w12_ref, b12_ref,
                      w22_ref, b22_ref, w31_ref, b31_ref, w32_ref, b32_ref,
                      wc_ref, bc_ref, wo_ref, bo_ref, o_ref, *, H, W, TH):
    P = _HALO
    wp = W + 2 * P
    t = pl.program_id(1)
    x = x_ref[...]                          # (8, (TH+2P)*wp) channel-major, flat rows
    cmask = cm_ref[...]                     # (1, (TH+2P)*wp) in-image-column indicator

    def shift(a, s):
        # a[:, i] -> a[:, i + s]; the circular wrap only touches halo columns that are
        # never consumed downstream (see halo/garbage-column accounting in the wrapper).
        if s == 0:
            return a
        return jnp.concatenate([a[:, s:], a[:, :s]], axis=1)

    def conv(a, rin, d, w3, b, relu=True):
        # 3x3 dilated conv in channel-major flat layout. The 3 kx taps are packed into
        # the MXU contraction dim (K = 3*Cin); one matmul per kernel row ky.
        rout = rin - 2 * d
        n = rout * wp
        cout = w3.shape[1]
        acc = jnp.zeros((cout, n), jnp.float32)
        for ky in range(3):
            base = a[:, ky * d * wp: ky * d * wp + n]
            blk = jnp.concatenate([shift(base, -d), base, shift(base, d)], axis=0)
            acc = acc + jnp.dot(w3[ky], blk, preferred_element_type=jnp.float32)
        acc = acc + b
        if relu:
            acc = jnp.maximum(acc, 0.0)
        return acc, rout

    def mask(a, rows, off):
        # Zero positions outside the HxW image (emulates the per-layer zero padding).
        # Rows are contiguous in the flat layout -> row test is two lane compares; the
        # column pattern is the precomputed cmask (no integer div/mod in-kernel).
        n = rows * wp
        i = lax.broadcasted_iota(jnp.int32, (1, n), 1)
        lo = (P - off - t * TH) * wp
        ok = (i >= lo) & (i < lo + H * wp)
        return a * jnp.where(ok, cmask[:, :n], jnp.float32(0.0))

    rin = TH + 2 * P
    # conv11 & conv21 fused (both 3->32, d=1) -> one 3(padded 8)->64 conv.
    h_a, r_a = conv(x, rin, 1, wa_ref[...], ba_ref[...])
    h_a = mask(h_a, r_a, 1)
    # branch 1 / branch 2 each read their own 32-channel half (aligned sublane slice).
    h12, _ = conv(h_a[0:32], r_a, 1, w12_ref[...], b12_ref[...])
    h22, _ = conv(h_a[32:64], r_a, 2, w22_ref[...], b22_ref[...])
    # branch 3
    h31, r31 = conv(x, rin, 2, w31_ref[...], b31_ref[...])
    h31 = mask(h31, r31, 2)
    h32, _ = conv(h31, r31, 3, w32_ref[...], b32_ref[...])

    # conv_connect: align the three branches on the same rows (band rows [P-1, P+TH+1))
    # and do ONE K=96 matmul against the aligned channel concat.
    nc = (TH + 2) * wp
    cat = jnp.concatenate([h12[:, 3 * wp: 3 * wp + nc],
                           h22[:, 2 * wp: 2 * wp + nc],
                           h32], axis=0)                                  # (96, nc)
    con = jnp.dot(wc_ref[...], cat, preferred_element_type=jnp.float32) + bc_ref[...]
    con = mask(con, TH + 2, 5)

    # conv_optimize (3x3, 64->1, Cout padded to 8) + sigmoid; lane-dense (1, TH*wp) store.
    # TODO(synk): fold conv_connect into conv_optimize (needs border-bias correction).
    y8, _ = conv(con, TH + 2, 1, wo_ref[...], bo_ref[...], relu=False)
    o_ref[...] = jax.nn.sigmoid(y8[0:1, :])


# ----------------------------------------------------------------------------
# Tiled clamp + global-min/max normalize kernel (lane-dense (B, H, W) layout).
# ----------------------------------------------------------------------------
def _normalize_kernel(p_ref, x_ref, o_ref):
    b = pl.program_id(0)
    o_ref[...] = (jnp.minimum(x_ref[...], p_ref[b, 0]) - p_ref[b, 1]) * p_ref[b, 2]


# ----------------------------------------------------------------------------
# Wrapper helpers.
# ----------------------------------------------------------------------------
def _vmem_budget_bytes():
    try:
        cap = int(pltpu.get_tpu_info().vmem_capacity_bytes)
    except Exception:  # pragma: no cover - conservative fallback off-TPU / old API
        cap = 64 * 2 ** 20
    return min(cap * 3 // 4, 96 * 2 ** 20)


def _pick_tile_rows(H, W, B, vmem_bytes):
    # Channel-major flat layout has ~no lane-padding inflation, so a nominal f32 byte
    # estimate is representative.  c_eq ~= live f32 "channels" incl. im2col transients.
    wp = W + 2 * _HALO
    c_eq = 320
    th = vmem_bytes // 2 // (4 * c_eq * wp) - 2 * _HALO
    th = int(max(8, min(64, th)))
    th -= th % 8
    th = max(8, min(th, H))
    if B == 1 and th >= H and H > 8:
        th = max(8, -(-H // 2))     # keep >=2 row bands so both v7x TensorCores get work
    return th


def _prep_w3(w, cin_pad=None):
    """(3,3,Cin,Cout) HWIO -> (3, Cout, 3*Cin) matmul LHS; K order = kx*Cin + ci."""
    if cin_pad is not None and cin_pad > w.shape[2]:
        w = jnp.pad(w, ((0, 0), (0, 0), (0, cin_pad - w.shape[2]), (0, 0)))
    cout = w.shape[3]
    return jnp.transpose(w, (0, 3, 1, 2)).reshape(3, cout, 3 * w.shape[2])


def _fused_forward(x_nchw, params):
    """x: (B, 3, H, W) f32 -> sigmoid map (B, H, W) f32 (before contrast adjust)."""
    B, C, H, W = x_nchw.shape
    P = _HALO
    vmem_bytes = _vmem_budget_bytes()
    TH = _pick_tile_rows(H, W, B, vmem_bytes)
    n_th = -(-H // TH)
    Hpad = n_th * TH
    Wp = W + 2 * P
    THp = TH + 2 * P
    L0 = THp * Wp

    # Channel-major input, channels padded 3->8, spatial zero-padded by the halo
    # (plus ragged bottom rows so every band DMA stays in bounds).
    xp = jnp.pad(x_nchw.astype(jnp.float32),
                 ((0, 0), (0, _CIN_PAD - C), (P, P + Hpad - H), (P, P)))
    # Materialize overlapping row bands so the halo window is a plain BlockSpec that
    # the Pallas pipeline auto double-buffers (no manual DMA / semaphores).
    bands = jnp.stack([xp[:, :, t * TH: t * TH + THp, :] for t in range(n_th)], axis=1)
    bands = bands.reshape(B, n_th, _CIN_PAD, L0)            # (B, n_th, 8, THp*Wp)

    col = jnp.arange(L0, dtype=jnp.int32) % Wp
    cmask = ((col >= P) & (col < P + W)).astype(jnp.float32).reshape(1, L0)

    w11, b11 = params["conv11"]
    w21, b21 = params["conv21"]
    w12, b12 = params["conv12"]
    w22, b22 = params["conv22"]
    w31, b31 = params["conv31"]
    w32, b32 = params["conv32"]
    wcn, bcn = params["conv_connect"]
    wop, bop = params["conv_optimize"]

    weight_args = (
        _prep_w3(jnp.concatenate([w11, w21], axis=3), _CIN_PAD),   # (3, 64, 24)
        jnp.concatenate([b11, b21]).reshape(64, 1),
        _prep_w3(w12), b12.reshape(32, 1),
        _prep_w3(w22), b22.reshape(32, 1),
        _prep_w3(w31, _CIN_PAD), b31.reshape(32, 1),
        _prep_w3(w32), b32.reshape(32, 1),
        jnp.transpose(wcn[0, 0]),                                  # (64, 96)
        bcn.reshape(64, 1),
        _prep_w3(jnp.pad(wop, ((0, 0), (0, 0), (0, 0), (0, 7)))),  # (3, 8, 192)
        jnp.pad(bop, (0, 7)).reshape(8, 1),
    )

    def const_spec(a):
        nd = a.ndim
        return pl.BlockSpec(a.shape, lambda b, t, _nd=nd: (0,) * _nd)

    macs_px = 2 * 9 * 3 * 32 + 3 * 9 * 32 * 32 + 96 * 64 + 9 * 64
    cost = pl.CostEstimate(
        flops=2 * macs_px * B * Hpad * W,
        transcendentals=B * Hpad * W,
        bytes_accessed=int(bands.size) * 4 + B * Hpad * Wp * 4
        + sum(int(a.size) for a in weight_args) * 4,
    )

    kernel = functools.partial(_fused_net_kernel, H=H, W=W, TH=TH)
    out = pl.pallas_call(
        kernel,
        out_shape=jax.ShapeDtypeStruct((B, n_th, 1, TH * Wp), jnp.float32),
        grid=(B, n_th),
        in_specs=[pl.BlockSpec((None, None, _CIN_PAD, L0), lambda b, t: (b, t, 0, 0)),
                  const_spec(cmask)] + [const_spec(a) for a in weight_args],
        out_specs=pl.BlockSpec((None, None, 1, TH * Wp), lambda b, t: (b, t, 0, 0)),
        compiler_params=pltpu.CompilerParams(
            dimension_semantics=("parallel", "parallel"),
            vmem_limit_bytes=vmem_bytes),
        cost_estimate=cost,
    )(bands, cmask, *weight_args)

    # Drop the ragged bottom rows and the zero-pad columns -> (B, H, W).
    return out.reshape(B, Hpad, Wp)[:, :H, P:P + W]


def expansion_convnet_forward(x_nchw, params, clip=0.1):
    B, _, H, W = x_nchw.shape
    out = _fused_forward(x_nchw, params)                            # (B, H, W)

    # enhance_contrast: exact k-th largest per image via top_k (matches torch.topk).
    # TODO(synk): for >=512^2 images replace with a histogram/quantile streaming pass.
    k = max(int(H * W * clip), 1)
    clip_vals = lax.top_k(out.reshape(B, H * W), k)[0][:, k - 1]    # (B,)

    # Global min/max of the clipped tensor from cheap per-image reductions:
    # min_p min(o, c) = min(min_p o, c), likewise for max.
    out_min = jnp.min(out, axis=(1, 2))
    out_max = jnp.max(out, axis=(1, 2))
    mn = jnp.min(jnp.minimum(out_min, clip_vals))
    mx = jnp.max(jnp.minimum(out_max, clip_vals))
    denom = jnp.where(mx - mn == 0, jnp.float32(1.0), mx - mn)      # guard constant maps
    inv = jnp.float32(1.0) / denom

    scalars = jnp.stack([clip_vals,
                         jnp.broadcast_to(mn, (B,)),
                         jnp.broadcast_to(inv, (B,))], axis=-1).astype(jnp.float32)

    adj = pl.pallas_call(
        _normalize_kernel,
        out_shape=jax.ShapeDtypeStruct((B, H, W), jnp.float32),
        grid=(B,),
        in_specs=[pl.BlockSpec(memory_space=pltpu.MemorySpace.SMEM),
                  pl.BlockSpec((1, H, W), lambda b: (b, 0, 0))],
        out_specs=pl.BlockSpec((1, H, W), lambda b: (b, 0, 0)),
        compiler_params=pltpu.CompilerParams(
            dimension_semantics=("parallel",),
            vmem_limit_bytes=_vmem_budget_bytes()),
        cost_estimate=pl.CostEstimate(flops=3 * B * H * W, transcendentals=0,
                                      bytes_accessed=2 * B * H * W * 4 + B * 12),
    )(scalars, out)

    return adj[:, None, :, :]                                       # (B, 1, H, W)


# ----------------------------------------------------------------------------
# Parameters (deterministic synthetic init; HWIO layout).
# ----------------------------------------------------------------------------
def init_params(key):
    def conv_init(k, K, cin, cout):
        kw, kb = jax.random.split(k)
        fan_in = cin * K * K
        w = jax.random.normal(kw, (K, K, cin, cout), jnp.float32) / jnp.sqrt(fan_in)
        b = jax.random.uniform(kb, (cout,), jnp.float32, minval=-0.1, maxval=0.1)
        return w, b

    keys = jax.random.split(key, 8)
    return {
        "conv11": conv_init(keys[0], 3, 3, 32),
        "conv12": conv_init(keys[1], 3, 32, 32),
        "conv21": conv_init(keys[2], 3, 3, 32),
        "conv22": conv_init(keys[3], 3, 32, 32),
        "conv31": conv_init(keys[4], 3, 3, 32),
        "conv32": conv_init(keys[5], 3, 32, 32),
        "conv_connect": conv_init(keys[6], 1, 96, 64),
        "conv_optimize": conv_init(keys[7], 3, 64, 1),
    }


# ----------------------------------------------------------------------------
# Pure-JAX reference (original unfused weights) for correctness check.
# ----------------------------------------------------------------------------
def reference_forward(x_nchw, p, clip=0.1):
    x = jnp.transpose(x_nchw, (0, 2, 3, 1))

    def conv(xx, w, b, K, dil):
        pad = dil * (K - 1) // 2
        y = lax.conv_general_dilated(
            xx, w, window_strides=(1, 1), padding=[(pad, pad), (pad, pad)],
            rhs_dilation=(dil, dil), dimension_numbers=("NHWC", "HWIO", "NHWC"))
        return y + b

    out11 = jax.nn.relu(conv(x, *p["conv11"], 3, 1))
    out12 = jax.nn.relu(conv(out11, *p["conv12"], 3, 1))
    out21 = jax.nn.relu(conv(x, *p["conv21"], 3, 1))
    out22 = jax.nn.relu(conv(out21, *p["conv22"], 3, 2))
    out31 = jax.nn.relu(conv(x, *p["conv31"], 3, 2))
    out32 = jax.nn.relu(conv(out31, *p["conv32"], 3, 3))
    cat = jnp.concatenate([out12, out22, out32], axis=-1)
    con = conv(cat, *p["conv_connect"], 1, 1)
    out = jax.nn.sigmoid(conv(con, *p["conv_optimize"], 3, 1))

    out_nchw = jnp.transpose(out, (0, 3, 1, 2))                     # (B,1,H,W)
    B, C, H, W = out_nchw.shape
    k = max(int(H * W * clip), 1)
    flat = out_nchw.reshape(B, C, H * W)
    clip_values = lax.top_k(flat, k)[0][:, :, k - 1]
    clipped = jnp.minimum(out_nchw, clip_values[:, :, None, None])
    return (clipped - clipped.min()) / (clipped.max() - clipped.min())


if __name__ == "__main__":
    key = jax.random.PRNGKey(0)
    kx, kp = jax.random.split(key)
    B, C, H, W = 2, 3, 16, 16
    x = jax.random.uniform(kx, (B, C, H, W), dtype=jnp.float32)
    params = init_params(kp)

    y = expansion_convnet_forward(x, params)
    y = jax.block_until_ready(y)

    y_ref = reference_forward(x, params)
    err = float(jnp.max(jnp.abs(y - y_ref)))
    assert y.shape == (B, 1, H, W), y.shape
    assert err < 1e-3, f"max abs error vs reference: {err}"
    print("KERNEL_OK")
</pallas_src>

<mosaic_0001>
module attributes {stable_mosaic.version = 11 : i64} {
  func.func @_fused_net_kernel(%arg0: i32, %arg1: i32, %arg2: memref<1x1x8x784xf32, #tpu.memory_space<vmem>>, %arg3: memref<1x784xf32, #tpu.memory_space<vmem>>, %arg4: memref<3x64x24xf32, #tpu.memory_space<vmem>>, %arg5: memref<64x1xf32, #tpu.memory_space<vmem>>, %arg6: memref<3x32x96xf32, #tpu.memory_space<vmem>>, %arg7: memref<32x1xf32, #tpu.memory_space<vmem>>, %arg8: memref<3x32x96xf32, #tpu.memory_space<vmem>>, %arg9: memref<32x1xf32, #tpu.memory_space<vmem>>, %arg10: memref<3x32x24xf32, #tpu.memory_space<vmem>>, %arg11: memref<32x1xf32, #tpu.memory_space<vmem>>, %arg12: memref<3x32x96xf32, #tpu.memory_space<vmem>>, %arg13: memref<32x1xf32, #tpu.memory_space<vmem>>, %arg14: memref<64x96xf32, #tpu.memory_space<vmem>>, %arg15: memref<64x1xf32, #tpu.memory_space<vmem>>, %arg16: memref<3x8x192xf32, #tpu.memory_space<vmem>>, %arg17: memref<8x1xf32, #tpu.memory_space<vmem>>, %arg18: memref<1x1x1x448xf32, #tpu.memory_space<vmem>>) attributes {dimension_semantics = [#tpu.dimension_semantics<parallel>, #tpu.dimension_semantics<parallel>], iteration_bounds = array<i64: 2, 1>, scalar_prefetch = 0 : i64, scratch_operands = 0 : i64, tpu.core_type = #tpu.core_type<tc>, window_params = [{transform_indices = @transform_0, window_bounds = array<i64: 1, 1, 8, 784>}, {pipeline_mode = #tpu.pipeline_mode<synchronous>, transform_indices = @transform_1, window_bounds = array<i64: 1, 784>}, {pipeline_mode = #tpu.pipeline_mode<synchronous>, transform_indices = @transform_2, window_bounds = array<i64: 3, 64, 24>}, {pipeline_mode = #tpu.pipeline_mode<synchronous>, transform_indices = @transform_3, window_bounds = array<i64: 64, 1>}, {pipeline_mode = #tpu.pipeline_mode<synchronous>, transform_indices = @transform_4, window_bounds = array<i64: 3, 32, 96>}, {pipeline_mode = #tpu.pipeline_mode<synchronous>, transform_indices = @transform_5, window_bounds = array<i64: 32, 1>}, {pipeline_mode = #tpu.pipeline_mode<synchronous>, transform_indices = @transform_6, window_bounds = array<i64: 3, 32, 96>}, {pipeline_mode = #tpu.pipeline_mode<synchronous>, transform_indices = @transform_7, window_bounds = array<i64: 32, 1>}, {pipeline_mode = #tpu.pipeline_mode<synchronous>, transform_indices = @transform_8, window_bounds = array<i64: 3, 32, 24>}, {pipeline_mode = #tpu.pipeline_mode<synchronous>, transform_indices = @transform_9, window_bounds = array<i64: 32, 1>}, {pipeline_mode = #tpu.pipeline_mode<synchronous>, transform_indices = @transform_10, window_bounds = array<i64: 3, 32, 96>}, {pipeline_mode = #tpu.pipeline_mode<synchronous>, transform_indices = @transform_11, window_bounds = array<i64: 32, 1>}, {pipeline_mode = #tpu.pipeline_mode<synchronous>, transform_indices = @transform_12, window_bounds = array<i64: 64, 96>}, {pipeline_mode = #tpu.pipeline_mode<synchronous>, transform_indices = @transform_13, window_bounds = array<i64: 64, 1>}, {pipeline_mode = #tpu.pipeline_mode<synchronous>, transform_indices = @transform_14, window_bounds = array<i64: 3, 8, 192>}, {pipeline_mode = #tpu.pipeline_mode<synchronous>, transform_indices = @transform_15, window_bounds = array<i64: 8, 1>}, {transform_indices = @transform_16, window_bounds = array<i64: 1, 1, 1, 448>}]} {
    %c0 = arith.constant 0 : index
    %c0_0 = arith.constant 0 : index
    %c0_1 = arith.constant 0 : index
    %c0_2 = arith.constant 0 : index
    %0 = vector.load %arg2[%c0, %c0_0, %c0_1, %c0_2] : memref<1x1x8x784xf32, #tpu.memory_space<vmem>>, vector<1x1x8x784xf32>
    %1 = vector.shape_cast %0 : vector<1x1x8x784xf32> to vector<8x784xf32>
    %c0_3 = arith.constant 0 : index
    %c0_4 = arith.constant 0 : index
    %2 = vector.load %arg3[%c0_3, %c0_4] : memref<1x784xf32, #tpu.memory_space<vmem>>, vector<1x784xf32>
    %c0_5 = arith.constant 0 : index
    %c0_6 = arith.constant 0 : index
    %c0_7 = arith.constant 0 : index
    %3 = vector.load %arg4[%c0_5, %c0_6, %c0_7] : memref<3x64x24xf32, #tpu.memory_space<vmem>>, vector<3x64x24xf32>
    %c0_8 = arith.constant 0 : index
    %c0_9 = arith.constant 0 : index
    %4 = vector.load %arg5[%c0_8, %c0_9] : memref<64x1xf32, #tpu.memory_space<vmem>>, vector<64x1xf32>
    %cst = arith.constant 0.000000e+00 : f32
    %5 = vector.broadcast %cst : f32 to vector<64x728xf32>
    %6 = vector.extract_strided_slice %1 {offsets = [0, 0], sizes = [8, 728], strides = [1, 1]} : vector<8x784xf32> to vector<8x728xf32>
    %7 = vector.extract_strided_slice %6 {offsets = [0, 727], sizes = [8, 1], strides = [1, 1]} : vector<8x728xf32> to vector<8x1xf32>
    %8 = vector.extract_strided_slice %6 {offsets = [0, 0], sizes = [8, 727], strides = [1, 1]} : vector<8x728xf32> to vector<8x727xf32>
    %9 = tpu.concatenate %7, %8 in 1 : vector<8x1xf32>, vector<8x727xf32> -> vector<8x728xf32>
    %10 = vector.extract_strided_slice %6 {offsets = [0, 1], sizes = [8, 727], strides = [1, 1]} : vector<8x728xf32> to vector<8x727xf32>
    %11 = vector.extract_strided_slice %6 {offsets = [0, 0], sizes = [8, 1], strides = [1, 1]} : vector<8x728xf32> to vector<8x1xf32>
    %12 = tpu.concatenate %10, %11 in 1 : vector<8x727xf32>, vector<8x1xf32> -> vector<8x728xf32>
    %13 = tpu.concatenate %9, %6, %12 in 0 : vector<8x728xf32>, vector<8x728xf32>, vector<8x728xf32> -> vector<24x728xf32>
    %14 = vector.extract_strided_slice %3 {offsets = [0, 0, 0], sizes = [1, 64, 24], strides = [1, 1, 1]} : vector<3x64x24xf32> to vector<1x64x24xf32>
    %15 = vector.shape_cast %14 : vector<1x64x24xf32> to vector<64x24xf32>
    %cst_10 = arith.constant dense<0.000000e+00> : vector<64x728xf32>
    %16 = tpu.matmul %15, %13, %cst_10 {dimension_numbers = #tpu.dot_dimension_numbers<[1], [0], [0], [1], [0, 0, 1, 1], [], []>} : vector<64x24xf32>, vector<24x728xf32>, vector<64x728xf32> -> vector<64x728xf32>
    %17 = arith.addf %5, %16 : vector<64x728xf32>
    %18 = vector.extract_strided_slice %1 {offsets = [0, 28], sizes = [8, 728], strides = [1, 1]} : vector<8x784xf32> to vector<8x728xf32>
    %19 = vector.extract_strided_slice %18 {offsets = [0, 727], sizes = [8, 1], strides = [1, 1]} : vector<8x728xf32> to vector<8x1xf32>
    %20 = vector.extract_strided_slice %18 {offsets = [0, 0], sizes = [8, 727], strides = [1, 1]} : vector<8x728xf32> to vector<8x727xf32>
    %21 = tpu.concatenate %19, %20 in 1 : vector<8x1xf32>, vector<8x727xf32> -> vector<8x728xf32>
    %22 = vector.extract_strided_slice %18 {offsets = [0, 1], sizes = [8, 727], strides = [1, 1]} : vector<8x728xf32> to vector<8x727xf32>
    %23 = vector.extract_strided_slice %18 {offsets = [0, 0], sizes = [8, 1], strides = [1, 1]} : vector<8x728xf32> to vector<8x1xf32>
    %24 = tpu.concatenate %22, %23 in 1 : vector<8x727xf32>, vector<8x1xf32> -> vector<8x728xf32>
    %25 = tpu.concatenate %21, %18, %24 in 0 : vector<8x728xf32>, vector<8x728xf32>, vector<8x728xf32> -> vector<24x728xf32>
    %26 = vector.extract_strided_slice %3 {offsets = [1, 0, 0], sizes = [1, 64, 24], strides = [1, 1, 1]} : vector<3x64x24xf32> to vector<1x64x24xf32>
    %27 = vector.shape_cast %26 : vector<1x64x24xf32> to vector<64x24xf32>
    %cst_11 = arith.constant dense<0.000000e+00> : vector<64x728xf32>
    %28 = tpu.matmul %27, %25, %cst_11 {dimension_numbers = #tpu.dot_dimension_numbers<[1], [0], [0], [1], [0, 0, 1, 1], [], []>} : vector<64x24xf32>, vector<24x728xf32>, vector<64x728xf32> -> vector<64x728xf32>
    %29 = arith.addf %17, %28 : vector<64x728xf32>
    %30 = vector.extract_strided_slice %1 {offsets = [0, 56], sizes = [8, 728], strides = [1, 1]} : vector<8x784xf32> to vector<8x728xf32>
    %31 = vector.extract_strided_slice %30 {offsets = [0, 727], sizes = [8, 1], strides = [1, 1]} : vector<8x728xf32> to vector<8x1xf32>
    %32 = vector.extract_strided_slice %30 {offsets = [0, 0], sizes = [8, 727], strides = [1, 1]} : vector<8x728xf32> to vector<8x727xf32>
    %33 = tpu.concatenate %31, %32 in 1 : vector<8x1xf32>, vector<8x727xf32> -> vector<8x728xf32>
    %34 = vector.extract_strided_slice %30 {offsets = [0, 1], sizes = [8, 727], strides = [1, 1]} : vector<8x728xf32> to vector<8x727xf32>
    %35 = vector.extract_strided_slice %30 {offsets = [0, 0], sizes = [8, 1], strides = [1, 1]} : vector<8x728xf32> to vector<8x1xf32>
    %36 = tpu.concatenate %34, %35 in 1 : vector<8x727xf32>, vector<8x1xf32> -> vector<8x728xf32>
    %37 = tpu.concatenate %33, %30, %36 in 0 : vector<8x728xf32>, vector<8x728xf32>, vector<8x728xf32> -> vector<24x728xf32>
    %38 = vector.extract_strided_slice %3 {offsets = [2, 0, 0], sizes = [1, 64, 24], strides = [1, 1, 1]} : vector<3x64x24xf32> to vector<1x64x24xf32>
    %39 = vector.shape_cast %38 : vector<1x64x24xf32> to vector<64x24xf32>
    %cst_12 = arith.constant dense<0.000000e+00> : vector<64x728xf32>
    %40 = tpu.matmul %39, %37, %cst_12 {dimension_numbers = #tpu.dot_dimension_numbers<[1], [0], [0], [1], [0, 0, 1, 1], [], []>} : vector<64x24xf32>, vector<24x728xf32>, vector<64x728xf32> -> vector<64x728xf32>
    %41 = arith.addf %29, %40 : vector<64x728xf32>
    %42 = vector.broadcast %4 : vector<64x1xf32> to vector<64x728xf32>
    %43 = arith.addf %41, %42 : vector<64x728xf32>
    %cst_13 = arith.constant 0.000000e+00 : f32
    %44 = vector.broadcast %cst_13 : f32 to vector<64x728xf32>
    %45 = arith.maximumf %43, %44 : vector<64x728xf32>
    %46 = tpu.iota {dimensions = array<i32: 1>} : vector<1x728xi32>
    %c16_i32 = arith.constant 16 : i32
    %47 = arith.muli %arg1, %c16_i32 : i32
    %c5_i32 = arith.constant 5 : i32
    %48 = arith.subi %c5_i32, %47 : i32
    %c28_i32 = arith.constant 28 : i32
    %49 = arith.muli %48, %c28_i32 : i32
    %50 = vector.broadcast %49 : i32 to vector<1x728xi32>
    %51 = arith.cmpi sge, %46, %50 : vector<1x728xi32>
    %c448_i32 = arith.constant 448 : i32
    %52 = arith.addi %49, %c448_i32 : i32
    %53 = vector.broadcast %52 : i32 to vector<1x728xi32>
    %54 = arith.cmpi slt, %46, %53 : vector<1x728xi32>
    %55 = arith.andi %51, %54 : vector<1x728xi1>
    %56 = vector.extract_strided_slice %2 {offsets = [0, 0], sizes = [1, 728], strides = [1, 1]} : vector<1x784xf32> to vector<1x728xf32>
    %cst_14 = arith.constant 0.000000e+00 : f32
    %57 = vector.broadcast %cst_14 : f32 to vector<1x728xf32>
    %58 = arith.select %55, %56, %57 : vector<1x728xi1>, vector<1x728xf32>
    %59 = vector.broadcast %58 : vector<1x728xf32> to vector<64x728xf32>
    %60 = arith.mulf %45, %59 : vector<64x728xf32>
    %61 = vector.extract_strided_slice %60 {offsets = [0, 0], sizes = [32, 728], strides = [1, 1]} : vector<64x728xf32> to vector<32x728xf32>
    %c0_15 = arith.constant 0 : index
    %c0_16 = arith.constant 0 : index
    %c0_17 = arith.constant 0 : index
    %62 = vector.load %arg6[%c0_15, %c0_16, %c0_17] : memref<3x32x96xf32, #tpu.memory_space<vmem>>, vector<3x32x96xf32>
    %c0_18 = arith.constant 0 : index
    %c0_19 = arith.constant 0 : index
    %63 = vector.load %arg7[%c0_18, %c0_19] : memref<32x1xf32, #tpu.memory_space<vmem>>, vector<32x1xf32>
    %cst_20 = arith.constant 0.000000e+00 : f32
    %64 = vector.broadcast %cst_20 : f32 to vector<32x672xf32>
    %65 = vector.extract_strided_slice %61 {offsets = [0, 0], sizes = [32, 672], strides = [1, 1]} : vector<32x728xf32> to vector<32x672xf32>
    %66 = vector.extract_strided_slice %65 {offsets = [0, 671], sizes = [32, 1], strides = [1, 1]} : vector<32x672xf32> to vector<32x1xf32>
    %67 = vector.extract_strided_slice %65 {offsets = [0, 0], sizes = [32, 671], strides = [1, 1]} : vector<32x672xf32> to vector<32x671xf32>
    %68 = tpu.concatenate %66, %67 in 1 : vector<32x1xf32>, vector<32x671xf32> -> vector<32x672xf32>
    %69 = vector.extract_strided_slice %65 {offsets = [0, 1], sizes = [32, 671], strides = [1, 1]} : vector<32x672xf32> to vector<32x671xf32>
    %70 = vector.extract_strided_slice %65 {offsets = [0, 0], sizes = [32, 1], strides = [1, 1]} : vector<32x672xf32> to vector<32x1xf32>
    %71 = tpu.concatenate %69, %70 in 1 : vector<32x671xf32>, vector<32x1xf32> -> vector<32x672xf32>
    %72 = tpu.concatenate %68, %65, %71 in 0 : vector<32x672xf32>, vector<32x672xf32>, vector<32x672xf32> -> vector<96x672xf32>
    %73 = vector.extract_strided_slice %62 {offsets = [0, 0, 0], sizes = [1, 32, 96], strides = [1, 1, 1]} : vector<3x32x96xf32> to vector<1x32x96xf32>
    %74 = vector.shape_cast %73 : vector<1x32x96xf32> to vector<32x96xf32>
    %cst_21 = arith.constant dense<0.000000e+00> : vector<32x672xf32>
    %75 = tpu.matmul %74, %72, %cst_21 {dimension_numbers = #tpu.dot_dimension_numbers<[1], [0], [0], [1], [0, 0, 1, 1], [], []>} : vector<32x96xf32>, vector<96x672xf32>, vector<32x672xf32> -> vector<32x672xf32>
    %76 = arith.addf %64, %75 : vector<32x672xf32>
    %77 = vector.extract_strided_slice %61 {offsets = [0, 28], sizes = [32, 672], strides = [1, 1]} : vector<32x728xf32> to vector<32x672xf32>
    %78 = vector.extract_strided_slice %77 {offsets = [0, 671], sizes = [32, 1], strides = [1, 1]} : vector<32x672xf32> to vector<32x1xf32>
    %79 = vector.extract_strided_slice %77 {offsets = [0, 0], sizes = [32, 671], strides = [1, 1]} : vector<32x672xf32> to vector<32x671xf32>
    %80 = tpu.concatenate %78, %79 in 1 : vector<32x1xf32>, vector<32x671xf32> -> vector<32x672xf32>
    %81 = vector.extract_strided_slice %77 {offsets = [0, 1], sizes = [32, 671], strides = [1, 1]} : vector<32x672xf32> to vector<32x671xf32>
    %82 = vector.extract_strided_slice %77 {offsets = [0, 0], sizes = [32, 1], strides = [1, 1]} : vector<32x672xf32> to vector<32x1xf32>
    %83 = tpu.concatenate %81, %82 in 1 : vector<32x671xf32>, vector<32x1xf32> -> vector<32x672xf32>
    %84 = tpu.concatenate %80, %77, %83 in 0 : vector<32x672xf32>, vector<32x672xf32>, vector<32x672xf32> -> vector<96x672xf32>
    %85 = vector.extract_strided_slice %62 {offsets = [1, 0, 0], sizes = [1, 32, 96], strides = [1, 1, 1]} : vector<3x32x96xf32> to vector<1x32x96xf32>
    %86 = vector.shape_cast %85 : vector<1x32x96xf32> to vector<32x96xf32>
    %cst_22 = arith.constant dense<0.000000e+00> : vector<32x672xf32>
    %87 = tpu.matmul %86, %84, %cst_22 {dimension_numbers = #tpu.dot_dimension_numbers<[1], [0], [0], [1], [0, 0, 1, 1], [], []>} : vector<32x96xf32>, vector<96x672xf32>, vector<32x672xf32> -> vector<32x672xf32>
    %88 = arith.addf %76, %87 : vector<32x672xf32>
    %89 = vector.extract_strided_slice %61 {offsets = [0, 56], sizes = [32, 672], strides = [1, 1]} : vector<32x728xf32> to vector<32x672xf32>
    %90 = vector.extract_strided_slice %89 {offsets = [0, 671], sizes = [32, 1], strides = [1, 1]} : vector<32x672xf32> to vector<32x1xf32>
    %91 = vector.extract_strided_slice %89 {offsets = [0, 0], sizes = [32, 671], strides = [1, 1]} : vector<32x672xf32> to vector<32x671xf32>
    %92 = tpu.concatenate %90, %91 in 1 : vector<32x1xf32>, vector<32x671xf32> -> vector<32x672xf32>
    %93 = vector.extract_strided_slice %89 {offsets = [0, 1], sizes = [32, 671], strides = [1, 1]} : vector<32x672xf32> to vector<32x671xf32>
    %94 = vector.extract_strided_slice %89 {offsets = [0, 0], sizes = [32, 1], strides = [1, 1]} : vector<32x672xf32> to vector<32x1xf32>
    %95 = tpu.concatenate %93, %94 in 1 : vector<32x671xf32>, vector<32x1xf32> -> vector<32x672xf32>
    %96 = tpu.concatenate %92, %89, %95 in 0 : vector<32x672xf32>, vector<32x672xf32>, vector<32x672xf32> -> vector<96x672xf32>
    %97 = vector.extract_strided_slice %62 {offsets = [2, 0, 0], sizes = [1, 32, 96], strides = [1, 1, 1]} : vector<3x32x96xf32> to vector<1x32x96xf32>
    %98 = vector.shape_cast %97 : vector<1x32x96xf32> to vector<32x96xf32>
    %cst_23 = arith.constant dense<0.000000e+00> : vector<32x672xf32>
    %99 = tpu.matmul %98, %96, %cst_23 {dimension_numbers = #tpu.dot_dimension_numbers<[1], [0], [0], [1], [0, 0, 1, 1], [], []>} : vector<32x96xf32>, vector<96x672xf32>, vector<32x672xf32> -> vector<32x672xf32>
    %100 = arith.addf %88, %99 : vector<32x672xf32>
    %101 = vector.broadcast %63 : vector<32x1xf32> to vector<32x672xf32>
    %102 = arith.addf %100, %101 : vector<32x672xf32>
    %cst_24 = arith.constant 0.000000e+00 : f32
    %103 = vector.broadcast %cst_24 : f32 to vector<32x672xf32>
    %104 = arith.maximumf %102, %103 : vector<32x672xf32>
    %105 = vector.extract_strided_slice %60 {offsets = [32, 0], sizes = [32, 728], strides = [1, 1]} : vector<64x728xf32> to vector<32x728xf32>
    %c0_25 = arith.constant 0 : index
    %c0_26 = arith.constant 0 : index
    %c0_27 = arith.constant 0 : index
    %106 = vector.load %arg8[%c0_25, %c0_26, %c0_27] : memref<3x32x96xf32, #tpu.memory_space<vmem>>, vector<3x32x96xf32>
    %c0_28 = arith.constant 0 : index
    %c0_29 = arith.constant 0 : index
    %107 = vector.load %arg9[%c0_28, %c0_29] : memref<32x1xf32, #tpu.memory_space<vmem>>, vector<32x1xf32>
    %cst_30 = arith.constant 0.000000e+00 : f32
    %108 = vector.broadcast %cst_30 : f32 to vector<32x616xf32>
    %109 = vector.extract_strided_slice %105 {offsets = [0, 0], sizes = [32, 616], strides = [1, 1]} : vector<32x728xf32> to vector<32x616xf32>
    %110 = vector.extract_strided_slice %109 {offsets = [0, 614], sizes = [32, 2], strides = [1, 1]} : vector<32x616xf32> to vector<32x2xf32>
    %111 = vector.extract_strided_slice %109 {offsets = [0, 0], sizes = [32, 614], strides = [1, 1]} : vector<32x616xf32> to vector<32x614xf32>
    %112 = tpu.concatenate %110, %111 in 1 : vector<32x2xf32>, vector<32x614xf32> -> vector<32x616xf32>
    %113 = vector.extract_strided_slice %109 {offsets = [0, 2], sizes = [32, 614], strides = [1, 1]} : vector<32x616xf32> to vector<32x614xf32>
    %114 = vector.extract_strided_slice %109 {offsets = [0, 0], sizes = [32, 2], strides = [1, 1]} : vector<32x616xf32> to vector<32x2xf32>
    %115 = tpu.concatenate %113, %114 in 1 : vector<32x614xf32>, vector<32x2xf32> -> vector<32x616xf32>
    %116 = tpu.concatenate %112, %109, %115 in 0 : vector<32x616xf32>, vector<32x616xf32>, vector<32x616xf32> -> vector<96x616xf32>
    %117 = vector.extract_strided_slice %106 {offsets = [0, 0, 0], sizes = [1, 32, 96], strides = [1, 1, 1]} : vector<3x32x96xf32> to vector<1x32x96xf32>
    %118 = vector.shape_cast %117 : vector<1x32x96xf32> to vector<32x96xf32>
    %cst_31 = arith.constant dense<0.000000e+00> : vector<32x616xf32>
    %119 = tpu.matmul %118, %116, %cst_31 {dimension_numbers = #tpu.dot_dimension_numbers<[1], [0], [0], [1], [0, 0, 1, 1], [], []>} : vector<32x96xf32>, vector<96x616xf32>, vector<32x616xf32> -> vector<32x616xf32>
    %120 = arith.addf %108, %119 : vector<32x616xf32>
    %121 = vector.extract_strided_slice %105 {offsets = [0, 56], sizes = [32, 616], strides = [1, 1]} : vector<32x728xf32> to vector<32x616xf32>
    %122 = vector.extract_strided_slice %121 {offsets = [0, 614], sizes = [32, 2], strides = [1, 1]} : vector<32x616xf32> to vector<32x2xf32>
    %123 = vector.extract_strided_slice %121 {offsets = [0, 0], sizes = [32, 614], strides = [1, 1]} : vector<32x616xf32> to vector<32x614xf32>
    %124 = tpu.concatenate %122, %123 in 1 : vector<32x2xf32>, vector<32x614xf32> -> vector<32x616xf32>
    %125 = vector.extract_strided_slice %121 {offsets = [0, 2], sizes = [32, 614], strides = [1, 1]} : vector<32x616xf32> to vector<32x614xf32>
    %126 = vector.extract_strided_slice %121 {offsets = [0, 0], sizes = [32, 2], strides = [1, 1]} : vector<32x616xf32> to vector<32x2xf32>
    %127 = tpu.concatenate %125, %126 in 1 : vector<32x614xf32>, vector<32x2xf32> -> vector<32x616xf32>
    %128 = tpu.concatenate %124, %121, %127 in 0 : vector<32x616xf32>, vector<32x616xf32>, vector<32x616xf32> -> vector<96x616xf32>
    %129 = vector.extract_strided_slice %106 {offsets = [1, 0, 0], sizes = [1, 32, 96], strides = [1, 1, 1]} : vector<3x32x96xf32> to vector<1x32x96xf32>
    %130 = vector.shape_cast %129 : vector<1x32x96xf32> to vector<32x96xf32>
    %cst_32 = arith.constant dense<0.000000e+00> : vector<32x616xf32>
    %131 = tpu.matmul %130, %128, %cst_32 {dimension_numbers = #tpu.dot_dimension_numbers<[1], [0], [0], [1], [0, 0, 1, 1], [], []>} : vector<32x96xf32>, vector<96x616xf32>, vector<32x616xf32> -> vector<32x616xf32>
    %132 = arith.addf %120, %131 : vector<32x616xf32>
    %133 = vector.extract_strided_slice %105 {offsets = [0, 112], sizes = [32, 616], strides = [1, 1]} : vector<32x728xf32> to vector<32x616xf32>
    %134 = vector.extract_strided_slice %133 {offsets = [0, 614], sizes = [32, 2], strides = [1, 1]} : vector<32x616xf32> to vector<32x2xf32>
    %135 = vector.extract_strided_slice %133 {offsets = [0, 0], sizes = [32, 614], strides = [1, 1]} : vector<32x616xf32> to vector<32x614xf32>
    %136 = tpu.concatenate %134, %135 in 1 : vector<32x2xf32>, vector<32x614xf32> -> vector<32x616xf32>
    %137 = vector.extract_strided_slice %133 {offsets = [0, 2], sizes = [32, 614], strides = [1, 1]} : vector<32x616xf32> to vector<32x614xf32>
    %138 = vector.extract_strided_slice %133 {offsets = [0, 0], sizes = [32, 2], strides = [1, 1]} : vector<32x616xf32> to vector<32x2xf32>
    %139 = tpu.concatenate %137, %138 in 1 : vector<32x614xf32>, vector<32x2xf32> -> vector<32x616xf32>
    %140 = tpu.concatenate %136, %133, %139 in 0 : vector<32x616xf32>, vector<32x616xf32>, vector<32x616xf32> -> vector<96x616xf32>
    %141 = vector.extract_strided_slice %106 {offsets = [2, 0, 0], sizes = [1, 32, 96], strides = [1, 1, 1]} : vector<3x32x96xf32> to vector<1x32x96xf32>
    %142 = vector.shape_cast %141 : vector<1x32x96xf32> to vector<32x96xf32>
    %cst_33 = arith.constant dense<0.000000e+00> : vector<32x616xf32>
    %143 = tpu.matmul %142, %140, %cst_33 {dimension_numbers = #tpu.dot_dimension_numbers<[1], [0], [0], [1], [0, 0, 1, 1], [], []>} : vector<32x96xf32>, vector<96x616xf32>, vector<32x616xf32> -> vector<32x616xf32>
    %144 = arith.addf %132, %143 : vector<32x616xf32>
    %145 = vector.broadcast %107 : vector<32x1xf32> to vector<32x616xf32>
    %146 = arith.addf %144, %145 : vector<32x616xf32>
    %cst_34 = arith.constant 0.000000e+00 : f32
    %147 = vector.broadcast %cst_34 : f32 to vector<32x616xf32>
    %148 = arith.maximumf %146, %147 : vector<32x616xf32>
    %c0_35 = arith.constant 0 : index
    %c0_36 = arith.constant 0 : index
    %c0_37 = arith.constant 0 : index
    %149 = vector.load %arg10[%c0_35, %c0_36, %c0_37] : memref<3x32x24xf32, #tpu.memory_space<vmem>>, vector<3x32x24xf32>
    %c0_38 = arith.constant 0 : index
    %c0_39 = arith.constant 0 : index
    %150 = vector.load %arg11[%c0_38, %c0_39] : memref<32x1xf32, #tpu.memory_space<vmem>>, vector<32x1xf32>
    %cst_40 = arith.constant 0.000000e+00 : f32
    %151 = vector.broadcast %cst_40 : f32 to vector<32x672xf32>
    %152 = vector.extract_strided_slice %1 {offsets = [0, 0], sizes = [8, 672], strides = [1, 1]} : vector<8x784xf32> to vector<8x672xf32>
    %153 = vector.extract_strided_slice %152 {offsets = [0, 670], sizes = [8, 2], strides = [1, 1]} : vector<8x672xf32> to vector<8x2xf32>
    %154 = vector.extract_strided_slice %152 {offsets = [0, 0], sizes = [8, 670], strides = [1, 1]} : vector<8x672xf32> to vector<8x670xf32>
    %155 = tpu.concatenate %153, %154 in 1 : vector<8x2xf32>, vector<8x670xf32> -> vector<8x672xf32>
    %156 = vector.extract_strided_slice %152 {offsets = [0, 2], sizes = [8, 670], strides = [1, 1]} : vector<8x672xf32> to vector<8x670xf32>
    %157 = vector.extract_strided_slice %152 {offsets = [0, 0], sizes = [8, 2], strides = [1, 1]} : vector<8x672xf32> to vector<8x2xf32>
    %158 = tpu.concatenate %156, %157 in 1 : vector<8x670xf32>, vector<8x2xf32> -> vector<8x672xf32>
    %159 = tpu.concatenate %155, %152, %158 in 0 : vector<8x672xf32>, vector<8x672xf32>, vector<8x672xf32> -> vector<24x672xf32>
    %160 = vector.extract_strided_slice %149 {offsets = [0, 0, 0], sizes = [1, 32, 24], strides = [1, 1, 1]} : vector<3x32x24xf32> to vector<1x32x24xf32>
    %161 = vector.shape_cast %160 : vector<1x32x24xf32> to vector<32x24xf32>
    %cst_41 = arith.constant dense<0.000000e+00> : vector<32x672xf32>
    %162 = tpu.matmul %161, %159, %cst_41 {dimension_numbers = #tpu.dot_dimension_numbers<[1], [0], [0], [1], [0, 0, 1, 1], [], []>} : vector<32x24xf32>, vector<24x672xf32>, vector<32x672xf32> -> vector<32x672xf32>
    %163 = arith.addf %151, %162 : vector<32x672xf32>
    %164 = vector.extract_strided_slice %1 {offsets = [0, 56], sizes = [8, 672], strides = [1, 1]} : vector<8x784xf32> to vector<8x672xf32>
    %165 = vector.extract_strided_slice %164 {offsets = [0, 670], sizes = [8, 2], strides = [1, 1]} : vector<8x672xf32> to vector<8x2xf32>
    %166 = vector.extract_strided_slice %164 {offsets = [0, 0], sizes = [8, 670], strides = [1, 1]} : vector<8x672xf32> to vector<8x670xf32>
    %167 = tpu.concatenate %165, %166 in 1 : vector<8x2xf32>, vector<8x670xf32> -> vector<8x672xf32>
    %168 = vector.extract_strided_slice %164 {offsets = [0, 2], sizes = [8, 670], strides = [1, 1]} : vector<8x672xf32> to vector<8x670xf32>
    %169 = vector.extract_strided_slice %164 {offsets = [0, 0], sizes = [8, 2], strides = [1, 1]} : vector<8x672xf32> to vector<8x2xf32>
    %170 = tpu.concatenate %168, %169 in 1 : vector<8x670xf32>, vector<8x2xf32> -> vector<8x672xf32>
    %171 = tpu.concatenate %167, %164, %170 in 0 : vector<8x672xf32>, vector<8x672xf32>, vector<8x672xf32> -> vector<24x672xf32>
    %172 = vector.extract_strided_slice %149 {offsets = [1, 0, 0], sizes = [1, 32, 24], strides = [1, 1, 1]} : vector<3x32x24xf32> to vector<1x32x24xf32>
    %173 = vector.shape_cast %172 : vector<1x32x24xf32> to vector<32x24xf32>
    %cst_42 = arith.constant dense<0.000000e+00> : vector<32x672xf32>
    %174 = tpu.matmul %173, %171, %cst_42 {dimension_numbers = #tpu.dot_dimension_numbers<[1], [0], [0], [1], [0, 0, 1, 1], [], []>} : vector<32x24xf32>, vector<24x672xf32>, vector<32x672xf32> -> vector<32x672xf32>
    %175 = arith.addf %163, %174 : vector<32x672xf32>
    %176 = vector.extract_strided_slice %1 {offsets = [0, 112], sizes = [8, 672], strides = [1, 1]} : vector<8x784xf32> to vector<8x672xf32>
    %177 = vector.extract_strided_slice %176 {offsets = [0, 670], sizes = [8, 2], strides = [1, 1]} : vector<8x672xf32> to vector<8x2xf32>
    %178 = vector.extract_strided_slice %176 {offsets = [0, 0], sizes = [8, 670], strides = [1, 1]} : vector<8x672xf32> to vector<8x670xf32>
    %179 = tpu.concatenate %177, %178 in 1 : vector<8x2xf32>, vector<8x670xf32> -> vector<8x672xf32>
    %180 = vector.extract_strided_slice %176 {offsets = [0, 2], sizes = [8, 670], strides = [1, 1]} : vector<8x672xf32> to vector<8x670xf32>
    %181 = vector.extract_strided_slice %176 {offsets = [0, 0], sizes = [8, 2], strides = [1, 1]} : vector<8x672xf32> to vector<8x2xf32>
    %182 = tpu.concatenate %180, %181 in 1 : vector<8x670xf32>, vector<8x2xf32> -> vector<8x672xf32>
    %183 = tpu.concatenate %179, %176, %182 in 0 : vector<8x672xf32>, vector<8x672xf32>, vector<8x672xf32> -> vector<24x672xf32>
    %184 = vector.extract_strided_slice %149 {offsets = [2, 0, 0], sizes = [1, 32, 24], strides = [1, 1, 1]} : vector<3x32x24xf32> to vector<1x32x24xf32>
    %185 = vector.shape_cast %184 : vector<1x32x24xf32> to vector<32x24xf32>
    %cst_43 = arith.constant dense<0.000000e+00> : vector<32x672xf32>
    %186 = tpu.matmul %185, %183, %cst_43 {dimension_numbers = #tpu.dot_dimension_numbers<[1], [0], [0], [1], [0, 0, 1, 1], [], []>} : vector<32x24xf32>, vector<24x672xf32>, vector<32x672xf32> -> vector<32x672xf32>
    %187 = arith.addf %175, %186 : vector<32x672xf32>
    %188 = vector.broadcast %150 : vector<32x1xf32> to vector<32x672xf32>
    %189 = arith.addf %187, %188 : vector<32x672xf32>
    %cst_44 = arith.constant 0.000000e+00 : f32
    %190 = vector.broadcast %cst_44 : f32 to vector<32x672xf32>
    %191 = arith.maximumf %189, %190 : vector<32x672xf32>
    %192 = tpu.iota {dimensions = array<i32: 1>} : vector<1x672xi32>
    %c16_i32_45 = arith.constant 16 : i32
    %193 = arith.muli %arg1, %c16_i32_45 : i32
    %c4_i32 = arith.constant 4 : i32
    %194 = arith.subi %c4_i32, %193 : i32
    %c28_i32_46 = arith.constant 28 : i32
    %195 = arith.muli %194, %c28_i32_46 : i32
    %196 = vector.broadcast %195 : i32 to vector<1x672xi32>
    %197 = arith.cmpi sge, %192, %196 : vector<1x672xi32>
    %c448_i32_47 = arith.constant 448 : i32
    %198 = arith.addi %195, %c448_i32_47 : i32
    %199 = vector.broadcast %198 : i32 to vector<1x672xi32>
    %200 = arith.cmpi slt, %192, %199 : vector<1x672xi32>
    %201 = arith.andi %197, %200 : vector<1x672xi1>
    %202 = vector.extract_strided_slice %2 {offsets = [0, 0], sizes = [1, 672], strides = [1, 1]} : vector<1x784xf32> to vector<1x672xf32>
    %cst_48 = arith.constant 0.000000e+00 : f32
    %203 = vector.broadcast %cst_48 : f32 to vector<1x672xf32>
    %204 = arith.select %201, %202, %203 : vector<1x672xi1>, vector<1x672xf32>
    %205 = vector.broadcast %204 : vector<1x672xf32> to vector<32x672xf32>
    %206 = arith.mulf %191, %205 : vector<32x672xf32>
    %c0_49 = arith.constant 0 : index
    %c0_50 = arith.constant 0 : index
    %c0_51 = arith.constant 0 : index
    %207 = vector.load %arg12[%c0_49, %c0_50, %c0_51] : memref<3x32x96xf32, #tpu.memory_space<vmem>>, vector<3x32x96xf32>
    %c0_52 = arith.constant 0 : index
    %c0_53 = arith.constant 0 : index
    %208 = vector.load %arg13[%c0_52, %c0_53] : memref<32x1xf32, #tpu.memory_space<vmem>>, vector<32x1xf32>
    %cst_54 = arith.constant 0.000000e+00 : f32
    %209 = vector.broadcast %cst_54 : f32 to vector<32x504xf32>
    %210 = vector.extract_strided_slice %206 {offsets = [0, 0], sizes = [32, 504], strides = [1, 1]} : vector<32x672xf32> to vector<32x504xf32>
    %211 = vector.extract_strided_slice %210 {offsets = [0, 501], sizes = [32, 3], strides = [1, 1]} : vector<32x504xf32> to vector<32x3xf32>
    %212 = vector.extract_strided_slice %210 {offsets = [0, 0], sizes = [32, 501], strides = [1, 1]} : vector<32x504xf32> to vector<32x501xf32>
    %213 = tpu.concatenate %211, %212 in 1 : vector<32x3xf32>, vector<32x501xf32> -> vector<32x504xf32>
    %214 = vector.extract_strided_slice %210 {offsets = [0, 3], sizes = [32, 501], strides = [1, 1]} : vector<32x504xf32> to vector<32x501xf32>
    %215 = vector.extract_strided_slice %210 {offsets = [0, 0], sizes = [32, 3], strides = [1, 1]} : vector<32x504xf32> to vector<32x3xf32>
    %216 = tpu.concatenate %214, %215 in 1 : vector<32x501xf32>, vector<32x3xf32> -> vector<32x504xf32>
    %217 = tpu.concatenate %213, %210, %216 in 0 : vector<32x504xf32>, vector<32x504xf32>, vector<32x504xf32> -> vector<96x504xf32>
    %218 = vector.extract_strided_slice %207 {offsets = [0, 0, 0], sizes = [1, 32, 96], strides = [1, 1, 1]} : vector<3x32x96xf32> to vector<1x32x96xf32>
    %219 = vector.shape_cast %218 : vector<1x32x96xf32> to vector<32x96xf32>
    %cst_55 = arith.constant dense<0.000000e+00> : vector<32x504xf32>
    %220 = tpu.matmul %219, %217, %cst_55 {dimension_numbers = #tpu.dot_dimension_numbers<[1], [0], [0], [1], [0, 0, 1, 1], [], []>} : vector<32x96xf32>, vector<96x504xf32>, vector<32x504xf32> -> vector<32x504xf32>
    %221 = arith.addf %209, %220 : vector<32x504xf32>
    %222 = vector.extract_strided_slice %206 {offsets = [0, 84], sizes = [32, 504], strides = [1, 1]} : vector<32x672xf32> to vector<32x504xf32>
    %223 = vector.extract_strided_slice %222 {offsets = [0, 501], sizes = [32, 3], strides = [1, 1]} : vector<32x504xf32> to vector<32x3xf32>
    %224 = vector.extract_strided_slice %222 {offsets = [0, 0], sizes = [32, 501], strides = [1, 1]} : vector<32x504xf32> to vector<32x501xf32>
    %225 = tpu.concatenate %223, %224 in 1 : vector<32x3xf32>, vector<32x501xf32> -> vector<32x504xf32>
    %226 = vector.extract_strided_slice %222 {offsets = [0, 3], sizes = [32, 501], strides = [1, 1]} : vector<32x504xf32> to vector<32x501xf32>
    %227 = vector.extract_strided_slice %222 {offsets = [0, 0], sizes = [32, 3], strides = [1, 1]} : vector<32x504xf32> to vector<32x3xf32>
    %228 = tpu.concatenate %226, %227 in 1 : vector<32x501xf32>, vector<32x3xf32> -> vector<32x504xf32>
    %229 = tpu.concatenate %225, %222, %228 in 0 : vector<32x504xf32>, vector<32x504xf32>, vector<32x504xf32> -> vector<96x504xf32>
    %230 = vector.extract_strided_slice %207 {offsets = [1, 0, 0], sizes = [1, 32, 96], strides = [1, 1, 1]} : vector<3x32x96xf32> to vector<1x32x96xf32>
    %231 = vector.shape_cast %230 : vector<1x32x96xf32> to vector<32x96xf32>
    %cst_56 = arith.constant dense<0.000000e+00> : vector<32x504xf32>
    %232 = tpu.matmul %231, %229, %cst_56 {dimension_numbers = #tpu.dot_dimension_numbers<[1], [0], [0], [1], [0, 0, 1, 1], [], []>} : vector<32x96xf32>, vector<96x504xf32>, vector<32x504xf32> -> vector<32x504xf32>
    %233 = arith.addf %221, %232 : vector<32x504xf32>
    %234 = vector.extract_strided_slice %206 {offsets = [0, 168], sizes = [32, 504], strides = [1, 1]} : vector<32x672xf32> to vector<32x504xf32>
    %235 = vector.extract_strided_slice %234 {offsets = [0, 501], sizes = [32, 3], strides = [1, 1]} : vector<32x504xf32> to vector<32x3xf32>
    %236 = vector.extract_strided_slice %234 {offsets = [0, 0], sizes = [32, 501], strides = [1, 1]} : vector<32x504xf32> to vector<32x501xf32>
    %237 = tpu.concatenate %235, %236 in 1 : vector<32x3xf32>, vector<32x501xf32> -> vector<32x504xf32>
    %238 = vector.extract_strided_slice %234 {offsets = [0, 3], sizes = [32, 501], strides = [1, 1]} : vector<32x504xf32> to vector<32x501xf32>
    %239 = vector.extract_strided_slice %234 {offsets = [0, 0], sizes = [32, 3], strides = [1, 1]} : vector<32x504xf32> to vector<32x3xf32>
    %240 = tpu.concatenate %238, %239 in 1 : vector<32x501xf32>, vector<32x3xf32> -> vector<32x504xf32>
    %241 = tpu.concatenate %237, %234, %240 in 0 : vector<32x504xf32>, vector<32x504xf32>, vector<32x504xf32> -> vector<96x504xf32>
    %242 = vector.extract_strided_slice %207 {offsets = [2, 0, 0], sizes = [1, 32, 96], strides = [1, 1, 1]} : vector<3x32x96xf32> to vector<1x32x96xf32>
    %243 = vector.shape_cast %242 : vector<1x32x96xf32> to vector<32x96xf32>
    %cst_57 = arith.constant dense<0.000000e+00> : vector<32x504xf32>
    %244 = tpu.matmul %243, %241, %cst_57 {dimension_numbers = #tpu.dot_dimension_numbers<[1], [0], [0], [1], [0, 0, 1, 1], [], []>} : vector<32x96xf32>, vector<96x504xf32>, vector<32x504xf32> -> vector<32x504xf32>
    %245 = arith.addf %233, %244 : vector<32x504xf32>
    %246 = vector.broadcast %208 : vector<32x1xf32> to vector<32x504xf32>
    %247 = arith.addf %245, %246 : vector<32x504xf32>
    %cst_58 = arith.constant 0.000000e+00 : f32
    %248 = vector.broadcast %cst_58 : f32 to vector<32x504xf32>
    %249 = arith.maximumf %247, %248 : vector<32x504xf32>
    %250 = vector.extract_strided_slice %104 {offsets = [0, 84], sizes = [32, 504], strides = [1, 1]} : vector<32x672xf32> to vector<32x504xf32>
    %251 = vector.extract_strided_slice %148 {offsets = [0, 56], sizes = [32, 504], strides = [1, 1]} : vector<32x616xf32> to vector<32x504xf32>
    %252 = tpu.concatenate %250, %251, %249 in 0 : vector<32x504xf32>, vector<32x504xf32>, vector<32x504xf32> -> vector<96x504xf32>
    %c0_59 = arith.constant 0 : index
    %c0_60 = arith.constant 0 : index
    %253 = vector.load %arg14[%c0_59, %c0_60] : memref<64x96xf32, #tpu.memory_space<vmem>>, vector<64x96xf32>
    %cst_61 = arith.constant dense<0.000000e+00> : vector<64x504xf32>
    %254 = tpu.matmul %253, %252, %cst_61 {dimension_numbers = #tpu.dot_dimension_numbers<[1], [0], [0], [1], [0, 0, 1, 1], [], []>} : vector<64x96xf32>, vector<96x504xf32>, vector<64x504xf32> -> vector<64x504xf32>
    %c0_62 = arith.constant 0 : index
    %c0_63 = arith.constant 0 : index
    %255 = vector.load %arg15[%c0_62, %c0_63] : memref<64x1xf32, #tpu.memory_space<vmem>>, vector<64x1xf32>
    %256 = vector.broadcast %255 : vector<64x1xf32> to vector<64x504xf32>
    %257 = arith.addf %254, %256 : vector<64x504xf32>
    %258 = tpu.iota {dimensions = array<i32: 1>} : vector<1x504xi32>
    %c16_i32_64 = arith.constant 16 : i32
    %259 = arith.muli %arg1, %c16_i32_64 : i32
    %c1_i32 = arith.constant 1 : i32
    %260 = arith.subi %c1_i32, %259 : i32
    %c28_i32_65 = arith.constant 28 : i32
    %261 = arith.muli %260, %c28_i32_65 : i32
    %262 = vector.broadcast %261 : i32 to vector<1x504xi32>
    %263 = arith.cmpi sge, %258, %262 : vector<1x504xi32>
    %c448_i32_66 = arith.constant 448 : i32
    %264 = arith.addi %261, %c448_i32_66 : i32
    %265 = vector.broadcast %264 : i32 to vector<1x504xi32>
    %266 = arith.cmpi slt, %258, %265 : vector<1x504xi32>
    %267 = arith.andi %263, %266 : vector<1x504xi1>
    %268 = vector.extract_strided_slice %2 {offsets = [0, 0], sizes = [1, 504], strides = [1, 1]} : vector<1x784xf32> to vector<1x504xf32>
    %cst_67 = arith.constant 0.000000e+00 : f32
    %269 = vector.broadcast %cst_67 : f32 to vector<1x504xf32>
    %270 = arith.select %267, %268, %269 : vector<1x504xi1>, vector<1x504xf32>
    %271 = vector.broadcast %270 : vector<1x504xf32> to vector<64x504xf32>
    %272 = arith.mulf %257, %271 : vector<64x504xf32>
    %c0_68 = arith.constant 0 : index
    %c0_69 = arith.constant 0 : index
    %c0_70 = arith.constant 0 : index
    %273 = vector.load %arg16[%c0_68, %c0_69, %c0_70] : memref<3x8x192xf32, #tpu.memory_space<vmem>>, vector<3x8x192xf32>
    %c0_71 = arith.constant 0 : index
    %c0_72 = arith.constant 0 : index
    %274 = vector.load %arg17[%c0_71, %c0_72] : memref<8x1xf32, #tpu.memory_space<vmem>>, vector<8x1xf32>
    %cst_73 = arith.constant 0.000000e+00 : f32
    %275 = vector.broadcast %cst_73 : f32 to vector<8x448xf32>
    %276 = vector.extract_strided_slice %272 {offsets = [0, 0], sizes = [64, 448], strides = [1, 1]} : vector<64x504xf32> to vector<64x448xf32>
    %277 = vector.extract_strided_slice %276 {offsets = [0, 447], sizes = [64, 1], strides = [1, 1]} : vector<64x448xf32> to vector<64x1xf32>
    %278 = vector.extract_strided_slice %276 {offsets = [0, 0], sizes = [64, 447], strides = [1, 1]} : vector<64x448xf32> to vector<64x447xf32>
    %279 = tpu.concatenate %277, %278 in 1 : vector<64x1xf32>, vector<64x447xf32> -> vector<64x448xf32>
    %280 = vector.extract_strided_slice %276 {offsets = [0, 1], sizes = [64, 447], strides = [1, 1]} : vector<64x448xf32> to vector<64x447xf32>
    %281 = vector.extract_strided_slice %276 {offsets = [0, 0], sizes = [64, 1], strides = [1, 1]} : vector<64x448xf32> to vector<64x1xf32>
    %282 = tpu.concatenate %280, %281 in 1 : vector<64x447xf32>, vector<64x1xf32> -> vector<64x448xf32>
    %283 = tpu.concatenate %279, %276, %282 in 0 : vector<64x448xf32>, vector<64x448xf32>, vector<64x448xf32> -> vector<192x448xf32>
    %284 = vector.extract_strided_slice %273 {offsets = [0, 0, 0], sizes = [1, 8, 192], strides = [1, 1, 1]} : vector<3x8x192xf32> to vector<1x8x192xf32>
    %285 = vector.shape_cast %284 : vector<1x8x192xf32> to vector<8x192xf32>
    %cst_74 = arith.constant dense<0.000000e+00> : vector<8x448xf32>
    %286 = tpu.matmul %285, %283, %cst_74 {dimension_numbers = #tpu.dot_dimension_numbers<[1], [0], [0], [1], [0, 0, 1, 1], [], []>} : vector<8x192xf32>, vector<192x448xf32>, vector<8x448xf32> -> vector<8x448xf32>
    %287 = arith.addf %275, %286 : vector<8x448xf32>
    %288 = vector.extract_strided_slice %272 {offsets = [0, 28], sizes = [64, 448], strides = [1, 1]} : vector<64x504xf32> to vector<64x448xf32>
    %289 = vector.extract_strided_slice %288 {offsets = [0, 447], sizes = [64, 1], strides = [1, 1]} : vector<64x448xf32> to vector<64x1xf32>
    %290 = vector.extract_strided_slice %288 {offsets = [0, 0], sizes = [64, 447], strides = [1, 1]} : vector<64x448xf32> to vector<64x447xf32>
    %291 = tpu.concatenate %289, %290 in 1 : vector<64x1xf32>, vector<64x447xf32> -> vector<64x448xf32>
    %292 = vector.extract_strided_slice %288 {offsets = [0, 1], sizes = [64, 447], strides = [1, 1]} : vector<64x448xf32> to vector<64x447xf32>
    %293 = vector.extract_strided_slice %288 {offsets = [0, 0], sizes = [64, 1], strides = [1, 1]} : vector<64x448xf32> to vector<64x1xf32>
    %294 = tpu.concatenate %292, %293 in 1 : vector<64x447xf32>, vector<64x1xf32> -> vector<64x448xf32>
    %295 = tpu.concatenate %291, %288, %294 in 0 : vector<64x448xf32>, vector<64x448xf32>, vector<64x448xf32> -> vector<192x448xf32>
    %296 = vector.extract_strided_slice %273 {offsets = [1, 0, 0], sizes = [1, 8, 192], strides = [1, 1, 1]} : vector<3x8x192xf32> to vector<1x8x192xf32>
    %297 = vector.shape_cast %296 : vector<1x8x192xf32> to vector<8x192xf32>
    %cst_75 = arith.constant dense<0.000000e+00> : vector<8x448xf32>
    %298 = tpu.matmul %297, %295, %cst_75 {dimension_numbers = #tpu.dot_dimension_numbers<[1], [0], [0], [1], [0, 0, 1, 1], [], []>} : vector<8x192xf32>, vector<192x448xf32>, vector<8x448xf32> -> vector<8x448xf32>
    %299 = arith.addf %287, %298 : vector<8x448xf32>
    %300 = vector.extract_strided_slice %272 {offsets = [0, 56], sizes = [64, 448], strides = [1, 1]} : vector<64x504xf32> to vector<64x448xf32>
    %301 = vector.extract_strided_slice %300 {offsets = [0, 447], sizes = [64, 1], strides = [1, 1]} : vector<64x448xf32> to vector<64x1xf32>
    %302 = vector.extract_strided_slice %300 {offsets = [0, 0], sizes = [64, 447], strides = [1, 1]} : vector<64x448xf32> to vector<64x447xf32>
    %303 = tpu.concatenate %301, %302 in 1 : vector<64x1xf32>, vector<64x447xf32> -> vector<64x448xf32>
    %304 = vector.extract_strided_slice %300 {offsets = [0, 1], sizes = [64, 447], strides = [1, 1]} : vector<64x448xf32> to vector<64x447xf32>
    %305 = vector.extract_strided_slice %300 {offsets = [0, 0], sizes = [64, 1], strides = [1, 1]} : vector<64x448xf32> to vector<64x1xf32>
    %306 = tpu.concatenate %304, %305 in 1 : vector<64x447xf32>, vector<64x1xf32> -> vector<64x448xf32>
    %307 = tpu.concatenate %303, %300, %306 in 0 : vector<64x448xf32>, vector<64x448xf32>, vector<64x448xf32> -> vector<192x448xf32>
    %308 = vector.extract_strided_slice %273 {offsets = [2, 0, 0], sizes = [1, 8, 192], strides = [1, 1, 1]} : vector<3x8x192xf32> to vector<1x8x192xf32>
    %309 = vector.shape_cast %308 : vector<1x8x192xf32> to vector<8x192xf32>
    %cst_76 = arith.constant dense<0.000000e+00> : vector<8x448xf32>
    %310 = tpu.matmul %309, %307, %cst_76 {dimension_numbers = #tpu.dot_dimension_numbers<[1], [0], [0], [1], [0, 0, 1, 1], [], []>} : vector<8x192xf32>, vector<192x448xf32>, vector<8x448xf32> -> vector<8x448xf32>
    %311 = arith.addf %299, %310 : vector<8x448xf32>
    %312 = vector.broadcast %274 : vector<8x1xf32> to vector<8x448xf32>
    %313 = arith.addf %311, %312 : vector<8x448xf32>
    %314 = vector.extract_strided_slice %313 {offsets = [0, 0], sizes = [1, 448], strides = [1, 1]} : vector<8x448xf32> to vector<1x448xf32>
    %315 = arith.negf %314 : vector<1x448xf32>
    %316 = math.exp %315 : vector<1x448xf32>
    %cst_77 = arith.constant 1.000000e+00 : f32
    %317 = vector.broadcast %cst_77 : f32 to vector<1x448xf32>
    %318 = arith.addf %317, %316 : vector<1x448xf32>
    %319 = arith.divf %317, %318 : vector<1x448xf32>
    %c0_78 = arith.constant 0 : index
    %c0_79 = arith.constant 0 : index
    %c0_80 = arith.constant 0 : index
    %c0_81 = arith.constant 0 : index
    %320 = vector.load %arg18[%c0_78, %c0_79, %c0_80, %c0_81] : memref<1x1x1x448xf32, #tpu.memory_space<vmem>>, vector<1x1x1x448xf32>
    %321 = vector.shape_cast %320 : vector<1x1x1x448xf32> to vector<1x448xf32>
    %322 = vector.shape_cast %319 : vector<1x448xf32> to vector<1x1x1x448xf32>
    tpu.vector_store %arg18[%c0_78, %c0_79, %c0_80, %c0_81], %322 {strides = array<i32>} : memref<1x1x1x448xf32, #tpu.memory_space<vmem>>, vector<1x1x1x448xf32>,
    return
  }
  func.func @transform_0(%arg0: i32, %arg1: i32) -> (i32, i32, i32, i32) {
    %c0_i32 = arith.constant 0 : i32
    %c0_i32_0 = arith.constant 0 : i32
    %c0_i32_1 = arith.constant 0 : i32
    return %arg0, %arg1, %c0_i32, %c0_i32_0 : i32, i32, i32, i32
  }
  func.func @transform_1(%arg0: i32, %arg1: i32) -> (i32, i32) {
    %c0_i32 = arith.constant 0 : i32
    %c0_i32_0 = arith.constant 0 : i32
    %c0_i32_1 = arith.constant 0 : i32
    return %c0_i32, %c0_i32_0 : i32, i32
  }
  func.func @transform_2(%arg0: i32, %arg1: i32) -> (i32, i32, i32) {
    %c0_i32 = arith.constant 0 : i32
    %c0_i32_0 = arith.constant 0 : i32
    %c0_i32_1 = arith.constant 0 : i32
    %c0_i32_2 = arith.constant 0 : i32
    return %c0_i32, %c0_i32_0, %c0_i32_1 : i32, i32, i32
  }
  func.func @transform_3(%arg0: i32, %arg1: i32) -> (i32, i32) {
    %c0_i32 = arith.constant 0 : i32
    %c0_i32_0 = arith.constant 0 : i32
    %c0_i32_1 = arith.constant 0 : i32
    return %c0_i32, %c0_i32_0 : i32, i32
  }
  func.func @transform_4(%arg0: i32, %arg1: i32) -> (i32, i32, i32) {
    %c0_i32 = arith.constant 0 : i32
    %c0_i32_0 = arith.constant 0 : i32
    %c0_i32_1 = arith.constant 0 : i32
    %c0_i32_2 = arith.constant 0 : i32
    return %c0_i32, %c0_i32_0, %c0_i32_1 : i32, i32, i32
  }
  func.func @transform_5(%arg0: i32, %arg1: i32) -> (i32, i32) {
    %c0_i32 = arith.constant 0 : i32
    %c0_i32_0 = arith.constant 0 : i32
    %c0_i32_1 = arith.constant 0 : i32
    return %c0_i32, %c0_i32_0 : i32, i32
  }
  func.func @transform_6(%arg0: i32, %arg1: i32) -> (i32, i32, i32) {
    %c0_i32 = arith.constant 0 : i32
    %c0_i32_0 = arith.constant 0 : i32
    %c0_i32_1 = arith.constant 0 : i32
    %c0_i32_2 = arith.constant 0 : i32
    return %c0_i32, %c0_i32_0, %c0_i32_1 : i32, i32, i32
  }
  func.func @transform_7(%arg0: i32, %arg1: i32) -> (i32, i32) {
    %c0_i32 = arith.constant 0 : i32
    %c0_i32_0 = arith.constant 0 : i32
    %c0_i32_1 = arith.constant 0 : i32
    return %c0_i32, %c0_i32_0 : i32, i32
  }
  func.func @transform_8(%arg0: i32, %arg1: i32) -> (i32, i32, i32) {
    %c0_i32 = arith.constant 0 : i32
    %c0_i32_0 = arith.constant 0 : i32
    %c0_i32_1 = arith.constant 0 : i32
    %c0_i32_2 = arith.constant 0 : i32
    return %c0_i32, %c0_i32_0, %c0_i32_1 : i32, i32, i32
  }
  func.func @transform_9(%arg0: i32, %arg1: i32) -> (i32, i32) {
    %c0_i32 = arith.constant 0 : i32
    %c0_i32_0 = arith.constant 0 : i32
    %c0_i32_1 = arith.constant 0 : i32
    return %c0_i32, %c0_i32_0 : i32, i32
  }
  func.func @transform_10(%arg0: i32, %arg1: i32) -> (i32, i32, i32) {
    %c0_i32 = arith.constant 0 : i32
    %c0_i32_0 = arith.constant 0 : i32
    %c0_i32_1 = arith.constant 0 : i32
    %c0_i32_2 = arith.constant 0 : i32
    return %c0_i32, %c0_i32_0, %c0_i32_1 : i32, i32, i32
  }
  func.func @transform_11(%arg0: i32, %arg1: i32) -> (i32, i32) {
    %c0_i32 = arith.constant 0 : i32
    %c0_i32_0 = arith.constant 0 : i32
    %c0_i32_1 = arith.constant 0 : i32
    return %c0_i32, %c0_i32_0 : i32, i32
  }
  func.func @transform_12(%arg0: i32, %arg1: i32) -> (i32, i32) {
    %c0_i32 = arith.constant 0 : i32
    %c0_i32_0 = arith.constant 0 : i32
    %c0_i32_1 = arith.constant 0 : i32
    return %c0_i32, %c0_i32_0 : i32, i32
  }
  func.func @transform_13(%arg0: i32, %arg1: i32) -> (i32, i32) {
    %c0_i32 = arith.constant 0 : i32
    %c0_i32_0 = arith.constant 0 : i32
    %c0_i32_1 = arith.constant 0 : i32
    return %c0_i32, %c0_i32_0 : i32, i32
  }
  func.func @transform_14(%arg0: i32, %arg1: i32) -> (i32, i32, i32) {
    %c0_i32 = arith.constant 0 : i32
    %c0_i32_0 = arith.constant 0 : i32
    %c0_i32_1 = arith.constant 0 : i32
    %c0_i32_2 = arith.constant 0 : i32
    return %c0_i32, %c0_i32_0, %c0_i32_1 : i32, i32, i32
  }
  func.func @transform_15(%arg0: i32, %arg1: i32) -> (i32, i32) {
    %c0_i32 = arith.constant 0 : i32
    %c0_i32_0 = arith.constant 0 : i32
    %c0_i32_1 = arith.constant 0 : i32
    return %c0_i32, %c0_i32_0 : i32, i32
  }
  func.func @transform_16(%arg0: i32, %arg1: i32) -> (i32, i32, i32, i32) {
    %c0_i32 = arith.constant 0 : i32
    %c0_i32_0 = arith.constant 0 : i32
    %c0_i32_1 = arith.constant 0 : i32
    return %arg0, %arg1, %c0_i32, %c0_i32_0 : i32, i32, i32, i32
  }
}

</mosaic_0001>

<llo_original>
// kernel: tpu_custom_call.1
$region0: #{tpu_custom_call.1}
  #allocation0 [shape = 'u32[]', space=smem, size = 0x4, offset = 0x4, fixed_abs, tag = 'smem constant byte address 0x4 - core index']
  #allocation1 [shape = 'u32[72,128]{1,0:T(1,128)}', space=vmem, size = 0x9000, scoped, tag = 'internal scratch']
  %s0 = inlined_call_operand.vmem [shape: f32[2,1,8,784], index: 0, kind: input, shape index: {}]
  %s1 = inlined_call_operand.vmem [shape: f32[1,784], index: 1, kind: input, shape index: {}]
  %s2 = inlined_call_operand.vmem [shape: f32[3,64,24], index: 2, kind: input, shape index: {}]
  %s3 = inlined_call_operand.vmem [shape: f32[64,1], index: 3, kind: input, shape index: {}]
  %s4 = inlined_call_operand.vmem [shape: f32[3,32,96], index: 4, kind: input, shape index: {}]
  %s5 = inlined_call_operand.vmem [shape: f32[32,1], index: 5, kind: input, shape index: {}]
  %s6 = inlined_call_operand.vmem [shape: f32[3,32,96], index: 6, kind: input, shape index: {}]
  %s7 = inlined_call_operand.vmem [shape: f32[32,1], index: 7, kind: input, shape index: {}]
  %s8 = inlined_call_operand.vmem [shape: f32[3,32,24], index: 8, kind: input, shape index: {}]
  %s9 = inlined_call_operand.vmem [shape: f32[32,1], index: 9, kind: input, shape index: {}]
  %s10 = inlined_call_operand.vmem [shape: f32[3,32,96], index: 10, kind: input, shape index: {}]
  %s11 = inlined_call_operand.vmem [shape: f32[32,1], index: 11, kind: input, shape index: {}]
  %s12 = inlined_call_operand.vmem [shape: f32[64,96], index: 12, kind: input, shape index: {}]
  %s13 = inlined_call_operand.vmem [shape: f32[64,1], index: 13, kind: input, shape index: {}]
  %s14 = inlined_call_operand.vmem [shape: f32[3,8,192], index: 14, kind: input, shape index: {}]
  %s15 = inlined_call_operand.vmem [shape: f32[8,1], index: 15, kind: input, shape index: {}]
  %s16 = inlined_call_operand.hbm [shape: f32[2,1,1,448], index: 16, kind: output, shape index: {}]
  %s17 = sld [smem:[#allocation0]]
  $region97: #{tpu_custom_call.1} parent=0
    _
  %s19 = ssub.s32 1, %s17
  %s20 = scalar_select 0, %s19, %s17
  $region1: #{tpu_custom_call.1} parent=0
    #allocation2 [shape = 'u8[4096]{0}', space=vmem, size = 0x1000, scoped, tag = 'output window, operand 0']
    #allocation3 [shape = 's32[2]{0}', space=sflag, size = 0x8, scoped, tag = 'scoped memory for tpu_custom_call.1']
    %21 = vsyncpa [#allocation3], 0
    %s22 = scalar_lea.sflag [#allocation3], 1
    %23 = vsyncpa %s22, 0
    loop: start=0, step=1, limit=4
    $region2: #{tpu_custom_call.1} parent=1 // loop_pre_header
      _
    $region3: #{tpu_custom_call.1} parent=1 // loop_header
      %s25 = sphi 0, %s29
      %p26 = scmp.ge.s32.totalorder %s25, 4
      %s32 = sphi 0, %s44
      %s33 = sphi 0, %s40
      %s34 = sphi 0, %s32
      %s35 = sphi 0, %s33
      %s36 = sphi 0, %s34
      %s37 = sphi 0, %s35
      %s49 = sphi 0, %s51
      %s52 = sphi 0, %s49
      %s53 = sphi 0, %s52
      %s69 = sphi 0, %s53
      %s73 = sphi 0, %s73
      %s75 = sphi 0, %s73
      %s76 = sphi 0, %s75
      %s90 = sphi 0, %s76
      %s94 = sphi 0, %s94
      %s96 = sphi 0, %s94
      %s97 = sphi 0, %s96
      %s111 = sphi 0, %s97
      %s115 = sphi 0, %s115
      %s117 = sphi 0, %s115
      %s118 = sphi 0, %s117
      %s132 = sphi 0, %s118
      %s136 = sphi 0, %s136
      %s138 = sphi 0, %s136
      %s139 = sphi 0, %s138
      %s153 = sphi 0, %s139
      %s157 = sphi 0, %s157
      %s159 = sphi 0, %s157
      %s160 = sphi 0, %s159
      %s174 = sphi 0, %s160
      %s178 = sphi 0, %s178
      %s180 = sphi 0, %s178
      %s181 = sphi 0, %s180
      %s195 = sphi 0, %s181
      %s199 = sphi 0, %s199
      %s201 = sphi 0, %s199
      %s202 = sphi 0, %s201
      %s216 = sphi 0, %s202
      %s220 = sphi 0, %s220
      %s222 = sphi 0, %s220
      %s223 = sphi 0, %s222
      %s237 = sphi 0, %s223
      %s241 = sphi 0, %s241
      %s243 = sphi 0, %s241
      %s244 = sphi 0, %s243
      %s258 = sphi 0, %s244
      %s262 = sphi 0, %s262
      %s264 = sphi 0, %s262
      %s265 = sphi 0, %s264
      %s279 = sphi 0, %s265
      %s283 = sphi 0, %s283
      %s285 = sphi 0, %s283
      %s286 = sphi 0, %s285
      %s300 = sphi 0, %s286
      %s304 = sphi 0, %s304
      %s306 = sphi 0, %s304
      %s307 = sphi 0, %s306
      %s321 = sphi 0, %s307
      %s325 = sphi 0, %s325
      %s327 = sphi 0, %s325
      %s328 = sphi 0, %s327
      %s342 = sphi 0, %s328
      %s346 = sphi 0, %s346
      %s348 = sphi 0, %s346
      %s349 = sphi 0, %s348
      %s363 = sphi 0, %s349
      %s367 = sphi 0, %s367
      %s369 = sphi 0, %s367
      %s370 = sphi 0, %s369
      %s384 = sphi 0, %s370
      %s392 = sphi 0, %s394
      %s395 = sphi 0, %s392
      %s396 = sphi 0, %s395
      %s412 = sphi 0, %s396
    $region4: #{tpu_custom_call.1} parent=1 // loop_header_branch
      %28 = sbr.rel (%p26) target = $region8
    $region5: #{tpu_custom_call.1} parent=1 // loop_body
      %s30 = ssub.s32 %s25, 1
      %s31 = ssub.s32 %s25, 2
      %s38 = sadd.s32 1, %s33
      %p39 = scmp.ge.s32.totalorder %s38, 1
      %s40 = scalar_select %p39, 0, %s38
      %s41 = sadd.s32 1, %s32
      %s42 = scalar_select %p39, %s41, %s32
      %p43 = scmp.ge.s32.totalorder %s42, 2
      %s44 = scalar_select %p43, 0, %s42
      %s45 = ssub.s32 %s32, %s44
      %s46 = ssub.s32 %s33, %s40
      %s47 = sor.u32 %s45, %s46
      %p48 = scmp.eq.s32.totalorder %s47, 0
      %s50 = sadd.s32 %s49, 1
      %s51 = scalar_select %p48, %s49, %s50
      %p54 = pneg %p48
      %p55 = scmp.eq.s32.totalorder %s25, 1
      %p56 = por %p54, %p55
      %p57 = scmp.ne.s32.totalorder %s49, %s52
      %p58 = scmp.eq.s32.totalorder %s25, 0
      %p59 = por %p57, %p58
      %p60 = scmp.ne.s32.totalorder %s49, %s52
      %p61 = scmp.eq.s32.totalorder %s30, 1
      %p62 = por %p60, %p61
      %p63 = scmp.ne.s32.totalorder %s52, %s53
      %p64 = scmp.eq.s32.totalorder %s30, 0
      %p65 = por %p63, %p64
      %p66 = scmp.ne.s32.totalorder %s52, %s53
      %p67 = scmp.eq.s32.totalorder %s31, 1
      %p68 = por %p66, %p67
      %p70 = scmp.ne.s32.totalorder %s53, %s69
      %p71 = scmp.eq.s32.totalorder %s31, 0
      %p72 = por %p70, %p71
      %s74 = sadd.s32 %s73, 1
      %p77 = scmp.eq.s32.totalorder %s25, 1
      %p78 = scmp.ne.s32.totalorder %s73, %s75
      %p79 = scmp.eq.s32.totalorder %s25, 0
      %p80 = por %p78, %p79
      %p81 = scmp.ne.s32.totalorder %s73, %s75
      %p82 = scmp.eq.s32.totalorder %s30, 1
      %p83 = por %p81, %p82
      %p84 = scmp.ne.s32.totalorder %s75, %s76
      %p85 = scmp.eq.s32.totalorder %s30, 0
      %p86 = por %p84, %p85
      %p87 = scmp.ne.s32.totalorder %s75, %s76
      %p88 = scmp.eq.s32.totalorder %s31, 1
      %p89 = por %p87, %p88
      %p91 = scmp.ne.s32.totalorder %s76, %s90
      %p92 = scmp.eq.s32.totalorder %s31, 0
      %p93 = por %p91, %p92
      %s95 = sadd.s32 %s94, 1
      %p98 = scmp.eq.s32.totalorder %s25, 1
      %p99 = scmp.ne.s32.totalorder %s94, %s96
      %p100 = scmp.eq.s32.totalorder %s25, 0
      %p101 = por %p99, %p100
      %p102 = scmp.ne.s32.totalorder %s94, %s96
      %p103 = scmp.eq.s32.totalorder %s30, 1
      %p104 = por %p102, %p103
      %p105 = scmp.ne.s32.totalorder %s96, %s97
      %p106 = scmp.eq.s32.totalorder %s30, 0
      %p107 = por %p105, %p106
      %p108 = scmp.ne.s32.totalorder %s96, %s97
      %p109 = scmp.eq.s32.totalorder %s31, 1
      %p110 = por %p108, %p109
      %p112 = scmp.ne.s32.totalorder %s97, %s111
      %p113 = scmp.eq.s32.totalorder %s31, 0
      %p114 = por %p112, %p113
      %s116 = sadd.s32 %s115, 1
      %p119 = scmp.eq.s32.totalorder %s25, 1
      %p120 = scmp.ne.s32.totalorder %s115, %s117
      %p121 = scmp.eq.s32.totalorder %s25, 0
      %p122 = por %p120, %p121
      %p123 = scmp.ne.s32.totalorder %s115, %s117
      %p124 = scmp.eq.s32.totalorder %s30, 1
      %p125 = por %p123, %p124
      %p126 = scmp.ne.s32.totalorder %s117, %s118
      %p127 = scmp.eq.s32.totalorder %s30, 0
      %p128 = por %p126, %p127
      %p129 = scmp.ne.s32.totalorder %s117, %s118
      %p130 = scmp.eq.s32.totalorder %s31, 1
      %p131 = por %p129, %p130
      %p133 = scmp.ne.s32.totalorder %s118, %s132
      %p134 = scmp.eq.s32.totalorder %s31, 0
      %p135 = por %p133, %p134
      %s137 = sadd.s32 %s136, 1
      %p140 = scmp.eq.s32.totalorder %s25, 1
      %p141 = scmp.ne.s32.totalorder %s136, %s138
      %p142 = scmp.eq.s32.totalorder %s25, 0
      %p143 = por %p141, %p142
      %p144 = scmp.ne.s32.totalorder %s136, %s138
      %p145 = scmp.eq.s32.totalorder %s30, 1
      %p146 = por %p144, %p145
      %p147 = scmp.ne.s32.totalorder %s138, %s139
      %p148 = scmp.eq.s32.totalorder %s30, 0
      %p149 = por %p147, %p148
      %p150 = scmp.ne.s32.totalorder %s138, %s139
      %p151 = scmp.eq.s32.totalorder %s31, 1
      %p152 = por %p150, %p151
      %p154 = scmp.ne.s32.totalorder %s139, %s153
      %p155 = scmp.eq.s32.totalorder %s31, 0
      %p156 = por %p154, %p155
      %s158 = sadd.s32 %s157, 1
      %p161 = scmp.eq.s32.totalorder %s25, 1
      %p162 = scmp.ne.s32.totalorder %s157, %s159
      %p163 = scmp.eq.s32.totalorder %s25, 0
      %p164 = por %p162, %p163
      %p165 = scmp.ne.s32.totalorder %s157, %s159
      %p166 = scmp.eq.s32.totalorder %s30, 1
      %p167 = por %p165, %p166
      %p168 = scmp.ne.s32.totalorder %s159, %s160
      %p169 = scmp.eq.s32.totalorder %s30, 0
      %p170 = por %p168, %p169
      %p171 = scmp.ne.s32.totalorder %s159, %s160
      %p172 = scmp.eq.s32.totalorder %s31, 1
      %p173 = por %p171, %p172
      %p175 = scmp.ne.s32.totalorder %s160, %s174
      %p176 = scmp.eq.s32.totalorder %s31, 0
      %p177 = por %p175, %p176
      %s179 = sadd.s32 %s178, 1
      %p182 = scmp.eq.s32.totalorder %s25, 1
      %p183 = scmp.ne.s32.totalorder %s178, %s180
      %p184 = scmp.eq.s32.totalorder %s25, 0
      %p185 = por %p183, %p184
      %p186 = scmp.ne.s32.totalorder %s178, %s180
      %p187 = scmp.eq.s32.totalorder %s30, 1
      %p188 = por %p186, %p187
      %p189 = scmp.ne.s32.totalorder %s180, %s181
      %p190 = scmp.eq.s32.totalorder %s30, 0
      %p191 = por %p189, %p190
      %p192 = scmp.ne.s32.totalorder %s180, %s181
      %p193 = scmp.eq.s32.totalorder %s31, 1
      %p194 = por %p192, %p193
      %p196 = scmp.ne.s32.totalorder %s181, %s195
      %p197 = scmp.eq.s32.totalorder %s31, 0
      %p198 = por %p196, %p197
      %s200 = sadd.s32 %s199, 1
      %p203 = scmp.eq.s32.totalorder %s25, 1
      %p204 = scmp.ne.s32.totalorder %s199, %s201
      %p205 = scmp.eq.s32.totalorder %s25, 0
      %p206 = por %p204, %p205
      %p207 = scmp.ne.s32.totalorder %s199, %s201
      %p208 = scmp.eq.s32.totalorder %s30, 1
      %p209 = por %p207, %p208
      %p210 = scmp.ne.s32.totalorder %s201, %s202
      %p211 = scmp.eq.s32.totalorder %s30, 0
      %p212 = por %p210, %p211
      %p213 = scmp.ne.s32.totalorder %s201, %s202
      %p214 = scmp.eq.s32.totalorder %s31, 1
      %p215 = por %p213, %p214
      %p217 = scmp.ne.s32.totalorder %s202, %s216
      %p218 = scmp.eq.s32.totalorder %s31, 0
      %p219 = por %p217, %p218
      %s221 = sadd.s32 %s220, 1
      %p224 = scmp.eq.s32.totalorder %s25, 1
      %p225 = scmp.ne.s32.totalorder %s220, %s222
      %p226 = scmp.eq.s32.totalorder %s25, 0
      %p227 = por %p225, %p226
      %p228 = scmp.ne.s32.totalorder %s220, %s222
      %p229 = scmp.eq.s32.totalorder %s30, 1
      %p230 = por %p228, %p229
      %p231 = scmp.ne.s32.totalorder %s222, %s223
      %p232 = scmp.eq.s32.totalorder %s30, 0
      %p233 = por %p231, %p232
      %p234 = scmp.ne.s32.totalorder %s222, %s223
      %p235 = scmp.eq.s32.totalorder %s31, 1
      %p236 = por %p234, %p235
      %p238 = scmp.ne.s32.totalorder %s223, %s237
      %p239 = scmp.eq.s32.totalorder %s31, 0
      %p240 = por %p238, %p239
      %s242 = sadd.s32 %s241, 1
      %p245 = scmp.eq.s32.totalorder %s25, 1
      %p246 = scmp.ne.s32.totalorder %s241, %s243
      %p247 = scmp.eq.s32.totalorder %s25, 0
      %p248 = por %p246, %p247
      %p249 = scmp.ne.s32.totalorder %s241, %s243
      %p250 = scmp.eq.s32.totalorder %s30, 1
      %p251 = por %p249, %p250
      %p252 = scmp.ne.s32.totalorder %s243, %s244
      %p253 = scmp.eq.s32.totalorder %s30, 0
      %p254 = por %p252, %p253
      %p255 = scmp.ne.s32.totalorder %s243, %s244
      %p256 = scmp.eq.s32.totalorder %s31, 1
      %p257 = por %p255, %p256
      %p259 = scmp.ne.s32.totalorder %s244, %s258
      %p260 = scmp.eq.s32.totalorder %s31, 0
      %p261 = por %p259, %p260
      %s263 = sadd.s32 %s262, 1
      %p266 = scmp.eq.s32.totalorder %s25, 1
      %p267 = scmp.ne.s32.totalorder %s262, %s264
      %p268 = scmp.eq.s32.totalorder %s25, 0
      %p269 = por %p267, %p268
      %p270 = scmp.ne.s32.totalorder %s262, %s264
      %p271 = scmp.eq.s32.totalorder %s30, 1
      %p272 = por %p270, %p271
      %p273 = scmp.ne.s32.totalorder %s264, %s265
      %p274 = scmp.eq.s32.totalorder %s30, 0
      %p275 = por %p273, %p274
      %p276 = scmp.ne.s32.totalorder %s264, %s265
      %p277 = scmp.eq.s32.totalorder %s31, 1
      %p278 = por %p276, %p277
      %p280 = scmp.ne.s32.totalorder %s265, %s279
      %p281 = scmp.eq.s32.totalorder %s31, 0
      %p282 = por %p280, %p281
      %s284 = sadd.s32 %s283, 1
      %p287 = scmp.eq.s32.totalorder %s25, 1
      %p288 = scmp.ne.s32.totalorder %s283, %s285
      %p289 = scmp.eq.s32.totalorder %s25, 0
      %p290 = por %p288, %p289
      %p291 = scmp.ne.s32.totalorder %s283, %s285
      %p292 = scmp.eq.s32.totalorder %s30, 1
      %p293 = por %p291, %p292
      %p294 = scmp.ne.s32.totalorder %s285, %s286
      %p295 = scmp.eq.s32.totalorder %s30, 0
      %p296 = por %p294, %p295
      %p297 = scmp.ne.s32.totalorder %s285, %s286
      %p298 = scmp.eq.s32.totalorder %s31, 1
      %p299 = por %p297, %p298
      %p301 = scmp.ne.s32.totalorder %s286, %s300
      %p302 = scmp.eq.s32.totalorder %s31, 0
      %p303 = por %p301, %p302
      %s305 = sadd.s32 %s304, 1
      %p308 = scmp.eq.s32.totalorder %s25, 1
      %p309 = scmp.ne.s32.totalorder %s304, %s306
      %p310 = scmp.eq.s32.totalorder %s25, 0
      %p311 = por %p309, %p310
      %p312 = scmp.ne.s32.totalorder %s304, %s306
      %p313 = scmp.eq.s32.totalorder %s30, 1
      %p314 = por %p312, %p313
      %p315 = scmp.ne.s32.totalorder %s306, %s307
      %p316 = scmp.eq.s32.totalorder %s30, 0
      %p317 = por %p315, %p316
      %p318 = scmp.ne.s32.totalorder %s306, %s307
      %p319 = scmp.eq.s32.totalorder %s31, 1
      %p320 = por %p318, %p319
      %p322 = scmp.ne.s32.totalorder %s307, %s321
      %p323 = scmp.eq.s32.totalorder %s31, 0
      %p324 = por %p322, %p323
      %s326 = sadd.s32 %s325, 1
      %p329 = scmp.eq.s32.totalorder %s25, 1
      %p330 = scmp.ne.s32.totalorder %s325, %s327
      %p331 = scmp.eq.s32.totalorder %s25, 0
      %p332 = por %p330, %p331
      %p333 = scmp.ne.s32.totalorder %s325, %s327
      %p334 = scmp.eq.s32.totalorder %s30, 1
      %p335 = por %p333, %p334
      %p336 = scmp.ne.s32.totalorder %s327, %s328
      %p337 = scmp.eq.s32.totalorder %s30, 0
      %p338 = por %p336, %p337
      %p339 = scmp.ne.s32.totalorder %s327, %s328
      %p340 = scmp.eq.s32.totalorder %s31, 1
      %p341 = por %p339, %p340
      %p343 = scmp.ne.s32.totalorder %s328, %s342
      %p344 = scmp.eq.s32.totalorder %s31, 0
      %p345 = por %p343, %p344
      %s347 = sadd.s32 %s346, 1
      %p350 = scmp.eq.s32.totalorder %s25, 1
      %p351 = scmp.ne.s32.totalorder %s346, %s348
      %p352 = scmp.eq.s32.totalorder %s25, 0
      %p353 = por %p351, %p352
      %p354 = scmp.ne.s32.totalorder %s346, %s348
      %p355 = scmp.eq.s32.totalorder %s30, 1
      %p356 = por %p354, %p355
      %p357 = scmp.ne.s32.totalorder %s348, %s349
      %p358 = scmp.eq.s32.totalorder %s30, 0
      %p359 = por %p357, %p358
      %p360 = scmp.ne.s32.totalorder %s348, %s349
      %p361 = scmp.eq.s32.totalorder %s31, 1
      %p362 = por %p360, %p361
      %p364 = scmp.ne.s32.totalorder %s349, %s363
      %p365 = scmp.eq.s32.totalorder %s31, 0
      %p366 = por %p364, %p365
      %s368 = sadd.s32 %s367, 1
      %p371 = scmp.eq.s32.totalorder %s25, 1
      %p372 = scmp.ne.s32.totalorder %s367, %s369
      %p373 = scmp.eq.s32.totalorder %s25, 0
      %p374 = por %p372, %p373
      %p375 = scmp.ne.s32.totalorder %s367, %s369
      %p376 = scmp.eq.s32.totalorder %s30, 1
      %p377 = por %p375, %p376
      %p378 = scmp.ne.s32.totalorder %s369, %s370
      %p379 = scmp.eq.s32.totalorder %s30, 0
      %p380 = por %p378, %p379
      %p381 = scmp.ne.s32.totalorder %s369, %s370
      %p382 = scmp.eq.s32.totalorder %s31, 1
      %p383 = por %p381, %p382
      %p385 = scmp.ne.s32.totalorder %s370, %s384
      %p386 = scmp.eq.s32.totalorder %s31, 0
      %p387 = por %p385, %p386
      %s388 = ssub.s32 %s32, %s44
      %s389 = ssub.s32 %s33, %s40
      %s390 = sor.u32 %s388, %s389
      %p391 = scmp.eq.s32.totalorder %s390, 0
      %s393 = sadd.s32 %s392, 1
      %s394 = scalar_select %p391, %s392, %s393
      %p397 = pneg %p391
      %p398 = scmp.eq.s32.totalorder %s25, 1
      %p399 = por %p397, %p398
      %p400 = scmp.ne.s32.totalorder %s392, %s395
      %p401 = scmp.eq.s32.totalorder %s25, 0
      %p402 = por %p400, %p401
      %p403 = scmp.ne.s32.totalorder %s392, %s395
      %p404 = scmp.eq.s32.totalorder %s30, 1
      %p405 = por %p403, %p404
      %p406 = scmp.ne.s32.totalorder %s395, %s396
      %p407 = scmp.eq.s32.totalorder %s30, 0
      %p408 = por %p406, %p407
      %p409 = scmp.ne.s32.totalorder %s395, %s396
      %p410 = scmp.eq.s32.totalorder %s31, 1
      %p411 = por %p409, %p410
      %p413 = scmp.ne.s32.totalorder %s396, %s412
      %p414 = scmp.eq.s32.totalorder %s31, 0
      %p415 = por %p413, %p414
      %p416 = scmp.le.s32.totalorder 1, %s25
      %p417 = scmp.lt.s32.totalorder %s25, 3
      %p418 = pnand %p416, %p417
      %p419 = pneg %p418
      // Predicated region
      $region9: #{tpu_custom_call.1} parent=5 // pred_check
        _
      $region10: #{tpu_custom_call.1} parent=5 // pred_check_branch
        %421 = sbr.rel (%p418) target = $region12
      $region11: #{tpu_custom_call.1} parent=5 // pred_region
        %s422 = ssub.s32 %s25, 1
        // Predicated region
        $region13: #{tpu_custom_call.1} parent=11 // pred_check
          %p423 = pneg %p86
        $region14: #{tpu_custom_call.1} parent=11 // pred_check_branch
          %425 = sbr.rel (%p423) target = $region16
        $region15: #{tpu_custom_call.1} parent=11 // pred_region
          _
        $region16: #{tpu_custom_call.1} parent=11 // pred_fallthru
          _
        // Predicated region
        $region17: #{tpu_custom_call.1} parent=11 // pred_check
          %p426 = pneg %p107
        $region18: #{tpu_custom_call.1} parent=11 // pred_check_branch
          %428 = sbr.rel (%p426) target = $region20
        $region19: #{tpu_custom_call.1} parent=11 // pred_region
          _
        $region20: #{tpu_custom_call.1} parent=11 // pred_fallthru
          _
        // Predicated region
        $region21: #{tpu_custom_call.1} parent=11 // pred_check
          %p429 = pneg %p128
        $region22: #{tpu_custom_call.1} parent=11 // pred_check_branch
          %431 = sbr.rel (%p429) target = $region24
        $region23: #{tpu_custom_call.1} parent=11 // pred_region
          _
        $region24: #{tpu_custom_call.1} parent=11 // pred_fallthru
          _
        // Predicated region
        $region25: #{tpu_custom_call.1} parent=11 // pred_check
          %p432 = pneg %p149
        $region26: #{tpu_custom_call.1} parent=11 // pred_check_branch
          %434 = sbr.rel (%p432) target = $region28
        $region27: #{tpu_custom_call.1} parent=11 // pred_region
          _
        $region28: #{tpu_custom_call.1} parent=11 // pred_fallthru
          _
        // Predicated region
        $region29: #{tpu_custom_call.1} parent=11 // pred_check
          %p435 = pneg %p170
        $region30: #{tpu_custom_call.1} parent=11 // pred_check_branch
          %437 = sbr.rel (%p435) target = $region32
        $region31: #{tpu_custom_call.1} parent=11 // pred_region
          _
        $region32: #{tpu_custom_call.1} parent=11 // pred_fallthru
          _
        // Predicated region
        $region33: #{tpu_custom_call.1} parent=11 // pred_check
          %p438 = pneg %p191
        $region34: #{tpu_custom_call.1} parent=11 // pred_check_branch
          %440 = sbr.rel (%p438) target = $region36
        $region35: #{tpu_custom_call.1} parent=11 // pred_region
          _
        $region36: #{tpu_custom_call.1} parent=11 // pred_fallthru
          _
        // Predicated region
        $region37: #{tpu_custom_call.1} parent=11 // pred_check
          %p441 = pneg %p212
        $region38: #{tpu_custom_call.1} parent=11 // pred_check_branch
          %443 = sbr.rel (%p441) target = $region40
        $region39: #{tpu_custom_call.1} parent=11 // pred_region
          _
        $region40: #{tpu_custom_call.1} parent=11 // pred_fallthru
          _
        // Predicated region
        $region41: #{tpu_custom_call.1} parent=11 // pred_check
          %p444 = pneg %p233
        $region42: #{tpu_custom_call.1} parent=11 // pred_check_branch
          %446 = sbr.rel (%p444) target = $region44
        $region43: #{tpu_custom_call.1} parent=11 // pred_region
          _
        $region44: #{tpu_custom_call.1} parent=11 // pred_fallthru
          _
        // Predicated region
        $region45: #{tpu_custom_call.1} parent=11 // pred_check
          %p447 = pneg %p254
        $region46: #{tpu_custom_call.1} parent=11 // pred_check_branch
          %449 = sbr.rel (%p447) target = $region48
        $region47: #{tpu_custom_call.1} parent=11 // pred_region
          _
        $region48: #{tpu_custom_call.1} parent=11 // pred_fallthru
          _
        // Predicated region
        $region49: #{tpu_custom_call.1} parent=11 // pred_check
          %p450 = pneg %p275
        $region50: #{tpu_custom_call.1} parent=11 // pred_check_branch
          %452 = sbr.rel (%p450) target = $region52
        $region51: #{tpu_custom_call.1} parent=11 // pred_region
          _
        $region52: #{tpu_custom_call.1} parent=11 // pred_fallthru
          _
        // Predicated region
        $region53: #{tpu_custom_call.1} parent=11 // pred_check
          %p453 = pneg %p296
        $region54: #{tpu_custom_call.1} parent=11 // pred_check_branch
          %455 = sbr.rel (%p453) target = $region56
        $region55: #{tpu_custom_call.1} parent=11 // pred_region
          _
        $region56: #{tpu_custom_call.1} parent=11 // pred_fallthru
          _
        // Predicated region
        $region57: #{tpu_custom_call.1} parent=11 // pred_check
          %p456 = pneg %p317
        $region58: #{tpu_custom_call.1} parent=11 // pred_check_branch
          %458 = sbr.rel (%p456) target = $region60
        $region59: #{tpu_custom_call.1} parent=11 // pred_region
          _
        $region60: #{tpu_custom_call.1} parent=11 // pred_fallthru
          _
        // Predicated region
        $region61: #{tpu_custom_call.1} parent=11 // pred_check
          %p459 = pneg %p338
        $region62: #{tpu_custom_call.1} parent=11 // pred_check_branch
          %461 = sbr.rel (%p459) target = $region64
        $region63: #{tpu_custom_call.1} parent=11 // pred_region
          _
        $region64: #{tpu_custom_call.1} parent=11 // pred_fallthru
          _
        // Predicated region
        $region65: #{tpu_custom_call.1} parent=11 // pred_check
          %p462 = pneg %p359
        $region66: #{tpu_custom_call.1} parent=11 // pred_check_branch
          %464 = sbr.rel (%p462) target = $region68
        $region67: #{tpu_custom_call.1} parent=11 // pred_region
          _
        $region68: #{tpu_custom_call.1} parent=11 // pred_fallthru
          _
        // Predicated region
        $region69: #{tpu_custom_call.1} parent=11 // pred_check
          %p465 = pneg %p380
        $region70: #{tpu_custom_call.1} parent=11 // pred_check_branch
          %467 = sbr.rel (%p465) target = $region72
        $region71: #{tpu_custom_call.1} parent=11 // pred_region
          _
        $region72: #{tpu_custom_call.1} parent=11 // pred_fallthru
          _
      $region12: #{tpu_custom_call.1} parent=5 // pred_fallthru
        _
      %p468 = scmp.lt.s32.totalorder %s25, 2
      // Predicated region
      $region73: #{tpu_custom_call.1} parent=5 // pred_check
        %p469 = pneg %p468
      $region74: #{tpu_custom_call.1} parent=5 // pred_check_branch
        %471 = sbr.rel (%p469) target = $region76
      $region75: #{tpu_custom_call.1} parent=5 // pred_region
        // Predicated region
        $region77: #{tpu_custom_call.1} parent=75 // pred_check
          %p472 = pneg %p59
        $region78: #{tpu_custom_call.1} parent=75 // pred_check_branch
          %474 = sbr.rel (%p472) target = $region80
        $region79: #{tpu_custom_call.1} parent=75 // pred_region
          %p475 = scmp.lt.s32.totalorder %s32, 1
          %s476 = scalar_select %p475, %s32, 1
          %p477 = scmp.lt.s32.totalorder %s33, 0
          %s478 = scalar_select %p477, %s33, 0
          %s479 = smul.addr %s478, 7
          %s480 = smul.addr %s476, 7
          %s481 = sadd.s32 %s479, %s480
          %s482 = smul.addr %s481, 8
          %s483 = scalar_lea.vmem %s0, %s482
        $region80: #{tpu_custom_call.1} parent=75 // pred_fallthru
          _
      $region76: #{tpu_custom_call.1} parent=5 // pred_fallthru
        _
      %p484 = scmp.le.s32.totalorder 1, %s25
      %p485 = scmp.lt.s32.totalorder %s25, 3
      %p486 = pnand %p484, %p485
      %p487 = pneg %p486
      // Predicated region
      $region81: #{tpu_custom_call.1} parent=5 // pred_check
        _
      $region82: #{tpu_custom_call.1} parent=5 // pred_check_branch
        %489 = sbr.rel (%p486) target = $region84
      $region83: #{tpu_custom_call.1} parent=5 // pred_region
        %s490 = ssub.s32 %s25, 1
        %p491 = scmp.lt.s32.totalorder %s34, 1
        %s492 = scalar_select %p491, %s34, 1
        %p493 = scmp.lt.s32.totalorder %s35, 0
        %s494 = scalar_select %p493, %s35, 0
        %s495 = smul.addr %s494, 7
        %s496 = smul.addr %s492, 7
        %s497 = sadd.s32 %s495, %s496
        %s498 = smul.addr %s497, 8
        %s499 = scalar_lea.vmem %s0, %s498
        %p500 = pneg %p65
        %p501 = pneg %p62
        %p502 = pneg %p86
        %p503 = pneg %p83
        %p504 = pneg %p107
        %p505 = pneg %p104
        %p506 = pneg %p128
        %p507 = pneg %p125
        %p508 = pneg %p149
        %p509 = pneg %p146
        %p510 = pneg %p170
        %p511 = pneg %p167
        %p512 = pneg %p191
        %p513 = pneg %p188
        %p514 = pneg %p212
        %p515 = pneg %p209
        %p516 = pneg %p233
        %p517 = pneg %p230
        %p518 = pneg %p254
        %p519 = pneg %p251
        %p520 = pneg %p275
        %p521 = pneg %p272
        %p522 = pneg %p296
        %p523 = pneg %p293
        %p524 = pneg %p317
        %p525 = pneg %p314
        %p526 = pneg %p338
        %p527 = pneg %p335
        %p528 = pneg %p359
        %p529 = pneg %p356
        %p530 = pneg %p380
        %p531 = pneg %p377
        %p532 = pneg %p408
        %p533 = pneg %p405
        %s534 = sand.u32 %s395, 1
        %s535 = scalar_lea.sflag [#allocation3], %s534
        %s536 = sand.u32 %s395, 1
        %s537 = smul.addr %s536, 4
        %s538 = scalar_lea.vmem [#allocation2], %s537
        %p539 = scmp.lt.s32.totalorder %s34, 1
        %s540 = scalar_select %p539, %s34, 1
        %p541 = scmp.lt.s32.totalorder %s35, 0
        %s542 = scalar_select %p541, %s35, 0
        %s543 = smul.addr %s542, 7
        %s544 = smul.addr %s540, 7
        %s545 = sadd.s32 %s543, %s544
        %s546 = smul.addr %s545, 8
        %s547 = scalar_lea.vmem %s0, %s546
        %v548 = vld [vmem:[%s547] sm:$0xff]
        %v549 = vld [vmem:[%s547 + $0x8] sm:$0xff]
        %v550 = vld [vmem:[%s547 + $0x10] sm:$0xff]
        %v551 = vld [vmem:[%s547 + $0x18] sm:$0xff]
        %v552 = vld [vmem:[%s547 + $0x20] sm:$0xff]
        %v553 = vld [vmem:[%s547 + $0x28] sm:$0xff]
        %v554 = vld [vmem:[%s547 + $0x30] sm:$0xff]
        %v555 = vld [vmem:[%s1] sm:$0x7f]
        %v556 = vld [vmem:[%s2] sm:$0xff]
        %v557 = vld [vmem:[%s2 + $0x8] sm:$0xff]
        %v558 = vld [vmem:[%s2 + $0x10] sm:$0xff]
        %v559 = vld [vmem:[%s2 + $0x18] sm:$0xff]
        %v560 = vld [vmem:[%s2 + $0x20] sm:$0xff]
        %v561 = vld [vmem:[%s2 + $0x28] sm:$0xff]
        %v562 = vld [vmem:[%s2 + $0x30] sm:$0xff]
        %v563 = vld [vmem:[%s2 + $0x38] sm:$0xff]
        %v564 = vld [vmem:[%s2 + $0x40] sm:$0xff]
        %v565 = vld [vmem:[%s2 + $0x48] sm:$0xff]
        %v566 = vld [vmem:[%s2 + $0x50] sm:$0xff]
        %v567 = vld [vmem:[%s2 + $0x58] sm:$0xff]
        %v568 = vld [vmem:[%s2 + $0x60] sm:$0xff]
        %v569 = vld [vmem:[%s2 + $0x68] sm:$0xff]
        %v570 = vld [vmem:[%s2 + $0x70] sm:$0xff]
        %v571 = vld [vmem:[%s2 + $0x78] sm:$0xff]
        %v572 = vld [vmem:[%s2 + $0x80] sm:$0xff]
        %v573 = vld [vmem:[%s2 + $0x88] sm:$0xff]
        %v574 = vld [vmem:[%s2 + $0x90] sm:$0xff]
        %v575 = vld [vmem:[%s2 + $0x98] sm:$0xff]
        %v576 = vld [vmem:[%s2 + $0xa0] sm:$0xff]
        %v577 = vld [vmem:[%s2 + $0xa8] sm:$0xff]
        %v578 = vld [vmem:[%s2 + $0xb0] sm:$0xff]
        %v579 = vld [vmem:[%s2 + $0xb8] sm:$0xff]
        %v580 = vld [vmem:[%s3] sm:$0xff]
        %v581 = vld [vmem:[%s3 + $0x8] sm:$0xff]
        %v582 = vld [vmem:[%s3 + $0x10] sm:$0xff]
        %v583 = vld [vmem:[%s3 + $0x18] sm:$0xff]
        %v584 = vld [vmem:[%s3 + $0x20] sm:$0xff]
        %v585 = vld [vmem:[%s3 + $0x28] sm:$0xff]
        %v586 = vld [vmem:[%s3 + $0x30] sm:$0xff]
        %v587 = vld [vmem:[%s3 + $0x38] sm:$0xff]
        %589 = vrot.lane.b32.xlu0 %v553, 41
        %v590 = vpop.permute.xlu0 %589
        %597 = vrot.lane.b32.xlu0 %v548, 1
        %v598 = vpop.permute.xlu0 %597
        %599 = vrot.lane.b32.xlu0 %v549, 1
        %v600 = vpop.permute.xlu0 %599
        %601 = vrot.lane.b32.xlu0 %v550, 1
        %v602 = vpop.permute.xlu0 %601
        %603 = vrot.lane.b32.xlu0 %v551, 1
        %v604 = vpop.permute.xlu0 %603
        %605 = vrot.lane.b32.xlu0 %v552, 1
        %v606 = vpop.permute.xlu0 %605
        %607 = vrot.lane.b32.xlu0 %v553, 1
        %v608 = vpop.permute.xlu0 %607
        %vm609 = vcmask 7168
        %v610 = vsel %vm609, %v598, %v600
        %v611 = vsel %vm609, %v600, %v602
        %v612 = vsel %vm609, %v602, %v604
        %v613 = vsel %vm609, %v604, %v606
        %v614 = vsel %vm609, %v606, %v608
        %v621 = vsel %vm609, %v590, %v598
        %622 = vrot.lane.b32.xlu0 %v548, 127
        %v623 = vpop.permute.xlu0 %622
        %624 = vrot.lane.b32.xlu0 %v549, 127
        %v625 = vpop.permute.xlu0 %624
        %626 = vrot.lane.b32.xlu0 %v550, 127
        %v627 = vpop.permute.xlu0 %626
        %628 = vrot.lane.b32.xlu0 %v551, 127
        %v629 = vpop.permute.xlu0 %628
        %630 = vrot.lane.b32.xlu0 %v552, 127
        %v631 = vpop.permute.xlu0 %630
        %632 = vrot.lane.b32.xlu0 %v553, 127
        %v633 = vpop.permute.xlu0 %632
        %vm634 = vcmask 1039360
        %v635 = vsel %vm634, %v623, %v625
        %v636 = vsel %vm634, %v625, %v627
        %v637 = vsel %vm634, %v627, %v629
        %v638 = vsel %vm634, %v629, %v631
        %v639 = vsel %vm634, %v631, %v633
        %646 = vrot.lane.b32.xlu0 %v548, 87
        %v647 = vpop.permute.xlu0 %646
        %vm649 = vcmask 711680
        %v650 = vsel %vm649, %v633, %v647
        %651 = vrot.lane.b32.xlu0 %v553, 13
        %v652 = vpop.permute.xlu0 %651
        %654 = vrot.lane.b32.xlu0 %v548, 101
        %v655 = vpop.permute.xlu0 %654
        %656 = vrot.lane.b32.xlu0 %v549, 101
        %v657 = vpop.permute.xlu0 %656
        %658 = vrot.lane.b32.xlu0 %v550, 101
        %v659 = vpop.permute.xlu0 %658
        %660 = vrot.lane.b32.xlu0 %v551, 101
        %v661 = vpop.permute.xlu0 %660
        %662 = vrot.lane.b32.xlu0 %v552, 101
        %v663 = vpop.permute.xlu0 %662
        %664 = vrot.lane.b32.xlu0 %v553, 101
        %v665 = vpop.permute.xlu0 %664
        %vm666 = vcmask 826368
        %v667 = vsel %vm666, %v655, %v657
        %v668 = vsel %vm666, %v657, %v659
        %v669 = vsel %vm666, %v659, %v661
        %v670 = vsel %vm666, %v661, %v663
        %v671 = vsel %vm666, %v663, %v665
        %v678 = vsel %vm609, %v652, %v667
        %679 = vrot.lane.b32.xlu0 %v548, 99
        %v680 = vpop.permute.xlu0 %679
        %681 = vrot.lane.b32.xlu0 %v549, 99
        %v682 = vpop.permute.xlu0 %681
        %683 = vrot.lane.b32.xlu0 %v550, 99
        %v684 = vpop.permute.xlu0 %683
        %685 = vrot.lane.b32.xlu0 %v551, 99
        %v686 = vpop.permute.xlu0 %685
        %687 = vrot.lane.b32.xlu0 %v552, 99
        %v688 = vpop.permute.xlu0 %687
        %689 = vrot.lane.b32.xlu0 %v553, 99
        %v690 = vpop.permute.xlu0 %689
        %vm691 = vcmask 809984
        %v692 = vsel %vm691, %v680, %v682
        %v693 = vsel %vm691, %v682, %v684
        %v694 = vsel %vm691, %v684, %v686
        %v695 = vsel %vm691, %v686, %v688
        %v696 = vsel %vm691, %v688, %v690
        %703 = vrot.lane.b32.xlu0 %v548, 59
        %v704 = vpop.permute.xlu0 %703
        %v706 = vsel %vm649, %v690, %v704
        %707 = vrot.lane.b32.xlu0 %v548, 100
        %v708 = vpop.permute.xlu0 %707
        %709 = vrot.lane.b32.xlu0 %v549, 100
        %v710 = vpop.permute.xlu0 %709
        %711 = vrot.lane.b32.xlu0 %v550, 100
        %v712 = vpop.permute.xlu0 %711
        %713 = vrot.lane.b32.xlu0 %v551, 100
        %v714 = vpop.permute.xlu0 %713
        %715 = vrot.lane.b32.xlu0 %v552, 100
        %v716 = vpop.permute.xlu0 %715
        %717 = vrot.lane.b32.xlu0 %v553, 100
        %v718 = vpop.permute.xlu0 %717
        %vm719 = vcmask 818176
        %v720 = vsel %vm719, %v708, %v710
        %v721 = vsel %vm719, %v710, %v712
        %v722 = vsel %vm719, %v712, %v714
        %v723 = vsel %vm719, %v714, %v716
        %v724 = vsel %vm719, %v716, %v718
        %vm731 = vcmask 195584
        %v733 = vsel %vm731, %v564, 0
        %v736 = vsel %vm731, %v565, 0
        %v739 = vsel %vm731, %v566, 0
        %v742 = vsel %vm731, %v567, 0
        %v745 = vsel %vm731, %v568, 0
        %v748 = vsel %vm731, %v569, 0
        %v751 = vsel %vm731, %v570, 0
        %v754 = vsel %vm731, %v571, 0
        %756 = vmatpush.msra.mxu0 0.0
        %757 = vmatpush.msra.mxu0 0.0
        %758 = vmatpush.msra.mxu0 0.0
        %759 = vmatpush.msra.mxu0 0.0
        %760 = vmatpush.msra.mxu0 0.0
        %761 = vmatpush.msra.mxu0 0.0
        %762 = vmatpush.msra.mxu0 0.0
        %763 = vmatpush.msra.mxu0 0.0
        %764 = vmatpush.msra.mxu0 0.0
        %765 = vmatpush.msra.mxu0 0.0
        %766 = vmatpush.msra.mxu0 0.0
        %767 = vmatpush.msra.mxu0 0.0
        %768 = vmatpush.msra.mxu0 0.0
        %769 = vmatpush.msra.mxu0 %v692
        %770 = vmatpush.msra.mxu0 %v720
        %771 = vmatpush.msra.mxu0 %v678
        %772 = vmatmul.f32.gmra.mxu0 %v733
        %v773 = vpop.f32.mrf.mxu0
        %v774 = vadd.f32 0.0, %v773
        %775 = vmatmul.f32.gmra.mxu0 %v736
        %v776 = vpop.f32.mrf.mxu0
        %v777 = vadd.f32 0.0, %v776
        %778 = vmatmul.f32.gmra.mxu0 %v739
        %v779 = vpop.f32.mrf.mxu0
        %v780 = vadd.f32 0.0, %v779
        %781 = vmatmul.f32.gmra.mxu0 %v742
        %v782 = vpop.f32.mrf.mxu0
        %v783 = vadd.f32 0.0, %v782
        %784 = vmatmul.f32.gmra.mxu0 %v745
        %v785 = vpop.f32.mrf.mxu0
        %v786 = vadd.f32 0.0, %v785
        %787 = vmatmul.f32.gmra.mxu0 %v748
        %v788 = vpop.f32.mrf.mxu0
        %v789 = vadd.f32 0.0, %v788
        %790 = vmatmul.f32.gmra.mxu0 %v751
        %v791 = vpop.f32.mrf.mxu0
        %v792 = vadd.f32 0.0, %v791
        %793 = vmatmul.f32.gmra.mxu0 %v754
        %v794 = vpop.f32.mrf.mxu0
        %v795 = vadd.f32 0.0, %v794
        %796 = vdwg.mxu0
        %797 = vmatpush.msra.mxu0 0.0
        %798 = vmatpush.msra.mxu0 0.0
        %799 = vmatpush.msra.mxu0 0.0
        %800 = vmatpush.msra.mxu0 0.0
        %801 = vmatpush.msra.mxu0 0.0
        %802 = vmatpush.msra.mxu0 0.0
        %803 = vmatpush.msra.mxu0 0.0
        %804 = vmatpush.msra.mxu0 0.0
        %805 = vmatpush.msra.mxu0 0.0
        %806 = vmatpush.msra.mxu0 0.0
        %807 = vmatpush.msra.mxu0 0.0
        %808 = vmatpush.msra.mxu0 0.0
        %809 = vmatpush.msra.mxu0 0.0
        %810 = vmatpush.msra.mxu0 %v693
        %811 = vmatpush.msra.mxu0 %v721
        %812 = vmatpush.msra.mxu0 %v668
        %813 = vmatmul.f32.gmra.mxu0 %v733
        %v814 = vpop.f32.mrf.mxu0
        %v815 = vadd.f32 0.0, %v814
        %816 = vmatmul.f32.gmra.mxu0 %v736
        %v817 = vpop.f32.mrf.mxu0
        %v818 = vadd.f32 0.0, %v817
        %819 = vmatmul.f32.gmra.mxu0 %v739
        %v820 = vpop.f32.mrf.mxu0
        %v821 = vadd.f32 0.0, %v820
        %822 = vmatmul.f32.gmra.mxu0 %v742
        %v823 = vpop.f32.mrf.mxu0
        %v824 = vadd.f32 0.0, %v823
        %825 = vmatmul.f32.gmra.mxu0 %v745
        %v826 = vpop.f32.mrf.mxu0
        %v827 = vadd.f32 0.0, %v826
        %828 = vmatmul.f32.gmra.mxu0 %v748
        %v829 = vpop.f32.mrf.mxu0
        %v830 = vadd.f32 0.0, %v829
        %831 = vmatmul.f32.gmra.mxu0 %v751
        %v832 = vpop.f32.mrf.mxu0
        %v833 = vadd.f32 0.0, %v832
        %834 = vmatmul.f32.gmra.mxu0 %v754
        %v835 = vpop.f32.mrf.mxu0
        %v836 = vadd.f32 0.0, %v835
        %837 = vdwg.mxu0
        %838 = vmatpush.msra.mxu0 0.0
        %839 = vmatpush.msra.mxu0 0.0
        %840 = vmatpush.msra.mxu0 0.0
        %841 = vmatpush.msra.mxu0 0.0
        %842 = vmatpush.msra.mxu0 0.0
        %843 = vmatpush.msra.mxu0 0.0
        %844 = vmatpush.msra.mxu0 0.0
        %845 = vmatpush.msra.mxu0 0.0
        %846 = vmatpush.msra.mxu0 0.0
        %847 = vmatpush.msra.mxu0 0.0
        %848 = vmatpush.msra.mxu0 0.0
        %849 = vmatpush.msra.mxu0 0.0
        %850 = vmatpush.msra.mxu0 0.0
        %851 = vmatpush.msra.mxu0 %v694
        %852 = vmatpush.msra.mxu0 %v722
        %853 = vmatpush.msra.mxu0 %v669
        %854 = vmatmul.f32.gmra.mxu0 %v733
        %v855 = vpop.f32.mrf.mxu0
        %v856 = vadd.f32 0.0, %v855
        %857 = vmatmul.f32.gmra.mxu0 %v736
        %v858 = vpop.f32.mrf.mxu0
        %v859 = vadd.f32 0.0, %v858
        %860 = vmatmul.f32.gmra.mxu0 %v739
        %v861 = vpop.f32.mrf.mxu0
        %v862 = vadd.f32 0.0, %v861
        %863 = vmatmul.f32.gmra.mxu0 %v742
        %v864 = vpop.f32.mrf.mxu0
        %v865 = vadd.f32 0.0, %v864
        %866 = vmatmul.f32.gmra.mxu0 %v745
        %v867 = vpop.f32.mrf.mxu0
        %v868 = vadd.f32 0.0, %v867
        %869 = vmatmul.f32.gmra.mxu0 %v748
        %v870 = vpop.f32.mrf.mxu0
        %v871 = vadd.f32 0.0, %v870
        %872 = vmatmul.f32.gmra.mxu0 %v751
        %v873 = vpop.f32.mrf.mxu0
        %v874 = vadd.f32 0.0, %v873
        %875 = vmatmul.f32.gmra.mxu0 %v754
        %v876 = vpop.f32.mrf.mxu0
        %v877 = vadd.f32 0.0, %v876
        %878 = vdwg.mxu0
        %879 = vmatpush.msra.mxu0 0.0
        %880 = vmatpush.msra.mxu0 0.0
        %881 = vmatpush.msra.mxu0 0.0
        %882 = vmatpush.msra.mxu0 0.0
        %883 = vmatpush.msra.mxu0 0.0
        %884 = vmatpush.msra.mxu0 0.0
        %885 = vmatpush.msra.mxu0 0.0
        %886 = vmatpush.msra.mxu0 0.0
        %887 = vmatpush.msra.mxu0 0.0
        %888 = vmatpush.msra.mxu0 0.0
        %889 = vmatpush.msra.mxu0 0.0
        %890 = vmatpush.msra.mxu0 0.0
        %891 = vmatpush.msra.mxu0 0.0
        %892 = vmatpush.msra.mxu0 %v695
        %893 = vmatpush.msra.mxu0 %v723
        %894 = vmatpush.msra.mxu0 %v670
        %895 = vmatmul.f32.gmra.mxu0 %v733
        %v896 = vpop.f32.mrf.mxu0
        %v897 = vadd.f32 0.0, %v896
        %898 = vmatmul.f32.gmra.mxu0 %v736
        %v899 = vpop.f32.mrf.mxu0
        %v900 = vadd.f32 0.0, %v899
        %901 = vmatmul.f32.gmra.mxu0 %v739
        %v902 = vpop.f32.mrf.mxu0
        %v903 = vadd.f32 0.0, %v902
        %904 = vmatmul.f32.gmra.mxu0 %v742
        %v905 = vpop.f32.mrf.mxu0
        %v906 = vadd.f32 0.0, %v905
        %907 = vmatmul.f32.gmra.mxu0 %v745
        %v908 = vpop.f32.mrf.mxu0
        %v909 = vadd.f32 0.0, %v908
        %910 = vmatmul.f32.gmra.mxu0 %v748
        %v911 = vpop.f32.mrf.mxu0
        %v912 = vadd.f32 0.0, %v911
        %913 = vmatmul.f32.gmra.mxu0 %v751
        %v914 = vpop.f32.mrf.mxu0
        %v915 = vadd.f32 0.0, %v914
        %916 = vmatmul.f32.gmra.mxu0 %v754
        %v917 = vpop.f32.mrf.mxu0
        %v918 = vadd.f32 0.0, %v917
        %919 = vdwg.mxu0
        %920 = vmatpush.msra.mxu0 0.0
        %921 = vmatpush.msra.mxu0 0.0
        %922 = vmatpush.msra.mxu0 0.0
        %923 = vmatpush.msra.mxu0 0.0
        %924 = vmatpush.msra.mxu0 0.0
        %925 = vmatpush.msra.mxu0 0.0
        %926 = vmatpush.msra.mxu0 0.0
        %927 = vmatpush.msra.mxu0 0.0
        %928 = vmatpush.msra.mxu0 0.0
        %929 = vmatpush.msra.mxu0 0.0
        %930 = vmatpush.msra.mxu0 0.0
        %931 = vmatpush.msra.mxu0 0.0
        %932 = vmatpush.msra.mxu0 0.0
        %933 = vmatpush.msra.mxu0 %v696
        %934 = vmatpush.msra.mxu0 %v724
        %935 = vmatpush.msra.mxu0 %v671
        %936 = vmatmul.f32.gmra.mxu0 %v733
        %v937 = vpop.f32.mrf.mxu0
        %v938 = vadd.f32 0.0, %v937
        %939 = vmatmul.f32.gmra.mxu0 %v736
        %v940 = vpop.f32.mrf.mxu0
        %v941 = vadd.f32 0.0, %v940
        %942 = vmatmul.f32.gmra.mxu0 %v739
        %v943 = vpop.f32.mrf.mxu0
        %v944 = vadd.f32 0.0, %v943
        %945 = vmatmul.f32.gmra.mxu0 %v742
        %v946 = vpop.f32.mrf.mxu0
        %v947 = vadd.f32 0.0, %v946
        %948 = vmatmul.f32.gmra.mxu0 %v745
        %v949 = vpop.f32.mrf.mxu0
        %v950 = vadd.f32 0.0, %v949
        %951 = vmatmul.f32.gmra.mxu0 %v748
        %v952 = vpop.f32.mrf.mxu0
        %v953 = vadd.f32 0.0, %v952
        %954 = vmatmul.f32.gmra.mxu0 %v751
        %v955 = vpop.f32.mrf.mxu0
        %v956 = vadd.f32 0.0, %v955
        %957 = vmatmul.f32.gmra.mxu0 %v754
        %v958 = vpop.f32.mrf.mxu0
        %v959 = vadd.f32 0.0, %v958
        %960 = vdwg.mxu0
        %961 = vmatpush.msra.mxu0 0.0
        %962 = vmatpush.msra.mxu0 0.0
        %963 = vmatpush.msra.mxu0 0.0
        %964 = vmatpush.msra.mxu0 0.0
        %965 = vmatpush.msra.mxu0 0.0
        %966 = vmatpush.msra.mxu0 0.0
        %967 = vmatpush.msra.mxu0 0.0
        %968 = vmatpush.msra.mxu0 0.0
        %969 = vmatpush.msra.mxu0 0.0
        %970 = vmatpush.msra.mxu0 0.0
        %971 = vmatpush.msra.mxu0 0.0
        %972 = vmatpush.msra.mxu0 0.0
        %973 = vmatpush.msra.mxu0 0.0
        %974 = vmatpush.msra.mxu0 %v706
        %975 = vmatpush.msra.mxu0 %v718
        %976 = vmatpush.msra.mxu0 %v665
        %977 = vmatmul.f32.gmra.mxu0 %v733
        %v978 = vpop.f32.mrf.mxu0
        %v979 = vadd.f32 0.0, %v978
        %980 = vmatmul.f32.gmra.mxu0 %v736
        %v981 = vpop.f32.mrf.mxu0
        %v982 = vadd.f32 0.0, %v981
        %983 = vmatmul.f32.gmra.mxu0 %v739
        %v984 = vpop.f32.mrf.mxu0
        %v985 = vadd.f32 0.0, %v984
        %986 = vmatmul.f32.gmra.mxu0 %v742
        %v987 = vpop.f32.mrf.mxu0
        %v988 = vadd.f32 0.0, %v987
        %989 = vmatmul.f32.gmra.mxu0 %v745
        %v990 = vpop.f32.mrf.mxu0
        %v991 = vadd.f32 0.0, %v990
        %992 = vmatmul.f32.gmra.mxu0 %v748
        %v993 = vpop.f32.mrf.mxu0
        %v994 = vadd.f32 0.0, %v993
        %995 = vmatmul.f32.gmra.mxu0 %v751
        %v996 = vpop.f32.mrf.mxu0
        %v997 = vadd.f32 0.0, %v996
        %998 = vmatmul.f32.gmra.mxu0 %v754
        %v999 = vpop.f32.mrf.mxu0
        %v1000 = vadd.f32 0.0, %v999
        %1001 = vdwg.mxu0
        %v1003 = vsel %vm731, %v556, 0
        %v1006 = vsel %vm731, %v557, 0
        %v1009 = vsel %vm731, %v558, 0
        %v1012 = vsel %vm731, %v559, 0
        %v1015 = vsel %vm731, %v560, 0
        %v1018 = vsel %vm731, %v561, 0
        %v1021 = vsel %vm731, %v562, 0
        %v1024 = vsel %vm731, %v563, 0
        %1026 = vmatpush.msra.mxu0 0.0
        %1027 = vmatpush.msra.mxu0 0.0
        %1028 = vmatpush.msra.mxu0 0.0
        %1029 = vmatpush.msra.mxu0 0.0
        %1030 = vmatpush.msra.mxu0 0.0
        %1031 = vmatpush.msra.mxu0 0.0
        %1032 = vmatpush.msra.mxu0 0.0
        %1033 = vmatpush.msra.mxu0 0.0
        %1034 = vmatpush.msra.mxu0 0.0
        %1035 = vmatpush.msra.mxu0 0.0
        %1036 = vmatpush.msra.mxu0 0.0
        %1037 = vmatpush.msra.mxu0 0.0
        %1038 = vmatpush.msra.mxu0 0.0
        %1039 = vmatpush.msra.mxu0 %v635
        %1040 = vmatpush.msra.mxu0 %v548
        %1041 = vmatpush.msra.mxu0 %v621
        %1042 = vmatmul.f32.gmra.mxu0 %v1003
        %v1043 = vpop.f32.mrf.mxu0
        %v1044 = vadd.f32 %v774, %v1043
        %1045 = vmatmul.f32.gmra.mxu0 %v1006
        %v1046 = vpop.f32.mrf.mxu0
        %v1047 = vadd.f32 %v777, %v1046
        %1048 = vmatmul.f32.gmra.mxu0 %v1009
        %v1049 = vpop.f32.mrf.mxu0
        %v1050 = vadd.f32 %v780, %v1049
        %1051 = vmatmul.f32.gmra.mxu0 %v1012
        %v1052 = vpop.f32.mrf.mxu0
        %v1053 = vadd.f32 %v783, %v1052
        %1054 = vmatmul.f32.gmra.mxu0 %v1015
        %v1055 = vpop.f32.mrf.mxu0
        %v1056 = vadd.f32 %v786, %v1055
        %1057 = vmatmul.f32.gmra.mxu0 %v1018
        %v1058 = vpop.f32.mrf.mxu0
        %v1059 = vadd.f32 %v789, %v1058
        %1060 = vmatmul.f32.gmra.mxu0 %v1021
        %v1061 = vpop.f32.mrf.mxu0
        %v1062 = vadd.f32 %v792, %v1061
        %1063 = vmatmul.f32.gmra.mxu0 %v1024
        %v1064 = vpop.f32.mrf.mxu0
        %v1065 = vadd.f32 %v795, %v1064
        %1066 = vdwg.mxu0
        %1067 = vmatpush.msra.mxu0 0.0
        %1068 = vmatpush.msra.mxu0 0.0
        %1069 = vmatpush.msra.mxu0 0.0
        %1070 = vmatpush.msra.mxu0 0.0
        %1071 = vmatpush.msra.mxu0 0.0
        %1072 = vmatpush.msra.mxu0 0.0
        %1073 = vmatpush.msra.mxu0 0.0
        %1074 = vmatpush.msra.mxu0 0.0
        %1075 = vmatpush.msra.mxu0 0.0
        %1076 = vmatpush.msra.mxu0 0.0
        %1077 = vmatpush.msra.mxu0 0.0
        %1078 = vmatpush.msra.mxu0 0.0
        %1079 = vmatpush.msra.mxu0 0.0
        %1080 = vmatpush.msra.mxu0 %v636
        %1081 = vmatpush.msra.mxu0 %v549
        %1082 = vmatpush.msra.mxu0 %v610
        %1083 = vmatmul.f32.gmra.mxu0 %v1003
        %v1084 = vpop.f32.mrf.mxu0
        %v1085 = vadd.f32 %v815, %v1084
        %1086 = vmatmul.f32.gmra.mxu0 %v1006
        %v1087 = vpop.f32.mrf.mxu0
        %v1088 = vadd.f32 %v818, %v1087
        %1089 = vmatmul.f32.gmra.mxu0 %v1009
        %v1090 = vpop.f32.mrf.mxu0
        %v1091 = vadd.f32 %v821, %v1090
        %1092 = vmatmul.f32.gmra.mxu0 %v1012
        %v1093 = vpop.f32.mrf.mxu0
        %v1094 = vadd.f32 %v824, %v1093
        %1095 = vmatmul.f32.gmra.mxu0 %v1015
        %v1096 = vpop.f32.mrf.mxu0
        %v1097 = vadd.f32 %v827, %v1096
        %1098 = vmatmul.f32.gmra.mxu0 %v1018
        %v1099 = vpop.f32.mrf.mxu0
        %v1100 = vadd.f32 %v830, %v1099
        %1101 = vmatmul.f32.gmra.mxu0 %v1021
        %v1102 = vpop.f32.mrf.mxu0
        %v1103 = vadd.f32 %v833, %v1102
        %1104 = vmatmul.f32.gmra.mxu0 %v1024
        %v1105 = vpop.f32.mrf.mxu0
        %v1106 = vadd.f32 %v836, %v1105
        %1107 = vdwg.mxu0
        %1108 = vmatpush.msra.mxu0 0.0
        %1109 = vmatpush.msra.mxu0 0.0
        %1110 = vmatpush.msra.mxu0 0.0
        %1111 = vmatpush.msra.mxu0 0.0
        %1112 = vmatpush.msra.mxu0 0.0
        %1113 = vmatpush.msra.mxu0 0.0
        %1114 = vmatpush.msra.mxu0 0.0
        %1115 = vmatpush.msra.mxu0 0.0
        %1116 = vmatpush.msra.mxu0 0.0
        %1117 = vmatpush.msra.mxu0 0.0
        %1118 = vmatpush.msra.mxu0 0.0
        %1119 = vmatpush.msra.mxu0 0.0
        %1120 = vmatpush.msra.mxu0 0.0
        %1121 = vmatpush.msra.mxu0 %v637
        %1122 = vmatpush.msra.mxu0 %v550
        %1123 = vmatpush.msra.mxu0 %v611
        %1124 = vmatmul.f32.gmra.mxu0 %v1003
        %v1125 = vpop.f32.mrf.mxu0
        %v1126 = vadd.f32 %v856, %v1125
        %1127 = vmatmul.f32.gmra.mxu0 %v1006
        %v1128 = vpop.f32.mrf.mxu0
        %v1129 = vadd.f32 %v859, %v1128
        %1130 = vmatmul.f32.gmra.mxu0 %v1009
        %v1131 = vpop.f32.mrf.mxu0
        %v1132 = vadd.f32 %v862, %v1131
        %1133 = vmatmul.f32.gmra.mxu0 %v1012
        %v1134 = vpop.f32.mrf.mxu0
        %v1135 = vadd.f32 %v865, %v1134
        %1136 = vmatmul.f32.gmra.mxu0 %v1015
        %v1137 = vpop.f32.mrf.mxu0
        %v1138 = vadd.f32 %v868, %v1137
        %1139 = vmatmul.f32.gmra.mxu0 %v1018
        %v1140 = vpop.f32.mrf.mxu0
        %v1141 = vadd.f32 %v871, %v1140
        %1142 = vmatmul.f32.gmra.mxu0 %v1021
        %v1143 = vpop.f32.mrf.mxu0
        %v1144 = vadd.f32 %v874, %v1143
        %1145 = vmatmul.f32.gmra.mxu0 %v1024
        %v1146 = vpop.f32.mrf.mxu0
        %v1147 = vadd.f32 %v877, %v1146
        %1148 = vdwg.mxu0
        %1149 = vmatpush.msra.mxu0 0.0
        %1150 = vmatpush.msra.mxu0 0.0
        %1151 = vmatpush.msra.mxu0 0.0
        %1152 = vmatpush.msra.mxu0 0.0
        %1153 = vmatpush.msra.mxu0 0.0
        %1154 = vmatpush.msra.mxu0 0.0
        %1155 = vmatpush.msra.mxu0 0.0
        %1156 = vmatpush.msra.mxu0 0.0
        %1157 = vmatpush.msra.mxu0 0.0
        %1158 = vmatpush.msra.mxu0 0.0
        %1159 = vmatpush.msra.mxu0 0.0
        %1160 = vmatpush.msra.mxu0 0.0
        %1161 = vmatpush.msra.mxu0 0.0
        %1162 = vmatpush.msra.mxu0 %v638
        %1163 = vmatpush.msra.mxu0 %v551
        %1164 = vmatpush.msra.mxu0 %v612
        %1165 = vmatmul.f32.gmra.mxu0 %v1003
        %v1166 = vpop.f32.mrf.mxu0
        %v1167 = vadd.f32 %v897, %v1166
        %1168 = vmatmul.f32.gmra.mxu0 %v1006
        %v1169 = vpop.f32.mrf.mxu0
        %v1170 = vadd.f32 %v900, %v1169
        %1171 = vmatmul.f32.gmra.mxu0 %v1009
        %v1172 = vpop.f32.mrf.mxu0
        %v1173 = vadd.f32 %v903, %v1172
        %1174 = vmatmul.f32.gmra.mxu0 %v1012
        %v1175 = vpop.f32.mrf.mxu0
        %v1176 = vadd.f32 %v906, %v1175
        %1177 = vmatmul.f32.gmra.mxu0 %v1015
        %v1178 = vpop.f32.mrf.mxu0
        %v1179 = vadd.f32 %v909, %v1178
        %1180 = vmatmul.f32.gmra.mxu0 %v1018
        %v1181 = vpop.f32.mrf.mxu0
        %v1182 = vadd.f32 %v912, %v1181
        %1183 = vmatmul.f32.gmra.mxu0 %v1021
        %v1184 = vpop.f32.mrf.mxu0
        %v1185 = vadd.f32 %v915, %v1184
        %1186 = vmatmul.f32.gmra.mxu0 %v1024
        %v1187 = vpop.f32.mrf.mxu0
        %v1188 = vadd.f32 %v918, %v1187
        %1189 = vdwg.mxu0
        %1190 = vmatpush.msra.mxu0 0.0
        %1191 = vmatpush.msra.mxu0 0.0
        %1192 = vmatpush.msra.mxu0 0.0
        %1193 = vmatpush.msra.mxu0 0.0
        %1194 = vmatpush.msra.mxu0 0.0
        %1195 = vmatpush.msra.mxu0 0.0
        %1196 = vmatpush.msra.mxu0 0.0
        %1197 = vmatpush.msra.mxu0 0.0
        %1198 = vmatpush.msra.mxu0 0.0
        %1199 = vmatpush.msra.mxu0 0.0
        %1200 = vmatpush.msra.mxu0 0.0
        %1201 = vmatpush.msra.mxu0 0.0
        %1202 = vmatpush.msra.mxu0 0.0
        %1203 = vmatpush.msra.mxu0 %v639
        %1204 = vmatpush.msra.mxu0 %v552
        %1205 = vmatpush.msra.mxu0 %v613
        %1206 = vmatmul.f32.gmra.mxu0 %v1003
        %v1207 = vpop.f32.mrf.mxu0
        %v1208 = vadd.f32 %v938, %v1207
        %1209 = vmatmul.f32.gmra.mxu0 %v1006
        %v1210 = vpop.f32.mrf.mxu0
        %v1211 = vadd.f32 %v941, %v1210
        %1212 = vmatmul.f32.gmra.mxu0 %v1009
        %v1213 = vpop.f32.mrf.mxu0
        %v1214 = vadd.f32 %v944, %v1213
        %1215 = vmatmul.f32.gmra.mxu0 %v1012
        %v1216 = vpop.f32.mrf.mxu0
        %v1217 = vadd.f32 %v947, %v1216
        %1218 = vmatmul.f32.gmra.mxu0 %v1015
        %v1219 = vpop.f32.mrf.mxu0
        %v1220 = vadd.f32 %v950, %v1219
        %1221 = vmatmul.f32.gmra.mxu0 %v1018
        %v1222 = vpop.f32.mrf.mxu0
        %v1223 = vadd.f32 %v953, %v1222
        %1224 = vmatmul.f32.gmra.mxu0 %v1021
        %v1225 = vpop.f32.mrf.mxu0
        %v1226 = vadd.f32 %v956, %v1225
        %1227 = vmatmul.f32.gmra.mxu0 %v1024
        %v1228 = vpop.f32.mrf.mxu0
        %v1229 = vadd.f32 %v959, %v1228
        %1230 = vdwg.mxu0
        %1231 = vmatpush.msra.mxu0 0.0
        %1232 = vmatpush.msra.mxu0 0.0
        %1233 = vmatpush.msra.mxu0 0.0
        %1234 = vmatpush.msra.mxu0 0.0
        %1235 = vmatpush.msra.mxu0 0.0
        %1236 = vmatpush.msra.mxu0 0.0
        %1237 = vmatpush.msra.mxu0 0.0
        %1238 = vmatpush.msra.mxu0 0.0
        %1239 = vmatpush.msra.mxu0 0.0
        %1240 = vmatpush.msra.mxu0 0.0
        %1241 = vmatpush.msra.mxu0 0.0
        %1242 = vmatpush.msra.mxu0 0.0
        %1243 = vmatpush.msra.mxu0 0.0
        %1244 = vmatpush.msra.mxu0 %v650
        %1245 = vmatpush.msra.mxu0 %v553
        %1246 = vmatpush.msra.mxu0 %v614
        %1247 = vmatmul.f32.gmra.mxu0 %v1003
        %v1248 = vpop.f32.mrf.mxu0
        %v1249 = vadd.f32 %v979, %v1248
        %1250 = vmatmul.f32.gmra.mxu0 %v1006
        %v1251 = vpop.f32.mrf.mxu0
        %v1252 = vadd.f32 %v982, %v1251
        %1253 = vmatmul.f32.gmra.mxu0 %v1009
        %v1254 = vpop.f32.mrf.mxu0
        %v1255 = vadd.f32 %v985, %v1254
        %1256 = vmatmul.f32.gmra.mxu0 %v1012
        %v1257 = vpop.f32.mrf.mxu0
        %v1258 = vadd.f32 %v988, %v1257
        %1259 = vmatmul.f32.gmra.mxu0 %v1015
        %v1260 = vpop.f32.mrf.mxu0
        %v1261 = vadd.f32 %v991, %v1260
        %1262 = vmatmul.f32.gmra.mxu0 %v1018
        %v1263 = vpop.f32.mrf.mxu0
        %v1264 = vadd.f32 %v994, %v1263
        %1265 = vmatmul.f32.gmra.mxu0 %v1021
        %v1266 = vpop.f32.mrf.mxu0
        %v1267 = vadd.f32 %v997, %v1266
        %1268 = vmatmul.f32.gmra.mxu0 %v1024
        %v1269 = vpop.f32.mrf.mxu0
        %v1270 = vadd.f32 %v1000, %v1269
        %1271 = vdwg.mxu0
        %1273 = vrot.lane.b32.xlu0 %v554, 113
        %v1274 = vpop.permute.xlu0 %1273
        %1276 = vrot.lane.b32.xlu0 %v548, 73
        %v1277 = vpop.permute.xlu0 %1276
        %1278 = vrot.lane.b32.xlu0 %v549, 73
        %v1279 = vpop.permute.xlu0 %1278
        %1280 = vrot.lane.b32.xlu0 %v550, 73
        %v1281 = vpop.permute.xlu0 %1280
        %1282 = vrot.lane.b32.xlu0 %v551, 73
        %v1283 = vpop.permute.xlu0 %1282
        %1284 = vrot.lane.b32.xlu0 %v552, 73
        %v1285 = vpop.permute.xlu0 %1284
        %1286 = vrot.lane.b32.xlu0 %v553, 73
        %v1287 = vpop.permute.xlu0 %1286
        %1288 = vrot.lane.b32.xlu0 %v554, 73
        %v1289 = vpop.permute.xlu0 %1288
        %vm1290 = vcmask 596992
        %v1291 = vsel %vm1290, %v1277, %v1279
        %v1292 = vsel %vm1290, %v1279, %v1281
        %v1293 = vsel %vm1290, %v1281, %v1283
        %v1294 = vsel %vm1290, %v1283, %v1285
        %v1295 = vsel %vm1290, %v1285, %v1287
        %v1296 = vsel %vm1290, %v1287, %v1289
        %v1303 = vsel %vm609, %v1274, %v1291
        %1304 = vrot.lane.b32.xlu0 %v548, 71
        %v1305 = vpop.permute.xlu0 %1304
        %1306 = vrot.lane.b32.xlu0 %v549, 71
        %v1307 = vpop.permute.xlu0 %1306
        %1308 = vrot.lane.b32.xlu0 %v550, 71
        %v1309 = vpop.permute.xlu0 %1308
        %1310 = vrot.lane.b32.xlu0 %v551, 71
        %v1311 = vpop.permute.xlu0 %1310
        %1312 = vrot.lane.b32.xlu0 %v552, 71
        %v1313 = vpop.permute.xlu0 %1312
        %1314 = vrot.lane.b32.xlu0 %v553, 71
        %v1315 = vpop.permute.xlu0 %1314
        %1316 = vrot.lane.b32.xlu0 %v554, 71
        %v1317 = vpop.permute.xlu0 %1316
        %vm1318 = vcmask 580608
        %v1319 = vsel %vm1318, %v1305, %v1307
        %v1320 = vsel %vm1318, %v1307, %v1309
        %v1321 = vsel %vm1318, %v1309, %v1311
        %v1322 = vsel %vm1318, %v1311, %v1313
        %v1323 = vsel %vm1318, %v1313, %v1315
        %v1324 = vsel %vm1318, %v1315, %v1317
        %1331 = vrot.lane.b32.xlu0 %v548, 31
        %v1332 = vpop.permute.xlu0 %1331
        %v1334 = vsel %vm649, %v1324, %v1332
        %1335 = vrot.lane.b32.xlu0 %v548, 72
        %v1336 = vpop.permute.xlu0 %1335
        %1337 = vrot.lane.b32.xlu0 %v549, 72
        %v1338 = vpop.permute.xlu0 %1337
        %1339 = vrot.lane.b32.xlu0 %v550, 72
        %v1340 = vpop.permute.xlu0 %1339
        %1341 = vrot.lane.b32.xlu0 %v551, 72
        %v1342 = vpop.permute.xlu0 %1341
        %1343 = vrot.lane.b32.xlu0 %v552, 72
        %v1344 = vpop.permute.xlu0 %1343
        %1345 = vrot.lane.b32.xlu0 %v553, 72
        %v1346 = vpop.permute.xlu0 %1345
        %1347 = vrot.lane.b32.xlu0 %v554, 72
        %v1348 = vpop.permute.xlu0 %1347
        %vm1349 = vcmask 588800
        %v1350 = vsel %vm1349, %v1336, %v1338
        %v1351 = vsel %vm1349, %v1338, %v1340
        %v1352 = vsel %vm1349, %v1340, %v1342
        %v1353 = vsel %vm1349, %v1342, %v1344
        %v1354 = vsel %vm1349, %v1344, %v1346
        %v1355 = vsel %vm1349, %v1346, %v1348
        %v1363 = vsel %vm731, %v572, 0
        %v1366 = vsel %vm731, %v573, 0
        %v1369 = vsel %vm731, %v574, 0
        %v1372 = vsel %vm731, %v575, 0
        %v1375 = vsel %vm731, %v576, 0
        %v1378 = vsel %vm731, %v577, 0
        %v1381 = vsel %vm731, %v578, 0
        %v1384 = vsel %vm731, %v579, 0
        %1386 = vmatpush.msra.mxu0 0.0
        %1387 = vmatpush.msra.mxu0 0.0
        %1388 = vmatpush.msra.mxu0 0.0
        %1389 = vmatpush.msra.mxu0 0.0
        %1390 = vmatpush.msra.mxu0 0.0
        %1391 = vmatpush.msra.mxu0 0.0
        %1392 = vmatpush.msra.mxu0 0.0
        %1393 = vmatpush.msra.mxu0 0.0
        %1394 = vmatpush.msra.mxu0 0.0
        %1395 = vmatpush.msra.mxu0 0.0
        %1396 = vmatpush.msra.mxu0 0.0
        %1397 = vmatpush.msra.mxu0 0.0
        %1398 = vmatpush.msra.mxu0 0.0
        %1399 = vmatpush.msra.mxu0 %v1319
        %1400 = vmatpush.msra.mxu0 %v1350
        %1401 = vmatpush.msra.mxu0 %v1303
        %1402 = vmatmul.f32.gmra.mxu0 %v1363
        %v1403 = vpop.f32.mrf.mxu0
        %v1404 = vadd.f32 0.0, %v1403
        %1405 = vmatmul.f32.gmra.mxu0 %v1366
        %v1406 = vpop.f32.mrf.mxu0
        %v1407 = vadd.f32 0.0, %v1406
        %1408 = vmatmul.f32.gmra.mxu0 %v1369
        %v1409 = vpop.f32.mrf.mxu0
        %v1410 = vadd.f32 0.0, %v1409
        %1411 = vmatmul.f32.gmra.mxu0 %v1372
        %v1412 = vpop.f32.mrf.mxu0
        %v1413 = vadd.f32 0.0, %v1412
        %1414 = vmatmul.f32.gmra.mxu0 %v1375
        %v1415 = vpop.f32.mrf.mxu0
        %v1416 = vadd.f32 0.0, %v1415
        %1417 = vmatmul.f32.gmra.mxu0 %v1378
        %v1418 = vpop.f32.mrf.mxu0
        %v1419 = vadd.f32 0.0, %v1418
        %1420 = vmatmul.f32.gmra.mxu0 %v1381
        %v1421 = vpop.f32.mrf.mxu0
        %v1422 = vadd.f32 0.0, %v1421
        %1423 = vmatmul.f32.gmra.mxu0 %v1384
        %v1424 = vpop.f32.mrf.mxu0
        %v1425 = vadd.f32 0.0, %v1424
        %1426 = vdwg.mxu0
        %1427 = vmatpush.msra.mxu0 0.0
        %1428 = vmatpush.msra.mxu0 0.0
        %1429 = vmatpush.msra.mxu0 0.0
        %1430 = vmatpush.msra.mxu0 0.0
        %1431 = vmatpush.msra.mxu0 0.0
        %1432 = vmatpush.msra.mxu0 0.0
        %1433 = vmatpush.msra.mxu0 0.0
        %1434 = vmatpush.msra.mxu0 0.0
        %1435 = vmatpush.msra.mxu0 0.0
        %1436 = vmatpush.msra.mxu0 0.0
        %1437 = vmatpush.msra.mxu0 0.0
        %1438 = vmatpush.msra.mxu0 0.0
        %1439 = vmatpush.msra.mxu0 0.0
        %1440 = vmatpush.msra.mxu0 %v1320
        %1441 = vmatpush.msra.mxu0 %v1351
        %1442 = vmatpush.msra.mxu0 %v1292
        %1443 = vmatmul.f32.gmra.mxu0 %v1363
        %v1444 = vpop.f32.mrf.mxu0
        %v1445 = vadd.f32 0.0, %v1444
        %1446 = vmatmul.f32.gmra.mxu0 %v1366
        %v1447 = vpop.f32.mrf.mxu0
        %v1448 = vadd.f32 0.0, %v1447
        %1449 = vmatmul.f32.gmra.mxu0 %v1369
        %v1450 = vpop.f32.mrf.mxu0
        %v1451 = vadd.f32 0.0, %v1450
        %1452 = vmatmul.f32.gmra.mxu0 %v1372
        %v1453 = vpop.f32.mrf.mxu0
        %v1454 = vadd.f32 0.0, %v1453
        %1455 = vmatmul.f32.gmra.mxu0 %v1375
        %v1456 = vpop.f32.mrf.mxu0
        %v1457 = vadd.f32 0.0, %v1456
        %1458 = vmatmul.f32.gmra.mxu0 %v1378
        %v1459 = vpop.f32.mrf.mxu0
        %v1460 = vadd.f32 0.0, %v1459
        %1461 = vmatmul.f32.gmra.mxu0 %v1381
        %v1462 = vpop.f32.mrf.mxu0
        %v1463 = vadd.f32 0.0, %v1462
        %1464 = vmatmul.f32.gmra.mxu0 %v1384
        %v1465 = vpop.f32.mrf.mxu0
        %v1466 = vadd.f32 0.0, %v1465
        %1467 = vdwg.mxu0
        %1468 = vmatpush.msra.mxu0 0.0
        %1469 = vmatpush.msra.mxu0 0.0
        %1470 = vmatpush.msra.mxu0 0.0
        %1471 = vmatpush.msra.mxu0 0.0
        %1472 = vmatpush.msra.mxu0 0.0
        %1473 = vmatpush.msra.mxu0 0.0
        %1474 = vmatpush.msra.mxu0 0.0
        %1475 = vmatpush.msra.mxu0 0.0
        %1476 = vmatpush.msra.mxu0 0.0
        %1477 = vmatpush.msra.mxu0 0.0
        %1478 = vmatpush.msra.mxu0 0.0
        %1479 = vmatpush.msra.mxu0 0.0
        %1480 = vmatpush.msra.mxu0 0.0
        %1481 = vmatpush.msra.mxu0 %v1321
        %1482 = vmatpush.msra.mxu0 %v1352
        %1483 = vmatpush.msra.mxu0 %v1293
        %1484 = vmatmul.f32.gmra.mxu0 %v1363
        %v1485 = vpop.f32.mrf.mxu0
        %v1486 = vadd.f32 0.0, %v1485
        %1487 = vmatmul.f32.gmra.mxu0 %v1366
        %v1488 = vpop.f32.mrf.mxu0
        %v1489 = vadd.f32 0.0, %v1488
        %1490 = vmatmul.f32.gmra.mxu0 %v1369
        %v1491 = vpop.f32.mrf.mxu0
        %v1492 = vadd.f32 0.0, %v1491
        %1493 = vmatmul.f32.gmra.mxu0 %v1372
        %v1494 = vpop.f32.mrf.mxu0
        %v1495 = vadd.f32 0.0, %v1494
        %1496 = vmatmul.f32.gmra.mxu0 %v1375
        %v1497 = vpop.f32.mrf.mxu0
        %v1498 = vadd.f32 0.0, %v1497
        %1499 = vmatmul.f32.gmra.mxu0 %v1378
        %v1500 = vpop.f32.mrf.mxu0
        %v1501 = vadd.f32 0.0, %v1500
        %1502 = vmatmul.f32.gmra.mxu0 %v1381
        %v1503 = vpop.f32.mrf.mxu0
        %v1504 = vadd.f32 0.0, %v1503
        %1505 = vmatmul.f32.gmra.mxu0 %v1384
        %v1506 = vpop.f32.mrf.mxu0
        %v1507 = vadd.f32 0.0, %v1506
        %1508 = vdwg.mxu0
        %1509 = vmatpush.msra.mxu0 0.0
        %1510 = vmatpush.msra.mxu0 0.0
        %1511 = vmatpush.msra.mxu0 0.0
        %1512 = vmatpush.msra.mxu0 0.0
        %1513 = vmatpush.msra.mxu0 0.0
        %1514 = vmatpush.msra.mxu0 0.0
        %1515 = vmatpush.msra.mxu0 0.0
        %1516 = vmatpush.msra.mxu0 0.0
        %1517 = vmatpush.msra.mxu0 0.0
        %1518 = vmatpush.msra.mxu0 0.0
        %1519 = vmatpush.msra.mxu0 0.0
        %1520 = vmatpush.msra.mxu0 0.0
        %1521 = vmatpush.msra.mxu0 0.0
        %1522 = vmatpush.msra.mxu0 %v1322
        %1523 = vmatpush.msra.mxu0 %v1353
        %1524 = vmatpush.msra.mxu0 %v1294
        %1525 = vmatmul.f32.gmra.mxu0 %v1363
        %v1526 = vpop.f32.mrf.mxu0
        %v1527 = vadd.f32 0.0, %v1526
        %1528 = vmatmul.f32.gmra.mxu0 %v1366
        %v1529 = vpop.f32.mrf.mxu0
        %v1530 = vadd.f32 0.0, %v1529
        %1531 = vmatmul.f32.gmra.mxu0 %v1369
        %v1532 = vpop.f32.mrf.mxu0
        %v1533 = vadd.f32 0.0, %v1532
        %1534 = vmatmul.f32.gmra.mxu0 %v1372
        %v1535 = vpop.f32.mrf.mxu0
        %v1536 = vadd.f32 0.0, %v1535
        %1537 = vmatmul.f32.gmra.mxu0 %v1375
        %v1538 = vpop.f32.mrf.mxu0
        %v1539 = vadd.f32 0.0, %v1538
        %1540 = vmatmul.f32.gmra.mxu0 %v1378
        %v1541 = vpop.f32.mrf.mxu0
        %v1542 = vadd.f32 0.0, %v1541
        %1543 = vmatmul.f32.gmra.mxu0 %v1381
        %v1544 = vpop.f32.mrf.mxu0
        %v1545 = vadd.f32 0.0, %v1544
        %1546 = vmatmul.f32.gmra.mxu0 %v1384
        %v1547 = vpop.f32.mrf.mxu0
        %v1548 = vadd.f32 0.0, %v1547
        %1549 = vdwg.mxu0
        %1550 = vmatpush.msra.mxu0 0.0
        %1551 = vmatpush.msra.mxu0 0.0
        %1552 = vmatpush.msra.mxu0 0.0
        %1553 = vmatpush.msra.mxu0 0.0
        %1554 = vmatpush.msra.mxu0 0.0
        %1555 = vmatpush.msra.mxu0 0.0
        %1556 = vmatpush.msra.mxu0 0.0
        %1557 = vmatpush.msra.mxu0 0.0
        %1558 = vmatpush.msra.mxu0 0.0
        %1559 = vmatpush.msra.mxu0 0.0
        %1560 = vmatpush.msra.mxu0 0.0
        %1561 = vmatpush.msra.mxu0 0.0
        %1562 = vmatpush.msra.mxu0 0.0
        %1563 = vmatpush.msra.mxu0 %v1323
        %1564 = vmatpush.msra.mxu0 %v1354
        %1565 = vmatpush.msra.mxu0 %v1295
        %1566 = vmatmul.f32.gmra.mxu0 %v1363
        %v1567 = vpop.f32.mrf.mxu0
        %v1568 = vadd.f32 0.0, %v1567
        %1569 = vmatmul.f32.gmra.mxu0 %v1366
        %v1570 = vpop.f32.mrf.mxu0
        %v1571 = vadd.f32 0.0, %v1570
        %1572 = vmatmul.f32.gmra.mxu0 %v1369
        %v1573 = vpop.f32.mrf.mxu0
        %v1574 = vadd.f32 0.0, %v1573
        %1575 = vmatmul.f32.gmra.mxu0 %v1372
        %v1576 = vpop.f32.mrf.mxu0
        %v1577 = vadd.f32 0.0, %v1576
        %1578 = vmatmul.f32.gmra.mxu0 %v1375
        %v1579 = vpop.f32.mrf.mxu0
        %v1580 = vadd.f32 0.0, %v1579
        %1581 = vmatmul.f32.gmra.mxu0 %v1378
        %v1582 = vpop.f32.mrf.mxu0
        %v1583 = vadd.f32 0.0, %v1582
        %1584 = vmatmul.f32.gmra.mxu0 %v1381
        %v1585 = vpop.f32.mrf.mxu0
        %v1586 = vadd.f32 0.0, %v1585
        %1587 = vmatmul.f32.gmra.mxu0 %v1384
        %v1588 = vpop.f32.mrf.mxu0
        %v1589 = vadd.f32 0.0, %v1588
        %1590 = vdwg.mxu0
        %1591 = vmatpush.msra.mxu0 0.0
        %1592 = vmatpush.msra.mxu0 0.0
        %1593 = vmatpush.msra.mxu0 0.0
        %1594 = vmatpush.msra.mxu0 0.0
        %1595 = vmatpush.msra.mxu0 0.0
        %1596 = vmatpush.msra.mxu0 0.0
        %1597 = vmatpush.msra.mxu0 0.0
        %1598 = vmatpush.msra.mxu0 0.0
        %1599 = vmatpush.msra.mxu0 0.0
        %1600 = vmatpush.msra.mxu0 0.0
        %1601 = vmatpush.msra.mxu0 0.0
        %1602 = vmatpush.msra.mxu0 0.0
        %1603 = vmatpush.msra.mxu0 0.0
        %1604 = vmatpush.msra.mxu0 %v1334
        %1605 = vmatpush.msra.mxu0 %v1355
        %1606 = vmatpush.msra.mxu0 %v1296
        %1607 = vmatmul.f32.gmra.mxu0 %v1363
        %v1608 = vpop.f32.mrf.mxu0
        %v1609 = vadd.f32 0.0, %v1608
        %1610 = vmatmul.f32.gmra.mxu0 %v1366
        %v1611 = vpop.f32.mrf.mxu0
        %v1612 = vadd.f32 0.0, %v1611
        %1613 = vmatmul.f32.gmra.mxu0 %v1369
        %v1614 = vpop.f32.mrf.mxu0
        %v1615 = vadd.f32 0.0, %v1614
        %1616 = vmatmul.f32.gmra.mxu0 %v1372
        %v1617 = vpop.f32.mrf.mxu0
        %v1618 = vadd.f32 0.0, %v1617
        %1619 = vmatmul.f32.gmra.mxu0 %v1375
        %v1620 = vpop.f32.mrf.mxu0
        %v1621 = vadd.f32 0.0, %v1620
        %1622 = vmatmul.f32.gmra.mxu0 %v1378
        %v1623 = vpop.f32.mrf.mxu0
        %v1624 = vadd.f32 0.0, %v1623
        %1625 = vmatmul.f32.gmra.mxu0 %v1381
        %v1626 = vpop.f32.mrf.mxu0
        %v1627 = vadd.f32 0.0, %v1626
        %1628 = vmatmul.f32.gmra.mxu0 %v1384
        %v1629 = vpop.f32.mrf.mxu0
        %v1630 = vadd.f32 0.0, %v1629
        %1631 = vdwg.mxu0
        %v1632 = vadd.f32 %v1044, %v1404
        %v1633 = vadd.f32 %v1085, %v1445
        %v1634 = vadd.f32 %v1126, %v1486
        %v1635 = vadd.f32 %v1167, %v1527
        %v1636 = vadd.f32 %v1208, %v1568
        %v1637 = vadd.f32 %v1249, %v1609
        %v1638 = vadd.f32 %v1047, %v1407
        %v1639 = vadd.f32 %v1088, %v1448
        %v1640 = vadd.f32 %v1129, %v1489
        %v1641 = vadd.f32 %v1170, %v1530
        %v1642 = vadd.f32 %v1211, %v1571
        %v1643 = vadd.f32 %v1252, %v1612
        %v1644 = vadd.f32 %v1050, %v1410
        %v1645 = vadd.f32 %v1091, %v1451
        %v1646 = vadd.f32 %v1132, %v1492
        %v1647 = vadd.f32 %v1173, %v1533
        %v1648 = vadd.f32 %v1214, %v1574
        %v1649 = vadd.f32 %v1255, %v1615
        %v1650 = vadd.f32 %v1053, %v1413
        %v1651 = vadd.f32 %v1094, %v1454
        %v1652 = vadd.f32 %v1135, %v1495
        %v1653 = vadd.f32 %v1176, %v1536
        %v1654 = vadd.f32 %v1217, %v1577
        %v1655 = vadd.f32 %v1258, %v1618
        %v1656 = vadd.f32 %v1056, %v1416
        %v1657 = vadd.f32 %v1097, %v1457
        %v1658 = vadd.f32 %v1138, %v1498
        %v1659 = vadd.f32 %v1179, %v1539
        %v1660 = vadd.f32 %v1220, %v1580
        %v1661 = vadd.f32 %v1261, %v1621
        %v1662 = vadd.f32 %v1059, %v1419
        %v1663 = vadd.f32 %v1100, %v1460
        %v1664 = vadd.f32 %v1141, %v1501
        %v1665 = vadd.f32 %v1182, %v1542
        %v1666 = vadd.f32 %v1223, %v1583
        %v1667 = vadd.f32 %v1264, %v1624
        %v1668 = vadd.f32 %v1062, %v1422
        %v1669 = vadd.f32 %v1103, %v1463
        %v1670 = vadd.f32 %v1144, %v1504
        %v1671 = vadd.f32 %v1185, %v1545
        %v1672 = vadd.f32 %v1226, %v1586
        %v1673 = vadd.f32 %v1267, %v1627
        %v1674 = vadd.f32 %v1065, %v1425
        %v1675 = vadd.f32 %v1106, %v1466
        %v1676 = vadd.f32 %v1147, %v1507
        %v1677 = vadd.f32 %v1188, %v1548
        %v1678 = vadd.f32 %v1229, %v1589
        %v1679 = vadd.f32 %v1270, %v1630
        %1681 = vset.pattern.permute.xlu0 0
        %1682 = vperm.xlu0 %1681, %v580
        %v1683 = vpop.permute.xlu0 %1682
        %1686 = vset.pattern.permute.xlu0 0
        %1687 = vperm.xlu0 %1686, %v581
        %v1688 = vpop.permute.xlu0 %1687
        %1691 = vset.pattern.permute.xlu0 0
        %1692 = vperm.xlu0 %1691, %v582
        %v1693 = vpop.permute.xlu0 %1692
        %1696 = vset.pattern.permute.xlu0 0
        %1697 = vperm.xlu0 %1696, %v583
        %v1698 = vpop.permute.xlu0 %1697
        %1701 = vset.pattern.permute.xlu0 0
        %1702 = vperm.xlu0 %1701, %v584
        %v1703 = vpop.permute.xlu0 %1702
        %1706 = vset.pattern.permute.xlu0 0
        %1707 = vperm.xlu0 %1706, %v585
        %v1708 = vpop.permute.xlu0 %1707
        %1711 = vset.pattern.permute.xlu0 0
        %1712 = vperm.xlu0 %1711, %v586
        %v1713 = vpop.permute.xlu0 %1712
        %1716 = vset.pattern.permute.xlu0 0
        %1717 = vperm.xlu0 %1716, %v587
        %v1718 = vpop.permute.xlu0 %1717
        %v1720 = vadd.f32 %v1632, %v1683
        %v1721 = vadd.f32 %v1633, %v1683
        %v1722 = vadd.f32 %v1634, %v1683
        %v1723 = vadd.f32 %v1635, %v1683
        %v1724 = vadd.f32 %v1636, %v1683
        %v1725 = vadd.f32 %v1637, %v1683
        %v1726 = vadd.f32 %v1638, %v1688
        %v1727 = vadd.f32 %v1639, %v1688
        %v1728 = vadd.f32 %v1640, %v1688
        %v1729 = vadd.f32 %v1641, %v1688
        %v1730 = vadd.f32 %v1642, %v1688
        %v1731 = vadd.f32 %v1643, %v1688
        %v1732 = vadd.f32 %v1644, %v1693
        %v1733 = vadd.f32 %v1645, %v1693
        %v1734 = vadd.f32 %v1646, %v1693
        %v1735 = vadd.f32 %v1647, %v1693
        %v1736 = vadd.f32 %v1648, %v1693
        %v1737 = vadd.f32 %v1649, %v1693
        %v1738 = vadd.f32 %v1650, %v1698
        %v1739 = vadd.f32 %v1651, %v1698
        %v1740 = vadd.f32 %v1652, %v1698
        %v1741 = vadd.f32 %v1653, %v1698
        %v1742 = vadd.f32 %v1654, %v1698
        %v1743 = vadd.f32 %v1655, %v1698
        %v1744 = vadd.f32 %v1656, %v1703
        %v1745 = vadd.f32 %v1657, %v1703
        %v1746 = vadd.f32 %v1658, %v1703
        %v1747 = vadd.f32 %v1659, %v1703
        %v1748 = vadd.f32 %v1660, %v1703
        %v1749 = vadd.f32 %v1661, %v1703
        %v1750 = vadd.f32 %v1662, %v1708
        %v1751 = vadd.f32 %v1663, %v1708
        %v1752 = vadd.f32 %v1664, %v1708
        %v1753 = vadd.f32 %v1665, %v1708
        %v1754 = vadd.f32 %v1666, %v1708
        %v1755 = vadd.f32 %v1667, %v1708
        %v1756 = vadd.f32 %v1668, %v1713
        %v1757 = vadd.f32 %v1669, %v1713
        %v1758 = vadd.f32 %v1670, %v1713
        %v1759 = vadd.f32 %v1671, %v1713
        %v1760 = vadd.f32 %v1672, %v1713
        %v1761 = vadd.f32 %v1673, %v1713
        %v1762 = vadd.f32 %v1674, %v1718
        %v1763 = vadd.f32 %v1675, %v1718
        %v1764 = vadd.f32 %v1676, %v1718
        %v1765 = vadd.f32 %v1677, %v1718
        %v1766 = vadd.f32 %v1678, %v1718
        %v1767 = vadd.f32 %v1679, %v1718
        %v1768 = vmax.f32 %v1720, 0.0
        %v1769 = vmax.f32 %v1721, 0.0
        %v1770 = vmax.f32 %v1722, 0.0
        %v1771 = vmax.f32 %v1723, 0.0
        %v1772 = vmax.f32 %v1724, 0.0
        %v1773 = vmax.f32 %v1725, 0.0
        %v1774 = vmax.f32 %v1726, 0.0
        %v1775 = vmax.f32 %v1727, 0.0
        %v1776 = vmax.f32 %v1728, 0.0
        %v1777 = vmax.f32 %v1729, 0.0
        %v1778 = vmax.f32 %v1730, 0.0
        %v1779 = vmax.f32 %v1731, 0.0
        %v1780 = vmax.f32 %v1732, 0.0
        %v1781 = vmax.f32 %v1733, 0.0
        %v1782 = vmax.f32 %v1734, 0.0
        %v1783 = vmax.f32 %v1735, 0.0
        %v1784 = vmax.f32 %v1736, 0.0
        %v1785 = vmax.f32 %v1737, 0.0
        %v1786 = vmax.f32 %v1738, 0.0
        %v1787 = vmax.f32 %v1739, 0.0
        %v1788 = vmax.f32 %v1740, 0.0
        %v1789 = vmax.f32 %v1741, 0.0
        %v1790 = vmax.f32 %v1742, 0.0
        %v1791 = vmax.f32 %v1743, 0.0
        %v1792 = vmax.f32 %v1744, 0.0
        %v1793 = vmax.f32 %v1745, 0.0
        %v1794 = vmax.f32 %v1746, 0.0
        %v1795 = vmax.f32 %v1747, 0.0
        %v1796 = vmax.f32 %v1748, 0.0
        %v1797 = vmax.f32 %v1749, 0.0
        %v1798 = vmax.f32 %v1750, 0.0
        %v1799 = vmax.f32 %v1751, 0.0
        %v1800 = vmax.f32 %v1752, 0.0
        %v1801 = vmax.f32 %v1753, 0.0
        %v1802 = vmax.f32 %v1754, 0.0
        %v1803 = vmax.f32 %v1755, 0.0
        %v1804 = vmax.f32 %v1756, 0.0
        %v1805 = vmax.f32 %v1757, 0.0
        %v1806 = vmax.f32 %v1758, 0.0
        %v1807 = vmax.f32 %v1759, 0.0
        %v1808 = vmax.f32 %v1760, 0.0
        %v1809 = vmax.f32 %v1761, 0.0
        %v1810 = vmax.f32 %v1762, 0.0
        %v1811 = vmax.f32 %v1763, 0.0
        %v1812 = vmax.f32 %v1764, 0.0
        %v1813 = vmax.f32 %v1765, 0.0
        %v1814 = vmax.f32 %v1766, 0.0
        %v1815 = vmax.f32 %v1767, 0.0
        %v1816 = vlaneseq
        %v1817 = vand.u32 %v1816, 127
        %v1818 = vadd.s32 %v1817, 128
        %v1819 = vadd.s32 %v1817, 256
        %v1820 = vadd.s32 %v1817, 384
        %v1821 = vadd.s32 %v1817, 512
        %v1822 = vadd.s32 %v1817, 640
        %s1823 = smul.u32 %s35, 16
        %s1824 = ssub.s32 5, %s1823
        %s1825 = smul.u32 %s1824, 28
        %v1826 = vstv %s1825
        %vm1827 = vcmp.ge.s32.totalorder %v1817, %v1826
        %vm1828 = vcmp.ge.s32.totalorder %v1818, %v1826
        %vm1829 = vcmp.ge.s32.totalorder %v1819, %v1826
        %vm1830 = vcmp.ge.s32.totalorder %v1820, %v1826
        %vm1831 = vcmp.ge.s32.totalorder %v1821, %v1826
        %vm1832 = vcmp.ge.s32.totalorder %v1822, %v1826
        %s1833 = sadd.s32 %s1825, 448
        %v1834 = vstv %s1833
        %vm1835 = vcmp.lt.s32.totalorder %v1817, %v1834
        %vm1836 = vcmp.lt.s32.totalorder %v1818, %v1834
        %vm1837 = vcmp.lt.s32.totalorder %v1819, %v1834
        %vm1838 = vcmp.lt.s32.totalorder %v1820, %v1834
        %vm1839 = vcmp.lt.s32.totalorder %v1821, %v1834
        %vm1840 = vcmp.lt.s32.totalorder %v1822, %v1834
        %vm1841 = vmand %vm1827, %vm1835
        %vm1842 = vmand %vm1828, %vm1836
        %vm1843 = vmand %vm1829, %vm1837
        %vm1844 = vmand %vm1830, %vm1838
        %vm1845 = vmand %vm1831, %vm1839
        %vm1846 = vmand %vm1832, %vm1840
        %v1848 = vperm.slane %v555, 0
        %v1849 = vperm.slane %v555, 1
        %v1850 = vperm.slane %v555, 2
        %v1851 = vperm.slane %v555, 3
        %v1852 = vperm.slane %v555, 4
        %v1853 = vperm.slane %v555, 5
        %v1860 = vsel %vm1841, %v1848, 0.0
        %v1861 = vsel %vm1842, %v1849, 0.0
        %v1862 = vsel %vm1843, %v1850, 0.0
        %v1863 = vsel %vm1844, %v1851, 0.0
        %v1864 = vsel %vm1845, %v1852, 0.0
        %v1865 = vsel %vm1846, %v1853, 0.0
        %v1866 = vperm.slane %v1860, 0
        %v1867 = vperm.slane %v1861, 0
        %v1868 = vperm.slane %v1862, 0
        %v1869 = vperm.slane %v1863, 0
        %v1870 = vperm.slane %v1864, 0
        %v1871 = vperm.slane %v1865, 0
        %v1872 = vmul.f32 %v1768, %v1866
        %v1873 = vmul.f32 %v1769, %v1867
        %v1874 = vmul.f32 %v1770, %v1868
        %v1875 = vmul.f32 %v1771, %v1869
        %v1876 = vmul.f32 %v1772, %v1870
        %v1877 = vmul.f32 %v1773, %v1871
        %v1878 = vmul.f32 %v1774, %v1866
        %v1879 = vmul.f32 %v1775, %v1867
        %v1880 = vmul.f32 %v1776, %v1868
        %v1881 = vmul.f32 %v1777, %v1869
        %v1882 = vmul.f32 %v1778, %v1870
        %v1883 = vmul.f32 %v1779, %v1871
        %v1884 = vmul.f32 %v1780, %v1866
        %v1885 = vmul.f32 %v1781, %v1867
        %v1886 = vmul.f32 %v1782, %v1868
        %v1887 = vmul.f32 %v1783, %v1869
        %v1888 = vmul.f32 %v1784, %v1870
        %v1889 = vmul.f32 %v1785, %v1871
        %v1890 = vmul.f32 %v1786, %v1866
        %v1891 = vmul.f32 %v1787, %v1867
        %v1892 = vmul.f32 %v1788, %v1868
        %v1893 = vmul.f32 %v1789, %v1869
        %v1894 = vmul.f32 %v1790, %v1870
        %v1895 = vmul.f32 %v1791, %v1871
        %v1896 = vmul.f32 %v1792, %v1866
        %v1897 = vmul.f32 %v1793, %v1867
        %v1898 = vmul.f32 %v1794, %v1868
        %v1899 = vmul.f32 %v1795, %v1869
        %v1900 = vmul.f32 %v1796, %v1870
        %v1901 = vmul.f32 %v1797, %v1871
        %v1902 = vmul.f32 %v1798, %v1866
        %v1903 = vmul.f32 %v1799, %v1867
        %v1904 = vmul.f32 %v1800, %v1868
        %v1905 = vmul.f32 %v1801, %v1869
        %v1906 = vmul.f32 %v1802, %v1870
        %v1907 = vmul.f32 %v1803, %v1871
        %v1908 = vmul.f32 %v1804, %v1866
        %v1909 = vmul.f32 %v1805, %v1867
        %v1910 = vmul.f32 %v1806, %v1868
        %v1911 = vmul.f32 %v1807, %v1869
        %v1912 = vmul.f32 %v1808, %v1870
        %v1913 = vmul.f32 %v1809, %v1871
        %v1914 = vmul.f32 %v1810, %v1866
        %v1915 = vmul.f32 %v1811, %v1867
        %v1916 = vmul.f32 %v1812, %v1868
        %v1917 = vmul.f32 %v1813, %v1869
        %v1918 = vmul.f32 %v1814, %v1870
        %v1919 = vmul.f32 %v1815, %v1871
        %v1920 = vld [vmem:[%s4] sm:$0xff]
        %v1921 = vld [vmem:[%s4 + $0x8] sm:$0xff]
        %v1922 = vld [vmem:[%s4 + $0x10] sm:$0xff]
        %v1923 = vld [vmem:[%s4 + $0x18] sm:$0xff]
        %v1924 = vld [vmem:[%s4 + $0x20] sm:$0xff]
        %v1925 = vld [vmem:[%s4 + $0x28] sm:$0xff]
        %v1926 = vld [vmem:[%s4 + $0x30] sm:$0xff]
        %v1927 = vld [vmem:[%s4 + $0x38] sm:$0xff]
        %v1928 = vld [vmem:[%s4 + $0x40] sm:$0xff]
        %v1929 = vld [vmem:[%s4 + $0x48] sm:$0xff]
        %v1930 = vld [vmem:[%s4 + $0x50] sm:$0xff]
        %v1931 = vld [vmem:[%s4 + $0x58] sm:$0xff]
        %v1932 = vld [vmem:[%s5] sm:$0xff]
        %v1933 = vld [vmem:[%s5 + $0x8] sm:$0xff]
        %v1934 = vld [vmem:[%s5 + $0x10] sm:$0xff]
        %v1935 = vld [vmem:[%s5 + $0x18] sm:$0xff]
        %1940 = vrot.lane.b32.xlu0 %v1877, 97
        %v1941 = vpop.permute.xlu0 %1940
        %1942 = vrot.lane.b32.xlu0 %v1883, 97
        %v1943 = vpop.permute.xlu0 %1942
        %1944 = vrot.lane.b32.xlu0 %v1889, 97
        %v1945 = vpop.permute.xlu0 %1944
        %1946 = vrot.lane.b32.xlu0 %v1895, 97
        %v1947 = vpop.permute.xlu0 %1946
        %1972 = vrot.lane.b32.xlu0 %v1872, 1
        %v1973 = vpop.permute.xlu0 %1972
        %1974 = vrot.lane.b32.xlu0 %v1873, 1
        %v1975 = vpop.permute.xlu0 %1974
        %1976 = vrot.lane.b32.xlu0 %v1874, 1
        %v1977 = vpop.permute.xlu0 %1976
        %1978 = vrot.lane.b32.xlu0 %v1875, 1
        %v1979 = vpop.permute.xlu0 %1978
        %1980 = vrot.lane.b32.xlu0 %v1876, 1
        %v1981 = vpop.permute.xlu0 %1980
        %1982 = vrot.lane.b32.xlu0 %v1878, 1
        %v1983 = vpop.permute.xlu0 %1982
        %1984 = vrot.lane.b32.xlu0 %v1879, 1
        %v1985 = vpop.permute.xlu0 %1984
        %1986 = vrot.lane.b32.xlu0 %v1880, 1
        %v1987 = vpop.permute.xlu0 %1986
        %1988 = vrot.lane.b32.xlu0 %v1881, 1
        %v1989 = vpop.permute.xlu0 %1988
        %1990 = vrot.lane.b32.xlu0 %v1882, 1
        %v1991 = vpop.permute.xlu0 %1990
        %1992 = vrot.lane.b32.xlu0 %v1884, 1
        %v1993 = vpop.permute.xlu0 %1992
        %1994 = vrot.lane.b32.xlu0 %v1885, 1
        %v1995 = vpop.permute.xlu0 %1994
        %1996 = vrot.lane.b32.xlu0 %v1886, 1
        %v1997 = vpop.permute.xlu0 %1996
        %1998 = vrot.lane.b32.xlu0 %v1887, 1
        %v1999 = vpop.permute.xlu0 %1998
        %2000 = vrot.lane.b32.xlu0 %v1888, 1
        %v2001 = vpop.permute.xlu0 %2000
        %2002 = vrot.lane.b32.xlu0 %v1890, 1
        %v2003 = vpop.permute.xlu0 %2002
        %2004 = vrot.lane.b32.xlu0 %v1891, 1
        %v2005 = vpop.permute.xlu0 %2004
        %2006 = vrot.lane.b32.xlu0 %v1892, 1
        %v2007 = vpop.permute.xlu0 %2006
        %2008 = vrot.lane.b32.xlu0 %v1893, 1
        %v2009 = vpop.permute.xlu0 %2008
        %2010 = vrot.lane.b32.xlu0 %v1894, 1
        %v2011 = vpop.permute.xlu0 %2010
        %v2012 = vsel %vm609, %v1973, %v1975
        %v2013 = vsel %vm609, %v1975, %v1977
        %v2014 = vsel %vm609, %v1977, %v1979
        %v2015 = vsel %vm609, %v1979, %v1981
        %v2016 = vsel %vm609, %v1983, %v1985
        %v2017 = vsel %vm609, %v1985, %v1987
        %v2018 = vsel %vm609, %v1987, %v1989
        %v2019 = vsel %vm609, %v1989, %v1991
        %v2020 = vsel %vm609, %v1993, %v1995
        %v2021 = vsel %vm609, %v1995, %v1997
        %v2022 = vsel %vm609, %v1997, %v1999
        %v2023 = vsel %vm609, %v1999, %v2001
        %v2024 = vsel %vm609, %v2003, %v2005
        %v2025 = vsel %vm609, %v2005, %v2007
        %v2026 = vsel %vm609, %v2007, %v2009
        %v2027 = vsel %vm609, %v2009, %v2011
        %v2048 = vsel %vm609, %v1941, %v1973
        %v2049 = vsel %vm609, %v1943, %v1983
        %v2050 = vsel %vm609, %v1945, %v1993
        %v2051 = vsel %vm609, %v1947, %v2003
        %2052 = vrot.lane.b32.xlu0 %v1872, 127
        %v2053 = vpop.permute.xlu0 %2052
        %2054 = vrot.lane.b32.xlu0 %v1873, 127
        %v2055 = vpop.permute.xlu0 %2054
        %2056 = vrot.lane.b32.xlu0 %v1874, 127
        %v2057 = vpop.permute.xlu0 %2056
        %2058 = vrot.lane.b32.xlu0 %v1875, 127
        %v2059 = vpop.permute.xlu0 %2058
        %2060 = vrot.lane.b32.xlu0 %v1876, 127
        %v2061 = vpop.permute.xlu0 %2060
        %2062 = vrot.lane.b32.xlu0 %v1877, 127
        %v2063 = vpop.permute.xlu0 %2062
        %2064 = vrot.lane.b32.xlu0 %v1878, 127
        %v2065 = vpop.permute.xlu0 %2064
        %2066 = vrot.lane.b32.xlu0 %v1879, 127
        %v2067 = vpop.permute.xlu0 %2066
        %2068 = vrot.lane.b32.xlu0 %v1880, 127
        %v2069 = vpop.permute.xlu0 %2068
        %2070 = vrot.lane.b32.xlu0 %v1881, 127
        %v2071 = vpop.permute.xlu0 %2070
        %2072 = vrot.lane.b32.xlu0 %v1882, 127
        %v2073 = vpop.permute.xlu0 %2072
        %2074 = vrot.lane.b32.xlu0 %v1883, 127
        %v2075 = vpop.permute.xlu0 %2074
        %2076 = vrot.lane.b32.xlu0 %v1884, 127
        %v2077 = vpop.permute.xlu0 %2076
        %2078 = vrot.lane.b32.xlu0 %v1885, 127
        %v2079 = vpop.permute.xlu0 %2078
        %2080 = vrot.lane.b32.xlu0 %v1886, 127
        %v2081 = vpop.permute.xlu0 %2080
        %2082 = vrot.lane.b32.xlu0 %v1887, 127
        %v2083 = vpop.permute.xlu0 %2082
        %2084 = vrot.lane.b32.xlu0 %v1888, 127
        %v2085 = vpop.permute.xlu0 %2084
        %2086 = vrot.lane.b32.xlu0 %v1889, 127
        %v2087 = vpop.permute.xlu0 %2086
        %2088 = vrot.lane.b32.xlu0 %v1890, 127
        %v2089 = vpop.permute.xlu0 %2088
        %2090 = vrot.lane.b32.xlu0 %v1891, 127
        %v2091 = vpop.permute.xlu0 %2090
        %2092 = vrot.lane.b32.xlu0 %v1892, 127
        %v2093 = vpop.permute.xlu0 %2092
        %2094 = vrot.lane.b32.xlu0 %v1893, 127
        %v2095 = vpop.permute.xlu0 %2094
        %2096 = vrot.lane.b32.xlu0 %v1894, 127
        %v2097 = vpop.permute.xlu0 %2096
        %2098 = vrot.lane.b32.xlu0 %v1895, 127
        %v2099 = vpop.permute.xlu0 %2098
        %v2100 = vsel %vm634, %v2053, %v2055
        %v2101 = vsel %vm634, %v2055, %v2057
        %v2102 = vsel %vm634, %v2057, %v2059
        %v2103 = vsel %vm634, %v2059, %v2061
        %v2104 = vsel %vm634, %v2061, %v2063
        %v2105 = vsel %vm634, %v2065, %v2067
        %v2106 = vsel %vm634, %v2067, %v2069
        %v2107 = vsel %vm634, %v2069, %v2071
        %v2108 = vsel %vm634, %v2071, %v2073
        %v2109 = vsel %vm634, %v2073, %v2075
        %v2110 = vsel %vm634, %v2077, %v2079
        %v2111 = vsel %vm634, %v2079, %v2081
        %v2112 = vsel %vm634, %v2081, %v2083
        %v2113 = vsel %vm634, %v2083, %v2085
        %v2114 = vsel %vm634, %v2085, %v2087
        %v2115 = vsel %vm634, %v2089, %v2091
        %v2116 = vsel %vm634, %v2091, %v2093
        %v2117 = vsel %vm634, %v2093, %v2095
        %v2118 = vsel %vm634, %v2095, %v2097
        %v2119 = vsel %vm634, %v2097, %v2099
        %2140 = vrot.lane.b32.xlu0 %v1877, 69
        %v2141 = vpop.permute.xlu0 %2140
        %2142 = vrot.lane.b32.xlu0 %v1883, 69
        %v2143 = vpop.permute.xlu0 %2142
        %2144 = vrot.lane.b32.xlu0 %v1889, 69
        %v2145 = vpop.permute.xlu0 %2144
        %2146 = vrot.lane.b32.xlu0 %v1895, 69
        %v2147 = vpop.permute.xlu0 %2146
        %2152 = vrot.lane.b32.xlu0 %v1872, 101
        %v2153 = vpop.permute.xlu0 %2152
        %2154 = vrot.lane.b32.xlu0 %v1873, 101
        %v2155 = vpop.permute.xlu0 %2154
        %2156 = vrot.lane.b32.xlu0 %v1874, 101
        %v2157 = vpop.permute.xlu0 %2156
        %2158 = vrot.lane.b32.xlu0 %v1875, 101
        %v2159 = vpop.permute.xlu0 %2158
        %2160 = vrot.lane.b32.xlu0 %v1876, 101
        %v2161 = vpop.permute.xlu0 %2160
        %2162 = vrot.lane.b32.xlu0 %v1877, 101
        %v2163 = vpop.permute.xlu0 %2162
        %2164 = vrot.lane.b32.xlu0 %v1878, 101
        %v2165 = vpop.permute.xlu0 %2164
        %2166 = vrot.lane.b32.xlu0 %v1879, 101
        %v2167 = vpop.permute.xlu0 %2166
        %2168 = vrot.lane.b32.xlu0 %v1880, 101
        %v2169 = vpop.permute.xlu0 %2168
        %2170 = vrot.lane.b32.xlu0 %v1881, 101
        %v2171 = vpop.permute.xlu0 %2170
        %2172 = vrot.lane.b32.xlu0 %v1882, 101
        %v2173 = vpop.permute.xlu0 %2172
        %2174 = vrot.lane.b32.xlu0 %v1883, 101
        %v2175 = vpop.permute.xlu0 %2174
        %2176 = vrot.lane.b32.xlu0 %v1884, 101
        %v2177 = vpop.permute.xlu0 %2176
        %2178 = vrot.lane.b32.xlu0 %v1885, 101
        %v2179 = vpop.permute.xlu0 %2178
        %2180 = vrot.lane.b32.xlu0 %v1886, 101
        %v2181 = vpop.permute.xlu0 %2180
        %2182 = vrot.lane.b32.xlu0 %v1887, 101
        %v2183 = vpop.permute.xlu0 %2182
        %2184 = vrot.lane.b32.xlu0 %v1888, 101
        %v2185 = vpop.permute.xlu0 %2184
        %2186 = vrot.lane.b32.xlu0 %v1889, 101
        %v2187 = vpop.permute.xlu0 %2186
        %2188 = vrot.lane.b32.xlu0 %v1890, 101
        %v2189 = vpop.permute.xlu0 %2188
        %2190 = vrot.lane.b32.xlu0 %v1891, 101
        %v2191 = vpop.permute.xlu0 %2190
        %2192 = vrot.lane.b32.xlu0 %v1892, 101
        %v2193 = vpop.permute.xlu0 %2192
        %2194 = vrot.lane.b32.xlu0 %v1893, 101
        %v2195 = vpop.permute.xlu0 %2194
        %2196 = vrot.lane.b32.xlu0 %v1894, 101
        %v2197 = vpop.permute.xlu0 %2196
        %2198 = vrot.lane.b32.xlu0 %v1895, 101
        %v2199 = vpop.permute.xlu0 %2198
        %v2200 = vsel %vm666, %v2153, %v2155
        %v2201 = vsel %vm666, %v2155, %v2157
        %v2202 = vsel %vm666, %v2157, %v2159
        %v2203 = vsel %vm666, %v2159, %v2161
        %v2204 = vsel %vm666, %v2161, %v2163
        %v2205 = vsel %vm666, %v2165, %v2167
        %v2206 = vsel %vm666, %v2167, %v2169
        %v2207 = vsel %vm666, %v2169, %v2171
        %v2208 = vsel %vm666, %v2171, %v2173
        %v2209 = vsel %vm666, %v2173, %v2175
        %v2210 = vsel %vm666, %v2177, %v2179
        %v2211 = vsel %vm666, %v2179, %v2181
        %v2212 = vsel %vm666, %v2181, %v2183
        %v2213 = vsel %vm666, %v2183, %v2185
        %v2214 = vsel %vm666, %v2185, %v2187
        %v2215 = vsel %vm666, %v2189, %v2191
        %v2216 = vsel %vm666, %v2191, %v2193
        %v2217 = vsel %vm666, %v2193, %v2195
        %v2218 = vsel %vm666, %v2195, %v2197
        %v2219 = vsel %vm666, %v2197, %v2199
        %v2240 = vsel %vm609, %v2141, %v2200
        %v2241 = vsel %vm609, %v2143, %v2205
        %v2242 = vsel %vm609, %v2145, %v2210
        %v2243 = vsel %vm609, %v2147, %v2215
        %2244 = vrot.lane.b32.xlu0 %v1872, 99
        %v2245 = vpop.permute.xlu0 %2244
        %2246 = vrot.lane.b32.xlu0 %v1873, 99
        %v2247 = vpop.permute.xlu0 %2246
        %2248 = vrot.lane.b32.xlu0 %v1874, 99
        %v2249 = vpop.permute.xlu0 %2248
        %2250 = vrot.lane.b32.xlu0 %v1875, 99
        %v2251 = vpop.permute.xlu0 %2250
        %2252 = vrot.lane.b32.xlu0 %v1876, 99
        %v2253 = vpop.permute.xlu0 %2252
        %2254 = vrot.lane.b32.xlu0 %v1877, 99
        %v2255 = vpop.permute.xlu0 %2254
        %2256 = vrot.lane.b32.xlu0 %v1878, 99
        %v2257 = vpop.permute.xlu0 %2256
        %2258 = vrot.lane.b32.xlu0 %v1879, 99
        %v2259 = vpop.permute.xlu0 %2258
        %2260 = vrot.lane.b32.xlu0 %v1880, 99
        %v2261 = vpop.permute.xlu0 %2260
        %2262 = vrot.lane.b32.xlu0 %v1881, 99
        %v2263 = vpop.permute.xlu0 %2262
        %2264 = vrot.lane.b32.xlu0 %v1882, 99
        %v2265 = vpop.permute.xlu0 %2264
        %2266 = vrot.lane.b32.xlu0 %v1883, 99
        %v2267 = vpop.permute.xlu0 %2266
        %2268 = vrot.lane.b32.xlu0 %v1884, 99
        %v2269 = vpop.permute.xlu0 %2268
        %2270 = vrot.lane.b32.xlu0 %v1885, 99
        %v2271 = vpop.permute.xlu0 %2270
        %2272 = vrot.lane.b32.xlu0 %v1886, 99
        %v2273 = vpop.permute.xlu0 %2272
        %2274 = vrot.lane.b32.xlu0 %v1887, 99
        %v2275 = vpop.permute.xlu0 %2274
        %2276 = vrot.lane.b32.xlu0 %v1888, 99
        %v2277 = vpop.permute.xlu0 %2276
        %2278 = vrot.lane.b32.xlu0 %v1889, 99
        %v2279 = vpop.permute.xlu0 %2278
        %2280 = vrot.lane.b32.xlu0 %v1890, 99
        %v2281 = vpop.permute.xlu0 %2280
        %2282 = vrot.lane.b32.xlu0 %v1891, 99
        %v2283 = vpop.permute.xlu0 %2282
        %2284 = vrot.lane.b32.xlu0 %v1892, 99
        %v2285 = vpop.permute.xlu0 %2284
        %2286 = vrot.lane.b32.xlu0 %v1893, 99
        %v2287 = vpop.permute.xlu0 %2286
        %2288 = vrot.lane.b32.xlu0 %v1894, 99
        %v2289 = vpop.permute.xlu0 %2288
        %2290 = vrot.lane.b32.xlu0 %v1895, 99
        %v2291 = vpop.permute.xlu0 %2290
        %v2292 = vsel %vm691, %v2245, %v2247
        %v2293 = vsel %vm691, %v2247, %v2249
        %v2294 = vsel %vm691, %v2249, %v2251
        %v2295 = vsel %vm691, %v2251, %v2253
        %v2296 = vsel %vm691, %v2253, %v2255
        %v2297 = vsel %vm691, %v2257, %v2259
        %v2298 = vsel %vm691, %v2259, %v2261
        %v2299 = vsel %vm691, %v2261, %v2263
        %v2300 = vsel %vm691, %v2263, %v2265
        %v2301 = vsel %vm691, %v2265, %v2267
        %v2302 = vsel %vm691, %v2269, %v2271
        %v2303 = vsel %vm691, %v2271, %v2273
        %v2304 = vsel %vm691, %v2273, %v2275
        %v2305 = vsel %vm691, %v2275, %v2277
        %v2306 = vsel %vm691, %v2277, %v2279
        %v2307 = vsel %vm691, %v2281, %v2283
        %v2308 = vsel %vm691, %v2283, %v2285
        %v2309 = vsel %vm691, %v2285, %v2287
        %v2310 = vsel %vm691, %v2287, %v2289
        %v2311 = vsel %vm691, %v2289, %v2291
        %2332 = vrot.lane.b32.xlu0 %v1872, 100
        %v2333 = vpop.permute.xlu0 %2332
        %2334 = vrot.lane.b32.xlu0 %v1873, 100
        %v2335 = vpop.permute.xlu0 %2334
        %2336 = vrot.lane.b32.xlu0 %v1874, 100
        %v2337 = vpop.permute.xlu0 %2336
        %2338 = vrot.lane.b32.xlu0 %v1875, 100
        %v2339 = vpop.permute.xlu0 %2338
        %2340 = vrot.lane.b32.xlu0 %v1876, 100
        %v2341 = vpop.permute.xlu0 %2340
        %2342 = vrot.lane.b32.xlu0 %v1877, 100
        %v2343 = vpop.permute.xlu0 %2342
        %2344 = vrot.lane.b32.xlu0 %v1878, 100
        %v2345 = vpop.permute.xlu0 %2344
        %2346 = vrot.lane.b32.xlu0 %v1879, 100
        %v2347 = vpop.permute.xlu0 %2346
        %2348 = vrot.lane.b32.xlu0 %v1880, 100
        %v2349 = vpop.permute.xlu0 %2348
        %2350 = vrot.lane.b32.xlu0 %v1881, 100
        %v2351 = vpop.permute.xlu0 %2350
        %2352 = vrot.lane.b32.xlu0 %v1882, 100
        %v2353 = vpop.permute.xlu0 %2352
        %2354 = vrot.lane.b32.xlu0 %v1883, 100
        %v2355 = vpop.permute.xlu0 %2354
        %2356 = vrot.lane.b32.xlu0 %v1884, 100
        %v2357 = vpop.permute.xlu0 %2356
        %2358 = vrot.lane.b32.xlu0 %v1885, 100
        %v2359 = vpop.permute.xlu0 %2358
        %2360 = vrot.lane.b32.xlu0 %v1886, 100
        %v2361 = vpop.permute.xlu0 %2360
        %2362 = vrot.lane.b32.xlu0 %v1887, 100
        %v2363 = vpop.permute.xlu0 %2362
        %2364 = vrot.lane.b32.xlu0 %v1888, 100
        %v2365 = vpop.permute.xlu0 %2364
        %2366 = vrot.lane.b32.xlu0 %v1889, 100
        %v2367 = vpop.permute.xlu0 %2366
        %2368 = vrot.lane.b32.xlu0 %v1890, 100
        %v2369 = vpop.permute.xlu0 %2368
        %2370 = vrot.lane.b32.xlu0 %v1891, 100
        %v2371 = vpop.permute.xlu0 %2370
        %2372 = vrot.lane.b32.xlu0 %v1892, 100
        %v2373 = vpop.permute.xlu0 %2372
        %2374 = vrot.lane.b32.xlu0 %v1893, 100
        %v2375 = vpop.permute.xlu0 %2374
        %2376 = vrot.lane.b32.xlu0 %v1894, 100
        %v2377 = vpop.permute.xlu0 %2376
        %2378 = vrot.lane.b32.xlu0 %v1895, 100
        %v2379 = vpop.permute.xlu0 %2378
        %v2380 = vsel %vm719, %v2333, %v2335
        %v2381 = vsel %vm719, %v2335, %v2337
        %v2382 = vsel %vm719, %v2337, %v2339
        %v2383 = vsel %vm719, %v2339, %v2341
        %v2384 = vsel %vm719, %v2341, %v2343
        %v2385 = vsel %vm719, %v2345, %v2347
        %v2386 = vsel %vm719, %v2347, %v2349
        %v2387 = vsel %vm719, %v2349, %v2351
        %v2388 = vsel %vm719, %v2351, %v2353
        %v2389 = vsel %vm719, %v2353, %v2355
        %v2390 = vsel %vm719, %v2357, %v2359
        %v2391 = vsel %vm719, %v2359, %v2361
        %v2392 = vsel %vm719, %v2361, %v2363
        %v2393 = vsel %vm719, %v2363, %v2365
        %v2394 = vsel %vm719, %v2365, %v2367
        %v2395 = vsel %vm719, %v2369, %v2371
        %v2396 = vsel %vm719, %v2371, %v2373
        %v2397 = vsel %vm719, %v2373, %v2375
        %v2398 = vsel %vm719, %v2375, %v2377
        %v2399 = vsel %vm719, %v2377, %v2379
        %vm2420 = vcmask 785408
        %v2422 = vsel %vm2420, %v1924, 0
        %v2425 = vsel %vm2420, %v1925, 0
        %v2428 = vsel %vm2420, %v1926, 0
        %v2431 = vsel %vm2420, %v1927, 0
        %2433 = vmatpush.msra.mxu0 0.0
        %2434 = vmatpush.msra.mxu0 0.0
        %2435 = vmatpush.msra.mxu0 0.0
        %2436 = vmatpush.msra.mxu0 0.0
        %2437 = vmatpush.msra.mxu0 %v2307
        %2438 = vmatpush.msra.mxu0 %v2302
        %2439 = vmatpush.msra.mxu0 %v2297
        %2440 = vmatpush.msra.mxu0 %v2292
        %2441 = vmatpush.msra.mxu0 %v2395
        %2442 = vmatpush.msra.mxu0 %v2390
        %2443 = vmatpush.msra.mxu0 %v2385
        %2444 = vmatpush.msra.mxu0 %v2380
        %2445 = vmatpush.msra.mxu0 %v2243
        %2446 = vmatpush.msra.mxu0 %v2242
        %2447 = vmatpush.msra.mxu0 %v2241
        %2448 = vmatpush.msra.mxu0 %v2240
        %2449 = vmatmul.f32.gmra.mxu0 %v2422
        %v2450 = vpop.f32.mrf.mxu0
        %v2451 = vadd.f32 0.0, %v2450
        %2452 = vmatmul.f32.gmra.mxu0 %v2425
        %v2453 = vpop.f32.mrf.mxu0
        %v2454 = vadd.f32 0.0, %v2453
        %2455 = vmatmul.f32.gmra.mxu0 %v2428
        %v2456 = vpop.f32.mrf.mxu0
        %v2457 = vadd.f32 0.0, %v2456
        %2458 = vmatmul.f32.gmra.mxu0 %v2431
        %v2459 = vpop.f32.mrf.mxu0
        %v2460 = vadd.f32 0.0, %v2459
        %2461 = vdwg.mxu0
        %2462 = vmatpush.msra.mxu0 0.0
        %2463 = vmatpush.msra.mxu0 0.0
        %2464 = vmatpush.msra.mxu0 0.0
        %2465 = vmatpush.msra.mxu0 0.0
        %2466 = vmatpush.msra.mxu0 %v2308
        %2467 = vmatpush.msra.mxu0 %v2303
        %2468 = vmatpush.msra.mxu0 %v2298
        %2469 = vmatpush.msra.mxu0 %v2293
        %2470 = vmatpush.msra.mxu0 %v2396
        %2471 = vmatpush.msra.mxu0 %v2391
        %2472 = vmatpush.msra.mxu0 %v2386
        %2473 = vmatpush.msra.mxu0 %v2381
        %2474 = vmatpush.msra.mxu0 %v2216
        %2475 = vmatpush.msra.mxu0 %v2211
        %2476 = vmatpush.msra.mxu0 %v2206
        %2477 = vmatpush.msra.mxu0 %v2201
        %2478 = vmatmul.f32.gmra.mxu0 %v2422
        %v2479 = vpop.f32.mrf.mxu0
        %v2480 = vadd.f32 0.0, %v2479
        %2481 = vmatmul.f32.gmra.mxu0 %v2425
        %v2482 = vpop.f32.mrf.mxu0
        %v2483 = vadd.f32 0.0, %v2482
        %2484 = vmatmul.f32.gmra.mxu0 %v2428
        %v2485 = vpop.f32.mrf.mxu0
        %v2486 = vadd.f32 0.0, %v2485
        %2487 = vmatmul.f32.gmra.mxu0 %v2431
        %v2488 = vpop.f32.mrf.mxu0
        %v2489 = vadd.f32 0.0, %v2488
        %2490 = vdwg.mxu0
        %2491 = vmatpush.msra.mxu0 0.0
        %2492 = vmatpush.msra.mxu0 0.0
        %2493 = vmatpush.msra.mxu0 0.0
        %2494 = vmatpush.msra.mxu0 0.0
        %2495 = vmatpush.msra.mxu0 %v2309
        %2496 = vmatpush.msra.mxu0 %v2304
        %2497 = vmatpush.msra.mxu0 %v2299
        %2498 = vmatpush.msra.mxu0 %v2294
        %2499 = vmatpush.msra.mxu0 %v2397
        %2500 = vmatpush.msra.mxu0 %v2392
        %2501 = vmatpush.msra.mxu0 %v2387
        %2502 = vmatpush.msra.mxu0 %v2382
        %2503 = vmatpush.msra.mxu0 %v2217
        %2504 = vmatpush.msra.mxu0 %v2212
        %2505 = vmatpush.msra.mxu0 %v2207
        %2506 = vmatpush.msra.mxu0 %v2202
        %2507 = vmatmul.f32.gmra.mxu0 %v2422
        %v2508 = vpop.f32.mrf.mxu0
        %v2509 = vadd.f32 0.0, %v2508
        %2510 = vmatmul.f32.gmra.mxu0 %v2425
        %v2511 = vpop.f32.mrf.mxu0
        %v2512 = vadd.f32 0.0, %v2511
        %2513 = vmatmul.f32.gmra.mxu0 %v2428
        %v2514 = vpop.f32.mrf.mxu0
        %v2515 = vadd.f32 0.0, %v2514
        %2516 = vmatmul.f32.gmra.mxu0 %v2431
        %v2517 = vpop.f32.mrf.mxu0
        %v2518 = vadd.f32 0.0, %v2517
        %2519 = vdwg.mxu0
        %2520 = vmatpush.msra.mxu0 0.0
        %2521 = vmatpush.msra.mxu0 0.0
        %2522 = vmatpush.msra.mxu0 0.0
        %2523 = vmatpush.msra.mxu0 0.0
        %2524 = vmatpush.msra.mxu0 %v2310
        %2525 = vmatpush.msra.mxu0 %v2305
        %2526 = vmatpush.msra.mxu0 %v2300
        %2527 = vmatpush.msra.mxu0 %v2295
        %2528 = vmatpush.msra.mxu0 %v2398
        %2529 = vmatpush.msra.mxu0 %v2393
        %2530 = vmatpush.msra.mxu0 %v2388
        %2531 = vmatpush.msra.mxu0 %v2383
        %2532 = vmatpush.msra.mxu0 %v2218
        %2533 = vmatpush.msra.mxu0 %v2213
        %2534 = vmatpush.msra.mxu0 %v2208
        %2535 = vmatpush.msra.mxu0 %v2203
        %2536 = vmatmul.f32.gmra.mxu0 %v2422
        %v2537 = vpop.f32.mrf.mxu0
        %v2538 = vadd.f32 0.0, %v2537
        %2539 = vmatmul.f32.gmra.mxu0 %v2425
        %v2540 = vpop.f32.mrf.mxu0
        %v2541 = vadd.f32 0.0, %v2540
        %2542 = vmatmul.f32.gmra.mxu0 %v2428
        %v2543 = vpop.f32.mrf.mxu0
        %v2544 = vadd.f32 0.0, %v2543
        %2545 = vmatmul.f32.gmra.mxu0 %v2431
        %v2546 = vpop.f32.mrf.mxu0
        %v2547 = vadd.f32 0.0, %v2546
        %2548 = vdwg.mxu0
        %2549 = vmatpush.msra.mxu0 0.0
        %2550 = vmatpush.msra.mxu0 0.0
        %2551 = vmatpush.msra.mxu0 0.0
        %2552 = vmatpush.msra.mxu0 0.0
        %2553 = vmatpush.msra.mxu0 %v2311
        %2554 = vmatpush.msra.mxu0 %v2306
        %2555 = vmatpush.msra.mxu0 %v2301
        %2556 = vmatpush.msra.mxu0 %v2296
        %2557 = vmatpush.msra.mxu0 %v2399
        %2558 = vmatpush.msra.mxu0 %v2394
        %2559 = vmatpush.msra.mxu0 %v2389
        %2560 = vmatpush.msra.mxu0 %v2384
        %2561 = vmatpush.msra.mxu0 %v2219
        %2562 = vmatpush.msra.mxu0 %v2214
        %2563 = vmatpush.msra.mxu0 %v2209
        %2564 = vmatpush.msra.mxu0 %v2204
        %2565 = vmatmul.f32.gmra.mxu0 %v2422
        %v2566 = vpop.f32.mrf.mxu0
        %v2567 = vadd.f32 0.0, %v2566
        %2568 = vmatmul.f32.gmra.mxu0 %v2425
        %v2569 = vpop.f32.mrf.mxu0
        %v2570 = vadd.f32 0.0, %v2569
        %2571 = vmatmul.f32.gmra.mxu0 %v2428
        %v2572 = vpop.f32.mrf.mxu0
        %v2573 = vadd.f32 0.0, %v2572
        %2574 = vmatmul.f32.gmra.mxu0 %v2431
        %v2575 = vpop.f32.mrf.mxu0
        %v2576 = vadd.f32 0.0, %v2575
        %2577 = vdwg.mxu0
        %v2579 = vsel %vm2420, %v1920, 0
        %v2582 = vsel %vm2420, %v1921, 0
        %v2585 = vsel %vm2420, %v1922, 0
        %v2588 = vsel %vm2420, %v1923, 0
        %2590 = vmatpush.msra.mxu0 0.0
        %2591 = vmatpush.msra.mxu0 0.0
        %2592 = vmatpush.msra.mxu0 0.0
        %2593 = vmatpush.msra.mxu0 0.0
        %2594 = vmatpush.msra.mxu0 %v2115
        %2595 = vmatpush.msra.mxu0 %v2110
        %2596 = vmatpush.msra.mxu0 %v2105
        %2597 = vmatpush.msra.mxu0 %v2100
        %2598 = vmatpush.msra.mxu0 %v1890
        %2599 = vmatpush.msra.mxu0 %v1884
        %2600 = vmatpush.msra.mxu0 %v1878
        %2601 = vmatpush.msra.mxu0 %v1872
        %2602 = vmatpush.msra.mxu0 %v2051
        %2603 = vmatpush.msra.mxu0 %v2050
        %2604 = vmatpush.msra.mxu0 %v2049
        %2605 = vmatpush.msra.mxu0 %v2048
        %2606 = vmatmul.f32.gmra.mxu0 %v2579
        %v2607 = vpop.f32.mrf.mxu0
        %v2608 = vadd.f32 %v2451, %v2607
        %2609 = vmatmul.f32.gmra.mxu0 %v2582
        %v2610 = vpop.f32.mrf.mxu0
        %v2611 = vadd.f32 %v2454, %v2610
        %2612 = vmatmul.f32.gmra.mxu0 %v2585
        %v2613 = vpop.f32.mrf.mxu0
        %v2614 = vadd.f32 %v2457, %v2613
        %2615 = vmatmul.f32.gmra.mxu0 %v2588
        %v2616 = vpop.f32.mrf.mxu0
        %v2617 = vadd.f32 %v2460, %v2616
        %2618 = vdwg.mxu0
        %2619 = vmatpush.msra.mxu0 0.0
        %2620 = vmatpush.msra.mxu0 0.0
        %2621 = vmatpush.msra.mxu0 0.0
        %2622 = vmatpush.msra.mxu0 0.0
        %2623 = vmatpush.msra.mxu0 %v2116
        %2624 = vmatpush.msra.mxu0 %v2111
        %2625 = vmatpush.msra.mxu0 %v2106
        %2626 = vmatpush.msra.mxu0 %v2101
        %2627 = vmatpush.msra.mxu0 %v1891
        %2628 = vmatpush.msra.mxu0 %v1885
        %2629 = vmatpush.msra.mxu0 %v1879
        %2630 = vmatpush.msra.mxu0 %v1873
        %2631 = vmatpush.msra.mxu0 %v2024
        %2632 = vmatpush.msra.mxu0 %v2020
        %2633 = vmatpush.msra.mxu0 %v2016
        %2634 = vmatpush.msra.mxu0 %v2012
        %2635 = vmatmul.f32.gmra.mxu0 %v2579
        %v2636 = vpop.f32.mrf.mxu0
        %v2637 = vadd.f32 %v2480, %v2636
        %2638 = vmatmul.f32.gmra.mxu0 %v2582
        %v2639 = vpop.f32.mrf.mxu0
        %v2640 = vadd.f32 %v2483, %v2639
        %2641 = vmatmul.f32.gmra.mxu0 %v2585
        %v2642 = vpop.f32.mrf.mxu0
        %v2643 = vadd.f32 %v2486, %v2642
        %2644 = vmatmul.f32.gmra.mxu0 %v2588
        %v2645 = vpop.f32.mrf.mxu0
        %v2646 = vadd.f32 %v2489, %v2645
        %2647 = vdwg.mxu0
        %2648 = vmatpush.msra.mxu0 0.0
        %2649 = vmatpush.msra.mxu0 0.0
        %2650 = vmatpush.msra.mxu0 0.0
        %2651 = vmatpush.msra.mxu0 0.0
        %2652 = vmatpush.msra.mxu0 %v2117
        %2653 = vmatpush.msra.mxu0 %v2112
        %2654 = vmatpush.msra.mxu0 %v2107
        %2655 = vmatpush.msra.mxu0 %v2102
        %2656 = vmatpush.msra.mxu0 %v1892
        %2657 = vmatpush.msra.mxu0 %v1886
        %2658 = vmatpush.msra.mxu0 %v1880
        %2659 = vmatpush.msra.mxu0 %v1874
        %2660 = vmatpush.msra.mxu0 %v2025
        %2661 = vmatpush.msra.mxu0 %v2021
        %2662 = vmatpush.msra.mxu0 %v2017
        %2663 = vmatpush.msra.mxu0 %v2013
        %2664 = vmatmul.f32.gmra.mxu0 %v2579
        %v2665 = vpop.f32.mrf.mxu0
        %v2666 = vadd.f32 %v2509, %v2665
        %2667 = vmatmul.f32.gmra.mxu0 %v2582
        %v2668 = vpop.f32.mrf.mxu0
        %v2669 = vadd.f32 %v2512, %v2668
        %2670 = vmatmul.f32.gmra.mxu0 %v2585
        %v2671 = vpop.f32.mrf.mxu0
        %v2672 = vadd.f32 %v2515, %v2671
        %2673 = vmatmul.f32.gmra.mxu0 %v2588
        %v2674 = vpop.f32.mrf.mxu0
        %v2675 = vadd.f32 %v2518, %v2674
        %2676 = vdwg.mxu0
        %2677 = vmatpush.msra.mxu0 0.0
        %2678 = vmatpush.msra.mxu0 0.0
        %2679 = vmatpush.msra.mxu0 0.0
        %2680 = vmatpush.msra.mxu0 0.0
        %2681 = vmatpush.msra.mxu0 %v2118
        %2682 = vmatpush.msra.mxu0 %v2113
        %2683 = vmatpush.msra.mxu0 %v2108
        %2684 = vmatpush.msra.mxu0 %v2103
        %2685 = vmatpush.msra.mxu0 %v1893
        %2686 = vmatpush.msra.mxu0 %v1887
        %2687 = vmatpush.msra.mxu0 %v1881
        %2688 = vmatpush.msra.mxu0 %v1875
        %2689 = vmatpush.msra.mxu0 %v2026
        %2690 = vmatpush.msra.mxu0 %v2022
        %2691 = vmatpush.msra.mxu0 %v2018
        %2692 = vmatpush.msra.mxu0 %v2014
        %2693 = vmatmul.f32.gmra.mxu0 %v2579
        %v2694 = vpop.f32.mrf.mxu0
        %v2695 = vadd.f32 %v2538, %v2694
        %2696 = vmatmul.f32.gmra.mxu0 %v2582
        %v2697 = vpop.f32.mrf.mxu0
        %v2698 = vadd.f32 %v2541, %v2697
        %2699 = vmatmul.f32.gmra.mxu0 %v2585
        %v2700 = vpop.f32.mrf.mxu0
        %v2701 = vadd.f32 %v2544, %v2700
        %2702 = vmatmul.f32.gmra.mxu0 %v2588
        %v2703 = vpop.f32.mrf.mxu0
        %v2704 = vadd.f32 %v2547, %v2703
        %2705 = vdwg.mxu0
        %2706 = vmatpush.msra.mxu0 0.0
        %2707 = vmatpush.msra.mxu0 0.0
        %2708 = vmatpush.msra.mxu0 0.0
        %2709 = vmatpush.msra.mxu0 0.0
        %2710 = vmatpush.msra.mxu0 %v2119
        %2711 = vmatpush.msra.mxu0 %v2114
        %2712 = vmatpush.msra.mxu0 %v2109
        %2713 = vmatpush.msra.mxu0 %v2104
        %2714 = vmatpush.msra.mxu0 %v1894
        %2715 = vmatpush.msra.mxu0 %v1888
        %2716 = vmatpush.msra.mxu0 %v1882
        %2717 = vmatpush.msra.mxu0 %v1876
        %2718 = vmatpush.msra.mxu0 %v2027
        %2719 = vmatpush.msra.mxu0 %v2023
        %2720 = vmatpush.msra.mxu0 %v2019
        %2721 = vmatpush.msra.mxu0 %v2015
        %2722 = vmatmul.f32.gmra.mxu0 %v2579
        %v2723 = vpop.f32.mrf.mxu0
        %v2724 = vadd.f32 %v2567, %v2723
        %2725 = vmatmul.f32.gmra.mxu0 %v2582
        %v2726 = vpop.f32.mrf.mxu0
        %v2727 = vadd.f32 %v2570, %v2726
        %2728 = vmatmul.f32.gmra.mxu0 %v2585
        %v2729 = vpop.f32.mrf.mxu0
        %v2730 = vadd.f32 %v2573, %v2729
        %2731 = vmatmul.f32.gmra.mxu0 %v2588
        %v2732 = vpop.f32.mrf.mxu0
        %v2733 = vadd.f32 %v2576, %v2732
        %2734 = vdwg.mxu0
        %2735 = vrot.lane.b32.xlu0 %v1877, 41
        %v2736 = vpop.permute.xlu0 %2735
        %2737 = vrot.lane.b32.xlu0 %v1883, 41
        %v2738 = vpop.permute.xlu0 %2737
        %2739 = vrot.lane.b32.xlu0 %v1889, 41
        %v2740 = vpop.permute.xlu0 %2739
        %2741 = vrot.lane.b32.xlu0 %v1895, 41
        %v2742 = vpop.permute.xlu0 %2741
        %2747 = vrot.lane.b32.xlu0 %v1872, 73
        %v2748 = vpop.permute.xlu0 %2747
        %2749 = vrot.lane.b32.xlu0 %v1873, 73
        %v2750 = vpop.permute.xlu0 %2749
        %2751 = vrot.lane.b32.xlu0 %v1874, 73
        %v2752 = vpop.permute.xlu0 %2751
        %2753 = vrot.lane.b32.xlu0 %v1875, 73
        %v2754 = vpop.permute.xlu0 %2753
        %2755 = vrot.lane.b32.xlu0 %v1876, 73
        %v2756 = vpop.permute.xlu0 %2755
        %2757 = vrot.lane.b32.xlu0 %v1877, 73
        %v2758 = vpop.permute.xlu0 %2757
        %2759 = vrot.lane.b32.xlu0 %v1878, 73
        %v2760 = vpop.permute.xlu0 %2759
        %2761 = vrot.lane.b32.xlu0 %v1879, 73
        %v2762 = vpop.permute.xlu0 %2761
        %2763 = vrot.lane.b32.xlu0 %v1880, 73
        %v2764 = vpop.permute.xlu0 %2763
        %2765 = vrot.lane.b32.xlu0 %v1881, 73
        %v2766 = vpop.permute.xlu0 %2765
        %2767 = vrot.lane.b32.xlu0 %v1882, 73
        %v2768 = vpop.permute.xlu0 %2767
        %2769 = vrot.lane.b32.xlu0 %v1883, 73
        %v2770 = vpop.permute.xlu0 %2769
        %2771 = vrot.lane.b32.xlu0 %v1884, 73
        %v2772 = vpop.permute.xlu0 %2771
        %2773 = vrot.lane.b32.xlu0 %v1885, 73
        %v2774 = vpop.permute.xlu0 %2773
        %2775 = vrot.lane.b32.xlu0 %v1886, 73
        %v2776 = vpop.permute.xlu0 %2775
        %2777 = vrot.lane.b32.xlu0 %v1887, 73
        %v2778 = vpop.permute.xlu0 %2777
        %2779 = vrot.lane.b32.xlu0 %v1888, 73
        %v2780 = vpop.permute.xlu0 %2779
        %2781 = vrot.lane.b32.xlu0 %v1889, 73
        %v2782 = vpop.permute.xlu0 %2781
        %2783 = vrot.lane.b32.xlu0 %v1890, 73
        %v2784 = vpop.permute.xlu0 %2783
        %2785 = vrot.lane.b32.xlu0 %v1891, 73
        %v2786 = vpop.permute.xlu0 %2785
        %2787 = vrot.lane.b32.xlu0 %v1892, 73
        %v2788 = vpop.permute.xlu0 %2787
        %2789 = vrot.lane.b32.xlu0 %v1893, 73
        %v2790 = vpop.permute.xlu0 %2789
        %2791 = vrot.lane.b32.xlu0 %v1894, 73
        %v2792 = vpop.permute.xlu0 %2791
        %2793 = vrot.lane.b32.xlu0 %v1895, 73
        %v2794 = vpop.permute.xlu0 %2793
        %v2795 = vsel %vm1290, %v2748, %v2750
        %v2796 = vsel %vm1290, %v2750, %v2752
        %v2797 = vsel %vm1290, %v2752, %v2754
        %v2798 = vsel %vm1290, %v2754, %v2756
        %v2799 = vsel %vm1290, %v2756, %v2758
        %v2800 = vsel %vm1290, %v2760, %v2762
        %v2801 = vsel %vm1290, %v2762, %v2764
        %v2802 = vsel %vm1290, %v2764, %v2766
        %v2803 = vsel %vm1290, %v2766, %v2768
        %v2804 = vsel %vm1290, %v2768, %v2770
        %v2805 = vsel %vm1290, %v2772, %v2774
        %v2806 = vsel %vm1290, %v2774, %v2776
        %v2807 = vsel %vm1290, %v2776, %v2778
        %v2808 = vsel %vm1290, %v2778, %v2780
        %v2809 = vsel %vm1290, %v2780, %v2782
        %v2810 = vsel %vm1290, %v2784, %v2786
        %v2811 = vsel %vm1290, %v2786, %v2788
        %v2812 = vsel %vm1290, %v2788, %v2790
        %v2813 = vsel %vm1290, %v2790, %v2792
        %v2814 = vsel %vm1290, %v2792, %v2794
        %v2835 = vsel %vm609, %v2736, %v2795
        %v2836 = vsel %vm609, %v2738, %v2800
        %v2837 = vsel %vm609, %v2740, %v2805
        %v2838 = vsel %vm609, %v2742, %v2810
        %2839 = vrot.lane.b32.xlu0 %v1872, 71
        %v2840 = vpop.permute.xlu0 %2839
        %2841 = vrot.lane.b32.xlu0 %v1873, 71
        %v2842 = vpop.permute.xlu0 %2841
        %2843 = vrot.lane.b32.xlu0 %v1874, 71
        %v2844 = vpop.permute.xlu0 %2843
        %2845 = vrot.lane.b32.xlu0 %v1875, 71
        %v2846 = vpop.permute.xlu0 %2845
        %2847 = vrot.lane.b32.xlu0 %v1876, 71
        %v2848 = vpop.permute.xlu0 %2847
        %2849 = vrot.lane.b32.xlu0 %v1877, 71
        %v2850 = vpop.permute.xlu0 %2849
        %2851 = vrot.lane.b32.xlu0 %v1878, 71
        %v2852 = vpop.permute.xlu0 %2851
        %2853 = vrot.lane.b32.xlu0 %v1879, 71
        %v2854 = vpop.permute.xlu0 %2853
        %2855 = vrot.lane.b32.xlu0 %v1880, 71
        %v2856 = vpop.permute.xlu0 %2855
        %2857 = vrot.lane.b32.xlu0 %v1881, 71
        %v2858 = vpop.permute.xlu0 %2857
        %2859 = vrot.lane.b32.xlu0 %v1882, 71
        %v2860 = vpop.permute.xlu0 %2859
        %2861 = vrot.lane.b32.xlu0 %v1883, 71
        %v2862 = vpop.permute.xlu0 %2861
        %2863 = vrot.lane.b32.xlu0 %v1884, 71
        %v2864 = vpop.permute.xlu0 %2863
        %2865 = vrot.lane.b32.xlu0 %v1885, 71
        %v2866 = vpop.permute.xlu0 %2865
        %2867 = vrot.lane.b32.xlu0 %v1886, 71
        %v2868 = vpop.permute.xlu0 %2867
        %2869 = vrot.lane.b32.xlu0 %v1887, 71
        %v2870 = vpop.permute.xlu0 %2869
        %2871 = vrot.lane.b32.xlu0 %v1888, 71
        %v2872 = vpop.permute.xlu0 %2871
        %2873 = vrot.lane.b32.xlu0 %v1889, 71
        %v2874 = vpop.permute.xlu0 %2873
        %2875 = vrot.lane.b32.xlu0 %v1890, 71
        %v2876 = vpop.permute.xlu0 %2875
        %2877 = vrot.lane.b32.xlu0 %v1891, 71
        %v2878 = vpop.permute.xlu0 %2877
        %2879 = vrot.lane.b32.xlu0 %v1892, 71
        %v2880 = vpop.permute.xlu0 %2879
        %2881 = vrot.lane.b32.xlu0 %v1893, 71
        %v2882 = vpop.permute.xlu0 %2881
        %2883 = vrot.lane.b32.xlu0 %v1894, 71
        %v2884 = vpop.permute.xlu0 %2883
        %2885 = vrot.lane.b32.xlu0 %v1895, 71
        %v2886 = vpop.permute.xlu0 %2885
        %v2887 = vsel %vm1318, %v2840, %v2842
        %v2888 = vsel %vm1318, %v2842, %v2844
        %v2889 = vsel %vm1318, %v2844, %v2846
        %v2890 = vsel %vm1318, %v2846, %v2848
        %v2891 = vsel %vm1318, %v2848, %v2850
        %v2892 = vsel %vm1318, %v2852, %v2854
        %v2893 = vsel %vm1318, %v2854, %v2856
        %v2894 = vsel %vm1318, %v2856, %v2858
        %v2895 = vsel %vm1318, %v2858, %v2860
        %v2896 = vsel %vm1318, %v2860, %v2862
        %v2897 = vsel %vm1318, %v2864, %v2866
        %v2898 = vsel %vm1318, %v2866, %v2868
        %v2899 = vsel %vm1318, %v2868, %v2870
        %v2900 = vsel %vm1318, %v2870, %v2872
        %v2901 = vsel %vm1318, %v2872, %v2874
        %v2902 = vsel %vm1318, %v2876, %v2878
        %v2903 = vsel %vm1318, %v2878, %v2880
        %v2904 = vsel %vm1318, %v2880, %v2882
        %v2905 = vsel %vm1318, %v2882, %v2884
        %v2906 = vsel %vm1318, %v2884, %v2886
        %2927 = vrot.lane.b32.xlu0 %v1872, 72
        %v2928 = vpop.permute.xlu0 %2927
        %2929 = vrot.lane.b32.xlu0 %v1873, 72
        %v2930 = vpop.permute.xlu0 %2929
        %2931 = vrot.lane.b32.xlu0 %v1874, 72
        %v2932 = vpop.permute.xlu0 %2931
        %2933 = vrot.lane.b32.xlu0 %v1875, 72
        %v2934 = vpop.permute.xlu0 %2933
        %2935 = vrot.lane.b32.xlu0 %v1876, 72
        %v2936 = vpop.permute.xlu0 %2935
        %2937 = vrot.lane.b32.xlu0 %v1877, 72
        %v2938 = vpop.permute.xlu0 %2937
        %2939 = vrot.lane.b32.xlu0 %v1878, 72
        %v2940 = vpop.permute.xlu0 %2939
        %2941 = vrot.lane.b32.xlu0 %v1879, 72
        %v2942 = vpop.permute.xlu0 %2941
        %2943 = vrot.lane.b32.xlu0 %v1880, 72
        %v2944 = vpop.permute.xlu0 %2943
        %2945 = vrot.lane.b32.xlu0 %v1881, 72
        %v2946 = vpop.permute.xlu0 %2945
        %2947 = vrot.lane.b32.xlu0 %v1882, 72
        %v2948 = vpop.permute.xlu0 %2947
        %2949 = vrot.lane.b32.xlu0 %v1883, 72
        %v2950 = vpop.permute.xlu0 %2949
        %2951 = vrot.lane.b32.xlu0 %v1884, 72
        %v2952 = vpop.permute.xlu0 %2951
        %2953 = vrot.lane.b32.xlu0 %v1885, 72
        %v2954 = vpop.permute.xlu0 %2953
        %2955 = vrot.lane.b32.xlu0 %v1886, 72
        %v2956 = vpop.permute.xlu0 %2955
        %2957 = vrot.lane.b32.xlu0 %v1887, 72
        %v2958 = vpop.permute.xlu0 %2957
        %2959 = vrot.lane.b32.xlu0 %v1888, 72
        %v2960 = vpop.permute.xlu0 %2959
        %2961 = vrot.lane.b32.xlu0 %v1889, 72
        %v2962 = vpop.permute.xlu0 %2961
        %2963 = vrot.lane.b32.xlu0 %v1890, 72
        %v2964 = vpop.permute.xlu0 %2963
        %2965 = vrot.lane.b32.xlu0 %v1891, 72
        %v2966 = vpop.permute.xlu0 %2965
        %2967 = vrot.lane.b32.xlu0 %v1892, 72
        %v2968 = vpop.permute.xlu0 %2967
        %2969 = vrot.lane.b32.xlu0 %v1893, 72
        %v2970 = vpop.permute.xlu0 %2969
        %2971 = vrot.lane.b32.xlu0 %v1894, 72
        %v2972 = vpop.permute.xlu0 %2971
        %2973 = vrot.lane.b32.xlu0 %v1895, 72
        %v2974 = vpop.permute.xlu0 %2973
        %v2975 = vsel %vm1349, %v2928, %v2930
        %v2976 = vsel %vm1349, %v2930, %v2932
        %v2977 = vsel %vm1349, %v2932, %v2934
        %v2978 = vsel %vm1349, %v2934, %v2936
        %v2979 = vsel %vm1349, %v2936, %v2938
        %v2980 = vsel %vm1349, %v2940, %v2942
        %v2981 = vsel %vm1349, %v2942, %v2944
        %v2982 = vsel %vm1349, %v2944, %v2946
        %v2983 = vsel %vm1349, %v2946, %v2948
        %v2984 = vsel %vm1349, %v2948, %v2950
        %v2985 = vsel %vm1349, %v2952, %v2954
        %v2986 = vsel %vm1349, %v2954, %v2956
        %v2987 = vsel %vm1349, %v2956, %v2958
        %v2988 = vsel %vm1349, %v2958, %v2960
        %v2989 = vsel %vm1349, %v2960, %v2962
        %v2990 = vsel %vm1349, %v2964, %v2966
        %v2991 = vsel %vm1349, %v2966, %v2968
        %v2992 = vsel %vm1349, %v2968, %v2970
        %v2993 = vsel %vm1349, %v2970, %v2972
        %v2994 = vsel %vm1349, %v2972, %v2974
        %v3016 = vsel %vm2420, %v1928, 0
        %v3019 = vsel %vm2420, %v1929, 0
        %v3022 = vsel %vm2420, %v1930, 0
        %v3025 = vsel %vm2420, %v1931, 0
        %3027 = vmatpush.msra.mxu0 0.0
        %3028 = vmatpush.msra.mxu0 0.0
        %3029 = vmatpush.msra.mxu0 0.0
        %3030 = vmatpush.msra.mxu0 0.0
        %3031 = vmatpush.msra.mxu0 %v2902
        %3032 = vmatpush.msra.mxu0 %v2897
        %3033 = vmatpush.msra.mxu0 %v2892
        %3034 = vmatpush.msra.mxu0 %v2887
        %3035 = vmatpush.msra.mxu0 %v2990
        %3036 = vmatpush.msra.mxu0 %v2985
        %3037 = vmatpush.msra.mxu0 %v2980
        %3038 = vmatpush.msra.mxu0 %v2975
        %3039 = vmatpush.msra.mxu0 %v2838
        %3040 = vmatpush.msra.mxu0 %v2837
        %3041 = vmatpush.msra.mxu0 %v2836
        %3042 = vmatpush.msra.mxu0 %v2835
        %3043 = vmatmul.f32.gmra.mxu0 %v3016
        %v3044 = vpop.f32.mrf.mxu0
        %v3045 = vadd.f32 0.0, %v3044
        %3046 = vmatmul.f32.gmra.mxu0 %v3019
        %v3047 = vpop.f32.mrf.mxu0
        %v3048 = vadd.f32 0.0, %v3047
        %3049 = vmatmul.f32.gmra.mxu0 %v3022
        %v3050 = vpop.f32.mrf.mxu0
        %v3051 = vadd.f32 0.0, %v3050
        %3052 = vmatmul.f32.gmra.mxu0 %v3025
        %v3053 = vpop.f32.mrf.mxu0
        %v3054 = vadd.f32 0.0, %v3053
        %3055 = vdwg.mxu0
        %3056 = vmatpush.msra.mxu0 0.0
        %3057 = vmatpush.msra.mxu0 0.0
        %3058 = vmatpush.msra.mxu0 0.0
        %3059 = vmatpush.msra.mxu0 0.0
        %3060 = vmatpush.msra.mxu0 %v2903
        %3061 = vmatpush.msra.mxu0 %v2898
        %3062 = vmatpush.msra.mxu0 %v2893
        %3063 = vmatpush.msra.mxu0 %v2888
        %3064 = vmatpush.msra.mxu0 %v2991
        %3065 = vmatpush.msra.mxu0 %v2986
        %3066 = vmatpush.msra.mxu0 %v2981
        %3067 = vmatpush.msra.mxu0 %v2976
        %3068 = vmatpush.msra.mxu0 %v2811
        %3069 = vmatpush.msra.mxu0 %v2806
        %3070 = vmatpush.msra.mxu0 %v2801
        %3071 = vmatpush.msra.mxu0 %v2796
        %3072 = vmatmul.f32.gmra.mxu0 %v3016
        %v3073 = vpop.f32.mrf.mxu0
        %v3074 = vadd.f32 0.0, %v3073
        %3075 = vmatmul.f32.gmra.mxu0 %v3019
        %v3076 = vpop.f32.mrf.mxu0
        %v3077 = vadd.f32 0.0, %v3076
        %3078 = vmatmul.f32.gmra.mxu0 %v3022
        %v3079 = vpop.f32.mrf.mxu0
        %v3080 = vadd.f32 0.0, %v3079
        %3081 = vmatmul.f32.gmra.mxu0 %v3025
        %v3082 = vpop.f32.mrf.mxu0
        %v3083 = vadd.f32 0.0, %v3082
        %3084 = vdwg.mxu0
        %3085 = vmatpush.msra.mxu0 0.0
        %3086 = vmatpush.msra.mxu0 0.0
        %3087 = vmatpush.msra.mxu0 0.0
        %3088 = vmatpush.msra.mxu0 0.0
        %3089 = vmatpush.msra.mxu0 %v2904
        %3090 = vmatpush.msra.mxu0 %v2899
        %3091 = vmatpush.msra.mxu0 %v2894
        %3092 = vmatpush.msra.mxu0 %v2889
        %3093 = vmatpush.msra.mxu0 %v2992
        %3094 = vmatpush.msra.mxu0 %v2987
        %3095 = vmatpush.msra.mxu0 %v2982
        %3096 = vmatpush.msra.mxu0 %v2977
        %3097 = vmatpush.msra.mxu0 %v2812
        %3098 = vmatpush.msra.mxu0 %v2807
        %3099 = vmatpush.msra.mxu0 %v2802
        %3100 = vmatpush.msra.mxu0 %v2797
        %3101 = vmatmul.f32.gmra.mxu0 %v3016
        %v3102 = vpop.f32.mrf.mxu0
        %v3103 = vadd.f32 0.0, %v3102
        %3104 = vmatmul.f32.gmra.mxu0 %v3019
        %v3105 = vpop.f32.mrf.mxu0
        %v3106 = vadd.f32 0.0, %v3105
        %3107 = vmatmul.f32.gmra.mxu0 %v3022
        %v3108 = vpop.f32.mrf.mxu0
        %v3109 = vadd.f32 0.0, %v3108
        %3110 = vmatmul.f32.gmra.mxu0 %v3025
        %v3111 = vpop.f32.mrf.mxu0
        %v3112 = vadd.f32 0.0, %v3111
        %3113 = vdwg.mxu0
        %3114 = vmatpush.msra.mxu0 0.0
        %3115 = vmatpush.msra.mxu0 0.0
        %3116 = vmatpush.msra.mxu0 0.0
        %3117 = vmatpush.msra.mxu0 0.0
        %3118 = vmatpush.msra.mxu0 %v2905
        %3119 = vmatpush.msra.mxu0 %v2900
        %3120 = vmatpush.msra.mxu0 %v2895
        %3121 = vmatpush.msra.mxu0 %v2890
        %3122 = vmatpush.msra.mxu0 %v2993
        %3123 = vmatpush.msra.mxu0 %v2988
        %3124 = vmatpush.msra.mxu0 %v2983
        %3125 = vmatpush.msra.mxu0 %v2978
        %3126 = vmatpush.msra.mxu0 %v2813
        %3127 = vmatpush.msra.mxu0 %v2808
        %3128 = vmatpush.msra.mxu0 %v2803
        %3129 = vmatpush.msra.mxu0 %v2798
        %3130 = vmatmul.f32.gmra.mxu0 %v3016
        %v3131 = vpop.f32.mrf.mxu0
        %v3132 = vadd.f32 0.0, %v3131
        %3133 = vmatmul.f32.gmra.mxu0 %v3019
        %v3134 = vpop.f32.mrf.mxu0
        %v3135 = vadd.f32 0.0, %v3134
        %3136 = vmatmul.f32.gmra.mxu0 %v3022
        %v3137 = vpop.f32.mrf.mxu0
        %v3138 = vadd.f32 0.0, %v3137
        %3139 = vmatmul.f32.gmra.mxu0 %v3025
        %v3140 = vpop.f32.mrf.mxu0
        %v3141 = vadd.f32 0.0, %v3140
        %3142 = vdwg.mxu0
        %3143 = vmatpush.msra.mxu0 0.0
        %3144 = vmatpush.msra.mxu0 0.0
        %3145 = vmatpush.msra.mxu0 0.0
        %3146 = vmatpush.msra.mxu0 0.0
        %3147 = vmatpush.msra.mxu0 %v2906
        %3148 = vmatpush.msra.mxu0 %v2901
        %3149 = vmatpush.msra.mxu0 %v2896
        %3150 = vmatpush.msra.mxu0 %v2891
        %3151 = vmatpush.msra.mxu0 %v2994
        %3152 = vmatpush.msra.mxu0 %v2989
        %3153 = vmatpush.msra.mxu0 %v2984
        %3154 = vmatpush.msra.mxu0 %v2979
        %3155 = vmatpush.msra.mxu0 %v2814
        %3156 = vmatpush.msra.mxu0 %v2809
        %3157 = vmatpush.msra.mxu0 %v2804
        %3158 = vmatpush.msra.mxu0 %v2799
        %3159 = vmatmul.f32.gmra.mxu0 %v3016
        %v3160 = vpop.f32.mrf.mxu0
        %v3161 = vadd.f32 0.0, %v3160
        %3162 = vmatmul.f32.gmra.mxu0 %v3019
        %v3163 = vpop.f32.mrf.mxu0
        %v3164 = vadd.f32 0.0, %v3163
        %3165 = vmatmul.f32.gmra.mxu0 %v3022
        %v3166 = vpop.f32.mrf.mxu0
        %v3167 = vadd.f32 0.0, %v3166
        %3168 = vmatmul.f32.gmra.mxu0 %v3025
        %v3169 = vpop.f32.mrf.mxu0
        %v3170 = vadd.f32 0.0, %v3169
        %3171 = vdwg.mxu0
        %v3172 = vadd.f32 %v2608, %v3045
        %v3173 = vadd.f32 %v2637, %v3074
        %v3174 = vadd.f32 %v2666, %v3103
        %v3175 = vadd.f32 %v2695, %v3132
        %v3176 = vadd.f32 %v2724, %v3161
        %v3177 = vadd.f32 %v2611, %v3048
        %v3178 = vadd.f32 %v2640, %v3077
        %v3179 = vadd.f32 %v2669, %v3106
        %v3180 = vadd.f32 %v2698, %v3135
        %v3181 = vadd.f32 %v2727, %v3164
        %v3182 = vadd.f32 %v2614, %v3051
        %v3183 = vadd.f32 %v2643, %v3080
        %v3184 = vadd.f32 %v2672, %v3109
        %v3185 = vadd.f32 %v2701, %v3138
        %v3186 = vadd.f32 %v2730, %v3167
        %v3187 = vadd.f32 %v2617, %v3054
        %v3188 = vadd.f32 %v2646, %v3083
        %v3189 = vadd.f32 %v2675, %v3112
        %v3190 = vadd.f32 %v2704, %v3141
        %v3191 = vadd.f32 %v2733, %v3170
        %3193 = vset.pattern.permute.xlu0 0
        %3194 = vperm.xlu0 %3193, %v1932
        %v3195 = vpop.permute.xlu0 %3194
        %3198 = vset.pattern.permute.xlu0 0
        %3199 = vperm.xlu0 %3198, %v1933
        %v3200 = vpop.permute.xlu0 %3199
        %3203 = vset.pattern.permute.xlu0 0
        %3204 = vperm.xlu0 %3203, %v1934
        %v3205 = vpop.permute.xlu0 %3204
        %3208 = vset.pattern.permute.xlu0 0
        %3209 = vperm.xlu0 %3208, %v1935
        %v3210 = vpop.permute.xlu0 %3209
        %v3212 = vadd.f32 %v3172, %v3195
        %v3213 = vadd.f32 %v3173, %v3195
        %v3214 = vadd.f32 %v3174, %v3195
        %v3215 = vadd.f32 %v3175, %v3195
        %v3216 = vadd.f32 %v3176, %v3195
        %v3217 = vadd.f32 %v3177, %v3200
        %v3218 = vadd.f32 %v3178, %v3200
        %v3219 = vadd.f32 %v3179, %v3200
        %v3220 = vadd.f32 %v3180, %v3200
        %v3221 = vadd.f32 %v3181, %v3200
        %v3222 = vadd.f32 %v3182, %v3205
        %v3223 = vadd.f32 %v3183, %v3205
        %v3224 = vadd.f32 %v3184, %v3205
        %v3225 = vadd.f32 %v3185, %v3205
        %v3226 = vadd.f32 %v3186, %v3205
        %v3227 = vadd.f32 %v3187, %v3210
        %v3228 = vadd.f32 %v3188, %v3210
        %v3229 = vadd.f32 %v3189, %v3210
        %v3230 = vadd.f32 %v3190, %v3210
        %v3231 = vadd.f32 %v3191, %v3210
        %v3232 = vmax.f32 %v3212, 0.0
        %v3233 = vmax.f32 %v3213, 0.0
        %v3234 = vmax.f32 %v3214, 0.0
        %v3235 = vmax.f32 %v3215, 0.0
        %v3236 = vmax.f32 %v3216, 0.0
        %v3237 = vmax.f32 %v3217, 0.0
        %v3238 = vmax.f32 %v3218, 0.0
        %v3239 = vmax.f32 %v3219, 0.0
        %v3240 = vmax.f32 %v3220, 0.0
        %v3241 = vmax.f32 %v3221, 0.0
        %v3242 = vmax.f32 %v3222, 0.0
        %v3243 = vmax.f32 %v3223, 0.0
        %v3244 = vmax.f32 %v3224, 0.0
        %v3245 = vmax.f32 %v3225, 0.0
        %v3246 = vmax.f32 %v3226, 0.0
        %v3247 = vmax.f32 %v3227, 0.0
        %v3248 = vmax.f32 %v3228, 0.0
        %v3249 = vmax.f32 %v3229, 0.0
        %v3250 = vmax.f32 %v3230, 0.0
        %v3251 = vmax.f32 %v3231, 0.0
        %v3252 = vld [vmem:[%s6] sm:$0xff]
        %v3253 = vld [vmem:[%s6 + $0x8] sm:$0xff]
        %v3254 = vld [vmem:[%s6 + $0x10] sm:$0xff]
        %v3255 = vld [vmem:[%s6 + $0x18] sm:$0xff]
        %v3256 = vld [vmem:[%s6 + $0x20] sm:$0xff]
        %v3257 = vld [vmem:[%s6 + $0x28] sm:$0xff]
        %v3258 = vld [vmem:[%s6 + $0x30] sm:$0xff]
        %v3259 = vld [vmem:[%s6 + $0x38] sm:$0xff]
        %v3260 = vld [vmem:[%s6 + $0x40] sm:$0xff]
        %v3261 = vld [vmem:[%s6 + $0x48] sm:$0xff]
        %v3262 = vld [vmem:[%s6 + $0x50] sm:$0xff]
        %v3263 = vld [vmem:[%s6 + $0x58] sm:$0xff]
        %v3264 = vld [vmem:[%s7] sm:$0xff]
        %v3265 = vld [vmem:[%s7 + $0x8] sm:$0xff]
        %v3266 = vld [vmem:[%s7 + $0x10] sm:$0xff]
        %v3267 = vld [vmem:[%s7 + $0x18] sm:$0xff]
        %3272 = vrot.lane.b32.xlu0 %v1900, 26
        %v3273 = vpop.permute.xlu0 %3272
        %3274 = vrot.lane.b32.xlu0 %v1906, 26
        %v3275 = vpop.permute.xlu0 %3274
        %3276 = vrot.lane.b32.xlu0 %v1912, 26
        %v3277 = vpop.permute.xlu0 %3276
        %3278 = vrot.lane.b32.xlu0 %v1918, 26
        %v3279 = vpop.permute.xlu0 %3278
        %3300 = vrot.lane.b32.xlu0 %v1896, 2
        %v3301 = vpop.permute.xlu0 %3300
        %3302 = vrot.lane.b32.xlu0 %v1897, 2
        %v3303 = vpop.permute.xlu0 %3302
        %3304 = vrot.lane.b32.xlu0 %v1898, 2
        %v3305 = vpop.permute.xlu0 %3304
        %3306 = vrot.lane.b32.xlu0 %v1899, 2
        %v3307 = vpop.permute.xlu0 %3306
        %3308 = vrot.lane.b32.xlu0 %v1900, 2
        %v3309 = vpop.permute.xlu0 %3308
        %3310 = vrot.lane.b32.xlu0 %v1902, 2
        %v3311 = vpop.permute.xlu0 %3310
        %3312 = vrot.lane.b32.xlu0 %v1903, 2
        %v3313 = vpop.permute.xlu0 %3312
        %3314 = vrot.lane.b32.xlu0 %v1904, 2
        %v3315 = vpop.permute.xlu0 %3314
        %3316 = vrot.lane.b32.xlu0 %v1905, 2
        %v3317 = vpop.permute.xlu0 %3316
        %3318 = vrot.lane.b32.xlu0 %v1906, 2
        %v3319 = vpop.permute.xlu0 %3318
        %3320 = vrot.lane.b32.xlu0 %v1908, 2
        %v3321 = vpop.permute.xlu0 %3320
        %3322 = vrot.lane.b32.xlu0 %v1909, 2
        %v3323 = vpop.permute.xlu0 %3322
        %3324 = vrot.lane.b32.xlu0 %v1910, 2
        %v3325 = vpop.permute.xlu0 %3324
        %3326 = vrot.lane.b32.xlu0 %v1911, 2
        %v3327 = vpop.permute.xlu0 %3326
        %3328 = vrot.lane.b32.xlu0 %v1912, 2
        %v3329 = vpop.permute.xlu0 %3328
        %3330 = vrot.lane.b32.xlu0 %v1914, 2
        %v3331 = vpop.permute.xlu0 %3330
        %3332 = vrot.lane.b32.xlu0 %v1915, 2
        %v3333 = vpop.permute.xlu0 %3332
        %3334 = vrot.lane.b32.xlu0 %v1916, 2
        %v3335 = vpop.permute.xlu0 %3334
        %3336 = vrot.lane.b32.xlu0 %v1917, 2
        %v3337 = vpop.permute.xlu0 %3336
        %3338 = vrot.lane.b32.xlu0 %v1918, 2
        %v3339 = vpop.permute.xlu0 %3338
        %vm3340 = vcmask 15360
        %v3341 = vsel %vm3340, %v3301, %v3303
        %v3342 = vsel %vm3340, %v3303, %v3305
        %v3343 = vsel %vm3340, %v3305, %v3307
        %v3344 = vsel %vm3340, %v3307, %v3309
        %v3345 = vsel %vm3340, %v3311, %v3313
        %v3346 = vsel %vm3340, %v3313, %v3315
        %v3347 = vsel %vm3340, %v3315, %v3317
        %v3348 = vsel %vm3340, %v3317, %v3319
        %v3349 = vsel %vm3340, %v3321, %v3323
        %v3350 = vsel %vm3340, %v3323, %v3325
        %v3351 = vsel %vm3340, %v3325, %v3327
        %v3352 = vsel %vm3340, %v3327, %v3329
        %v3353 = vsel %vm3340, %v3331, %v3333
        %v3354 = vsel %vm3340, %v3333, %v3335
        %v3355 = vsel %vm3340, %v3335, %v3337
        %v3356 = vsel %vm3340, %v3337, %v3339
        %v3377 = vsel %vm3340, %v3273, %v3301
        %v3378 = vsel %vm3340, %v3275, %v3311
        %v3379 = vsel %vm3340, %v3277, %v3321
        %v3380 = vsel %vm3340, %v3279, %v3331
        %3381 = vrot.lane.b32.xlu0 %v1896, 126
        %v3382 = vpop.permute.xlu0 %3381
        %3383 = vrot.lane.b32.xlu0 %v1897, 126
        %v3384 = vpop.permute.xlu0 %3383
        %3385 = vrot.lane.b32.xlu0 %v1898, 126
        %v3386 = vpop.permute.xlu0 %3385
        %3387 = vrot.lane.b32.xlu0 %v1899, 126
        %v3388 = vpop.permute.xlu0 %3387
        %3389 = vrot.lane.b32.xlu0 %v1900, 126
        %v3390 = vpop.permute.xlu0 %3389
        %3391 = vrot.lane.b32.xlu0 %v1902, 126
        %v3392 = vpop.permute.xlu0 %3391
        %3393 = vrot.lane.b32.xlu0 %v1903, 126
        %v3394 = vpop.permute.xlu0 %3393
        %3395 = vrot.lane.b32.xlu0 %v1904, 126
        %v3396 = vpop.permute.xlu0 %3395
        %3397 = vrot.lane.b32.xlu0 %v1905, 126
        %v3398 = vpop.permute.xlu0 %3397
        %3399 = vrot.lane.b32.xlu0 %v1906, 126
        %v3400 = vpop.permute.xlu0 %3399
        %3401 = vrot.lane.b32.xlu0 %v1908, 126
        %v3402 = vpop.permute.xlu0 %3401
        %3403 = vrot.lane.b32.xlu0 %v1909, 126
        %v3404 = vpop.permute.xlu0 %3403
        %3405 = vrot.lane.b32.xlu0 %v1910, 126
        %v3406 = vpop.permute.xlu0 %3405
        %3407 = vrot.lane.b32.xlu0 %v1911, 126
        %v3408 = vpop.permute.xlu0 %3407
        %3409 = vrot.lane.b32.xlu0 %v1912, 126
        %v3410 = vpop.permute.xlu0 %3409
        %3411 = vrot.lane.b32.xlu0 %v1914, 126
        %v3412 = vpop.permute.xlu0 %3411
        %3413 = vrot.lane.b32.xlu0 %v1915, 126
        %v3414 = vpop.permute.xlu0 %3413
        %3415 = vrot.lane.b32.xlu0 %v1916, 126
        %v3416 = vpop.permute.xlu0 %3415
        %3417 = vrot.lane.b32.xlu0 %v1917, 126
        %v3418 = vpop.permute.xlu0 %3417
        %3419 = vrot.lane.b32.xlu0 %v1918, 126
        %v3420 = vpop.permute.xlu0 %3419
        %vm3421 = vcmask 1031168
        %v3422 = vsel %vm3421, %v3382, %v3384
        %v3423 = vsel %vm3421, %v3384, %v3386
        %v3424 = vsel %vm3421, %v3386, %v3388
        %v3425 = vsel %vm3421, %v3388, %v3390
        %v3426 = vsel %vm3421, %v3392, %v3394
        %v3427 = vsel %vm3421, %v3394, %v3396
        %v3428 = vsel %vm3421, %v3396, %v3398
        %v3429 = vsel %vm3421, %v3398, %v3400
        %v3430 = vsel %vm3421, %v3402, %v3404
        %v3431 = vsel %vm3421, %v3404, %v3406
        %v3432 = vsel %vm3421, %v3406, %v3408
        %v3433 = vsel %vm3421, %v3408, %v3410
        %v3434 = vsel %vm3421, %v3412, %v3414
        %v3435 = vsel %vm3421, %v3414, %v3416
        %v3436 = vsel %vm3421, %v3416, %v3418
        %v3437 = vsel %vm3421, %v3418, %v3420
        %3458 = vrot.lane.b32.xlu0 %v1896, 102
        %v3459 = vpop.permute.xlu0 %3458
        %3460 = vrot.lane.b32.xlu0 %v1902, 102
        %v3461 = vpop.permute.xlu0 %3460
        %3462 = vrot.lane.b32.xlu0 %v1908, 102
        %v3463 = vpop.permute.xlu0 %3462
        %3464 = vrot.lane.b32.xlu0 %v1914, 102
        %v3465 = vpop.permute.xlu0 %3464
        %vm3470 = vcmask 834560
        %v3471 = vsel %vm3470, %v3390, %v3459
        %v3472 = vsel %vm3470, %v3400, %v3461
        %v3473 = vsel %vm3470, %v3410, %v3463
        %v3474 = vsel %vm3470, %v3420, %v3465
        %3479 = vrot.lane.b32.xlu0 %v1901, 98
        %v3480 = vpop.permute.xlu0 %3479
        %3481 = vrot.lane.b32.xlu0 %v1907, 98
        %v3482 = vpop.permute.xlu0 %3481
        %3483 = vrot.lane.b32.xlu0 %v1913, 98
        %v3484 = vpop.permute.xlu0 %3483
        %3485 = vrot.lane.b32.xlu0 %v1919, 98
        %v3486 = vpop.permute.xlu0 %3485
        %3491 = vrot.lane.b32.xlu0 %v1896, 74
        %v3492 = vpop.permute.xlu0 %3491
        %3493 = vrot.lane.b32.xlu0 %v1897, 74
        %v3494 = vpop.permute.xlu0 %3493
        %3495 = vrot.lane.b32.xlu0 %v1898, 74
        %v3496 = vpop.permute.xlu0 %3495
        %3497 = vrot.lane.b32.xlu0 %v1899, 74
        %v3498 = vpop.permute.xlu0 %3497
        %3499 = vrot.lane.b32.xlu0 %v1900, 74
        %v3500 = vpop.permute.xlu0 %3499
        %3501 = vrot.lane.b32.xlu0 %v1901, 74
        %v3502 = vpop.permute.xlu0 %3501
        %3503 = vrot.lane.b32.xlu0 %v1902, 74
        %v3504 = vpop.permute.xlu0 %3503
        %3505 = vrot.lane.b32.xlu0 %v1903, 74
        %v3506 = vpop.permute.xlu0 %3505
        %3507 = vrot.lane.b32.xlu0 %v1904, 74
        %v3508 = vpop.permute.xlu0 %3507
        %3509 = vrot.lane.b32.xlu0 %v1905, 74
        %v3510 = vpop.permute.xlu0 %3509
        %3511 = vrot.lane.b32.xlu0 %v1906, 74
        %v3512 = vpop.permute.xlu0 %3511
        %3513 = vrot.lane.b32.xlu0 %v1907, 74
        %v3514 = vpop.permute.xlu0 %3513
        %3515 = vrot.lane.b32.xlu0 %v1908, 74
        %v3516 = vpop.permute.xlu0 %3515
        %3517 = vrot.lane.b32.xlu0 %v1909, 74
        %v3518 = vpop.permute.xlu0 %3517
        %3519 = vrot.lane.b32.xlu0 %v1910, 74
        %v3520 = vpop.permute.xlu0 %3519
        %3521 = vrot.lane.b32.xlu0 %v1911, 74
        %v3522 = vpop.permute.xlu0 %3521
        %3523 = vrot.lane.b32.xlu0 %v1912, 74
        %v3524 = vpop.permute.xlu0 %3523
        %3525 = vrot.lane.b32.xlu0 %v1913, 74
        %v3526 = vpop.permute.xlu0 %3525
        %3527 = vrot.lane.b32.xlu0 %v1914, 74
        %v3528 = vpop.permute.xlu0 %3527
        %3529 = vrot.lane.b32.xlu0 %v1915, 74
        %v3530 = vpop.permute.xlu0 %3529
        %3531 = vrot.lane.b32.xlu0 %v1916, 74
        %v3532 = vpop.permute.xlu0 %3531
        %3533 = vrot.lane.b32.xlu0 %v1917, 74
        %v3534 = vpop.permute.xlu0 %3533
        %3535 = vrot.lane.b32.xlu0 %v1918, 74
        %v3536 = vpop.permute.xlu0 %3535
        %3537 = vrot.lane.b32.xlu0 %v1919, 74
        %v3538 = vpop.permute.xlu0 %3537
        %vm3539 = vcmask 605184
        %v3540 = vsel %vm3539, %v3492, %v3494
        %v3541 = vsel %vm3539, %v3494, %v3496
        %v3542 = vsel %vm3539, %v3496, %v3498
        %v3543 = vsel %vm3539, %v3498, %v3500
        %v3544 = vsel %vm3539, %v3500, %v3502
        %v3545 = vsel %vm3539, %v3504, %v3506
        %v3546 = vsel %vm3539, %v3506, %v3508
        %v3547 = vsel %vm3539, %v3508, %v3510
        %v3548 = vsel %vm3539, %v3510, %v3512
        %v3549 = vsel %vm3539, %v3512, %v3514
        %v3550 = vsel %vm3539, %v3516, %v3518
        %v3551 = vsel %vm3539, %v3518, %v3520
        %v3552 = vsel %vm3539, %v3520, %v3522
        %v3553 = vsel %vm3539, %v3522, %v3524
        %v3554 = vsel %vm3539, %v3524, %v3526
        %v3555 = vsel %vm3539, %v3528, %v3530
        %v3556 = vsel %vm3539, %v3530, %v3532
        %v3557 = vsel %vm3539, %v3532, %v3534
        %v3558 = vsel %vm3539, %v3534, %v3536
        %v3559 = vsel %vm3539, %v3536, %v3538
        %v3580 = vsel %vm3340, %v3480, %v3540
        %v3581 = vsel %vm3340, %v3482, %v3545
        %v3582 = vsel %vm3340, %v3484, %v3550
        %v3583 = vsel %vm3340, %v3486, %v3555
        %3584 = vrot.lane.b32.xlu0 %v1896, 70
        %v3585 = vpop.permute.xlu0 %3584
        %3586 = vrot.lane.b32.xlu0 %v1897, 70
        %v3587 = vpop.permute.xlu0 %3586
        %3588 = vrot.lane.b32.xlu0 %v1898, 70
        %v3589 = vpop.permute.xlu0 %3588
        %3590 = vrot.lane.b32.xlu0 %v1899, 70
        %v3591 = vpop.permute.xlu0 %3590
        %3592 = vrot.lane.b32.xlu0 %v1900, 70
        %v3593 = vpop.permute.xlu0 %3592
        %3594 = vrot.lane.b32.xlu0 %v1901, 70
        %v3595 = vpop.permute.xlu0 %3594
        %3596 = vrot.lane.b32.xlu0 %v1902, 70
        %v3597 = vpop.permute.xlu0 %3596
        %3598 = vrot.lane.b32.xlu0 %v1903, 70
        %v3599 = vpop.permute.xlu0 %3598
        %3600 = vrot.lane.b32.xlu0 %v1904, 70
        %v3601 = vpop.permute.xlu0 %3600
        %3602 = vrot.lane.b32.xlu0 %v1905, 70
        %v3603 = vpop.permute.xlu0 %3602
        %3604 = vrot.lane.b32.xlu0 %v1906, 70
        %v3605 = vpop.permute.xlu0 %3604
        %3606 = vrot.lane.b32.xlu0 %v1907, 70
        %v3607 = vpop.permute.xlu0 %3606
        %3608 = vrot.lane.b32.xlu0 %v1908, 70
        %v3609 = vpop.permute.xlu0 %3608
        %3610 = vrot.lane.b32.xlu0 %v1909, 70
        %v3611 = vpop.permute.xlu0 %3610
        %3612 = vrot.lane.b32.xlu0 %v1910, 70
        %v3613 = vpop.permute.xlu0 %3612
        %3614 = vrot.lane.b32.xlu0 %v1911, 70
        %v3615 = vpop.permute.xlu0 %3614
        %3616 = vrot.lane.b32.xlu0 %v1912, 70
        %v3617 = vpop.permute.xlu0 %3616
        %3618 = vrot.lane.b32.xlu0 %v1913, 70
        %v3619 = vpop.permute.xlu0 %3618
        %3620 = vrot.lane.b32.xlu0 %v1914, 70
        %v3621 = vpop.permute.xlu0 %3620
        %3622 = vrot.lane.b32.xlu0 %v1915, 70
        %v3623 = vpop.permute.xlu0 %3622
        %3624 = vrot.lane.b32.xlu0 %v1916, 70
        %v3625 = vpop.permute.xlu0 %3624
        %3626 = vrot.lane.b32.xlu0 %v1917, 70
        %v3627 = vpop.permute.xlu0 %3626
        %3628 = vrot.lane.b32.xlu0 %v1918, 70
        %v3629 = vpop.permute.xlu0 %3628
        %3630 = vrot.lane.b32.xlu0 %v1919, 70
        %v3631 = vpop.permute.xlu0 %3630
        %vm3632 = vcmask 572416
        %v3633 = vsel %vm3632, %v3585, %v3587
        %v3634 = vsel %vm3632, %v3587, %v3589
        %v3635 = vsel %vm3632, %v3589, %v3591
        %v3636 = vsel %vm3632, %v3591, %v3593
        %v3637 = vsel %vm3632, %v3593, %v3595
        %v3638 = vsel %vm3632, %v3597, %v3599
        %v3639 = vsel %vm3632, %v3599, %v3601
        %v3640 = vsel %vm3632, %v3601, %v3603
        %v3641 = vsel %vm3632, %v3603, %v3605
        %v3642 = vsel %vm3632, %v3605, %v3607
        %v3643 = vsel %vm3632, %v3609, %v3611
        %v3644 = vsel %vm3632, %v3611, %v3613
        %v3645 = vsel %vm3632, %v3613, %v3615
        %v3646 = vsel %vm3632, %v3615, %v3617
        %v3647 = vsel %vm3632, %v3617, %v3619
        %v3648 = vsel %vm3632, %v3621, %v3623
        %v3649 = vsel %vm3632, %v3623, %v3625
        %v3650 = vsel %vm3632, %v3625, %v3627
        %v3651 = vsel %vm3632, %v3627, %v3629
        %v3652 = vsel %vm3632, %v3629, %v3631
        %3673 = vrot.lane.b32.xlu0 %v1896, 46
        %v3674 = vpop.permute.xlu0 %3673
        %3675 = vrot.lane.b32.xlu0 %v1902, 46
        %v3676 = vpop.permute.xlu0 %3675
        %3677 = vrot.lane.b32.xlu0 %v1908, 46
        %v3678 = vpop.permute.xlu0 %3677
        %3679 = vrot.lane.b32.xlu0 %v1914, 46
        %v3680 = vpop.permute.xlu0 %3679
        %v3685 = vsel %vm3470, %v3637, %v3674
        %v3686 = vsel %vm3470, %v3642, %v3676
        %v3687 = vsel %vm3470, %v3647, %v3678
        %v3688 = vsel %vm3470, %v3652, %v3680
        %3689 = vrot.lane.b32.xlu0 %v1896, 72
        %v3690 = vpop.permute.xlu0 %3689
        %3691 = vrot.lane.b32.xlu0 %v1897, 72
        %v3692 = vpop.permute.xlu0 %3691
        %3693 = vrot.lane.b32.xlu0 %v1898, 72
        %v3694 = vpop.permute.xlu0 %3693
        %3695 = vrot.lane.b32.xlu0 %v1899, 72
        %v3696 = vpop.permute.xlu0 %3695
        %3697 = vrot.lane.b32.xlu0 %v1900, 72
        %v3698 = vpop.permute.xlu0 %3697
        %3699 = vrot.lane.b32.xlu0 %v1901, 72
        %v3700 = vpop.permute.xlu0 %3699
        %3701 = vrot.lane.b32.xlu0 %v1902, 72
        %v3702 = vpop.permute.xlu0 %3701
        %3703 = vrot.lane.b32.xlu0 %v1903, 72
        %v3704 = vpop.permute.xlu0 %3703
        %3705 = vrot.lane.b32.xlu0 %v1904, 72
        %v3706 = vpop.permute.xlu0 %3705
        %3707 = vrot.lane.b32.xlu0 %v1905, 72
        %v3708 = vpop.permute.xlu0 %3707
        %3709 = vrot.lane.b32.xlu0 %v1906, 72
        %v3710 = vpop.permute.xlu0 %3709
        %3711 = vrot.lane.b32.xlu0 %v1907, 72
        %v3712 = vpop.permute.xlu0 %3711
        %3713 = vrot.lane.b32.xlu0 %v1908, 72
        %v3714 = vpop.permute.xlu0 %3713
        %3715 = vrot.lane.b32.xlu0 %v1909, 72
        %v3716 = vpop.permute.xlu0 %3715
        %3717 = vrot.lane.b32.xlu0 %v1910, 72
        %v3718 = vpop.permute.xlu0 %3717
        %3719 = vrot.lane.b32.xlu0 %v1911, 72
        %v3720 = vpop.permute.xlu0 %3719
        %3721 = vrot.lane.b32.xlu0 %v1912, 72
        %v3722 = vpop.permute.xlu0 %3721
        %3723 = vrot.lane.b32.xlu0 %v1913, 72
        %v3724 = vpop.permute.xlu0 %3723
        %3725 = vrot.lane.b32.xlu0 %v1914, 72
        %v3726 = vpop.permute.xlu0 %3725
        %3727 = vrot.lane.b32.xlu0 %v1915, 72
        %v3728 = vpop.permute.xlu0 %3727
        %3729 = vrot.lane.b32.xlu0 %v1916, 72
        %v3730 = vpop.permute.xlu0 %3729
        %3731 = vrot.lane.b32.xlu0 %v1917, 72
        %v3732 = vpop.permute.xlu0 %3731
        %3733 = vrot.lane.b32.xlu0 %v1918, 72
        %v3734 = vpop.permute.xlu0 %3733
        %3735 = vrot.lane.b32.xlu0 %v1919, 72
        %v3736 = vpop.permute.xlu0 %3735
        %v3737 = vsel %vm1349, %v3690, %v3692
        %v3738 = vsel %vm1349, %v3692, %v3694
        %v3739 = vsel %vm1349, %v3694, %v3696
        %v3740 = vsel %vm1349, %v3696, %v3698
        %v3741 = vsel %vm1349, %v3698, %v3700
        %v3742 = vsel %vm1349, %v3702, %v3704
        %v3743 = vsel %vm1349, %v3704, %v3706
        %v3744 = vsel %vm1349, %v3706, %v3708
        %v3745 = vsel %vm1349, %v3708, %v3710
        %v3746 = vsel %vm1349, %v3710, %v3712
        %v3747 = vsel %vm1349, %v3714, %v3716
        %v3748 = vsel %vm1349, %v3716, %v3718
        %v3749 = vsel %vm1349, %v3718, %v3720
        %v3750 = vsel %vm1349, %v3720, %v3722
        %v3751 = vsel %vm1349, %v3722, %v3724
        %v3752 = vsel %vm1349, %v3726, %v3728
        %v3753 = vsel %vm1349, %v3728, %v3730
        %v3754 = vsel %vm1349, %v3730, %v3732
        %v3755 = vsel %vm1349, %v3732, %v3734
        %v3756 = vsel %vm1349, %v3734, %v3736
        %v3778 = vsel %vm2420, %v3256, 0
        %v3781 = vsel %vm2420, %v3257, 0
        %v3784 = vsel %vm2420, %v3258, 0
        %v3787 = vsel %vm2420, %v3259, 0
        %3789 = vmatpush.msra.mxu0 0.0
        %3790 = vmatpush.msra.mxu0 0.0
        %3791 = vmatpush.msra.mxu0 0.0
        %3792 = vmatpush.msra.mxu0 0.0
        %3793 = vmatpush.msra.mxu0 %v3648
        %3794 = vmatpush.msra.mxu0 %v3643
        %3795 = vmatpush.msra.mxu0 %v3638
        %3796 = vmatpush.msra.mxu0 %v3633
        %3797 = vmatpush.msra.mxu0 %v3752
        %3798 = vmatpush.msra.mxu0 %v3747
        %3799 = vmatpush.msra.mxu0 %v3742
        %3800 = vmatpush.msra.mxu0 %v3737
        %3801 = vmatpush.msra.mxu0 %v3583
        %3802 = vmatpush.msra.mxu0 %v3582
        %3803 = vmatpush.msra.mxu0 %v3581
        %3804 = vmatpush.msra.mxu0 %v3580
        %3805 = vmatmul.f32.gmra.mxu0 %v3778
        %v3806 = vpop.f32.mrf.mxu0
        %v3807 = vadd.f32 0.0, %v3806
        %3808 = vmatmul.f32.gmra.mxu0 %v3781
        %v3809 = vpop.f32.mrf.mxu0
        %v3810 = vadd.f32 0.0, %v3809
        %3811 = vmatmul.f32.gmra.mxu0 %v3784
        %v3812 = vpop.f32.mrf.mxu0
        %v3813 = vadd.f32 0.0, %v3812
        %3814 = vmatmul.f32.gmra.mxu0 %v3787
        %v3815 = vpop.f32.mrf.mxu0
        %v3816 = vadd.f32 0.0, %v3815
        %3817 = vdwg.mxu0
        %3818 = vmatpush.msra.mxu0 0.0
        %3819 = vmatpush.msra.mxu0 0.0
        %3820 = vmatpush.msra.mxu0 0.0
        %3821 = vmatpush.msra.mxu0 0.0
        %3822 = vmatpush.msra.mxu0 %v3649
        %3823 = vmatpush.msra.mxu0 %v3644
        %3824 = vmatpush.msra.mxu0 %v3639
        %3825 = vmatpush.msra.mxu0 %v3634
        %3826 = vmatpush.msra.mxu0 %v3753
        %3827 = vmatpush.msra.mxu0 %v3748
        %3828 = vmatpush.msra.mxu0 %v3743
        %3829 = vmatpush.msra.mxu0 %v3738
        %3830 = vmatpush.msra.mxu0 %v3556
        %3831 = vmatpush.msra.mxu0 %v3551
        %3832 = vmatpush.msra.mxu0 %v3546
        %3833 = vmatpush.msra.mxu0 %v3541
        %3834 = vmatmul.f32.gmra.mxu0 %v3778
        %v3835 = vpop.f32.mrf.mxu0
        %v3836 = vadd.f32 0.0, %v3835
        %3837 = vmatmul.f32.gmra.mxu0 %v3781
        %v3838 = vpop.f32.mrf.mxu0
        %v3839 = vadd.f32 0.0, %v3838
        %3840 = vmatmul.f32.gmra.mxu0 %v3784
        %v3841 = vpop.f32.mrf.mxu0
        %v3842 = vadd.f32 0.0, %v3841
        %3843 = vmatmul.f32.gmra.mxu0 %v3787
        %v3844 = vpop.f32.mrf.mxu0
        %v3845 = vadd.f32 0.0, %v3844
        %3846 = vdwg.mxu0
        %3847 = vmatpush.msra.mxu0 0.0
        %3848 = vmatpush.msra.mxu0 0.0
        %3849 = vmatpush.msra.mxu0 0.0
        %3850 = vmatpush.msra.mxu0 0.0
        %3851 = vmatpush.msra.mxu0 %v3650
        %3852 = vmatpush.msra.mxu0 %v3645
        %3853 = vmatpush.msra.mxu0 %v3640
        %3854 = vmatpush.msra.mxu0 %v3635
        %3855 = vmatpush.msra.mxu0 %v3754
        %3856 = vmatpush.msra.mxu0 %v3749
        %3857 = vmatpush.msra.mxu0 %v3744
        %3858 = vmatpush.msra.mxu0 %v3739
        %3859 = vmatpush.msra.mxu0 %v3557
        %3860 = vmatpush.msra.mxu0 %v3552
        %3861 = vmatpush.msra.mxu0 %v3547
        %3862 = vmatpush.msra.mxu0 %v3542
        %3863 = vmatmul.f32.gmra.mxu0 %v3778
        %v3864 = vpop.f32.mrf.mxu0
        %v3865 = vadd.f32 0.0, %v3864
        %3866 = vmatmul.f32.gmra.mxu0 %v3781
        %v3867 = vpop.f32.mrf.mxu0
        %v3868 = vadd.f32 0.0, %v3867
        %3869 = vmatmul.f32.gmra.mxu0 %v3784
        %v3870 = vpop.f32.mrf.mxu0
        %v3871 = vadd.f32 0.0, %v3870
        %3872 = vmatmul.f32.gmra.mxu0 %v3787
        %v3873 = vpop.f32.mrf.mxu0
        %v3874 = vadd.f32 0.0, %v3873
        %3875 = vdwg.mxu0
        %3876 = vmatpush.msra.mxu0 0.0
        %3877 = vmatpush.msra.mxu0 0.0
        %3878 = vmatpush.msra.mxu0 0.0
        %3879 = vmatpush.msra.mxu0 0.0
        %3880 = vmatpush.msra.mxu0 %v3651
        %3881 = vmatpush.msra.mxu0 %v3646
        %3882 = vmatpush.msra.mxu0 %v3641
        %3883 = vmatpush.msra.mxu0 %v3636
        %3884 = vmatpush.msra.mxu0 %v3755
        %3885 = vmatpush.msra.mxu0 %v3750
        %3886 = vmatpush.msra.mxu0 %v3745
        %3887 = vmatpush.msra.mxu0 %v3740
        %3888 = vmatpush.msra.mxu0 %v3558
        %3889 = vmatpush.msra.mxu0 %v3553
        %3890 = vmatpush.msra.mxu0 %v3548
        %3891 = vmatpush.msra.mxu0 %v3543
        %3892 = vmatmul.f32.gmra.mxu0 %v3778
        %v3893 = vpop.f32.mrf.mxu0
        %v3894 = vadd.f32 0.0, %v3893
        %3895 = vmatmul.f32.gmra.mxu0 %v3781
        %v3896 = vpop.f32.mrf.mxu0
        %v3897 = vadd.f32 0.0, %v3896
        %3898 = vmatmul.f32.gmra.mxu0 %v3784
        %v3899 = vpop.f32.mrf.mxu0
        %v3900 = vadd.f32 0.0, %v3899
        %3901 = vmatmul.f32.gmra.mxu0 %v3787
        %v3902 = vpop.f32.mrf.mxu0
        %v3903 = vadd.f32 0.0, %v3902
        %3904 = vdwg.mxu0
        %3905 = vmatpush.msra.mxu0 0.0
        %3906 = vmatpush.msra.mxu0 0.0
        %3907 = vmatpush.msra.mxu0 0.0
        %3908 = vmatpush.msra.mxu0 0.0
        %3909 = vmatpush.msra.mxu0 %v3688
        %3910 = vmatpush.msra.mxu0 %v3687
        %3911 = vmatpush.msra.mxu0 %v3686
        %3912 = vmatpush.msra.mxu0 %v3685
        %3913 = vmatpush.msra.mxu0 %v3756
        %3914 = vmatpush.msra.mxu0 %v3751
        %3915 = vmatpush.msra.mxu0 %v3746
        %3916 = vmatpush.msra.mxu0 %v3741
        %3917 = vmatpush.msra.mxu0 %v3559
        %3918 = vmatpush.msra.mxu0 %v3554
        %3919 = vmatpush.msra.mxu0 %v3549
        %3920 = vmatpush.msra.mxu0 %v3544
        %3921 = vmatmul.f32.gmra.mxu0 %v3778
        %v3922 = vpop.f32.mrf.mxu0
        %v3923 = vadd.f32 0.0, %v3922
        %3924 = vmatmul.f32.gmra.mxu0 %v3781
        %v3925 = vpop.f32.mrf.mxu0
        %v3926 = vadd.f32 0.0, %v3925
        %3927 = vmatmul.f32.gmra.mxu0 %v3784
        %v3928 = vpop.f32.mrf.mxu0
        %v3929 = vadd.f32 0.0, %v3928
        %3930 = vmatmul.f32.gmra.mxu0 %v3787
        %v3931 = vpop.f32.mrf.mxu0
        %v3932 = vadd.f32 0.0, %v3931
        %3933 = vdwg.mxu0
        %v3935 = vsel %vm2420, %v3252, 0
        %v3938 = vsel %vm2420, %v3253, 0
        %v3941 = vsel %vm2420, %v3254, 0
        %v3944 = vsel %vm2420, %v3255, 0
        %3946 = vmatpush.msra.mxu0 0.0
        %3947 = vmatpush.msra.mxu0 0.0
        %3948 = vmatpush.msra.mxu0 0.0
        %3949 = vmatpush.msra.mxu0 0.0
        %3950 = vmatpush.msra.mxu0 %v3434
        %3951 = vmatpush.msra.mxu0 %v3430
        %3952 = vmatpush.msra.mxu0 %v3426
        %3953 = vmatpush.msra.mxu0 %v3422
        %3954 = vmatpush.msra.mxu0 %v1914
        %3955 = vmatpush.msra.mxu0 %v1908
        %3956 = vmatpush.msra.mxu0 %v1902
        %3957 = vmatpush.msra.mxu0 %v1896
        %3958 = vmatpush.msra.mxu0 %v3380
        %3959 = vmatpush.msra.mxu0 %v3379
        %3960 = vmatpush.msra.mxu0 %v3378
        %3961 = vmatpush.msra.mxu0 %v3377
        %3962 = vmatmul.f32.gmra.mxu0 %v3935
        %v3963 = vpop.f32.mrf.mxu0
        %v3964 = vadd.f32 %v3807, %v3963
        %3965 = vmatmul.f32.gmra.mxu0 %v3938
        %v3966 = vpop.f32.mrf.mxu0
        %v3967 = vadd.f32 %v3810, %v3966
        %3968 = vmatmul.f32.gmra.mxu0 %v3941
        %v3969 = vpop.f32.mrf.mxu0
        %v3970 = vadd.f32 %v3813, %v3969
        %3971 = vmatmul.f32.gmra.mxu0 %v3944
        %v3972 = vpop.f32.mrf.mxu0
        %v3973 = vadd.f32 %v3816, %v3972
        %3974 = vdwg.mxu0
        %3975 = vmatpush.msra.mxu0 0.0
        %3976 = vmatpush.msra.mxu0 0.0
        %3977 = vmatpush.msra.mxu0 0.0
        %3978 = vmatpush.msra.mxu0 0.0
        %3979 = vmatpush.msra.mxu0 %v3435
        %3980 = vmatpush.msra.mxu0 %v3431
        %3981 = vmatpush.msra.mxu0 %v3427
        %3982 = vmatpush.msra.mxu0 %v3423
        %3983 = vmatpush.msra.mxu0 %v1915
        %3984 = vmatpush.msra.mxu0 %v1909
        %3985 = vmatpush.msra.mxu0 %v1903
        %3986 = vmatpush.msra.mxu0 %v1897
        %3987 = vmatpush.msra.mxu0 %v3353
        %3988 = vmatpush.msra.mxu0 %v3349
        %3989 = vmatpush.msra.mxu0 %v3345
        %3990 = vmatpush.msra.mxu0 %v3341
        %3991 = vmatmul.f32.gmra.mxu0 %v3935
        %v3992 = vpop.f32.mrf.mxu0
        %v3993 = vadd.f32 %v3836, %v3992
        %3994 = vmatmul.f32.gmra.mxu0 %v3938
        %v3995 = vpop.f32.mrf.mxu0
        %v3996 = vadd.f32 %v3839, %v3995
        %3997 = vmatmul.f32.gmra.mxu0 %v3941
        %v3998 = vpop.f32.mrf.mxu0
        %v3999 = vadd.f32 %v3842, %v3998
        %4000 = vmatmul.f32.gmra.mxu0 %v3944
        %v4001 = vpop.f32.mrf.mxu0
        %v4002 = vadd.f32 %v3845, %v4001
        %4003 = vdwg.mxu0
        %4004 = vmatpush.msra.mxu0 0.0
        %4005 = vmatpush.msra.mxu0 0.0
        %4006 = vmatpush.msra.mxu0 0.0
        %4007 = vmatpush.msra.mxu0 0.0
        %4008 = vmatpush.msra.mxu0 %v3436
        %4009 = vmatpush.msra.mxu0 %v3432
        %4010 = vmatpush.msra.mxu0 %v3428
        %4011 = vmatpush.msra.mxu0 %v3424
        %4012 = vmatpush.msra.mxu0 %v1916
        %4013 = vmatpush.msra.mxu0 %v1910
        %4014 = vmatpush.msra.mxu0 %v1904
        %4015 = vmatpush.msra.mxu0 %v1898
        %4016 = vmatpush.msra.mxu0 %v3354
        %4017 = vmatpush.msra.mxu0 %v3350
        %4018 = vmatpush.msra.mxu0 %v3346
        %4019 = vmatpush.msra.mxu0 %v3342
        %4020 = vmatmul.f32.gmra.mxu0 %v3935
        %v4021 = vpop.f32.mrf.mxu0
        %v4022 = vadd.f32 %v3865, %v4021
        %4023 = vmatmul.f32.gmra.mxu0 %v3938
        %v4024 = vpop.f32.mrf.mxu0
        %v4025 = vadd.f32 %v3868, %v4024
        %4026 = vmatmul.f32.gmra.mxu0 %v3941
        %v4027 = vpop.f32.mrf.mxu0
        %v4028 = vadd.f32 %v3871, %v4027
        %4029 = vmatmul.f32.gmra.mxu0 %v3944
        %v4030 = vpop.f32.mrf.mxu0
        %v4031 = vadd.f32 %v3874, %v4030
        %4032 = vdwg.mxu0
        %4033 = vmatpush.msra.mxu0 0.0
        %4034 = vmatpush.msra.mxu0 0.0
        %4035 = vmatpush.msra.mxu0 0.0
        %4036 = vmatpush.msra.mxu0 0.0
        %4037 = vmatpush.msra.mxu0 %v3437
        %4038 = vmatpush.msra.mxu0 %v3433
        %4039 = vmatpush.msra.mxu0 %v3429
        %4040 = vmatpush.msra.mxu0 %v3425
        %4041 = vmatpush.msra.mxu0 %v1917
        %4042 = vmatpush.msra.mxu0 %v1911
        %4043 = vmatpush.msra.mxu0 %v1905
        %4044 = vmatpush.msra.mxu0 %v1899
        %4045 = vmatpush.msra.mxu0 %v3355
        %4046 = vmatpush.msra.mxu0 %v3351
        %4047 = vmatpush.msra.mxu0 %v3347
        %4048 = vmatpush.msra.mxu0 %v3343
        %4049 = vmatmul.f32.gmra.mxu0 %v3935
        %v4050 = vpop.f32.mrf.mxu0
        %v4051 = vadd.f32 %v3894, %v4050
        %4052 = vmatmul.f32.gmra.mxu0 %v3938
        %v4053 = vpop.f32.mrf.mxu0
        %v4054 = vadd.f32 %v3897, %v4053
        %4055 = vmatmul.f32.gmra.mxu0 %v3941
        %v4056 = vpop.f32.mrf.mxu0
        %v4057 = vadd.f32 %v3900, %v4056
        %4058 = vmatmul.f32.gmra.mxu0 %v3944
        %v4059 = vpop.f32.mrf.mxu0
        %v4060 = vadd.f32 %v3903, %v4059
        %4061 = vdwg.mxu0
        %4062 = vmatpush.msra.mxu0 0.0
        %4063 = vmatpush.msra.mxu0 0.0
        %4064 = vmatpush.msra.mxu0 0.0
        %4065 = vmatpush.msra.mxu0 0.0
        %4066 = vmatpush.msra.mxu0 %v3474
        %4067 = vmatpush.msra.mxu0 %v3473
        %4068 = vmatpush.msra.mxu0 %v3472
        %4069 = vmatpush.msra.mxu0 %v3471
        %4070 = vmatpush.msra.mxu0 %v1918
        %4071 = vmatpush.msra.mxu0 %v1912
        %4072 = vmatpush.msra.mxu0 %v1906
        %4073 = vmatpush.msra.mxu0 %v1900
        %4074 = vmatpush.msra.mxu0 %v3356
        %4075 = vmatpush.msra.mxu0 %v3352
        %4076 = vmatpush.msra.mxu0 %v3348
        %4077 = vmatpush.msra.mxu0 %v3344
        %4078 = vmatmul.f32.gmra.mxu0 %v3935
        %v4079 = vpop.f32.mrf.mxu0
        %v4080 = vadd.f32 %v3923, %v4079
        %4081 = vmatmul.f32.gmra.mxu0 %v3938
        %v4082 = vpop.f32.mrf.mxu0
        %v4083 = vadd.f32 %v3926, %v4082
        %4084 = vmatmul.f32.gmra.mxu0 %v3941
        %v4085 = vpop.f32.mrf.mxu0
        %v4086 = vadd.f32 %v3929, %v4085
        %4087 = vmatmul.f32.gmra.mxu0 %v3944
        %v4088 = vpop.f32.mrf.mxu0
        %v4089 = vadd.f32 %v3932, %v4088
        %4090 = vdwg.mxu0
        %4091 = vrot.lane.b32.xlu0 %v1901, 42
        %v4092 = vpop.permute.xlu0 %4091
        %4093 = vrot.lane.b32.xlu0 %v1907, 42
        %v4094 = vpop.permute.xlu0 %4093
        %4095 = vrot.lane.b32.xlu0 %v1913, 42
        %v4096 = vpop.permute.xlu0 %4095
        %4097 = vrot.lane.b32.xlu0 %v1919, 42
        %v4098 = vpop.permute.xlu0 %4097
        %4103 = vrot.lane.b32.xlu0 %v1896, 18
        %v4104 = vpop.permute.xlu0 %4103
        %4105 = vrot.lane.b32.xlu0 %v1897, 18
        %v4106 = vpop.permute.xlu0 %4105
        %4107 = vrot.lane.b32.xlu0 %v1898, 18
        %v4108 = vpop.permute.xlu0 %4107
        %4109 = vrot.lane.b32.xlu0 %v1899, 18
        %v4110 = vpop.permute.xlu0 %4109
        %4111 = vrot.lane.b32.xlu0 %v1900, 18
        %v4112 = vpop.permute.xlu0 %4111
        %4113 = vrot.lane.b32.xlu0 %v1901, 18
        %v4114 = vpop.permute.xlu0 %4113
        %4115 = vrot.lane.b32.xlu0 %v1902, 18
        %v4116 = vpop.permute.xlu0 %4115
        %4117 = vrot.lane.b32.xlu0 %v1903, 18
        %v4118 = vpop.permute.xlu0 %4117
        %4119 = vrot.lane.b32.xlu0 %v1904, 18
        %v4120 = vpop.permute.xlu0 %4119
        %4121 = vrot.lane.b32.xlu0 %v1905, 18
        %v4122 = vpop.permute.xlu0 %4121
        %4123 = vrot.lane.b32.xlu0 %v1906, 18
        %v4124 = vpop.permute.xlu0 %4123
        %4125 = vrot.lane.b32.xlu0 %v1907, 18
        %v4126 = vpop.permute.xlu0 %4125
        %4127 = vrot.lane.b32.xlu0 %v1908, 18
        %v4128 = vpop.permute.xlu0 %4127
        %4129 = vrot.lane.b32.xlu0 %v1909, 18
        %v4130 = vpop.permute.xlu0 %4129
        %4131 = vrot.lane.b32.xlu0 %v1910, 18
        %v4132 = vpop.permute.xlu0 %4131
        %4133 = vrot.lane.b32.xlu0 %v1911, 18
        %v4134 = vpop.permute.xlu0 %4133
        %4135 = vrot.lane.b32.xlu0 %v1912, 18
        %v4136 = vpop.permute.xlu0 %4135
        %4137 = vrot.lane.b32.xlu0 %v1913, 18
        %v4138 = vpop.permute.xlu0 %4137
        %4139 = vrot.lane.b32.xlu0 %v1914, 18
        %v4140 = vpop.permute.xlu0 %4139
        %4141 = vrot.lane.b32.xlu0 %v1915, 18
        %v4142 = vpop.permute.xlu0 %4141
        %4143 = vrot.lane.b32.xlu0 %v1916, 18
        %v4144 = vpop.permute.xlu0 %4143
        %4145 = vrot.lane.b32.xlu0 %v1917, 18
        %v4146 = vpop.permute.xlu0 %4145
        %4147 = vrot.lane.b32.xlu0 %v1918, 18
        %v4148 = vpop.permute.xlu0 %4147
        %4149 = vrot.lane.b32.xlu0 %v1919, 18
        %v4150 = vpop.permute.xlu0 %4149
        %vm4151 = vcmask 146432
        %v4152 = vsel %vm4151, %v4104, %v4106
        %v4153 = vsel %vm4151, %v4106, %v4108
        %v4154 = vsel %vm4151, %v4108, %v4110
        %v4155 = vsel %vm4151, %v4110, %v4112
        %v4156 = vsel %vm4151, %v4112, %v4114
        %v4157 = vsel %vm4151, %v4116, %v4118
        %v4158 = vsel %vm4151, %v4118, %v4120
        %v4159 = vsel %vm4151, %v4120, %v4122
        %v4160 = vsel %vm4151, %v4122, %v4124
        %v4161 = vsel %vm4151, %v4124, %v4126
        %v4162 = vsel %vm4151, %v4128, %v4130
        %v4163 = vsel %vm4151, %v4130, %v4132
        %v4164 = vsel %vm4151, %v4132, %v4134
        %v4165 = vsel %vm4151, %v4134, %v4136
        %v4166 = vsel %vm4151, %v4136, %v4138
        %v4167 = vsel %vm4151, %v4140, %v4142
        %v4168 = vsel %vm4151, %v4142, %v4144
        %v4169 = vsel %vm4151, %v4144, %v4146
        %v4170 = vsel %vm4151, %v4146, %v4148
        %v4171 = vsel %vm4151, %v4148, %v4150
        %v4192 = vsel %vm3340, %v4092, %v4152
        %v4193 = vsel %vm3340, %v4094, %v4157
        %v4194 = vsel %vm3340, %v4096, %v4162
        %v4195 = vsel %vm3340, %v4098, %v4167
        %4196 = vrot.lane.b32.xlu0 %v1896, 14
        %v4197 = vpop.permute.xlu0 %4196
        %4198 = vrot.lane.b32.xlu0 %v1897, 14
        %v4199 = vpop.permute.xlu0 %4198
        %4200 = vrot.lane.b32.xlu0 %v1898, 14
        %v4201 = vpop.permute.xlu0 %4200
        %4202 = vrot.lane.b32.xlu0 %v1899, 14
        %v4203 = vpop.permute.xlu0 %4202
        %4204 = vrot.lane.b32.xlu0 %v1900, 14
        %v4205 = vpop.permute.xlu0 %4204
        %4206 = vrot.lane.b32.xlu0 %v1901, 14
        %v4207 = vpop.permute.xlu0 %4206
        %4208 = vrot.lane.b32.xlu0 %v1902, 14
        %v4209 = vpop.permute.xlu0 %4208
        %4210 = vrot.lane.b32.xlu0 %v1903, 14
        %v4211 = vpop.permute.xlu0 %4210
        %4212 = vrot.lane.b32.xlu0 %v1904, 14
        %v4213 = vpop.permute.xlu0 %4212
        %4214 = vrot.lane.b32.xlu0 %v1905, 14
        %v4215 = vpop.permute.xlu0 %4214
        %4216 = vrot.lane.b32.xlu0 %v1906, 14
        %v4217 = vpop.permute.xlu0 %4216
        %4218 = vrot.lane.b32.xlu0 %v1907, 14
        %v4219 = vpop.permute.xlu0 %4218
        %4220 = vrot.lane.b32.xlu0 %v1908, 14
        %v4221 = vpop.permute.xlu0 %4220
        %4222 = vrot.lane.b32.xlu0 %v1909, 14
        %v4223 = vpop.permute.xlu0 %4222
        %4224 = vrot.lane.b32.xlu0 %v1910, 14
        %v4225 = vpop.permute.xlu0 %4224
        %4226 = vrot.lane.b32.xlu0 %v1911, 14
        %v4227 = vpop.permute.xlu0 %4226
        %4228 = vrot.lane.b32.xlu0 %v1912, 14
        %v4229 = vpop.permute.xlu0 %4228
        %4230 = vrot.lane.b32.xlu0 %v1913, 14
        %v4231 = vpop.permute.xlu0 %4230
        %4232 = vrot.lane.b32.xlu0 %v1914, 14
        %v4233 = vpop.permute.xlu0 %4232
        %4234 = vrot.lane.b32.xlu0 %v1915, 14
        %v4235 = vpop.permute.xlu0 %4234
        %4236 = vrot.lane.b32.xlu0 %v1916, 14
        %v4237 = vpop.permute.xlu0 %4236
        %4238 = vrot.lane.b32.xlu0 %v1917, 14
        %v4239 = vpop.permute.xlu0 %4238
        %4240 = vrot.lane.b32.xlu0 %v1918, 14
        %v4241 = vpop.permute.xlu0 %4240
        %4242 = vrot.lane.b32.xlu0 %v1919, 14
        %v4243 = vpop.permute.xlu0 %4242
        %vm4244 = vcmask 113664
        %v4245 = vsel %vm4244, %v4197, %v4199
        %v4246 = vsel %vm4244, %v4199, %v4201
        %v4247 = vsel %vm4244, %v4201, %v4203
        %v4248 = vsel %vm4244, %v4203, %v4205
        %v4249 = vsel %vm4244, %v4205, %v4207
        %v4250 = vsel %vm4244, %v4209, %v4211
        %v4251 = vsel %vm4244, %v4211, %v4213
        %v4252 = vsel %vm4244, %v4213, %v4215
        %v4253 = vsel %vm4244, %v4215, %v4217
        %v4254 = vsel %vm4244, %v4217, %v4219
        %v4255 = vsel %vm4244, %v4221, %v4223
        %v4256 = vsel %vm4244, %v4223, %v4225
        %v4257 = vsel %vm4244, %v4225, %v4227
        %v4258 = vsel %vm4244, %v4227, %v4229
        %v4259 = vsel %vm4244, %v4229, %v4231
        %v4260 = vsel %vm4244, %v4233, %v4235
        %v4261 = vsel %vm4244, %v4235, %v4237
        %v4262 = vsel %vm4244, %v4237, %v4239
        %v4263 = vsel %vm4244, %v4239, %v4241
        %v4264 = vsel %vm4244, %v4241, %v4243
        %4285 = vrot.lane.b32.xlu0 %v1896, 118
        %v4286 = vpop.permute.xlu0 %4285
        %4287 = vrot.lane.b32.xlu0 %v1902, 118
        %v4288 = vpop.permute.xlu0 %4287
        %4289 = vrot.lane.b32.xlu0 %v1908, 118
        %v4290 = vpop.permute.xlu0 %4289
        %4291 = vrot.lane.b32.xlu0 %v1914, 118
        %v4292 = vpop.permute.xlu0 %4291
        %v4297 = vsel %vm3470, %v4249, %v4286
        %v4298 = vsel %vm3470, %v4254, %v4288
        %v4299 = vsel %vm3470, %v4259, %v4290
        %v4300 = vsel %vm3470, %v4264, %v4292
        %4301 = vrot.lane.b32.xlu0 %v1896, 16
        %v4302 = vpop.permute.xlu0 %4301
        %4303 = vrot.lane.b32.xlu0 %v1897, 16
        %v4304 = vpop.permute.xlu0 %4303
        %4305 = vrot.lane.b32.xlu0 %v1898, 16
        %v4306 = vpop.permute.xlu0 %4305
        %4307 = vrot.lane.b32.xlu0 %v1899, 16
        %v4308 = vpop.permute.xlu0 %4307
        %4309 = vrot.lane.b32.xlu0 %v1900, 16
        %v4310 = vpop.permute.xlu0 %4309
        %4311 = vrot.lane.b32.xlu0 %v1901, 16
        %v4312 = vpop.permute.xlu0 %4311
        %4313 = vrot.lane.b32.xlu0 %v1902, 16
        %v4314 = vpop.permute.xlu0 %4313
        %4315 = vrot.lane.b32.xlu0 %v1903, 16
        %v4316 = vpop.permute.xlu0 %4315
        %4317 = vrot.lane.b32.xlu0 %v1904, 16
        %v4318 = vpop.permute.xlu0 %4317
        %4319 = vrot.lane.b32.xlu0 %v1905, 16
        %v4320 = vpop.permute.xlu0 %4319
        %4321 = vrot.lane.b32.xlu0 %v1906, 16
        %v4322 = vpop.permute.xlu0 %4321
        %4323 = vrot.lane.b32.xlu0 %v1907, 16
        %v4324 = vpop.permute.xlu0 %4323
        %4325 = vrot.lane.b32.xlu0 %v1908, 16
        %v4326 = vpop.permute.xlu0 %4325
        %4327 = vrot.lane.b32.xlu0 %v1909, 16
        %v4328 = vpop.permute.xlu0 %4327
        %4329 = vrot.lane.b32.xlu0 %v1910, 16
        %v4330 = vpop.permute.xlu0 %4329
        %4331 = vrot.lane.b32.xlu0 %v1911, 16
        %v4332 = vpop.permute.xlu0 %4331
        %4333 = vrot.lane.b32.xlu0 %v1912, 16
        %v4334 = vpop.permute.xlu0 %4333
        %4335 = vrot.lane.b32.xlu0 %v1913, 16
        %v4336 = vpop.permute.xlu0 %4335
        %4337 = vrot.lane.b32.xlu0 %v1914, 16
        %v4338 = vpop.permute.xlu0 %4337
        %4339 = vrot.lane.b32.xlu0 %v1915, 16
        %v4340 = vpop.permute.xlu0 %4339
        %4341 = vrot.lane.b32.xlu0 %v1916, 16
        %v4342 = vpop.permute.xlu0 %4341
        %4343 = vrot.lane.b32.xlu0 %v1917, 16
        %v4344 = vpop.permute.xlu0 %4343
        %4345 = vrot.lane.b32.xlu0 %v1918, 16
        %v4346 = vpop.permute.xlu0 %4345
        %4347 = vrot.lane.b32.xlu0 %v1919, 16
        %v4348 = vpop.permute.xlu0 %4347
        %vm4349 = vcmask 130048
        %v4350 = vsel %vm4349, %v4302, %v4304
        %v4351 = vsel %vm4349, %v4304, %v4306
        %v4352 = vsel %vm4349, %v4306, %v4308
        %v4353 = vsel %vm4349, %v4308, %v4310
        %v4354 = vsel %vm4349, %v4310, %v4312
        %v4355 = vsel %vm4349, %v4314, %v4316
        %v4356 = vsel %vm4349, %v4316, %v4318
        %v4357 = vsel %vm4349, %v4318, %v4320
        %v4358 = vsel %vm4349, %v4320, %v4322
        %v4359 = vsel %vm4349, %v4322, %v4324
        %v4360 = vsel %vm4349, %v4326, %v4328
        %v4361 = vsel %vm4349, %v4328, %v4330
        %v4362 = vsel %vm4349, %v4330, %v4332
        %v4363 = vsel %vm4349, %v4332, %v4334
        %v4364 = vsel %vm4349, %v4334, %v4336
        %v4365 = vsel %vm4349, %v4338, %v4340
        %v4366 = vsel %vm4349, %v4340, %v4342
        %v4367 = vsel %vm4349, %v4342, %v4344
        %v4368 = vsel %vm4349, %v4344, %v4346
        %v4369 = vsel %vm4349, %v4346, %v4348
        %v4391 = vsel %vm2420, %v3260, 0
        %v4394 = vsel %vm2420, %v3261, 0
        %v4397 = vsel %vm2420, %v3262, 0
        %v4400 = vsel %vm2420, %v3263, 0
        %4402 = vmatpush.msra.mxu0 0.0
        %4403 = vmatpush.msra.mxu0 0.0
        %4404 = vmatpush.msra.mxu0 0.0
        %4405 = vmatpush.msra.mxu0 0.0
        %4406 = vmatpush.msra.mxu0 %v4260
        %4407 = vmatpush.msra.mxu0 %v4255
        %4408 = vmatpush.msra.mxu0 %v4250
        %4409 = vmatpush.msra.mxu0 %v4245
        %4410 = vmatpush.msra.mxu0 %v4365
        %4411 = vmatpush.msra.mxu0 %v4360
        %4412 = vmatpush.msra.mxu0 %v4355
        %4413 = vmatpush.msra.mxu0 %v4350
        %4414 = vmatpush.msra.mxu0 %v4195
        %4415 = vmatpush.msra.mxu0 %v4194
        %4416 = vmatpush.msra.mxu0 %v4193
        %4417 = vmatpush.msra.mxu0 %v4192
        %4418 = vmatmul.f32.gmra.mxu0 %v4391
        %v4419 = vpop.f32.mrf.mxu0
        %v4420 = vadd.f32 0.0, %v4419
        %4421 = vmatmul.f32.gmra.mxu0 %v4394
        %v4422 = vpop.f32.mrf.mxu0
        %v4423 = vadd.f32 0.0, %v4422
        %4424 = vmatmul.f32.gmra.mxu0 %v4397
        %v4425 = vpop.f32.mrf.mxu0
        %v4426 = vadd.f32 0.0, %v4425
        %4427 = vmatmul.f32.gmra.mxu0 %v4400
        %v4428 = vpop.f32.mrf.mxu0
        %v4429 = vadd.f32 0.0, %v4428
        %4430 = vdwg.mxu0
        %4431 = vmatpush.msra.mxu0 0.0
        %4432 = vmatpush.msra.mxu0 0.0
        %4433 = vmatpush.msra.mxu0 0.0
        %4434 = vmatpush.msra.mxu0 0.0
        %4435 = vmatpush.msra.mxu0 %v4261
        %4436 = vmatpush.msra.mxu0 %v4256
        %4437 = vmatpush.msra.mxu0 %v4251
        %4438 = vmatpush.msra.mxu0 %v4246
        %4439 = vmatpush.msra.mxu0 %v4366
        %4440 = vmatpush.msra.mxu0 %v4361
        %4441 = vmatpush.msra.mxu0 %v4356
        %4442 = vmatpush.msra.mxu0 %v4351
        %4443 = vmatpush.msra.mxu0 %v4168
        %4444 = vmatpush.msra.mxu0 %v4163
        %4445 = vmatpush.msra.mxu0 %v4158
        %4446 = vmatpush.msra.mxu0 %v4153
        %4447 = vmatmul.f32.gmra.mxu0 %v4391
        %v4448 = vpop.f32.mrf.mxu0
        %v4449 = vadd.f32 0.0, %v4448
        %4450 = vmatmul.f32.gmra.mxu0 %v4394
        %v4451 = vpop.f32.mrf.mxu0
        %v4452 = vadd.f32 0.0, %v4451
        %4453 = vmatmul.f32.gmra.mxu0 %v4397
        %v4454 = vpop.f32.mrf.mxu0
        %v4455 = vadd.f32 0.0, %v4454
        %4456 = vmatmul.f32.gmra.mxu0 %v4400
        %v4457 = vpop.f32.mrf.mxu0
        %v4458 = vadd.f32 0.0, %v4457
        %4459 = vdwg.mxu0
        %4460 = vmatpush.msra.mxu0 0.0
        %4461 = vmatpush.msra.mxu0 0.0
        %4462 = vmatpush.msra.mxu0 0.0
        %4463 = vmatpush.msra.mxu0 0.0
        %4464 = vmatpush.msra.mxu0 %v4262
        %4465 = vmatpush.msra.mxu0 %v4257
        %4466 = vmatpush.msra.mxu0 %v4252
        %4467 = vmatpush.msra.mxu0 %v4247
        %4468 = vmatpush.msra.mxu0 %v4367
        %4469 = vmatpush.msra.mxu0 %v4362
        %4470 = vmatpush.msra.mxu0 %v4357
        %4471 = vmatpush.msra.mxu0 %v4352
        %4472 = vmatpush.msra.mxu0 %v4169
        %4473 = vmatpush.msra.mxu0 %v4164
        %4474 = vmatpush.msra.mxu0 %v4159
        %4475 = vmatpush.msra.mxu0 %v4154
        %4476 = vmatmul.f32.gmra.mxu0 %v4391
        %v4477 = vpop.f32.mrf.mxu0
        %v4478 = vadd.f32 0.0, %v4477
        %4479 = vmatmul.f32.gmra.mxu0 %v4394
        %v4480 = vpop.f32.mrf.mxu0
        %v4481 = vadd.f32 0.0, %v4480
        %4482 = vmatmul.f32.gmra.mxu0 %v4397
        %v4483 = vpop.f32.mrf.mxu0
        %v4484 = vadd.f32 0.0, %v4483
        %4485 = vmatmul.f32.gmra.mxu0 %v4400
        %v4486 = vpop.f32.mrf.mxu0
        %v4487 = vadd.f32 0.0, %v4486
        %4488 = vdwg.mxu0
        %4489 = vmatpush.msra.mxu0 0.0
        %4490 = vmatpush.msra.mxu0 0.0
        %4491 = vmatpush.msra.mxu0 0.0
        %4492 = vmatpush.msra.mxu0 0.0
        %4493 = vmatpush.msra.mxu0 %v4263
        %4494 = vmatpush.msra.mxu0 %v4258
        %4495 = vmatpush.msra.mxu0 %v4253
        %4496 = vmatpush.msra.mxu0 %v4248
        %4497 = vmatpush.msra.mxu0 %v4368
        %4498 = vmatpush.msra.mxu0 %v4363
        %4499 = vmatpush.msra.mxu0 %v4358
        %4500 = vmatpush.msra.mxu0 %v4353
        %4501 = vmatpush.msra.mxu0 %v4170
        %4502 = vmatpush.msra.mxu0 %v4165
        %4503 = vmatpush.msra.mxu0 %v4160
        %4504 = vmatpush.msra.mxu0 %v4155
        %4505 = vmatmul.f32.gmra.mxu0 %v4391
        %v4506 = vpop.f32.mrf.mxu0
        %v4507 = vadd.f32 0.0, %v4506
        %4508 = vmatmul.f32.gmra.mxu0 %v4394
        %v4509 = vpop.f32.mrf.mxu0
        %v4510 = vadd.f32 0.0, %v4509
        %4511 = vmatmul.f32.gmra.mxu0 %v4397
        %v4512 = vpop.f32.mrf.mxu0
        %v4513 = vadd.f32 0.0, %v4512
        %4514 = vmatmul.f32.gmra.mxu0 %v4400
        %v4515 = vpop.f32.mrf.mxu0
        %v4516 = vadd.f32 0.0, %v4515
        %4517 = vdwg.mxu0
        %4518 = vmatpush.msra.mxu0 0.0
        %4519 = vmatpush.msra.mxu0 0.0
        %4520 = vmatpush.msra.mxu0 0.0
        %4521 = vmatpush.msra.mxu0 0.0
        %4522 = vmatpush.msra.mxu0 %v4300
        %4523 = vmatpush.msra.mxu0 %v4299
        %4524 = vmatpush.msra.mxu0 %v4298
        %4525 = vmatpush.msra.mxu0 %v4297
        %4526 = vmatpush.msra.mxu0 %v4369
        %4527 = vmatpush.msra.mxu0 %v4364
        %4528 = vmatpush.msra.mxu0 %v4359
        %4529 = vmatpush.msra.mxu0 %v4354
        %4530 = vmatpush.msra.mxu0 %v4171
        %4531 = vmatpush.msra.mxu0 %v4166
        %4532 = vmatpush.msra.mxu0 %v4161
        %4533 = vmatpush.msra.mxu0 %v4156
        %4534 = vmatmul.f32.gmra.mxu0 %v4391
        %v4535 = vpop.f32.mrf.mxu0
        %v4536 = vadd.f32 0.0, %v4535
        %4537 = vmatmul.f32.gmra.mxu0 %v4394
        %v4538 = vpop.f32.mrf.mxu0
        %v4539 = vadd.f32 0.0, %v4538
        %4540 = vmatmul.f32.gmra.mxu0 %v4397
        %v4541 = vpop.f32.mrf.mxu0
        %v4542 = vadd.f32 0.0, %v4541
        %4543 = vmatmul.f32.gmra.mxu0 %v4400
        %v4544 = vpop.f32.mrf.mxu0
        %v4545 = vadd.f32 0.0, %v4544
        %4546 = vdwg.mxu0
        %v4547 = vadd.f32 %v3964, %v4420
        %v4548 = vadd.f32 %v3993, %v4449
        %v4549 = vadd.f32 %v4022, %v4478
        %v4550 = vadd.f32 %v4051, %v4507
        %v4551 = vadd.f32 %v4080, %v4536
        %v4552 = vadd.f32 %v3967, %v4423
        %v4553 = vadd.f32 %v3996, %v4452
        %v4554 = vadd.f32 %v4025, %v4481
        %v4555 = vadd.f32 %v4054, %v4510
        %v4556 = vadd.f32 %v4083, %v4539
        %v4557 = vadd.f32 %v3970, %v4426
        %v4558 = vadd.f32 %v3999, %v4455
        %v4559 = vadd.f32 %v4028, %v4484
        %v4560 = vadd.f32 %v4057, %v4513
        %v4561 = vadd.f32 %v4086, %v4542
        %v4562 = vadd.f32 %v3973, %v4429
        %v4563 = vadd.f32 %v4002, %v4458
        %v4564 = vadd.f32 %v4031, %v4487
        %v4565 = vadd.f32 %v4060, %v4516
        %v4566 = vadd.f32 %v4089, %v4545
        %4568 = vset.pattern.permute.xlu0 0
        %4569 = vperm.xlu0 %4568, %v3264
        %v4570 = vpop.permute.xlu0 %4569
        %4573 = vset.pattern.permute.xlu0 0
        %4574 = vperm.xlu0 %4573, %v3265
        %v4575 = vpop.permute.xlu0 %4574
        %4578 = vset.pattern.permute.xlu0 0
        %4579 = vperm.xlu0 %4578, %v3266
        %v4580 = vpop.permute.xlu0 %4579
        %4583 = vset.pattern.permute.xlu0 0
        %4584 = vperm.xlu0 %4583, %v3267
        %v4585 = vpop.permute.xlu0 %4584
        %v4587 = vadd.f32 %v4547, %v4570
        %v4588 = vadd.f32 %v4548, %v4570
        %v4589 = vadd.f32 %v4549, %v4570
        %v4590 = vadd.f32 %v4550, %v4570
        %v4591 = vadd.f32 %v4551, %v4570
        %v4592 = vadd.f32 %v4552, %v4575
        %v4593 = vadd.f32 %v4553, %v4575
        %v4594 = vadd.f32 %v4554, %v4575
        %v4595 = vadd.f32 %v4555, %v4575
        %v4596 = vadd.f32 %v4556, %v4575
        %v4597 = vadd.f32 %v4557, %v4580
        %v4598 = vadd.f32 %v4558, %v4580
        %v4599 = vadd.f32 %v4559, %v4580
        %v4600 = vadd.f32 %v4560, %v4580
        %v4601 = vadd.f32 %v4561, %v4580
        %v4602 = vadd.f32 %v4562, %v4585
        %v4603 = vadd.f32 %v4563, %v4585
        %v4604 = vadd.f32 %v4564, %v4585
        %v4605 = vadd.f32 %v4565, %v4585
        %v4606 = vadd.f32 %v4566, %v4585
        %v4607 = vmax.f32 %v4587, 0.0
        %v4608 = vmax.f32 %v4588, 0.0
        %v4609 = vmax.f32 %v4589, 0.0
        %v4610 = vmax.f32 %v4590, 0.0
        %v4611 = vmax.f32 %v4591, 0.0
        %v4612 = vmax.f32 %v4592, 0.0
        %v4613 = vmax.f32 %v4593, 0.0
        %v4614 = vmax.f32 %v4594, 0.0
        %v4615 = vmax.f32 %v4595, 0.0
        %v4616 = vmax.f32 %v4596, 0.0
        %v4617 = vmax.f32 %v4597, 0.0
        %v4618 = vmax.f32 %v4598, 0.0
        %v4619 = vmax.f32 %v4599, 0.0
        %v4620 = vmax.f32 %v4600, 0.0
        %v4621 = vmax.f32 %v4601, 0.0
        %v4622 = vmax.f32 %v4602, 0.0
        %v4623 = vmax.f32 %v4603, 0.0
        %v4624 = vmax.f32 %v4604, 0.0
        %v4625 = vmax.f32 %v4605, 0.0
        %v4626 = vmax.f32 %v4606, 0.0
        %v4627 = vld [vmem:[%s8] sm:$0xff]
        %v4628 = vld [vmem:[%s8 + $0x8] sm:$0xff]
        %v4629 = vld [vmem:[%s8 + $0x10] sm:$0xff]
        %v4630 = vld [vmem:[%s8 + $0x18] sm:$0xff]
        %v4631 = vld [vmem:[%s8 + $0x20] sm:$0xff]
        %v4632 = vld [vmem:[%s8 + $0x28] sm:$0xff]
        %v4633 = vld [vmem:[%s8 + $0x30] sm:$0xff]
        %v4634 = vld [vmem:[%s8 + $0x38] sm:$0xff]
        %v4635 = vld [vmem:[%s8 + $0x40] sm:$0xff]
        %v4636 = vld [vmem:[%s8 + $0x48] sm:$0xff]
        %v4637 = vld [vmem:[%s8 + $0x50] sm:$0xff]
        %v4638 = vld [vmem:[%s8 + $0x58] sm:$0xff]
        %v4639 = vld [vmem:[%s9] sm:$0xff]
        %v4640 = vld [vmem:[%s9 + $0x8] sm:$0xff]
        %v4641 = vld [vmem:[%s9 + $0x10] sm:$0xff]
        %v4642 = vld [vmem:[%s9 + $0x18] sm:$0xff]
        %4643 = vrot.lane.b32.xlu0 %v553, 98
        %v4644 = vpop.permute.xlu0 %4643
        %4646 = vrot.lane.b32.xlu0 %v548, 2
        %v4647 = vpop.permute.xlu0 %4646
        %4648 = vrot.lane.b32.xlu0 %v549, 2
        %v4649 = vpop.permute.xlu0 %4648
        %4650 = vrot.lane.b32.xlu0 %v550, 2
        %v4651 = vpop.permute.xlu0 %4650
        %4652 = vrot.lane.b32.xlu0 %v551, 2
        %v4653 = vpop.permute.xlu0 %4652
        %4654 = vrot.lane.b32.xlu0 %v552, 2
        %v4655 = vpop.permute.xlu0 %4654
        %4656 = vrot.lane.b32.xlu0 %v553, 2
        %v4657 = vpop.permute.xlu0 %4656
        %v4658 = vsel %vm3340, %v4647, %v4649
        %v4659 = vsel %vm3340, %v4649, %v4651
        %v4660 = vsel %vm3340, %v4651, %v4653
        %v4661 = vsel %vm3340, %v4653, %v4655
        %v4662 = vsel %vm3340, %v4655, %v4657
        %v4669 = vsel %vm3340, %v4644, %v4647
        %4670 = vrot.lane.b32.xlu0 %v548, 126
        %v4671 = vpop.permute.xlu0 %4670
        %4672 = vrot.lane.b32.xlu0 %v549, 126
        %v4673 = vpop.permute.xlu0 %4672
        %4674 = vrot.lane.b32.xlu0 %v550, 126
        %v4675 = vpop.permute.xlu0 %4674
        %4676 = vrot.lane.b32.xlu0 %v551, 126
        %v4677 = vpop.permute.xlu0 %4676
        %4678 = vrot.lane.b32.xlu0 %v552, 126
        %v4679 = vpop.permute.xlu0 %4678
        %4680 = vrot.lane.b32.xlu0 %v553, 126
        %v4681 = vpop.permute.xlu0 %4680
        %v4682 = vsel %vm3421, %v4671, %v4673
        %v4683 = vsel %vm3421, %v4673, %v4675
        %v4684 = vsel %vm3421, %v4675, %v4677
        %v4685 = vsel %vm3421, %v4677, %v4679
        %v4686 = vsel %vm3421, %v4679, %v4681
        %4693 = vrot.lane.b32.xlu0 %v548, 30
        %v4694 = vpop.permute.xlu0 %4693
        %vm4696 = vcmask 244736
        %v4697 = vsel %vm4696, %v4681, %v4694
        %4698 = vrot.lane.b32.xlu0 %v553, 42
        %v4699 = vpop.permute.xlu0 %4698
        %4701 = vrot.lane.b32.xlu0 %v548, 74
        %v4702 = vpop.permute.xlu0 %4701
        %4703 = vrot.lane.b32.xlu0 %v549, 74
        %v4704 = vpop.permute.xlu0 %4703
        %4705 = vrot.lane.b32.xlu0 %v550, 74
        %v4706 = vpop.permute.xlu0 %4705
        %4707 = vrot.lane.b32.xlu0 %v551, 74
        %v4708 = vpop.permute.xlu0 %4707
        %4709 = vrot.lane.b32.xlu0 %v552, 74
        %v4710 = vpop.permute.xlu0 %4709
        %4711 = vrot.lane.b32.xlu0 %v553, 74
        %v4712 = vpop.permute.xlu0 %4711
        %v4713 = vsel %vm3539, %v4702, %v4704
        %v4714 = vsel %vm3539, %v4704, %v4706
        %v4715 = vsel %vm3539, %v4706, %v4708
        %v4716 = vsel %vm3539, %v4708, %v4710
        %v4717 = vsel %vm3539, %v4710, %v4712
        %v4724 = vsel %vm3340, %v4699, %v4713
        %4725 = vrot.lane.b32.xlu0 %v548, 70
        %v4726 = vpop.permute.xlu0 %4725
        %4727 = vrot.lane.b32.xlu0 %v549, 70
        %v4728 = vpop.permute.xlu0 %4727
        %4729 = vrot.lane.b32.xlu0 %v550, 70
        %v4730 = vpop.permute.xlu0 %4729
        %4731 = vrot.lane.b32.xlu0 %v551, 70
        %v4732 = vpop.permute.xlu0 %4731
        %4733 = vrot.lane.b32.xlu0 %v552, 70
        %v4734 = vpop.permute.xlu0 %4733
        %4735 = vrot.lane.b32.xlu0 %v553, 70
        %v4736 = vpop.permute.xlu0 %4735
        %v4737 = vsel %vm3632, %v4726, %v4728
        %v4738 = vsel %vm3632, %v4728, %v4730
        %v4739 = vsel %vm3632, %v4730, %v4732
        %v4740 = vsel %vm3632, %v4732, %v4734
        %v4741 = vsel %vm3632, %v4734, %v4736
        %4748 = vrot.lane.b32.xlu0 %v548, 102
        %v4749 = vpop.permute.xlu0 %4748
        %v4751 = vsel %vm4696, %v4736, %v4749
        %v4754 = vsel %vm731, %v4631, 0
        %v4757 = vsel %vm731, %v4632, 0
        %v4760 = vsel %vm731, %v4633, 0
        %v4763 = vsel %vm731, %v4634, 0
        %4765 = vmatpush.msra.mxu0 0.0
        %4766 = vmatpush.msra.mxu0 0.0
        %4767 = vmatpush.msra.mxu0 0.0
        %4768 = vmatpush.msra.mxu0 0.0
        %4769 = vmatpush.msra.mxu0 0.0
        %4770 = vmatpush.msra.mxu0 0.0
        %4771 = vmatpush.msra.mxu0 0.0
        %4772 = vmatpush.msra.mxu0 0.0
        %4773 = vmatpush.msra.mxu0 0.0
        %4774 = vmatpush.msra.mxu0 0.0
        %4775 = vmatpush.msra.mxu0 0.0
        %4776 = vmatpush.msra.mxu0 0.0
        %4777 = vmatpush.msra.mxu0 0.0
        %4778 = vmatpush.msra.mxu0 %v4737
        %4779 = vmatpush.msra.mxu0 %v1350
        %4780 = vmatpush.msra.mxu0 %v4724
        %4781 = vmatmul.f32.gmra.mxu0 %v4754
        %v4782 = vpop.f32.mrf.mxu0
        %v4783 = vadd.f32 0.0, %v4782
        %4784 = vmatmul.f32.gmra.mxu0 %v4757
        %v4785 = vpop.f32.mrf.mxu0
        %v4786 = vadd.f32 0.0, %v4785
        %4787 = vmatmul.f32.gmra.mxu0 %v4760
        %v4788 = vpop.f32.mrf.mxu0
        %v4789 = vadd.f32 0.0, %v4788
        %4790 = vmatmul.f32.gmra.mxu0 %v4763
        %v4791 = vpop.f32.mrf.mxu0
        %v4792 = vadd.f32 0.0, %v4791
        %4793 = vdwg.mxu0
        %4794 = vmatpush.msra.mxu0 0.0
        %4795 = vmatpush.msra.mxu0 0.0
        %4796 = vmatpush.msra.mxu0 0.0
        %4797 = vmatpush.msra.mxu0 0.0
        %4798 = vmatpush.msra.mxu0 0.0
        %4799 = vmatpush.msra.mxu0 0.0
        %4800 = vmatpush.msra.mxu0 0.0
        %4801 = vmatpush.msra.mxu0 0.0
        %4802 = vmatpush.msra.mxu0 0.0
        %4803 = vmatpush.msra.mxu0 0.0
        %4804 = vmatpush.msra.mxu0 0.0
        %4805 = vmatpush.msra.mxu0 0.0
        %4806 = vmatpush.msra.mxu0 0.0
        %4807 = vmatpush.msra.mxu0 %v4738
        %4808 = vmatpush.msra.mxu0 %v1351
        %4809 = vmatpush.msra.mxu0 %v4714
        %4810 = vmatmul.f32.gmra.mxu0 %v4754
        %v4811 = vpop.f32.mrf.mxu0
        %v4812 = vadd.f32 0.0, %v4811
        %4813 = vmatmul.f32.gmra.mxu0 %v4757
        %v4814 = vpop.f32.mrf.mxu0
        %v4815 = vadd.f32 0.0, %v4814
        %4816 = vmatmul.f32.gmra.mxu0 %v4760
        %v4817 = vpop.f32.mrf.mxu0
        %v4818 = vadd.f32 0.0, %v4817
        %4819 = vmatmul.f32.gmra.mxu0 %v4763
        %v4820 = vpop.f32.mrf.mxu0
        %v4821 = vadd.f32 0.0, %v4820
        %4822 = vdwg.mxu0
        %4823 = vmatpush.msra.mxu0 0.0
        %4824 = vmatpush.msra.mxu0 0.0
        %4825 = vmatpush.msra.mxu0 0.0
        %4826 = vmatpush.msra.mxu0 0.0
        %4827 = vmatpush.msra.mxu0 0.0
        %4828 = vmatpush.msra.mxu0 0.0
        %4829 = vmatpush.msra.mxu0 0.0
        %4830 = vmatpush.msra.mxu0 0.0
        %4831 = vmatpush.msra.mxu0 0.0
        %4832 = vmatpush.msra.mxu0 0.0
        %4833 = vmatpush.msra.mxu0 0.0
        %4834 = vmatpush.msra.mxu0 0.0
        %4835 = vmatpush.msra.mxu0 0.0
        %4836 = vmatpush.msra.mxu0 %v4739
        %4837 = vmatpush.msra.mxu0 %v1352
        %4838 = vmatpush.msra.mxu0 %v4715
        %4839 = vmatmul.f32.gmra.mxu0 %v4754
        %v4840 = vpop.f32.mrf.mxu0
        %v4841 = vadd.f32 0.0, %v4840
        %4842 = vmatmul.f32.gmra.mxu0 %v4757
        %v4843 = vpop.f32.mrf.mxu0
        %v4844 = vadd.f32 0.0, %v4843
        %4845 = vmatmul.f32.gmra.mxu0 %v4760
        %v4846 = vpop.f32.mrf.mxu0
        %v4847 = vadd.f32 0.0, %v4846
        %4848 = vmatmul.f32.gmra.mxu0 %v4763
        %v4849 = vpop.f32.mrf.mxu0
        %v4850 = vadd.f32 0.0, %v4849
        %4851 = vdwg.mxu0
        %4852 = vmatpush.msra.mxu0 0.0
        %4853 = vmatpush.msra.mxu0 0.0
        %4854 = vmatpush.msra.mxu0 0.0
        %4855 = vmatpush.msra.mxu0 0.0
        %4856 = vmatpush.msra.mxu0 0.0
        %4857 = vmatpush.msra.mxu0 0.0
        %4858 = vmatpush.msra.mxu0 0.0
        %4859 = vmatpush.msra.mxu0 0.0
        %4860 = vmatpush.msra.mxu0 0.0
        %4861 = vmatpush.msra.mxu0 0.0
        %4862 = vmatpush.msra.mxu0 0.0
        %4863 = vmatpush.msra.mxu0 0.0
        %4864 = vmatpush.msra.mxu0 0.0
        %4865 = vmatpush.msra.mxu0 %v4740
        %4866 = vmatpush.msra.mxu0 %v1353
        %4867 = vmatpush.msra.mxu0 %v4716
        %4868 = vmatmul.f32.gmra.mxu0 %v4754
        %v4869 = vpop.f32.mrf.mxu0
        %v4870 = vadd.f32 0.0, %v4869
        %4871 = vmatmul.f32.gmra.mxu0 %v4757
        %v4872 = vpop.f32.mrf.mxu0
        %v4873 = vadd.f32 0.0, %v4872
        %4874 = vmatmul.f32.gmra.mxu0 %v4760
        %v4875 = vpop.f32.mrf.mxu0
        %v4876 = vadd.f32 0.0, %v4875
        %4877 = vmatmul.f32.gmra.mxu0 %v4763
        %v4878 = vpop.f32.mrf.mxu0
        %v4879 = vadd.f32 0.0, %v4878
        %4880 = vdwg.mxu0
        %4881 = vmatpush.msra.mxu0 0.0
        %4882 = vmatpush.msra.mxu0 0.0
        %4883 = vmatpush.msra.mxu0 0.0
        %4884 = vmatpush.msra.mxu0 0.0
        %4885 = vmatpush.msra.mxu0 0.0
        %4886 = vmatpush.msra.mxu0 0.0
        %4887 = vmatpush.msra.mxu0 0.0
        %4888 = vmatpush.msra.mxu0 0.0
        %4889 = vmatpush.msra.mxu0 0.0
        %4890 = vmatpush.msra.mxu0 0.0
        %4891 = vmatpush.msra.mxu0 0.0
        %4892 = vmatpush.msra.mxu0 0.0
        %4893 = vmatpush.msra.mxu0 0.0
        %4894 = vmatpush.msra.mxu0 %v4741
        %4895 = vmatpush.msra.mxu0 %v1354
        %4896 = vmatpush.msra.mxu0 %v4717
        %4897 = vmatmul.f32.gmra.mxu0 %v4754
        %v4898 = vpop.f32.mrf.mxu0
        %v4899 = vadd.f32 0.0, %v4898
        %4900 = vmatmul.f32.gmra.mxu0 %v4757
        %v4901 = vpop.f32.mrf.mxu0
        %v4902 = vadd.f32 0.0, %v4901
        %4903 = vmatmul.f32.gmra.mxu0 %v4760
        %v4904 = vpop.f32.mrf.mxu0
        %v4905 = vadd.f32 0.0, %v4904
        %4906 = vmatmul.f32.gmra.mxu0 %v4763
        %v4907 = vpop.f32.mrf.mxu0
        %v4908 = vadd.f32 0.0, %v4907
        %4909 = vdwg.mxu0
        %4910 = vmatpush.msra.mxu0 0.0
        %4911 = vmatpush.msra.mxu0 0.0
        %4912 = vmatpush.msra.mxu0 0.0
        %4913 = vmatpush.msra.mxu0 0.0
        %4914 = vmatpush.msra.mxu0 0.0
        %4915 = vmatpush.msra.mxu0 0.0
        %4916 = vmatpush.msra.mxu0 0.0
        %4917 = vmatpush.msra.mxu0 0.0
        %4918 = vmatpush.msra.mxu0 0.0
        %4919 = vmatpush.msra.mxu0 0.0
        %4920 = vmatpush.msra.mxu0 0.0
        %4921 = vmatpush.msra.mxu0 0.0
        %4922 = vmatpush.msra.mxu0 0.0
        %4923 = vmatpush.msra.mxu0 %v4751
        %4924 = vmatpush.msra.mxu0 %v1346
        %4925 = vmatpush.msra.mxu0 %v4712
        %4926 = vmatmul.f32.gmra.mxu0 %v4754
        %v4927 = vpop.f32.mrf.mxu0
        %v4928 = vadd.f32 0.0, %v4927
        %4929 = vmatmul.f32.gmra.mxu0 %v4757
        %v4930 = vpop.f32.mrf.mxu0
        %v4931 = vadd.f32 0.0, %v4930
        %4932 = vmatmul.f32.gmra.mxu0 %v4760
        %v4933 = vpop.f32.mrf.mxu0
        %v4934 = vadd.f32 0.0, %v4933
        %4935 = vmatmul.f32.gmra.mxu0 %v4763
        %v4936 = vpop.f32.mrf.mxu0
        %v4937 = vadd.f32 0.0, %v4936
        %4938 = vdwg.mxu0
        %v4940 = vsel %vm731, %v4627, 0
        %v4943 = vsel %vm731, %v4628, 0
        %v4946 = vsel %vm731, %v4629, 0
        %v4949 = vsel %vm731, %v4630, 0
        %4951 = vmatpush.msra.mxu0 0.0
        %4952 = vmatpush.msra.mxu0 0.0
        %4953 = vmatpush.msra.mxu0 0.0
        %4954 = vmatpush.msra.mxu0 0.0
        %4955 = vmatpush.msra.mxu0 0.0
        %4956 = vmatpush.msra.mxu0 0.0
        %4957 = vmatpush.msra.mxu0 0.0
        %4958 = vmatpush.msra.mxu0 0.0
        %4959 = vmatpush.msra.mxu0 0.0
        %4960 = vmatpush.msra.mxu0 0.0
        %4961 = vmatpush.msra.mxu0 0.0
        %4962 = vmatpush.msra.mxu0 0.0
        %4963 = vmatpush.msra.mxu0 0.0
        %4964 = vmatpush.msra.mxu0 %v4682
        %4965 = vmatpush.msra.mxu0 %v548
        %4966 = vmatpush.msra.mxu0 %v4669
        %4967 = vmatmul.f32.gmra.mxu0 %v4940
        %v4968 = vpop.f32.mrf.mxu0
        %v4969 = vadd.f32 %v4783, %v4968
        %4970 = vmatmul.f32.gmra.mxu0 %v4943
        %v4971 = vpop.f32.mrf.mxu0
        %v4972 = vadd.f32 %v4786, %v4971
        %4973 = vmatmul.f32.gmra.mxu0 %v4946
        %v4974 = vpop.f32.mrf.mxu0
        %v4975 = vadd.f32 %v4789, %v4974
        %4976 = vmatmul.f32.gmra.mxu0 %v4949
        %v4977 = vpop.f32.mrf.mxu0
        %v4978 = vadd.f32 %v4792, %v4977
        %4979 = vdwg.mxu0
        %4980 = vmatpush.msra.mxu0 0.0
        %4981 = vmatpush.msra.mxu0 0.0
        %4982 = vmatpush.msra.mxu0 0.0
        %4983 = vmatpush.msra.mxu0 0.0
        %4984 = vmatpush.msra.mxu0 0.0
        %4985 = vmatpush.msra.mxu0 0.0
        %4986 = vmatpush.msra.mxu0 0.0
        %4987 = vmatpush.msra.mxu0 0.0
        %4988 = vmatpush.msra.mxu0 0.0
        %4989 = vmatpush.msra.mxu0 0.0
        %4990 = vmatpush.msra.mxu0 0.0
        %4991 = vmatpush.msra.mxu0 0.0
        %4992 = vmatpush.msra.mxu0 0.0
        %4993 = vmatpush.msra.mxu0 %v4683
        %4994 = vmatpush.msra.mxu0 %v549
        %4995 = vmatpush.msra.mxu0 %v4658
        %4996 = vmatmul.f32.gmra.mxu0 %v4940
        %v4997 = vpop.f32.mrf.mxu0
        %v4998 = vadd.f32 %v4812, %v4997
        %4999 = vmatmul.f32.gmra.mxu0 %v4943
        %v5000 = vpop.f32.mrf.mxu0
        %v5001 = vadd.f32 %v4815, %v5000
        %5002 = vmatmul.f32.gmra.mxu0 %v4946
        %v5003 = vpop.f32.mrf.mxu0
        %v5004 = vadd.f32 %v4818, %v5003
        %5005 = vmatmul.f32.gmra.mxu0 %v4949
        %v5006 = vpop.f32.mrf.mxu0
        %v5007 = vadd.f32 %v4821, %v5006
        %5008 = vdwg.mxu0
        %5009 = vmatpush.msra.mxu0 0.0
        %5010 = vmatpush.msra.mxu0 0.0
        %5011 = vmatpush.msra.mxu0 0.0
        %5012 = vmatpush.msra.mxu0 0.0
        %5013 = vmatpush.msra.mxu0 0.0
        %5014 = vmatpush.msra.mxu0 0.0
        %5015 = vmatpush.msra.mxu0 0.0
        %5016 = vmatpush.msra.mxu0 0.0
        %5017 = vmatpush.msra.mxu0 0.0
        %5018 = vmatpush.msra.mxu0 0.0
        %5019 = vmatpush.msra.mxu0 0.0
        %5020 = vmatpush.msra.mxu0 0.0
        %5021 = vmatpush.msra.mxu0 0.0
        %5022 = vmatpush.msra.mxu0 %v4684
        %5023 = vmatpush.msra.mxu0 %v550
        %5024 = vmatpush.msra.mxu0 %v4659
        %5025 = vmatmul.f32.gmra.mxu0 %v4940
        %v5026 = vpop.f32.mrf.mxu0
        %v5027 = vadd.f32 %v4841, %v5026
        %5028 = vmatmul.f32.gmra.mxu0 %v4943
        %v5029 = vpop.f32.mrf.mxu0
        %v5030 = vadd.f32 %v4844, %v5029
        %5031 = vmatmul.f32.gmra.mxu0 %v4946
        %v5032 = vpop.f32.mrf.mxu0
        %v5033 = vadd.f32 %v4847, %v5032
        %5034 = vmatmul.f32.gmra.mxu0 %v4949
        %v5035 = vpop.f32.mrf.mxu0
        %v5036 = vadd.f32 %v4850, %v5035
        %5037 = vdwg.mxu0
        %5038 = vmatpush.msra.mxu0 0.0
        %5039 = vmatpush.msra.mxu0 0.0
        %5040 = vmatpush.msra.mxu0 0.0
        %5041 = vmatpush.msra.mxu0 0.0
        %5042 = vmatpush.msra.mxu0 0.0
        %5043 = vmatpush.msra.mxu0 0.0
        %5044 = vmatpush.msra.mxu0 0.0
        %5045 = vmatpush.msra.mxu0 0.0
        %5046 = vmatpush.msra.mxu0 0.0
        %5047 = vmatpush.msra.mxu0 0.0
        %5048 = vmatpush.msra.mxu0 0.0
        %5049 = vmatpush.msra.mxu0 0.0
        %5050 = vmatpush.msra.mxu0 0.0
        %5051 = vmatpush.msra.mxu0 %v4685
        %5052 = vmatpush.msra.mxu0 %v551
        %5053 = vmatpush.msra.mxu0 %v4660
        %5054 = vmatmul.f32.gmra.mxu0 %v4940
        %v5055 = vpop.f32.mrf.mxu0
        %v5056 = vadd.f32 %v4870, %v5055
        %5057 = vmatmul.f32.gmra.mxu0 %v4943
        %v5058 = vpop.f32.mrf.mxu0
        %v5059 = vadd.f32 %v4873, %v5058
        %5060 = vmatmul.f32.gmra.mxu0 %v4946
        %v5061 = vpop.f32.mrf.mxu0
        %v5062 = vadd.f32 %v4876, %v5061
        %5063 = vmatmul.f32.gmra.mxu0 %v4949
        %v5064 = vpop.f32.mrf.mxu0
        %v5065 = vadd.f32 %v4879, %v5064
        %5066 = vdwg.mxu0
        %5067 = vmatpush.msra.mxu0 0.0
        %5068 = vmatpush.msra.mxu0 0.0
        %5069 = vmatpush.msra.mxu0 0.0
        %5070 = vmatpush.msra.mxu0 0.0
        %5071 = vmatpush.msra.mxu0 0.0
        %5072 = vmatpush.msra.mxu0 0.0
        %5073 = vmatpush.msra.mxu0 0.0
        %5074 = vmatpush.msra.mxu0 0.0
        %5075 = vmatpush.msra.mxu0 0.0
        %5076 = vmatpush.msra.mxu0 0.0
        %5077 = vmatpush.msra.mxu0 0.0
        %5078 = vmatpush.msra.mxu0 0.0
        %5079 = vmatpush.msra.mxu0 0.0
        %5080 = vmatpush.msra.mxu0 %v4686
        %5081 = vmatpush.msra.mxu0 %v552
        %5082 = vmatpush.msra.mxu0 %v4661
        %5083 = vmatmul.f32.gmra.mxu0 %v4940
        %v5084 = vpop.f32.mrf.mxu0
        %v5085 = vadd.f32 %v4899, %v5084
        %5086 = vmatmul.f32.gmra.mxu0 %v4943
        %v5087 = vpop.f32.mrf.mxu0
        %v5088 = vadd.f32 %v4902, %v5087
        %5089 = vmatmul.f32.gmra.mxu0 %v4946
        %v5090 = vpop.f32.mrf.mxu0
        %v5091 = vadd.f32 %v4905, %v5090
        %5092 = vmatmul.f32.gmra.mxu0 %v4949
        %v5093 = vpop.f32.mrf.mxu0
        %v5094 = vadd.f32 %v4908, %v5093
        %5095 = vdwg.mxu0
        %5096 = vmatpush.msra.mxu0 0.0
        %5097 = vmatpush.msra.mxu0 0.0
        %5098 = vmatpush.msra.mxu0 0.0
        %5099 = vmatpush.msra.mxu0 0.0
        %5100 = vmatpush.msra.mxu0 0.0
        %5101 = vmatpush.msra.mxu0 0.0
        %5102 = vmatpush.msra.mxu0 0.0
        %5103 = vmatpush.msra.mxu0 0.0
        %5104 = vmatpush.msra.mxu0 0.0
        %5105 = vmatpush.msra.mxu0 0.0
        %5106 = vmatpush.msra.mxu0 0.0
        %5107 = vmatpush.msra.mxu0 0.0
        %5108 = vmatpush.msra.mxu0 0.0
        %5109 = vmatpush.msra.mxu0 %v4697
        %5110 = vmatpush.msra.mxu0 %v553
        %5111 = vmatpush.msra.mxu0 %v4662
        %5112 = vmatmul.f32.gmra.mxu0 %v4940
        %v5113 = vpop.f32.mrf.mxu0
        %v5114 = vadd.f32 %v4928, %v5113
        %5115 = vmatmul.f32.gmra.mxu0 %v4943
        %v5116 = vpop.f32.mrf.mxu0
        %v5117 = vadd.f32 %v4931, %v5116
        %5118 = vmatmul.f32.gmra.mxu0 %v4946
        %v5119 = vpop.f32.mrf.mxu0
        %v5120 = vadd.f32 %v4934, %v5119
        %5121 = vmatmul.f32.gmra.mxu0 %v4949
        %v5122 = vpop.f32.mrf.mxu0
        %v5123 = vadd.f32 %v4937, %v5122
        %5124 = vdwg.mxu0
        %5125 = vrot.lane.b32.xlu0 %v554, 114
        %v5126 = vpop.permute.xlu0 %5125
        %5128 = vrot.lane.b32.xlu0 %v548, 18
        %v5129 = vpop.permute.xlu0 %5128
        %5130 = vrot.lane.b32.xlu0 %v549, 18
        %v5131 = vpop.permute.xlu0 %5130
        %5132 = vrot.lane.b32.xlu0 %v550, 18
        %v5133 = vpop.permute.xlu0 %5132
        %5134 = vrot.lane.b32.xlu0 %v551, 18
        %v5135 = vpop.permute.xlu0 %5134
        %5136 = vrot.lane.b32.xlu0 %v552, 18
        %v5137 = vpop.permute.xlu0 %5136
        %5138 = vrot.lane.b32.xlu0 %v553, 18
        %v5139 = vpop.permute.xlu0 %5138
        %5140 = vrot.lane.b32.xlu0 %v554, 18
        %v5141 = vpop.permute.xlu0 %5140
        %v5142 = vsel %vm4151, %v5129, %v5131
        %v5143 = vsel %vm4151, %v5131, %v5133
        %v5144 = vsel %vm4151, %v5133, %v5135
        %v5145 = vsel %vm4151, %v5135, %v5137
        %v5146 = vsel %vm4151, %v5137, %v5139
        %v5147 = vsel %vm4151, %v5139, %v5141
        %v5154 = vsel %vm3340, %v5126, %v5142
        %5155 = vrot.lane.b32.xlu0 %v548, 14
        %v5156 = vpop.permute.xlu0 %5155
        %5157 = vrot.lane.b32.xlu0 %v549, 14
        %v5158 = vpop.permute.xlu0 %5157
        %5159 = vrot.lane.b32.xlu0 %v550, 14
        %v5160 = vpop.permute.xlu0 %5159
        %5161 = vrot.lane.b32.xlu0 %v551, 14
        %v5162 = vpop.permute.xlu0 %5161
        %5163 = vrot.lane.b32.xlu0 %v552, 14
        %v5164 = vpop.permute.xlu0 %5163
        %5165 = vrot.lane.b32.xlu0 %v553, 14
        %v5166 = vpop.permute.xlu0 %5165
        %5167 = vrot.lane.b32.xlu0 %v554, 14
        %v5168 = vpop.permute.xlu0 %5167
        %v5169 = vsel %vm4244, %v5156, %v5158
        %v5170 = vsel %vm4244, %v5158, %v5160
        %v5171 = vsel %vm4244, %v5160, %v5162
        %v5172 = vsel %vm4244, %v5162, %v5164
        %v5173 = vsel %vm4244, %v5164, %v5166
        %v5174 = vsel %vm4244, %v5166, %v5168
        %5181 = vrot.lane.b32.xlu0 %v548, 46
        %v5182 = vpop.permute.xlu0 %5181
        %v5184 = vsel %vm4696, %v5174, %v5182
        %5185 = vrot.lane.b32.xlu0 %v548, 16
        %v5186 = vpop.permute.xlu0 %5185
        %5187 = vrot.lane.b32.xlu0 %v549, 16
        %v5188 = vpop.permute.xlu0 %5187
        %5189 = vrot.lane.b32.xlu0 %v550, 16
        %v5190 = vpop.permute.xlu0 %5189
        %5191 = vrot.lane.b32.xlu0 %v551, 16
        %v5192 = vpop.permute.xlu0 %5191
        %5193 = vrot.lane.b32.xlu0 %v552, 16
        %v5194 = vpop.permute.xlu0 %5193
        %5195 = vrot.lane.b32.xlu0 %v553, 16
        %v5196 = vpop.permute.xlu0 %5195
        %5197 = vrot.lane.b32.xlu0 %v554, 16
        %v5198 = vpop.permute.xlu0 %5197
        %v5199 = vsel %vm4349, %v5186, %v5188
        %v5200 = vsel %vm4349, %v5188, %v5190
        %v5201 = vsel %vm4349, %v5190, %v5192
        %v5202 = vsel %vm4349, %v5192, %v5194
        %v5203 = vsel %vm4349, %v5194, %v5196
        %v5204 = vsel %vm4349, %v5196, %v5198
        %v5212 = vsel %vm731, %v4635, 0
        %v5215 = vsel %vm731, %v4636, 0
        %v5218 = vsel %vm731, %v4637, 0
        %v5221 = vsel %vm731, %v4638, 0
        %5223 = vmatpush.msra.mxu0 0.0
        %5224 = vmatpush.msra.mxu0 0.0
        %5225 = vmatpush.msra.mxu0 0.0
        %5226 = vmatpush.msra.mxu0 0.0
        %5227 = vmatpush.msra.mxu0 0.0
        %5228 = vmatpush.msra.mxu0 0.0
        %5229 = vmatpush.msra.mxu0 0.0
        %5230 = vmatpush.msra.mxu0 0.0
        %5231 = vmatpush.msra.mxu0 0.0
        %5232 = vmatpush.msra.mxu0 0.0
        %5233 = vmatpush.msra.mxu0 0.0
        %5234 = vmatpush.msra.mxu0 0.0
        %5235 = vmatpush.msra.mxu0 0.0
        %5236 = vmatpush.msra.mxu0 %v5169
        %5237 = vmatpush.msra.mxu0 %v5199
        %5238 = vmatpush.msra.mxu0 %v5154
        %5239 = vmatmul.f32.gmra.mxu0 %v5212
        %v5240 = vpop.f32.mrf.mxu0
        %v5241 = vadd.f32 0.0, %v5240
        %5242 = vmatmul.f32.gmra.mxu0 %v5215
        %v5243 = vpop.f32.mrf.mxu0
        %v5244 = vadd.f32 0.0, %v5243
        %5245 = vmatmul.f32.gmra.mxu0 %v5218
        %v5246 = vpop.f32.mrf.mxu0
        %v5247 = vadd.f32 0.0, %v5246
        %5248 = vmatmul.f32.gmra.mxu0 %v5221
        %v5249 = vpop.f32.mrf.mxu0
        %v5250 = vadd.f32 0.0, %v5249
        %5251 = vdwg.mxu0
        %5252 = vmatpush.msra.mxu0 0.0
        %5253 = vmatpush.msra.mxu0 0.0
        %5254 = vmatpush.msra.mxu0 0.0
        %5255 = vmatpush.msra.mxu0 0.0
        %5256 = vmatpush.msra.mxu0 0.0
        %5257 = vmatpush.msra.mxu0 0.0
        %5258 = vmatpush.msra.mxu0 0.0
        %5259 = vmatpush.msra.mxu0 0.0
        %5260 = vmatpush.msra.mxu0 0.0
        %5261 = vmatpush.msra.mxu0 0.0
        %5262 = vmatpush.msra.mxu0 0.0
        %5263 = vmatpush.msra.mxu0 0.0
        %5264 = vmatpush.msra.mxu0 0.0
        %5265 = vmatpush.msra.mxu0 %v5170
        %5266 = vmatpush.msra.mxu0 %v5200
        %5267 = vmatpush.msra.mxu0 %v5143
        %5268 = vmatmul.f32.gmra.mxu0 %v5212
        %v5269 = vpop.f32.mrf.mxu0
        %v5270 = vadd.f32 0.0, %v5269
        %5271 = vmatmul.f32.gmra.mxu0 %v5215
        %v5272 = vpop.f32.mrf.mxu0
        %v5273 = vadd.f32 0.0, %v5272
        %5274 = vmatmul.f32.gmra.mxu0 %v5218
        %v5275 = vpop.f32.mrf.mxu0
        %v5276 = vadd.f32 0.0, %v5275
        %5277 = vmatmul.f32.gmra.mxu0 %v5221
        %v5278 = vpop.f32.mrf.mxu0
        %v5279 = vadd.f32 0.0, %v5278
        %5280 = vdwg.mxu0
        %5281 = vmatpush.msra.mxu0 0.0
        %5282 = vmatpush.msra.mxu0 0.0
        %5283 = vmatpush.msra.mxu0 0.0
        %5284 = vmatpush.msra.mxu0 0.0
        %5285 = vmatpush.msra.mxu0 0.0
        %5286 = vmatpush.msra.mxu0 0.0
        %5287 = vmatpush.msra.mxu0 0.0
        %5288 = vmatpush.msra.mxu0 0.0
        %5289 = vmatpush.msra.mxu0 0.0
        %5290 = vmatpush.msra.mxu0 0.0
        %5291 = vmatpush.msra.mxu0 0.0
        %5292 = vmatpush.msra.mxu0 0.0
        %5293 = vmatpush.msra.mxu0 0.0
        %5294 = vmatpush.msra.mxu0 %v5171
        %5295 = vmatpush.msra.mxu0 %v5201
        %5296 = vmatpush.msra.mxu0 %v5144
        %5297 = vmatmul.f32.gmra.mxu0 %v5212
        %v5298 = vpop.f32.mrf.mxu0
        %v5299 = vadd.f32 0.0, %v5298
        %5300 = vmatmul.f32.gmra.mxu0 %v5215
        %v5301 = vpop.f32.mrf.mxu0
        %v5302 = vadd.f32 0.0, %v5301
        %5303 = vmatmul.f32.gmra.mxu0 %v5218
        %v5304 = vpop.f32.mrf.mxu0
        %v5305 = vadd.f32 0.0, %v5304
        %5306 = vmatmul.f32.gmra.mxu0 %v5221
        %v5307 = vpop.f32.mrf.mxu0
        %v5308 = vadd.f32 0.0, %v5307
        %5309 = vdwg.mxu0
        %5310 = vmatpush.msra.mxu0 0.0
        %5311 = vmatpush.msra.mxu0 0.0
        %5312 = vmatpush.msra.mxu0 0.0
        %5313 = vmatpush.msra.mxu0 0.0
        %5314 = vmatpush.msra.mxu0 0.0
        %5315 = vmatpush.msra.mxu0 0.0
        %5316 = vmatpush.msra.mxu0 0.0
        %5317 = vmatpush.msra.mxu0 0.0
        %5318 = vmatpush.msra.mxu0 0.0
        %5319 = vmatpush.msra.mxu0 0.0
        %5320 = vmatpush.msra.mxu0 0.0
        %5321 = vmatpush.msra.mxu0 0.0
        %5322 = vmatpush.msra.mxu0 0.0
        %5323 = vmatpush.msra.mxu0 %v5172
        %5324 = vmatpush.msra.mxu0 %v5202
        %5325 = vmatpush.msra.mxu0 %v5145
        %5326 = vmatmul.f32.gmra.mxu0 %v5212
        %v5327 = vpop.f32.mrf.mxu0
        %v5328 = vadd.f32 0.0, %v5327
        %5329 = vmatmul.f32.gmra.mxu0 %v5215
        %v5330 = vpop.f32.mrf.mxu0
        %v5331 = vadd.f32 0.0, %v5330
        %5332 = vmatmul.f32.gmra.mxu0 %v5218
        %v5333 = vpop.f32.mrf.mxu0
        %v5334 = vadd.f32 0.0, %v5333
        %5335 = vmatmul.f32.gmra.mxu0 %v5221
        %v5336 = vpop.f32.mrf.mxu0
        %v5337 = vadd.f32 0.0, %v5336
        %5338 = vdwg.mxu0
        %5339 = vmatpush.msra.mxu0 0.0
        %5340 = vmatpush.msra.mxu0 0.0
        %5341 = vmatpush.msra.mxu0 0.0
        %5342 = vmatpush.msra.mxu0 0.0
        %5343 = vmatpush.msra.mxu0 0.0
        %5344 = vmatpush.msra.mxu0 0.0
        %5345 = vmatpush.msra.mxu0 0.0
        %5346 = vmatpush.msra.mxu0 0.0
        %5347 = vmatpush.msra.mxu0 0.0
        %5348 = vmatpush.msra.mxu0 0.0
        %5349 = vmatpush.msra.mxu0 0.0
        %5350 = vmatpush.msra.mxu0 0.0
        %5351 = vmatpush.msra.mxu0 0.0
        %5352 = vmatpush.msra.mxu0 %v5173
        %5353 = vmatpush.msra.mxu0 %v5203
        %5354 = vmatpush.msra.mxu0 %v5146
        %5355 = vmatmul.f32.gmra.mxu0 %v5212
        %v5356 = vpop.f32.mrf.mxu0
        %v5357 = vadd.f32 0.0, %v5356
        %5358 = vmatmul.f32.gmra.mxu0 %v5215
        %v5359 = vpop.f32.mrf.mxu0
        %v5360 = vadd.f32 0.0, %v5359
        %5361 = vmatmul.f32.gmra.mxu0 %v5218
        %v5362 = vpop.f32.mrf.mxu0
        %v5363 = vadd.f32 0.0, %v5362
        %5364 = vmatmul.f32.gmra.mxu0 %v5221
        %v5365 = vpop.f32.mrf.mxu0
        %v5366 = vadd.f32 0.0, %v5365
        %5367 = vdwg.mxu0
        %5368 = vmatpush.msra.mxu0 0.0
        %5369 = vmatpush.msra.mxu0 0.0
        %5370 = vmatpush.msra.mxu0 0.0
        %5371 = vmatpush.msra.mxu0 0.0
        %5372 = vmatpush.msra.mxu0 0.0
        %5373 = vmatpush.msra.mxu0 0.0
        %5374 = vmatpush.msra.mxu0 0.0
        %5375 = vmatpush.msra.mxu0 0.0
        %5376 = vmatpush.msra.mxu0 0.0
        %5377 = vmatpush.msra.mxu0 0.0
        %5378 = vmatpush.msra.mxu0 0.0
        %5379 = vmatpush.msra.mxu0 0.0
        %5380 = vmatpush.msra.mxu0 0.0
        %5381 = vmatpush.msra.mxu0 %v5184
        %5382 = vmatpush.msra.mxu0 %v5204
        %5383 = vmatpush.msra.mxu0 %v5147
        %5384 = vmatmul.f32.gmra.mxu0 %v5212
        %v5385 = vpop.f32.mrf.mxu0
        %v5386 = vadd.f32 0.0, %v5385
        %5387 = vmatmul.f32.gmra.mxu0 %v5215
        %v5388 = vpop.f32.mrf.mxu0
        %v5389 = vadd.f32 0.0, %v5388
        %5390 = vmatmul.f32.gmra.mxu0 %v5218
        %v5391 = vpop.f32.mrf.mxu0
        %v5392 = vadd.f32 0.0, %v5391
        %5393 = vmatmul.f32.gmra.mxu0 %v5221
        %v5394 = vpop.f32.mrf.mxu0
        %v5395 = vadd.f32 0.0, %v5394
        %5396 = vdwg.mxu0
        %v5397 = vadd.f32 %v4969, %v5241
        %v5398 = vadd.f32 %v4998, %v5270
        %v5399 = vadd.f32 %v5027, %v5299
        %v5400 = vadd.f32 %v5056, %v5328
        %v5401 = vadd.f32 %v5085, %v5357
        %v5402 = vadd.f32 %v5114, %v5386
        %v5403 = vadd.f32 %v4972, %v5244
        %v5404 = vadd.f32 %v5001, %v5273
        %v5405 = vadd.f32 %v5030, %v5302
        %v5406 = vadd.f32 %v5059, %v5331
        %v5407 = vadd.f32 %v5088, %v5360
        %v5408 = vadd.f32 %v5117, %v5389
        %v5409 = vadd.f32 %v4975, %v5247
        %v5410 = vadd.f32 %v5004, %v5276
        %v5411 = vadd.f32 %v5033, %v5305
        %v5412 = vadd.f32 %v5062, %v5334
        %v5413 = vadd.f32 %v5091, %v5363
        %v5414 = vadd.f32 %v5120, %v5392
        %v5415 = vadd.f32 %v4978, %v5250
        %v5416 = vadd.f32 %v5007, %v5279
        %v5417 = vadd.f32 %v5036, %v5308
        %v5418 = vadd.f32 %v5065, %v5337
        %v5419 = vadd.f32 %v5094, %v5366
        %v5420 = vadd.f32 %v5123, %v5395
        %5422 = vset.pattern.permute.xlu0 0
        %5423 = vperm.xlu0 %5422, %v4639
        %v5424 = vpop.permute.xlu0 %5423
        %5427 = vset.pattern.permute.xlu0 0
        %5428 = vperm.xlu0 %5427, %v4640
        %v5429 = vpop.permute.xlu0 %5428
        %5432 = vset.pattern.permute.xlu0 0
        %5433 = vperm.xlu0 %5432, %v4641
        %v5434 = vpop.permute.xlu0 %5433
        %5437 = vset.pattern.permute.xlu0 0
        %5438 = vperm.xlu0 %5437, %v4642
        %v5439 = vpop.permute.xlu0 %5438
        %v5441 = vadd.f32 %v5397, %v5424
        %v5442 = vadd.f32 %v5398, %v5424
        %v5443 = vadd.f32 %v5399, %v5424
        %v5444 = vadd.f32 %v5400, %v5424
        %v5445 = vadd.f32 %v5401, %v5424
        %v5446 = vadd.f32 %v5402, %v5424
        %v5447 = vadd.f32 %v5403, %v5429
        %v5448 = vadd.f32 %v5404, %v5429
        %v5449 = vadd.f32 %v5405, %v5429
        %v5450 = vadd.f32 %v5406, %v5429
        %v5451 = vadd.f32 %v5407, %v5429
        %v5452 = vadd.f32 %v5408, %v5429
        %v5453 = vadd.f32 %v5409, %v5434
        %v5454 = vadd.f32 %v5410, %v5434
        %v5455 = vadd.f32 %v5411, %v5434
        %v5456 = vadd.f32 %v5412, %v5434
        %v5457 = vadd.f32 %v5413, %v5434
        %v5458 = vadd.f32 %v5414, %v5434
        %v5459 = vadd.f32 %v5415, %v5439
        %v5460 = vadd.f32 %v5416, %v5439
        %v5461 = vadd.f32 %v5417, %v5439
        %v5462 = vadd.f32 %v5418, %v5439
        %v5463 = vadd.f32 %v5419, %v5439
        %v5464 = vadd.f32 %v5420, %v5439
        %v5465 = vmax.f32 %v5441, 0.0
        %v5466 = vmax.f32 %v5442, 0.0
        %v5467 = vmax.f32 %v5443, 0.0
        %v5468 = vmax.f32 %v5444, 0.0
        %v5469 = vmax.f32 %v5445, 0.0
        %v5470 = vmax.f32 %v5446, 0.0
        %v5471 = vmax.f32 %v5447, 0.0
        %v5472 = vmax.f32 %v5448, 0.0
        %v5473 = vmax.f32 %v5449, 0.0
        %v5474 = vmax.f32 %v5450, 0.0
        %v5475 = vmax.f32 %v5451, 0.0
        %v5476 = vmax.f32 %v5452, 0.0
        %v5477 = vmax.f32 %v5453, 0.0
        %v5478 = vmax.f32 %v5454, 0.0
        %v5479 = vmax.f32 %v5455, 0.0
        %v5480 = vmax.f32 %v5456, 0.0
        %v5481 = vmax.f32 %v5457, 0.0
        %v5482 = vmax.f32 %v5458, 0.0
        %v5483 = vmax.f32 %v5459, 0.0
        %v5484 = vmax.f32 %v5460, 0.0
        %v5485 = vmax.f32 %v5461, 0.0
        %v5486 = vmax.f32 %v5462, 0.0
        %v5487 = vmax.f32 %v5463, 0.0
        %v5488 = vmax.f32 %v5464, 0.0
        %s5489 = ssub.s32 4, %s1823
        %s5490 = smul.u32 %s5489, 28
        %v5491 = vstv %s5490
        %vm5492 = vcmp.ge.s32.totalorder %v1817, %v5491
        %vm5493 = vcmp.ge.s32.totalorder %v1818, %v5491
        %vm5494 = vcmp.ge.s32.totalorder %v1819, %v5491
        %vm5495 = vcmp.ge.s32.totalorder %v1820, %v5491
        %vm5496 = vcmp.ge.s32.totalorder %v1821, %v5491
        %vm5497 = vcmp.ge.s32.totalorder %v1822, %v5491
        %s5498 = sadd.s32 %s5490, 448
        %v5499 = vstv %s5498
        %vm5500 = vcmp.lt.s32.totalorder %v1817, %v5499
        %vm5501 = vcmp.lt.s32.totalorder %v1818, %v5499
        %vm5502 = vcmp.lt.s32.totalorder %v1819, %v5499
        %vm5503 = vcmp.lt.s32.totalorder %v1820, %v5499
        %vm5504 = vcmp.lt.s32.totalorder %v1821, %v5499
        %vm5505 = vcmp.lt.s32.totalorder %v1822, %v5499
        %vm5506 = vmand %vm5492, %vm5500
        %vm5507 = vmand %vm5493, %vm5501
        %vm5508 = vmand %vm5494, %vm5502
        %vm5509 = vmand %vm5495, %vm5503
        %vm5510 = vmand %vm5496, %vm5504
        %vm5511 = vmand %vm5497, %vm5505
        %v5512 = vsel %vm5506, %v1848, 0.0
        %v5513 = vsel %vm5507, %v1849, 0.0
        %v5514 = vsel %vm5508, %v1850, 0.0
        %v5515 = vsel %vm5509, %v1851, 0.0
        %v5516 = vsel %vm5510, %v1852, 0.0
        %v5517 = vsel %vm5511, %v1853, 0.0
        %v5518 = vperm.slane %v5512, 0
        %v5519 = vperm.slane %v5513, 0
        %v5520 = vperm.slane %v5514, 0
        %v5521 = vperm.slane %v5515, 0
        %v5522 = vperm.slane %v5516, 0
        %v5523 = vperm.slane %v5517, 0
        %v5524 = vmul.f32 %v5465, %v5518
        %v5525 = vmul.f32 %v5466, %v5519
        %v5526 = vmul.f32 %v5467, %v5520
        %v5527 = vmul.f32 %v5468, %v5521
        %v5528 = vmul.f32 %v5469, %v5522
        %v5529 = vmul.f32 %v5470, %v5523
        %v5530 = vmul.f32 %v5471, %v5518
        %v5531 = vmul.f32 %v5472, %v5519
        %v5532 = vmul.f32 %v5473, %v5520
        %v5533 = vmul.f32 %v5474, %v5521
        %v5534 = vmul.f32 %v5475, %v5522
        %v5535 = vmul.f32 %v5476, %v5523
        %v5536 = vmul.f32 %v5477, %v5518
        %v5537 = vmul.f32 %v5478, %v5519
        %v5538 = vmul.f32 %v5479, %v5520
        %v5539 = vmul.f32 %v5480, %v5521
        %v5540 = vmul.f32 %v5481, %v5522
        %v5541 = vmul.f32 %v5482, %v5523
        %v5542 = vmul.f32 %v5483, %v5518
        %v5543 = vmul.f32 %v5484, %v5519
        %v5544 = vmul.f32 %v5485, %v5520
        %v5545 = vmul.f32 %v5486, %v5521
        %v5546 = vmul.f32 %v5487, %v5522
        %v5547 = vmul.f32 %v5488, %v5523
        %v5548 = vld [vmem:[%s10] sm:$0xff]
        %v5549 = vld [vmem:[%s10 + $0x8] sm:$0xff]
        %v5550 = vld [vmem:[%s10 + $0x10] sm:$0xff]
        %v5551 = vld [vmem:[%s10 + $0x18] sm:$0xff]
        %v5552 = vld [vmem:[%s10 + $0x20] sm:$0xff]
        %v5553 = vld [vmem:[%s10 + $0x28] sm:$0xff]
        %v5554 = vld [vmem:[%s10 + $0x30] sm:$0xff]
        %v5555 = vld [vmem:[%s10 + $0x38] sm:$0xff]
        %v5556 = vld [vmem:[%s10 + $0x40] sm:$0xff]
        %v5557 = vld [vmem:[%s10 + $0x48] sm:$0xff]
        %v5558 = vld [vmem:[%s10 + $0x50] sm:$0xff]
        %v5559 = vld [vmem:[%s10 + $0x58] sm:$0xff]
        %v5560 = vld [vmem:[%s11] sm:$0xff]
        %v5561 = vld [vmem:[%s11 + $0x8] sm:$0xff]
        %v5562 = vld [vmem:[%s11 + $0x10] sm:$0xff]
        %v5563 = vld [vmem:[%s11 + $0x18] sm:$0xff]
        %5568 = vrot.lane.b32.xlu0 %v5527, 11
        %v5569 = vpop.permute.xlu0 %5568
        %5570 = vrot.lane.b32.xlu0 %v5533, 11
        %v5571 = vpop.permute.xlu0 %5570
        %5572 = vrot.lane.b32.xlu0 %v5539, 11
        %v5573 = vpop.permute.xlu0 %5572
        %5574 = vrot.lane.b32.xlu0 %v5545, 11
        %v5575 = vpop.permute.xlu0 %5574
        %5592 = vrot.lane.b32.xlu0 %v5524, 3
        %v5593 = vpop.permute.xlu0 %5592
        %5594 = vrot.lane.b32.xlu0 %v5525, 3
        %v5595 = vpop.permute.xlu0 %5594
        %5596 = vrot.lane.b32.xlu0 %v5526, 3
        %v5597 = vpop.permute.xlu0 %5596
        %5598 = vrot.lane.b32.xlu0 %v5527, 3
        %v5599 = vpop.permute.xlu0 %5598
        %5600 = vrot.lane.b32.xlu0 %v5530, 3
        %v5601 = vpop.permute.xlu0 %5600
        %5602 = vrot.lane.b32.xlu0 %v5531, 3
        %v5603 = vpop.permute.xlu0 %5602
        %5604 = vrot.lane.b32.xlu0 %v5532, 3
        %v5605 = vpop.permute.xlu0 %5604
        %5606 = vrot.lane.b32.xlu0 %v5533, 3
        %v5607 = vpop.permute.xlu0 %5606
        %5608 = vrot.lane.b32.xlu0 %v5536, 3
        %v5609 = vpop.permute.xlu0 %5608
        %5610 = vrot.lane.b32.xlu0 %v5537, 3
        %v5611 = vpop.permute.xlu0 %5610
        %5612 = vrot.lane.b32.xlu0 %v5538, 3
        %v5613 = vpop.permute.xlu0 %5612
        %5614 = vrot.lane.b32.xlu0 %v5539, 3
        %v5615 = vpop.permute.xlu0 %5614
        %5616 = vrot.lane.b32.xlu0 %v5542, 3
        %v5617 = vpop.permute.xlu0 %5616
        %5618 = vrot.lane.b32.xlu0 %v5543, 3
        %v5619 = vpop.permute.xlu0 %5618
        %5620 = vrot.lane.b32.xlu0 %v5544, 3
        %v5621 = vpop.permute.xlu0 %5620
        %5622 = vrot.lane.b32.xlu0 %v5545, 3
        %v5623 = vpop.permute.xlu0 %5622
        %vm5624 = vcmask 23552
        %v5625 = vsel %vm5624, %v5593, %v5595
        %v5626 = vsel %vm5624, %v5595, %v5597
        %v5627 = vsel %vm5624, %v5597, %v5599
        %v5628 = vsel %vm5624, %v5601, %v5603
        %v5629 = vsel %vm5624, %v5603, %v5605
        %v5630 = vsel %vm5624, %v5605, %v5607
        %v5631 = vsel %vm5624, %v5609, %v5611
        %v5632 = vsel %vm5624, %v5611, %v5613
        %v5633 = vsel %vm5624, %v5613, %v5615
        %v5634 = vsel %vm5624, %v5617, %v5619
        %v5635 = vsel %vm5624, %v5619, %v5621
        %v5636 = vsel %vm5624, %v5621, %v5623
        %v5653 = vsel %vm5624, %v5569, %v5593
        %v5654 = vsel %vm5624, %v5571, %v5601
        %v5655 = vsel %vm5624, %v5573, %v5609
        %v5656 = vsel %vm5624, %v5575, %v5617
        %5657 = vrot.lane.b32.xlu0 %v5524, 125
        %v5658 = vpop.permute.xlu0 %5657
        %5659 = vrot.lane.b32.xlu0 %v5525, 125
        %v5660 = vpop.permute.xlu0 %5659
        %5661 = vrot.lane.b32.xlu0 %v5526, 125
        %v5662 = vpop.permute.xlu0 %5661
        %5663 = vrot.lane.b32.xlu0 %v5527, 125
        %v5664 = vpop.permute.xlu0 %5663
        %5665 = vrot.lane.b32.xlu0 %v5530, 125
        %v5666 = vpop.permute.xlu0 %5665
        %5667 = vrot.lane.b32.xlu0 %v5531, 125
        %v5668 = vpop.permute.xlu0 %5667
        %5669 = vrot.lane.b32.xlu0 %v5532, 125
        %v5670 = vpop.permute.xlu0 %5669
        %5671 = vrot.lane.b32.xlu0 %v5533, 125
        %v5672 = vpop.permute.xlu0 %5671
        %5673 = vrot.lane.b32.xlu0 %v5536, 125
        %v5674 = vpop.permute.xlu0 %5673
        %5675 = vrot.lane.b32.xlu0 %v5537, 125
        %v5676 = vpop.permute.xlu0 %5675
        %5677 = vrot.lane.b32.xlu0 %v5538, 125
        %v5678 = vpop.permute.xlu0 %5677
        %5679 = vrot.lane.b32.xlu0 %v5539, 125
        %v5680 = vpop.permute.xlu0 %5679
        %5681 = vrot.lane.b32.xlu0 %v5542, 125
        %v5682 = vpop.permute.xlu0 %5681
        %5683 = vrot.lane.b32.xlu0 %v5543, 125
        %v5684 = vpop.permute.xlu0 %5683
        %5685 = vrot.lane.b32.xlu0 %v5544, 125
        %v5686 = vpop.permute.xlu0 %5685
        %5687 = vrot.lane.b32.xlu0 %v5545, 125
        %v5688 = vpop.permute.xlu0 %5687
        %vm5689 = vcmask 1022976
        %v5690 = vsel %vm5689, %v5658, %v5660
        %v5691 = vsel %vm5689, %v5660, %v5662
        %v5692 = vsel %vm5689, %v5662, %v5664
        %v5693 = vsel %vm5689, %v5666, %v5668
        %v5694 = vsel %vm5689, %v5668, %v5670
        %v5695 = vsel %vm5689, %v5670, %v5672
        %v5696 = vsel %vm5689, %v5674, %v5676
        %v5697 = vsel %vm5689, %v5676, %v5678
        %v5698 = vsel %vm5689, %v5678, %v5680
        %v5699 = vsel %vm5689, %v5682, %v5684
        %v5700 = vsel %vm5689, %v5684, %v5686
        %v5701 = vsel %vm5689, %v5686, %v5688
        %5718 = vrot.lane.b32.xlu0 %v5524, 117
        %v5719 = vpop.permute.xlu0 %5718
        %5720 = vrot.lane.b32.xlu0 %v5530, 117
        %v5721 = vpop.permute.xlu0 %5720
        %5722 = vrot.lane.b32.xlu0 %v5536, 117
        %v5723 = vpop.permute.xlu0 %5722
        %5724 = vrot.lane.b32.xlu0 %v5542, 117
        %v5725 = vpop.permute.xlu0 %5724
        %vm5730 = vcmask 957440
        %v5731 = vsel %vm5730, %v5664, %v5719
        %v5732 = vsel %vm5730, %v5672, %v5721
        %v5733 = vsel %vm5730, %v5680, %v5723
        %v5734 = vsel %vm5730, %v5688, %v5725
        %5739 = vrot.lane.b32.xlu0 %v5528, 55
        %v5740 = vpop.permute.xlu0 %5739
        %5741 = vrot.lane.b32.xlu0 %v5534, 55
        %v5742 = vpop.permute.xlu0 %5741
        %5743 = vrot.lane.b32.xlu0 %v5540, 55
        %v5744 = vpop.permute.xlu0 %5743
        %5745 = vrot.lane.b32.xlu0 %v5546, 55
        %v5746 = vpop.permute.xlu0 %5745
        %5751 = vrot.lane.b32.xlu0 %v5524, 47
        %v5752 = vpop.permute.xlu0 %5751
        %5753 = vrot.lane.b32.xlu0 %v5525, 47
        %v5754 = vpop.permute.xlu0 %5753
        %5755 = vrot.lane.b32.xlu0 %v5526, 47
        %v5756 = vpop.permute.xlu0 %5755
        %5757 = vrot.lane.b32.xlu0 %v5527, 47
        %v5758 = vpop.permute.xlu0 %5757
        %5759 = vrot.lane.b32.xlu0 %v5528, 47
        %v5760 = vpop.permute.xlu0 %5759
        %5761 = vrot.lane.b32.xlu0 %v5530, 47
        %v5762 = vpop.permute.xlu0 %5761
        %5763 = vrot.lane.b32.xlu0 %v5531, 47
        %v5764 = vpop.permute.xlu0 %5763
        %5765 = vrot.lane.b32.xlu0 %v5532, 47
        %v5766 = vpop.permute.xlu0 %5765
        %5767 = vrot.lane.b32.xlu0 %v5533, 47
        %v5768 = vpop.permute.xlu0 %5767
        %5769 = vrot.lane.b32.xlu0 %v5534, 47
        %v5770 = vpop.permute.xlu0 %5769
        %5771 = vrot.lane.b32.xlu0 %v5536, 47
        %v5772 = vpop.permute.xlu0 %5771
        %5773 = vrot.lane.b32.xlu0 %v5537, 47
        %v5774 = vpop.permute.xlu0 %5773
        %5775 = vrot.lane.b32.xlu0 %v5538, 47
        %v5776 = vpop.permute.xlu0 %5775
        %5777 = vrot.lane.b32.xlu0 %v5539, 47
        %v5778 = vpop.permute.xlu0 %5777
        %5779 = vrot.lane.b32.xlu0 %v5540, 47
        %v5780 = vpop.permute.xlu0 %5779
        %5781 = vrot.lane.b32.xlu0 %v5542, 47
        %v5782 = vpop.permute.xlu0 %5781
        %5783 = vrot.lane.b32.xlu0 %v5543, 47
        %v5784 = vpop.permute.xlu0 %5783
        %5785 = vrot.lane.b32.xlu0 %v5544, 47
        %v5786 = vpop.permute.xlu0 %5785
        %5787 = vrot.lane.b32.xlu0 %v5545, 47
        %v5788 = vpop.permute.xlu0 %5787
        %5789 = vrot.lane.b32.xlu0 %v5546, 47
        %v5790 = vpop.permute.xlu0 %5789
        %vm5791 = vcmask 384000
        %v5792 = vsel %vm5791, %v5752, %v5754
        %v5793 = vsel %vm5791, %v5754, %v5756
        %v5794 = vsel %vm5791, %v5756, %v5758
        %v5795 = vsel %vm5791, %v5758, %v5760
        %v5796 = vsel %vm5791, %v5762, %v5764
        %v5797 = vsel %vm5791, %v5764, %v5766
        %v5798 = vsel %vm5791, %v5766, %v5768
        %v5799 = vsel %vm5791, %v5768, %v5770
        %v5800 = vsel %vm5791, %v5772, %v5774
        %v5801 = vsel %vm5791, %v5774, %v5776
        %v5802 = vsel %vm5791, %v5776, %v5778
        %v5803 = vsel %vm5791, %v5778, %v5780
        %v5804 = vsel %vm5791, %v5782, %v5784
        %v5805 = vsel %vm5791, %v5784, %v5786
        %v5806 = vsel %vm5791, %v5786, %v5788
        %v5807 = vsel %vm5791, %v5788, %v5790
        %v5824 = vsel %vm5624, %v5740, %v5792
        %v5825 = vsel %vm5624, %v5742, %v5796
        %v5826 = vsel %vm5624, %v5744, %v5800
        %v5827 = vsel %vm5624, %v5746, %v5804
        %5828 = vrot.lane.b32.xlu0 %v5524, 41
        %v5829 = vpop.permute.xlu0 %5828
        %5830 = vrot.lane.b32.xlu0 %v5525, 41
        %v5831 = vpop.permute.xlu0 %5830
        %5832 = vrot.lane.b32.xlu0 %v5526, 41
        %v5833 = vpop.permute.xlu0 %5832
        %5834 = vrot.lane.b32.xlu0 %v5527, 41
        %v5835 = vpop.permute.xlu0 %5834
        %5836 = vrot.lane.b32.xlu0 %v5528, 41
        %v5837 = vpop.permute.xlu0 %5836
        %5838 = vrot.lane.b32.xlu0 %v5530, 41
        %v5839 = vpop.permute.xlu0 %5838
        %5840 = vrot.lane.b32.xlu0 %v5531, 41
        %v5841 = vpop.permute.xlu0 %5840
        %5842 = vrot.lane.b32.xlu0 %v5532, 41
        %v5843 = vpop.permute.xlu0 %5842
        %5844 = vrot.lane.b32.xlu0 %v5533, 41
        %v5845 = vpop.permute.xlu0 %5844
        %5846 = vrot.lane.b32.xlu0 %v5534, 41
        %v5847 = vpop.permute.xlu0 %5846
        %5848 = vrot.lane.b32.xlu0 %v5536, 41
        %v5849 = vpop.permute.xlu0 %5848
        %5850 = vrot.lane.b32.xlu0 %v5537, 41
        %v5851 = vpop.permute.xlu0 %5850
        %5852 = vrot.lane.b32.xlu0 %v5538, 41
        %v5853 = vpop.permute.xlu0 %5852
        %5854 = vrot.lane.b32.xlu0 %v5539, 41
        %v5855 = vpop.permute.xlu0 %5854
        %5856 = vrot.lane.b32.xlu0 %v5540, 41
        %v5857 = vpop.permute.xlu0 %5856
        %5858 = vrot.lane.b32.xlu0 %v5542, 41
        %v5859 = vpop.permute.xlu0 %5858
        %5860 = vrot.lane.b32.xlu0 %v5543, 41
        %v5861 = vpop.permute.xlu0 %5860
        %5862 = vrot.lane.b32.xlu0 %v5544, 41
        %v5863 = vpop.permute.xlu0 %5862
        %5864 = vrot.lane.b32.xlu0 %v5545, 41
        %v5865 = vpop.permute.xlu0 %5864
        %5866 = vrot.lane.b32.xlu0 %v5546, 41
        %v5867 = vpop.permute.xlu0 %5866
        %vm5868 = vcmask 334848
        %v5869 = vsel %vm5868, %v5829, %v5831
        %v5870 = vsel %vm5868, %v5831, %v5833
        %v5871 = vsel %vm5868, %v5833, %v5835
        %v5872 = vsel %vm5868, %v5835, %v5837
        %v5873 = vsel %vm5868, %v5839, %v5841
        %v5874 = vsel %vm5868, %v5841, %v5843
        %v5875 = vsel %vm5868, %v5843, %v5845
        %v5876 = vsel %vm5868, %v5845, %v5847
        %v5877 = vsel %vm5868, %v5849, %v5851
        %v5878 = vsel %vm5868, %v5851, %v5853
        %v5879 = vsel %vm5868, %v5853, %v5855
        %v5880 = vsel %vm5868, %v5855, %v5857
        %v5881 = vsel %vm5868, %v5859, %v5861
        %v5882 = vsel %vm5868, %v5861, %v5863
        %v5883 = vsel %vm5868, %v5863, %v5865
        %v5884 = vsel %vm5868, %v5865, %v5867
        %5901 = vrot.lane.b32.xlu0 %v5524, 33
        %v5902 = vpop.permute.xlu0 %5901
        %5903 = vrot.lane.b32.xlu0 %v5530, 33
        %v5904 = vpop.permute.xlu0 %5903
        %5905 = vrot.lane.b32.xlu0 %v5536, 33
        %v5906 = vpop.permute.xlu0 %5905
        %5907 = vrot.lane.b32.xlu0 %v5542, 33
        %v5908 = vpop.permute.xlu0 %5907
        %v5913 = vsel %vm5730, %v5872, %v5902
        %v5914 = vsel %vm5730, %v5876, %v5904
        %v5915 = vsel %vm5730, %v5880, %v5906
        %v5916 = vsel %vm5730, %v5884, %v5908
        %5917 = vrot.lane.b32.xlu0 %v5524, 44
        %v5918 = vpop.permute.xlu0 %5917
        %5919 = vrot.lane.b32.xlu0 %v5525, 44
        %v5920 = vpop.permute.xlu0 %5919
        %5921 = vrot.lane.b32.xlu0 %v5526, 44
        %v5922 = vpop.permute.xlu0 %5921
        %5923 = vrot.lane.b32.xlu0 %v5527, 44
        %v5924 = vpop.permute.xlu0 %5923
        %5925 = vrot.lane.b32.xlu0 %v5528, 44
        %v5926 = vpop.permute.xlu0 %5925
        %5927 = vrot.lane.b32.xlu0 %v5530, 44
        %v5928 = vpop.permute.xlu0 %5927
        %5929 = vrot.lane.b32.xlu0 %v5531, 44
        %v5930 = vpop.permute.xlu0 %5929
        %5931 = vrot.lane.b32.xlu0 %v5532, 44
        %v5932 = vpop.permute.xlu0 %5931
        %5933 = vrot.lane.b32.xlu0 %v5533, 44
        %v5934 = vpop.permute.xlu0 %5933
        %5935 = vrot.lane.b32.xlu0 %v5534, 44
        %v5936 = vpop.permute.xlu0 %5935
        %5937 = vrot.lane.b32.xlu0 %v5536, 44
        %v5938 = vpop.permute.xlu0 %5937
        %5939 = vrot.lane.b32.xlu0 %v5537, 44
        %v5940 = vpop.permute.xlu0 %5939
        %5941 = vrot.lane.b32.xlu0 %v5538, 44
        %v5942 = vpop.permute.xlu0 %5941
        %5943 = vrot.lane.b32.xlu0 %v5539, 44
        %v5944 = vpop.permute.xlu0 %5943
        %5945 = vrot.lane.b32.xlu0 %v5540, 44
        %v5946 = vpop.permute.xlu0 %5945
        %5947 = vrot.lane.b32.xlu0 %v5542, 44
        %v5948 = vpop.permute.xlu0 %5947
        %5949 = vrot.lane.b32.xlu0 %v5543, 44
        %v5950 = vpop.permute.xlu0 %5949
        %5951 = vrot.lane.b32.xlu0 %v5544, 44
        %v5952 = vpop.permute.xlu0 %5951
        %5953 = vrot.lane.b32.xlu0 %v5545, 44
        %v5954 = vpop.permute.xlu0 %5953
        %5955 = vrot.lane.b32.xlu0 %v5546, 44
        %v5956 = vpop.permute.xlu0 %5955
        %vm5957 = vcmask 359424
        %v5958 = vsel %vm5957, %v5918, %v5920
        %v5959 = vsel %vm5957, %v5920, %v5922
        %v5960 = vsel %vm5957, %v5922, %v5924
        %v5961 = vsel %vm5957, %v5924, %v5926
        %v5962 = vsel %vm5957, %v5928, %v5930
        %v5963 = vsel %vm5957, %v5930, %v5932
        %v5964 = vsel %vm5957, %v5932, %v5934
        %v5965 = vsel %vm5957, %v5934, %v5936
        %v5966 = vsel %vm5957, %v5938, %v5940
        %v5967 = vsel %vm5957, %v5940, %v5942
        %v5968 = vsel %vm5957, %v5942, %v5944
        %v5969 = vsel %vm5957, %v5944, %v5946
        %v5970 = vsel %vm5957, %v5948, %v5950
        %v5971 = vsel %vm5957, %v5950, %v5952
        %v5972 = vsel %vm5957, %v5952, %v5954
        %v5973 = vsel %vm5957, %v5954, %v5956
        %v5991 = vsel %vm2420, %v5552, 0
        %v5994 = vsel %vm2420, %v5553, 0
        %v5997 = vsel %vm2420, %v5554, 0
        %v6000 = vsel %vm2420, %v5555, 0
        %6002 = vmatpush.msra.mxu0 0.0
        %6003 = vmatpush.msra.mxu0 0.0
        %6004 = vmatpush.msra.mxu0 0.0
        %6005 = vmatpush.msra.mxu0 0.0
        %6006 = vmatpush.msra.mxu0 %v5881
        %6007 = vmatpush.msra.mxu0 %v5877
        %6008 = vmatpush.msra.mxu0 %v5873
        %6009 = vmatpush.msra.mxu0 %v5869
        %6010 = vmatpush.msra.mxu0 %v5970
        %6011 = vmatpush.msra.mxu0 %v5966
        %6012 = vmatpush.msra.mxu0 %v5962
        %6013 = vmatpush.msra.mxu0 %v5958
        %6014 = vmatpush.msra.mxu0 %v5827
        %6015 = vmatpush.msra.mxu0 %v5826
        %6016 = vmatpush.msra.mxu0 %v5825
        %6017 = vmatpush.msra.mxu0 %v5824
        %6018 = vmatmul.f32.gmra.mxu0 %v5991
        %v6019 = vpop.f32.mrf.mxu0
        %v6020 = vadd.f32 0.0, %v6019
        %6021 = vmatmul.f32.gmra.mxu0 %v5994
        %v6022 = vpop.f32.mrf.mxu0
        %v6023 = vadd.f32 0.0, %v6022
        %6024 = vmatmul.f32.gmra.mxu0 %v5997
        %v6025 = vpop.f32.mrf.mxu0
        %v6026 = vadd.f32 0.0, %v6025
        %6027 = vmatmul.f32.gmra.mxu0 %v6000
        %v6028 = vpop.f32.mrf.mxu0
        %v6029 = vadd.f32 0.0, %v6028
        %6030 = vdwg.mxu0
        %6031 = vmatpush.msra.mxu0 0.0
        %6032 = vmatpush.msra.mxu0 0.0
        %6033 = vmatpush.msra.mxu0 0.0
        %6034 = vmatpush.msra.mxu0 0.0
        %6035 = vmatpush.msra.mxu0 %v5882
        %6036 = vmatpush.msra.mxu0 %v5878
        %6037 = vmatpush.msra.mxu0 %v5874
        %6038 = vmatpush.msra.mxu0 %v5870
        %6039 = vmatpush.msra.mxu0 %v5971
        %6040 = vmatpush.msra.mxu0 %v5967
        %6041 = vmatpush.msra.mxu0 %v5963
        %6042 = vmatpush.msra.mxu0 %v5959
        %6043 = vmatpush.msra.mxu0 %v5805
        %6044 = vmatpush.msra.mxu0 %v5801
        %6045 = vmatpush.msra.mxu0 %v5797
        %6046 = vmatpush.msra.mxu0 %v5793
        %6047 = vmatmul.f32.gmra.mxu0 %v5991
        %v6048 = vpop.f32.mrf.mxu0
        %v6049 = vadd.f32 0.0, %v6048
        %6050 = vmatmul.f32.gmra.mxu0 %v5994
        %v6051 = vpop.f32.mrf.mxu0
        %v6052 = vadd.f32 0.0, %v6051
        %6053 = vmatmul.f32.gmra.mxu0 %v5997
        %v6054 = vpop.f32.mrf.mxu0
        %v6055 = vadd.f32 0.0, %v6054
        %6056 = vmatmul.f32.gmra.mxu0 %v6000
        %v6057 = vpop.f32.mrf.mxu0
        %v6058 = vadd.f32 0.0, %v6057
        %6059 = vdwg.mxu0
        %6060 = vmatpush.msra.mxu0 0.0
        %6061 = vmatpush.msra.mxu0 0.0
        %6062 = vmatpush.msra.mxu0 0.0
        %6063 = vmatpush.msra.mxu0 0.0
        %6064 = vmatpush.msra.mxu0 %v5883
        %6065 = vmatpush.msra.mxu0 %v5879
        %6066 = vmatpush.msra.mxu0 %v5875
        %6067 = vmatpush.msra.mxu0 %v5871
        %6068 = vmatpush.msra.mxu0 %v5972
        %6069 = vmatpush.msra.mxu0 %v5968
        %6070 = vmatpush.msra.mxu0 %v5964
        %6071 = vmatpush.msra.mxu0 %v5960
        %6072 = vmatpush.msra.mxu0 %v5806
        %6073 = vmatpush.msra.mxu0 %v5802
        %6074 = vmatpush.msra.mxu0 %v5798
        %6075 = vmatpush.msra.mxu0 %v5794
        %6076 = vmatmul.f32.gmra.mxu0 %v5991
        %v6077 = vpop.f32.mrf.mxu0
        %v6078 = vadd.f32 0.0, %v6077
        %6079 = vmatmul.f32.gmra.mxu0 %v5994
        %v6080 = vpop.f32.mrf.mxu0
        %v6081 = vadd.f32 0.0, %v6080
        %6082 = vmatmul.f32.gmra.mxu0 %v5997
        %v6083 = vpop.f32.mrf.mxu0
        %v6084 = vadd.f32 0.0, %v6083
        %6085 = vmatmul.f32.gmra.mxu0 %v6000
        %v6086 = vpop.f32.mrf.mxu0
        %v6087 = vadd.f32 0.0, %v6086
        %6088 = vdwg.mxu0
        %6089 = vmatpush.msra.mxu0 0.0
        %6090 = vmatpush.msra.mxu0 0.0
        %6091 = vmatpush.msra.mxu0 0.0
        %6092 = vmatpush.msra.mxu0 0.0
        %6093 = vmatpush.msra.mxu0 %v5916
        %6094 = vmatpush.msra.mxu0 %v5915
        %6095 = vmatpush.msra.mxu0 %v5914
        %6096 = vmatpush.msra.mxu0 %v5913
        %6097 = vmatpush.msra.mxu0 %v5973
        %6098 = vmatpush.msra.mxu0 %v5969
        %6099 = vmatpush.msra.mxu0 %v5965
        %6100 = vmatpush.msra.mxu0 %v5961
        %6101 = vmatpush.msra.mxu0 %v5807
        %6102 = vmatpush.msra.mxu0 %v5803
        %6103 = vmatpush.msra.mxu0 %v5799
        %6104 = vmatpush.msra.mxu0 %v5795
        %6105 = vmatmul.f32.gmra.mxu0 %v5991
        %v6106 = vpop.f32.mrf.mxu0
        %v6107 = vadd.f32 0.0, %v6106
        %6108 = vmatmul.f32.gmra.mxu0 %v5994
        %v6109 = vpop.f32.mrf.mxu0
        %v6110 = vadd.f32 0.0, %v6109
        %6111 = vmatmul.f32.gmra.mxu0 %v5997
        %v6112 = vpop.f32.mrf.mxu0
        %v6113 = vadd.f32 0.0, %v6112
        %6114 = vmatmul.f32.gmra.mxu0 %v6000
        %v6115 = vpop.f32.mrf.mxu0
        %v6116 = vadd.f32 0.0, %v6115
        %6117 = vdwg.mxu0
        %v6119 = vsel %vm2420, %v5548, 0
        %v6122 = vsel %vm2420, %v5549, 0
        %v6125 = vsel %vm2420, %v5550, 0
        %v6128 = vsel %vm2420, %v5551, 0
        %6130 = vmatpush.msra.mxu0 0.0
        %6131 = vmatpush.msra.mxu0 0.0
        %6132 = vmatpush.msra.mxu0 0.0
        %6133 = vmatpush.msra.mxu0 0.0
        %6134 = vmatpush.msra.mxu0 %v5699
        %6135 = vmatpush.msra.mxu0 %v5696
        %6136 = vmatpush.msra.mxu0 %v5693
        %6137 = vmatpush.msra.mxu0 %v5690
        %6138 = vmatpush.msra.mxu0 %v5542
        %6139 = vmatpush.msra.mxu0 %v5536
        %6140 = vmatpush.msra.mxu0 %v5530
        %6141 = vmatpush.msra.mxu0 %v5524
        %6142 = vmatpush.msra.mxu0 %v5656
        %6143 = vmatpush.msra.mxu0 %v5655
        %6144 = vmatpush.msra.mxu0 %v5654
        %6145 = vmatpush.msra.mxu0 %v5653
        %6146 = vmatmul.f32.gmra.mxu0 %v6119
        %v6147 = vpop.f32.mrf.mxu0
        %v6148 = vadd.f32 %v6020, %v6147
        %6149 = vmatmul.f32.gmra.mxu0 %v6122
        %v6150 = vpop.f32.mrf.mxu0
        %v6151 = vadd.f32 %v6023, %v6150
        %6152 = vmatmul.f32.gmra.mxu0 %v6125
        %v6153 = vpop.f32.mrf.mxu0
        %v6154 = vadd.f32 %v6026, %v6153
        %6155 = vmatmul.f32.gmra.mxu0 %v6128
        %v6156 = vpop.f32.mrf.mxu0
        %v6157 = vadd.f32 %v6029, %v6156
        %6158 = vdwg.mxu0
        %6159 = vmatpush.msra.mxu0 0.0
        %6160 = vmatpush.msra.mxu0 0.0
        %6161 = vmatpush.msra.mxu0 0.0
        %6162 = vmatpush.msra.mxu0 0.0
        %6163 = vmatpush.msra.mxu0 %v5700
        %6164 = vmatpush.msra.mxu0 %v5697
        %6165 = vmatpush.msra.mxu0 %v5694
        %6166 = vmatpush.msra.mxu0 %v5691
        %6167 = vmatpush.msra.mxu0 %v5543
        %6168 = vmatpush.msra.mxu0 %v5537
        %6169 = vmatpush.msra.mxu0 %v5531
        %6170 = vmatpush.msra.mxu0 %v5525
        %6171 = vmatpush.msra.mxu0 %v5634
        %6172 = vmatpush.msra.mxu0 %v5631
        %6173 = vmatpush.msra.mxu0 %v5628
        %6174 = vmatpush.msra.mxu0 %v5625
        %6175 = vmatmul.f32.gmra.mxu0 %v6119
        %v6176 = vpop.f32.mrf.mxu0
        %v6177 = vadd.f32 %v6049, %v6176
        %6178 = vmatmul.f32.gmra.mxu0 %v6122
        %v6179 = vpop.f32.mrf.mxu0
        %v6180 = vadd.f32 %v6052, %v6179
        %6181 = vmatmul.f32.gmra.mxu0 %v6125
        %v6182 = vpop.f32.mrf.mxu0
        %v6183 = vadd.f32 %v6055, %v6182
        %6184 = vmatmul.f32.gmra.mxu0 %v6128
        %v6185 = vpop.f32.mrf.mxu0
        %v6186 = vadd.f32 %v6058, %v6185
        %6187 = vdwg.mxu0
        %6188 = vmatpush.msra.mxu0 0.0
        %6189 = vmatpush.msra.mxu0 0.0
        %6190 = vmatpush.msra.mxu0 0.0
        %6191 = vmatpush.msra.mxu0 0.0
        %6192 = vmatpush.msra.mxu0 %v5701
        %6193 = vmatpush.msra.mxu0 %v5698
        %6194 = vmatpush.msra.mxu0 %v5695
        %6195 = vmatpush.msra.mxu0 %v5692
        %6196 = vmatpush.msra.mxu0 %v5544
        %6197 = vmatpush.msra.mxu0 %v5538
        %6198 = vmatpush.msra.mxu0 %v5532
        %6199 = vmatpush.msra.mxu0 %v5526
        %6200 = vmatpush.msra.mxu0 %v5635
        %6201 = vmatpush.msra.mxu0 %v5632
        %6202 = vmatpush.msra.mxu0 %v5629
        %6203 = vmatpush.msra.mxu0 %v5626
        %6204 = vmatmul.f32.gmra.mxu0 %v6119
        %v6205 = vpop.f32.mrf.mxu0
        %v6206 = vadd.f32 %v6078, %v6205
        %6207 = vmatmul.f32.gmra.mxu0 %v6122
        %v6208 = vpop.f32.mrf.mxu0
        %v6209 = vadd.f32 %v6081, %v6208
        %6210 = vmatmul.f32.gmra.mxu0 %v6125
        %v6211 = vpop.f32.mrf.mxu0
        %v6212 = vadd.f32 %v6084, %v6211
        %6213 = vmatmul.f32.gmra.mxu0 %v6128
        %v6214 = vpop.f32.mrf.mxu0
        %v6215 = vadd.f32 %v6087, %v6214
        %6216 = vdwg.mxu0
        %6217 = vmatpush.msra.mxu0 0.0
        %6218 = vmatpush.msra.mxu0 0.0
        %6219 = vmatpush.msra.mxu0 0.0
        %6220 = vmatpush.msra.mxu0 0.0
        %6221 = vmatpush.msra.mxu0 %v5734
        %6222 = vmatpush.msra.mxu0 %v5733
        %6223 = vmatpush.msra.mxu0 %v5732
        %6224 = vmatpush.msra.mxu0 %v5731
        %6225 = vmatpush.msra.mxu0 %v5545
        %6226 = vmatpush.msra.mxu0 %v5539
        %6227 = vmatpush.msra.mxu0 %v5533
        %6228 = vmatpush.msra.mxu0 %v5527
        %6229 = vmatpush.msra.mxu0 %v5636
        %6230 = vmatpush.msra.mxu0 %v5633
        %6231 = vmatpush.msra.mxu0 %v5630
        %6232 = vmatpush.msra.mxu0 %v5627
        %6233 = vmatmul.f32.gmra.mxu0 %v6119
        %v6234 = vpop.f32.mrf.mxu0
        %v6235 = vadd.f32 %v6107, %v6234
        %6236 = vmatmul.f32.gmra.mxu0 %v6122
        %v6237 = vpop.f32.mrf.mxu0
        %v6238 = vadd.f32 %v6110, %v6237
        %6239 = vmatmul.f32.gmra.mxu0 %v6125
        %v6240 = vpop.f32.mrf.mxu0
        %v6241 = vadd.f32 %v6113, %v6240
        %6242 = vmatmul.f32.gmra.mxu0 %v6128
        %v6243 = vpop.f32.mrf.mxu0
        %v6244 = vadd.f32 %v6116, %v6243
        %6245 = vdwg.mxu0
        %6250 = vrot.lane.b32.xlu0 %v5529, 99
        %v6251 = vpop.permute.xlu0 %6250
        %6252 = vrot.lane.b32.xlu0 %v5535, 99
        %v6253 = vpop.permute.xlu0 %6252
        %6254 = vrot.lane.b32.xlu0 %v5541, 99
        %v6255 = vpop.permute.xlu0 %6254
        %6256 = vrot.lane.b32.xlu0 %v5547, 99
        %v6257 = vpop.permute.xlu0 %6256
        %6262 = vrot.lane.b32.xlu0 %v5525, 91
        %v6263 = vpop.permute.xlu0 %6262
        %6264 = vrot.lane.b32.xlu0 %v5526, 91
        %v6265 = vpop.permute.xlu0 %6264
        %6266 = vrot.lane.b32.xlu0 %v5527, 91
        %v6267 = vpop.permute.xlu0 %6266
        %6268 = vrot.lane.b32.xlu0 %v5528, 91
        %v6269 = vpop.permute.xlu0 %6268
        %6270 = vrot.lane.b32.xlu0 %v5529, 91
        %v6271 = vpop.permute.xlu0 %6270
        %6272 = vrot.lane.b32.xlu0 %v5531, 91
        %v6273 = vpop.permute.xlu0 %6272
        %6274 = vrot.lane.b32.xlu0 %v5532, 91
        %v6275 = vpop.permute.xlu0 %6274
        %6276 = vrot.lane.b32.xlu0 %v5533, 91
        %v6277 = vpop.permute.xlu0 %6276
        %6278 = vrot.lane.b32.xlu0 %v5534, 91
        %v6279 = vpop.permute.xlu0 %6278
        %6280 = vrot.lane.b32.xlu0 %v5535, 91
        %v6281 = vpop.permute.xlu0 %6280
        %6282 = vrot.lane.b32.xlu0 %v5537, 91
        %v6283 = vpop.permute.xlu0 %6282
        %6284 = vrot.lane.b32.xlu0 %v5538, 91
        %v6285 = vpop.permute.xlu0 %6284
        %6286 = vrot.lane.b32.xlu0 %v5539, 91
        %v6287 = vpop.permute.xlu0 %6286
        %6288 = vrot.lane.b32.xlu0 %v5540, 91
        %v6289 = vpop.permute.xlu0 %6288
        %6290 = vrot.lane.b32.xlu0 %v5541, 91
        %v6291 = vpop.permute.xlu0 %6290
        %6292 = vrot.lane.b32.xlu0 %v5543, 91
        %v6293 = vpop.permute.xlu0 %6292
        %6294 = vrot.lane.b32.xlu0 %v5544, 91
        %v6295 = vpop.permute.xlu0 %6294
        %6296 = vrot.lane.b32.xlu0 %v5545, 91
        %v6297 = vpop.permute.xlu0 %6296
        %6298 = vrot.lane.b32.xlu0 %v5546, 91
        %v6299 = vpop.permute.xlu0 %6298
        %6300 = vrot.lane.b32.xlu0 %v5547, 91
        %v6301 = vpop.permute.xlu0 %6300
        %vm6302 = vcmask 744448
        %v6303 = vsel %vm6302, %v6263, %v6265
        %v6304 = vsel %vm6302, %v6265, %v6267
        %v6305 = vsel %vm6302, %v6267, %v6269
        %v6306 = vsel %vm6302, %v6269, %v6271
        %v6307 = vsel %vm6302, %v6273, %v6275
        %v6308 = vsel %vm6302, %v6275, %v6277
        %v6309 = vsel %vm6302, %v6277, %v6279
        %v6310 = vsel %vm6302, %v6279, %v6281
        %v6311 = vsel %vm6302, %v6283, %v6285
        %v6312 = vsel %vm6302, %v6285, %v6287
        %v6313 = vsel %vm6302, %v6287, %v6289
        %v6314 = vsel %vm6302, %v6289, %v6291
        %v6315 = vsel %vm6302, %v6293, %v6295
        %v6316 = vsel %vm6302, %v6295, %v6297
        %v6317 = vsel %vm6302, %v6297, %v6299
        %v6318 = vsel %vm6302, %v6299, %v6301
        %v6335 = vsel %vm5624, %v6251, %v6303
        %v6336 = vsel %vm5624, %v6253, %v6307
        %v6337 = vsel %vm5624, %v6255, %v6311
        %v6338 = vsel %vm5624, %v6257, %v6315
        %6339 = vrot.lane.b32.xlu0 %v5525, 85
        %v6340 = vpop.permute.xlu0 %6339
        %6341 = vrot.lane.b32.xlu0 %v5526, 85
        %v6342 = vpop.permute.xlu0 %6341
        %6343 = vrot.lane.b32.xlu0 %v5527, 85
        %v6344 = vpop.permute.xlu0 %6343
        %6345 = vrot.lane.b32.xlu0 %v5528, 85
        %v6346 = vpop.permute.xlu0 %6345
        %6347 = vrot.lane.b32.xlu0 %v5529, 85
        %v6348 = vpop.permute.xlu0 %6347
        %6349 = vrot.lane.b32.xlu0 %v5531, 85
        %v6350 = vpop.permute.xlu0 %6349
        %6351 = vrot.lane.b32.xlu0 %v5532, 85
        %v6352 = vpop.permute.xlu0 %6351
        %6353 = vrot.lane.b32.xlu0 %v5533, 85
        %v6354 = vpop.permute.xlu0 %6353
        %6355 = vrot.lane.b32.xlu0 %v5534, 85
        %v6356 = vpop.permute.xlu0 %6355
        %6357 = vrot.lane.b32.xlu0 %v5535, 85
        %v6358 = vpop.permute.xlu0 %6357
        %6359 = vrot.lane.b32.xlu0 %v5537, 85
        %v6360 = vpop.permute.xlu0 %6359
        %6361 = vrot.lane.b32.xlu0 %v5538, 85
        %v6362 = vpop.permute.xlu0 %6361
        %6363 = vrot.lane.b32.xlu0 %v5539, 85
        %v6364 = vpop.permute.xlu0 %6363
        %6365 = vrot.lane.b32.xlu0 %v5540, 85
        %v6366 = vpop.permute.xlu0 %6365
        %6367 = vrot.lane.b32.xlu0 %v5541, 85
        %v6368 = vpop.permute.xlu0 %6367
        %6369 = vrot.lane.b32.xlu0 %v5543, 85
        %v6370 = vpop.permute.xlu0 %6369
        %6371 = vrot.lane.b32.xlu0 %v5544, 85
        %v6372 = vpop.permute.xlu0 %6371
        %6373 = vrot.lane.b32.xlu0 %v5545, 85
        %v6374 = vpop.permute.xlu0 %6373
        %6375 = vrot.lane.b32.xlu0 %v5546, 85
        %v6376 = vpop.permute.xlu0 %6375
        %6377 = vrot.lane.b32.xlu0 %v5547, 85
        %v6378 = vpop.permute.xlu0 %6377
        %vm6379 = vcmask 695296
        %v6380 = vsel %vm6379, %v6340, %v6342
        %v6381 = vsel %vm6379, %v6342, %v6344
        %v6382 = vsel %vm6379, %v6344, %v6346
        %v6383 = vsel %vm6379, %v6346, %v6348
        %v6384 = vsel %vm6379, %v6350, %v6352
        %v6385 = vsel %vm6379, %v6352, %v6354
        %v6386 = vsel %vm6379, %v6354, %v6356
        %v6387 = vsel %vm6379, %v6356, %v6358
        %v6388 = vsel %vm6379, %v6360, %v6362
        %v6389 = vsel %vm6379, %v6362, %v6364
        %v6390 = vsel %vm6379, %v6364, %v6366
        %v6391 = vsel %vm6379, %v6366, %v6368
        %v6392 = vsel %vm6379, %v6370, %v6372
        %v6393 = vsel %vm6379, %v6372, %v6374
        %v6394 = vsel %vm6379, %v6374, %v6376
        %v6395 = vsel %vm6379, %v6376, %v6378
        %6412 = vrot.lane.b32.xlu0 %v5525, 77
        %v6413 = vpop.permute.xlu0 %6412
        %6414 = vrot.lane.b32.xlu0 %v5531, 77
        %v6415 = vpop.permute.xlu0 %6414
        %6416 = vrot.lane.b32.xlu0 %v5537, 77
        %v6417 = vpop.permute.xlu0 %6416
        %6418 = vrot.lane.b32.xlu0 %v5543, 77
        %v6419 = vpop.permute.xlu0 %6418
        %v6424 = vsel %vm5730, %v6383, %v6413
        %v6425 = vsel %vm5730, %v6387, %v6415
        %v6426 = vsel %vm5730, %v6391, %v6417
        %v6427 = vsel %vm5730, %v6395, %v6419
        %6428 = vrot.lane.b32.xlu0 %v5525, 88
        %v6429 = vpop.permute.xlu0 %6428
        %6430 = vrot.lane.b32.xlu0 %v5526, 88
        %v6431 = vpop.permute.xlu0 %6430
        %6432 = vrot.lane.b32.xlu0 %v5527, 88
        %v6433 = vpop.permute.xlu0 %6432
        %6434 = vrot.lane.b32.xlu0 %v5528, 88
        %v6435 = vpop.permute.xlu0 %6434
        %6436 = vrot.lane.b32.xlu0 %v5529, 88
        %v6437 = vpop.permute.xlu0 %6436
        %6438 = vrot.lane.b32.xlu0 %v5531, 88
        %v6439 = vpop.permute.xlu0 %6438
        %6440 = vrot.lane.b32.xlu0 %v5532, 88
        %v6441 = vpop.permute.xlu0 %6440
        %6442 = vrot.lane.b32.xlu0 %v5533, 88
        %v6443 = vpop.permute.xlu0 %6442
        %6444 = vrot.lane.b32.xlu0 %v5534, 88
        %v6445 = vpop.permute.xlu0 %6444
        %6446 = vrot.lane.b32.xlu0 %v5535, 88
        %v6447 = vpop.permute.xlu0 %6446
        %6448 = vrot.lane.b32.xlu0 %v5537, 88
        %v6449 = vpop.permute.xlu0 %6448
        %6450 = vrot.lane.b32.xlu0 %v5538, 88
        %v6451 = vpop.permute.xlu0 %6450
        %6452 = vrot.lane.b32.xlu0 %v5539, 88
        %v6453 = vpop.permute.xlu0 %6452
        %6454 = vrot.lane.b32.xlu0 %v5540, 88
        %v6455 = vpop.permute.xlu0 %6454
        %6456 = vrot.lane.b32.xlu0 %v5541, 88
        %v6457 = vpop.permute.xlu0 %6456
        %6458 = vrot.lane.b32.xlu0 %v5543, 88
        %v6459 = vpop.permute.xlu0 %6458
        %6460 = vrot.lane.b32.xlu0 %v5544, 88
        %v6461 = vpop.permute.xlu0 %6460
        %6462 = vrot.lane.b32.xlu0 %v5545, 88
        %v6463 = vpop.permute.xlu0 %6462
        %6464 = vrot.lane.b32.xlu0 %v5546, 88
        %v6465 = vpop.permute.xlu0 %6464
        %6466 = vrot.lane.b32.xlu0 %v5547, 88
        %v6467 = vpop.permute.xlu0 %6466
        %vm6468 = vcmask 719872
        %v6469 = vsel %vm6468, %v6429, %v6431
        %v6470 = vsel %vm6468, %v6431, %v6433
        %v6471 = vsel %vm6468, %v6433, %v6435
        %v6472 = vsel %vm6468, %v6435, %v6437
        %v6473 = vsel %vm6468, %v6439, %v6441
        %v6474 = vsel %vm6468, %v6441, %v6443
        %v6475 = vsel %vm6468, %v6443, %v6445
        %v6476 = vsel %vm6468, %v6445, %v6447
        %v6477 = vsel %vm6468, %v6449, %v6451
        %v6478 = vsel %vm6468, %v6451, %v6453
        %v6479 = vsel %vm6468, %v6453, %v6455
        %v6480 = vsel %vm6468, %v6455, %v6457
        %v6481 = vsel %vm6468, %v6459, %v6461
        %v6482 = vsel %vm6468, %v6461, %v6463
        %v6483 = vsel %vm6468, %v6463, %v6465
        %v6484 = vsel %vm6468, %v6465, %v6467
        %v6502 = vsel %vm2420, %v5556, 0
        %v6505 = vsel %vm2420, %v5557, 0
        %v6508 = vsel %vm2420, %v5558, 0
        %v6511 = vsel %vm2420, %v5559, 0
        %6513 = vmatpush.msra.mxu0 0.0
        %6514 = vmatpush.msra.mxu0 0.0
        %6515 = vmatpush.msra.mxu0 0.0
        %6516 = vmatpush.msra.mxu0 0.0
        %6517 = vmatpush.msra.mxu0 %v6392
        %6518 = vmatpush.msra.mxu0 %v6388
        %6519 = vmatpush.msra.mxu0 %v6384
        %6520 = vmatpush.msra.mxu0 %v6380
        %6521 = vmatpush.msra.mxu0 %v6481
        %6522 = vmatpush.msra.mxu0 %v6477
        %6523 = vmatpush.msra.mxu0 %v6473
        %6524 = vmatpush.msra.mxu0 %v6469
        %6525 = vmatpush.msra.mxu0 %v6338
        %6526 = vmatpush.msra.mxu0 %v6337
        %6527 = vmatpush.msra.mxu0 %v6336
        %6528 = vmatpush.msra.mxu0 %v6335
        %6529 = vmatmul.f32.gmra.mxu0 %v6502
        %v6530 = vpop.f32.mrf.mxu0
        %v6531 = vadd.f32 0.0, %v6530
        %6532 = vmatmul.f32.gmra.mxu0 %v6505
        %v6533 = vpop.f32.mrf.mxu0
        %v6534 = vadd.f32 0.0, %v6533
        %6535 = vmatmul.f32.gmra.mxu0 %v6508
        %v6536 = vpop.f32.mrf.mxu0
        %v6537 = vadd.f32 0.0, %v6536
        %6538 = vmatmul.f32.gmra.mxu0 %v6511
        %v6539 = vpop.f32.mrf.mxu0
        %v6540 = vadd.f32 0.0, %v6539
        %6541 = vdwg.mxu0
        %6542 = vmatpush.msra.mxu0 0.0
        %6543 = vmatpush.msra.mxu0 0.0
        %6544 = vmatpush.msra.mxu0 0.0
        %6545 = vmatpush.msra.mxu0 0.0
        %6546 = vmatpush.msra.mxu0 %v6393
        %6547 = vmatpush.msra.mxu0 %v6389
        %6548 = vmatpush.msra.mxu0 %v6385
        %6549 = vmatpush.msra.mxu0 %v6381
        %6550 = vmatpush.msra.mxu0 %v6482
        %6551 = vmatpush.msra.mxu0 %v6478
        %6552 = vmatpush.msra.mxu0 %v6474
        %6553 = vmatpush.msra.mxu0 %v6470
        %6554 = vmatpush.msra.mxu0 %v6316
        %6555 = vmatpush.msra.mxu0 %v6312
        %6556 = vmatpush.msra.mxu0 %v6308
        %6557 = vmatpush.msra.mxu0 %v6304
        %6558 = vmatmul.f32.gmra.mxu0 %v6502
        %v6559 = vpop.f32.mrf.mxu0
        %v6560 = vadd.f32 0.0, %v6559
        %6561 = vmatmul.f32.gmra.mxu0 %v6505
        %v6562 = vpop.f32.mrf.mxu0
        %v6563 = vadd.f32 0.0, %v6562
        %6564 = vmatmul.f32.gmra.mxu0 %v6508
        %v6565 = vpop.f32.mrf.mxu0
        %v6566 = vadd.f32 0.0, %v6565
        %6567 = vmatmul.f32.gmra.mxu0 %v6511
        %v6568 = vpop.f32.mrf.mxu0
        %v6569 = vadd.f32 0.0, %v6568
        %6570 = vdwg.mxu0
        %6571 = vmatpush.msra.mxu0 0.0
        %6572 = vmatpush.msra.mxu0 0.0
        %6573 = vmatpush.msra.mxu0 0.0
        %6574 = vmatpush.msra.mxu0 0.0
        %6575 = vmatpush.msra.mxu0 %v6394
        %6576 = vmatpush.msra.mxu0 %v6390
        %6577 = vmatpush.msra.mxu0 %v6386
        %6578 = vmatpush.msra.mxu0 %v6382
        %6579 = vmatpush.msra.mxu0 %v6483
        %6580 = vmatpush.msra.mxu0 %v6479
        %6581 = vmatpush.msra.mxu0 %v6475
        %6582 = vmatpush.msra.mxu0 %v6471
        %6583 = vmatpush.msra.mxu0 %v6317
        %6584 = vmatpush.msra.mxu0 %v6313
        %6585 = vmatpush.msra.mxu0 %v6309
        %6586 = vmatpush.msra.mxu0 %v6305
        %6587 = vmatmul.f32.gmra.mxu0 %v6502
        %v6588 = vpop.f32.mrf.mxu0
        %v6589 = vadd.f32 0.0, %v6588
        %6590 = vmatmul.f32.gmra.mxu0 %v6505
        %v6591 = vpop.f32.mrf.mxu0
        %v6592 = vadd.f32 0.0, %v6591
        %6593 = vmatmul.f32.gmra.mxu0 %v6508
        %v6594 = vpop.f32.mrf.mxu0
        %v6595 = vadd.f32 0.0, %v6594
        %6596 = vmatmul.f32.gmra.mxu0 %v6511
        %v6597 = vpop.f32.mrf.mxu0
        %v6598 = vadd.f32 0.0, %v6597
        %6599 = vdwg.mxu0
        %6600 = vmatpush.msra.mxu0 0.0
        %6601 = vmatpush.msra.mxu0 0.0
        %6602 = vmatpush.msra.mxu0 0.0
        %6603 = vmatpush.msra.mxu0 0.0
        %6604 = vmatpush.msra.mxu0 %v6427
        %6605 = vmatpush.msra.mxu0 %v6426
        %6606 = vmatpush.msra.mxu0 %v6425
        %6607 = vmatpush.msra.mxu0 %v6424
        %6608 = vmatpush.msra.mxu0 %v6484
        %6609 = vmatpush.msra.mxu0 %v6480
        %6610 = vmatpush.msra.mxu0 %v6476
        %6611 = vmatpush.msra.mxu0 %v6472
        %6612 = vmatpush.msra.mxu0 %v6318
        %6613 = vmatpush.msra.mxu0 %v6314
        %6614 = vmatpush.msra.mxu0 %v6310
        %6615 = vmatpush.msra.mxu0 %v6306
        %6616 = vmatmul.f32.gmra.mxu0 %v6502
        %v6617 = vpop.f32.mrf.mxu0
        %v6618 = vadd.f32 0.0, %v6617
        %6619 = vmatmul.f32.gmra.mxu0 %v6505
        %v6620 = vpop.f32.mrf.mxu0
        %v6621 = vadd.f32 0.0, %v6620
        %6622 = vmatmul.f32.gmra.mxu0 %v6508
        %v6623 = vpop.f32.mrf.mxu0
        %v6624 = vadd.f32 0.0, %v6623
        %6625 = vmatmul.f32.gmra.mxu0 %v6511
        %v6626 = vpop.f32.mrf.mxu0
        %v6627 = vadd.f32 0.0, %v6626
        %6628 = vdwg.mxu0
        %v6629 = vadd.f32 %v6148, %v6531
        %v6630 = vadd.f32 %v6177, %v6560
        %v6631 = vadd.f32 %v6206, %v6589
        %v6632 = vadd.f32 %v6235, %v6618
        %v6633 = vadd.f32 %v6151, %v6534
        %v6634 = vadd.f32 %v6180, %v6563
        %v6635 = vadd.f32 %v6209, %v6592
        %v6636 = vadd.f32 %v6238, %v6621
        %v6637 = vadd.f32 %v6154, %v6537
        %v6638 = vadd.f32 %v6183, %v6566
        %v6639 = vadd.f32 %v6212, %v6595
        %v6640 = vadd.f32 %v6241, %v6624
        %v6641 = vadd.f32 %v6157, %v6540
        %v6642 = vadd.f32 %v6186, %v6569
        %v6643 = vadd.f32 %v6215, %v6598
        %v6644 = vadd.f32 %v6244, %v6627
        %6646 = vset.pattern.permute.xlu0 0
        %6647 = vperm.xlu0 %6646, %v5560
        %v6648 = vpop.permute.xlu0 %6647
        %6651 = vset.pattern.permute.xlu0 0
        %6652 = vperm.xlu0 %6651, %v5561
        %v6653 = vpop.permute.xlu0 %6652
        %6656 = vset.pattern.permute.xlu0 0
        %6657 = vperm.xlu0 %6656, %v5562
        %v6658 = vpop.permute.xlu0 %6657
        %6661 = vset.pattern.permute.xlu0 0
        %6662 = vperm.xlu0 %6661, %v5563
        %v6663 = vpop.permute.xlu0 %6662
        %v6665 = vadd.f32 %v6629, %v6648
        %v6666 = vadd.f32 %v6630, %v6648
        %v6667 = vadd.f32 %v6631, %v6648
        %v6668 = vadd.f32 %v6632, %v6648
        %v6669 = vadd.f32 %v6633, %v6653
        %v6670 = vadd.f32 %v6634, %v6653
        %v6671 = vadd.f32 %v6635, %v6653
        %v6672 = vadd.f32 %v6636, %v6653
        %v6673 = vadd.f32 %v6637, %v6658
        %v6674 = vadd.f32 %v6638, %v6658
        %v6675 = vadd.f32 %v6639, %v6658
        %v6676 = vadd.f32 %v6640, %v6658
        %v6677 = vadd.f32 %v6641, %v6663
        %v6678 = vadd.f32 %v6642, %v6663
        %v6679 = vadd.f32 %v6643, %v6663
        %v6680 = vadd.f32 %v6644, %v6663
        %v6681 = vmax.f32 %v6665, 0.0
        %v6682 = vmax.f32 %v6666, 0.0
        %v6683 = vmax.f32 %v6667, 0.0
        %v6684 = vmax.f32 %v6668, 0.0
        %v6685 = vmax.f32 %v6669, 0.0
        %v6686 = vmax.f32 %v6670, 0.0
        %v6687 = vmax.f32 %v6671, 0.0
        %v6688 = vmax.f32 %v6672, 0.0
        %v6689 = vmax.f32 %v6673, 0.0
        %v6690 = vmax.f32 %v6674, 0.0
        %v6691 = vmax.f32 %v6675, 0.0
        %v6692 = vmax.f32 %v6676, 0.0
        %v6693 = vmax.f32 %v6677, 0.0
        %v6694 = vmax.f32 %v6678, 0.0
        %v6695 = vmax.f32 %v6679, 0.0
        %v6696 = vmax.f32 %v6680, 0.0
        %6717 = vrot.lane.b32.xlu0 %v4607, 28
        %v6718 = vpop.permute.xlu0 %6717
        %6719 = vrot.lane.b32.xlu0 %v4608, 28
        %v6720 = vpop.permute.xlu0 %6719
        %6721 = vrot.lane.b32.xlu0 %v4609, 28
        %v6722 = vpop.permute.xlu0 %6721
        %6723 = vrot.lane.b32.xlu0 %v4610, 28
        %v6724 = vpop.permute.xlu0 %6723
        %6725 = vrot.lane.b32.xlu0 %v4611, 28
        %v6726 = vpop.permute.xlu0 %6725
        %6727 = vrot.lane.b32.xlu0 %v4612, 28
        %v6728 = vpop.permute.xlu0 %6727
        %6729 = vrot.lane.b32.xlu0 %v4613, 28
        %v6730 = vpop.permute.xlu0 %6729
        %6731 = vrot.lane.b32.xlu0 %v4614, 28
        %v6732 = vpop.permute.xlu0 %6731
        %6733 = vrot.lane.b32.xlu0 %v4615, 28
        %v6734 = vpop.permute.xlu0 %6733
        %6735 = vrot.lane.b32.xlu0 %v4616, 28
        %v6736 = vpop.permute.xlu0 %6735
        %6737 = vrot.lane.b32.xlu0 %v4617, 28
        %v6738 = vpop.permute.xlu0 %6737
        %6739 = vrot.lane.b32.xlu0 %v4618, 28
        %v6740 = vpop.permute.xlu0 %6739
        %6741 = vrot.lane.b32.xlu0 %v4619, 28
        %v6742 = vpop.permute.xlu0 %6741
        %6743 = vrot.lane.b32.xlu0 %v4620, 28
        %v6744 = vpop.permute.xlu0 %6743
        %6745 = vrot.lane.b32.xlu0 %v4621, 28
        %v6746 = vpop.permute.xlu0 %6745
        %6747 = vrot.lane.b32.xlu0 %v4622, 28
        %v6748 = vpop.permute.xlu0 %6747
        %6749 = vrot.lane.b32.xlu0 %v4623, 28
        %v6750 = vpop.permute.xlu0 %6749
        %6751 = vrot.lane.b32.xlu0 %v4624, 28
        %v6752 = vpop.permute.xlu0 %6751
        %6753 = vrot.lane.b32.xlu0 %v4625, 28
        %v6754 = vpop.permute.xlu0 %6753
        %6755 = vrot.lane.b32.xlu0 %v4626, 28
        %v6756 = vpop.permute.xlu0 %6755
        %vm6757 = vcmask 228352
        %v6758 = vsel %vm6757, %v6718, %v6720
        %v6759 = vsel %vm6757, %v6720, %v6722
        %v6760 = vsel %vm6757, %v6722, %v6724
        %v6761 = vsel %vm6757, %v6724, %v6726
        %v6762 = vsel %vm6757, %v6728, %v6730
        %v6763 = vsel %vm6757, %v6730, %v6732
        %v6764 = vsel %vm6757, %v6732, %v6734
        %v6765 = vsel %vm6757, %v6734, %v6736
        %v6766 = vsel %vm6757, %v6738, %v6740
        %v6767 = vsel %vm6757, %v6740, %v6742
        %v6768 = vsel %vm6757, %v6742, %v6744
        %v6769 = vsel %vm6757, %v6744, %v6746
        %v6770 = vsel %vm6757, %v6748, %v6750
        %v6771 = vsel %vm6757, %v6750, %v6752
        %v6772 = vsel %vm6757, %v6752, %v6754
        %v6773 = vsel %vm6757, %v6754, %v6756
        %6790 = vrot.lane.b32.xlu0 %v6681, 84
        %v6791 = vpop.permute.xlu0 %6790
        %6792 = vrot.lane.b32.xlu0 %v6682, 84
        %v6793 = vpop.permute.xlu0 %6792
        %6794 = vrot.lane.b32.xlu0 %v6683, 84
        %v6795 = vpop.permute.xlu0 %6794
        %6796 = vrot.lane.b32.xlu0 %v6684, 84
        %v6797 = vpop.permute.xlu0 %6796
        %6798 = vrot.lane.b32.xlu0 %v6685, 84
        %v6799 = vpop.permute.xlu0 %6798
        %6800 = vrot.lane.b32.xlu0 %v6686, 84
        %v6801 = vpop.permute.xlu0 %6800
        %6802 = vrot.lane.b32.xlu0 %v6687, 84
        %v6803 = vpop.permute.xlu0 %6802
        %6804 = vrot.lane.b32.xlu0 %v6688, 84
        %v6805 = vpop.permute.xlu0 %6804
        %6806 = vrot.lane.b32.xlu0 %v6689, 84
        %v6807 = vpop.permute.xlu0 %6806
        %6808 = vrot.lane.b32.xlu0 %v6690, 84
        %v6809 = vpop.permute.xlu0 %6808
        %6810 = vrot.lane.b32.xlu0 %v6691, 84
        %v6811 = vpop.permute.xlu0 %6810
        %6812 = vrot.lane.b32.xlu0 %v6692, 84
        %v6813 = vpop.permute.xlu0 %6812
        %6814 = vrot.lane.b32.xlu0 %v6693, 84
        %v6815 = vpop.permute.xlu0 %6814
        %6816 = vrot.lane.b32.xlu0 %v6694, 84
        %v6817 = vpop.permute.xlu0 %6816
        %6818 = vrot.lane.b32.xlu0 %v6695, 84
        %v6819 = vpop.permute.xlu0 %6818
        %6820 = vrot.lane.b32.xlu0 %v6696, 84
        %v6821 = vpop.permute.xlu0 %6820
        %vm6822 = vcmask 687104
        %v6823 = vsel %vm6822, %v6791, %v6793
        %v6824 = vsel %vm6822, %v6793, %v6795
        %v6825 = vsel %vm6822, %v6795, %v6797
        %v6826 = vsel %vm6822, %v6799, %v6801
        %v6827 = vsel %vm6822, %v6801, %v6803
        %v6828 = vsel %vm6822, %v6803, %v6805
        %v6829 = vsel %vm6822, %v6807, %v6809
        %v6830 = vsel %vm6822, %v6809, %v6811
        %v6831 = vsel %vm6822, %v6811, %v6813
        %v6832 = vsel %vm6822, %v6815, %v6817
        %v6833 = vsel %vm6822, %v6817, %v6819
        %v6834 = vsel %vm6822, %v6819, %v6821
        %v6835 = vld [vmem:[%s12] sm:$0xff]
        %v6836 = vld [vmem:[%s12 + $0x8] sm:$0xff]
        %v6837 = vld [vmem:[%s12 + $0x10] sm:$0xff]
        %v6838 = vld [vmem:[%s12 + $0x18] sm:$0xff]
        %v6839 = vld [vmem:[%s12 + $0x20] sm:$0xff]
        %v6840 = vld [vmem:[%s12 + $0x28] sm:$0xff]
        %v6841 = vld [vmem:[%s12 + $0x30] sm:$0xff]
        %v6842 = vld [vmem:[%s12 + $0x38] sm:$0xff]
        %v6843 = vld [vmem:[%s13] sm:$0xff]
        %v6844 = vld [vmem:[%s13 + $0x8] sm:$0xff]
        %v6845 = vld [vmem:[%s13 + $0x10] sm:$0xff]
        %v6846 = vld [vmem:[%s13 + $0x18] sm:$0xff]
        %v6847 = vld [vmem:[%s13 + $0x20] sm:$0xff]
        %v6848 = vld [vmem:[%s13 + $0x28] sm:$0xff]
        %v6849 = vld [vmem:[%s13 + $0x30] sm:$0xff]
        %v6850 = vld [vmem:[%s13 + $0x38] sm:$0xff]
        %6852 = vset.pattern.permute.xlu0 0
        %6853 = vperm.xlu0 %6852, %v6843
        %v6854 = vpop.permute.xlu0 %6853
        %6857 = vset.pattern.permute.xlu0 0
        %6858 = vperm.xlu0 %6857, %v6844
        %v6859 = vpop.permute.xlu0 %6858
        %6862 = vset.pattern.permute.xlu0 0
        %6863 = vperm.xlu0 %6862, %v6845
        %v6864 = vpop.permute.xlu0 %6863
        %6867 = vset.pattern.permute.xlu0 0
        %6868 = vperm.xlu0 %6867, %v6846
        %v6869 = vpop.permute.xlu0 %6868
        %6872 = vset.pattern.permute.xlu0 0
        %6873 = vperm.xlu0 %6872, %v6847
        %v6874 = vpop.permute.xlu0 %6873
        %6877 = vset.pattern.permute.xlu0 0
        %6878 = vperm.xlu0 %6877, %v6848
        %v6879 = vpop.permute.xlu0 %6878
        %6882 = vset.pattern.permute.xlu0 0
        %6883 = vperm.xlu0 %6882, %v6849
        %v6884 = vpop.permute.xlu0 %6883
        %6887 = vset.pattern.permute.xlu0 0
        %6888 = vperm.xlu0 %6887, %v6850
        %v6889 = vpop.permute.xlu0 %6888
        %6911 = vrot.lane.b32.xlu0 %v3232, 44
        %v6912 = vpop.permute.xlu0 %6911
        %6913 = vrot.lane.b32.xlu0 %v3233, 44
        %v6914 = vpop.permute.xlu0 %6913
        %6915 = vrot.lane.b32.xlu0 %v3234, 44
        %v6916 = vpop.permute.xlu0 %6915
        %6917 = vrot.lane.b32.xlu0 %v3235, 44
        %v6918 = vpop.permute.xlu0 %6917
        %6919 = vrot.lane.b32.xlu0 %v3236, 44
        %v6920 = vpop.permute.xlu0 %6919
        %6921 = vrot.lane.b32.xlu0 %v3237, 44
        %v6922 = vpop.permute.xlu0 %6921
        %6923 = vrot.lane.b32.xlu0 %v3238, 44
        %v6924 = vpop.permute.xlu0 %6923
        %6925 = vrot.lane.b32.xlu0 %v3239, 44
        %v6926 = vpop.permute.xlu0 %6925
        %6927 = vrot.lane.b32.xlu0 %v3240, 44
        %v6928 = vpop.permute.xlu0 %6927
        %6929 = vrot.lane.b32.xlu0 %v3241, 44
        %v6930 = vpop.permute.xlu0 %6929
        %6931 = vrot.lane.b32.xlu0 %v3242, 44
        %v6932 = vpop.permute.xlu0 %6931
        %6933 = vrot.lane.b32.xlu0 %v3243, 44
        %v6934 = vpop.permute.xlu0 %6933
        %6935 = vrot.lane.b32.xlu0 %v3244, 44
        %v6936 = vpop.permute.xlu0 %6935
        %6937 = vrot.lane.b32.xlu0 %v3245, 44
        %v6938 = vpop.permute.xlu0 %6937
        %6939 = vrot.lane.b32.xlu0 %v3246, 44
        %v6940 = vpop.permute.xlu0 %6939
        %6941 = vrot.lane.b32.xlu0 %v3247, 44
        %v6942 = vpop.permute.xlu0 %6941
        %6943 = vrot.lane.b32.xlu0 %v3248, 44
        %v6944 = vpop.permute.xlu0 %6943
        %6945 = vrot.lane.b32.xlu0 %v3249, 44
        %v6946 = vpop.permute.xlu0 %6945
        %6947 = vrot.lane.b32.xlu0 %v3250, 44
        %v6948 = vpop.permute.xlu0 %6947
        %6949 = vrot.lane.b32.xlu0 %v3251, 44
        %v6950 = vpop.permute.xlu0 %6949
        %6951 = vrot.lane.b32.xlu0 %v6718, 44
        %v6952 = vpop.permute.xlu0 %6951
        %6953 = vrot.lane.b32.xlu0 %v6758, 44
        %v6954 = vpop.permute.xlu0 %6953
        %6955 = vrot.lane.b32.xlu0 %v6759, 44
        %v6956 = vpop.permute.xlu0 %6955
        %6957 = vrot.lane.b32.xlu0 %v6760, 44
        %v6958 = vpop.permute.xlu0 %6957
        %6959 = vrot.lane.b32.xlu0 %v6761, 44
        %v6960 = vpop.permute.xlu0 %6959
        %6961 = vrot.lane.b32.xlu0 %v6728, 44
        %v6962 = vpop.permute.xlu0 %6961
        %6963 = vrot.lane.b32.xlu0 %v6762, 44
        %v6964 = vpop.permute.xlu0 %6963
        %6965 = vrot.lane.b32.xlu0 %v6763, 44
        %v6966 = vpop.permute.xlu0 %6965
        %6967 = vrot.lane.b32.xlu0 %v6764, 44
        %v6968 = vpop.permute.xlu0 %6967
        %6969 = vrot.lane.b32.xlu0 %v6765, 44
        %v6970 = vpop.permute.xlu0 %6969
        %6971 = vrot.lane.b32.xlu0 %v6738, 44
        %v6972 = vpop.permute.xlu0 %6971
        %6973 = vrot.lane.b32.xlu0 %v6766, 44
        %v6974 = vpop.permute.xlu0 %6973
        %6975 = vrot.lane.b32.xlu0 %v6767, 44
        %v6976 = vpop.permute.xlu0 %6975
        %6977 = vrot.lane.b32.xlu0 %v6768, 44
        %v6978 = vpop.permute.xlu0 %6977
        %6979 = vrot.lane.b32.xlu0 %v6769, 44
        %v6980 = vpop.permute.xlu0 %6979
        %6981 = vrot.lane.b32.xlu0 %v6748, 44
        %v6982 = vpop.permute.xlu0 %6981
        %6983 = vrot.lane.b32.xlu0 %v6770, 44
        %v6984 = vpop.permute.xlu0 %6983
        %6985 = vrot.lane.b32.xlu0 %v6771, 44
        %v6986 = vpop.permute.xlu0 %6985
        %6987 = vrot.lane.b32.xlu0 %v6772, 44
        %v6988 = vpop.permute.xlu0 %6987
        %6989 = vrot.lane.b32.xlu0 %v6773, 44
        %v6990 = vpop.permute.xlu0 %6989
        %6991 = vrot.lane.b32.xlu0 %v6791, 44
        %v6992 = vpop.permute.xlu0 %6991
        %6993 = vrot.lane.b32.xlu0 %v6823, 44
        %v6994 = vpop.permute.xlu0 %6993
        %6995 = vrot.lane.b32.xlu0 %v6824, 44
        %v6996 = vpop.permute.xlu0 %6995
        %6997 = vrot.lane.b32.xlu0 %v6825, 44
        %v6998 = vpop.permute.xlu0 %6997
        %6999 = vrot.lane.b32.xlu0 %v6797, 44
        %v7000 = vpop.permute.xlu0 %6999
        %7001 = vrot.lane.b32.xlu0 %v6799, 44
        %v7002 = vpop.permute.xlu0 %7001
        %7003 = vrot.lane.b32.xlu0 %v6826, 44
        %v7004 = vpop.permute.xlu0 %7003
        %7005 = vrot.lane.b32.xlu0 %v6827, 44
        %v7006 = vpop.permute.xlu0 %7005
        %7007 = vrot.lane.b32.xlu0 %v6828, 44
        %v7008 = vpop.permute.xlu0 %7007
        %7009 = vrot.lane.b32.xlu0 %v6805, 44
        %v7010 = vpop.permute.xlu0 %7009
        %7011 = vrot.lane.b32.xlu0 %v6807, 44
        %v7012 = vpop.permute.xlu0 %7011
        %7013 = vrot.lane.b32.xlu0 %v6829, 44
        %v7014 = vpop.permute.xlu0 %7013
        %7015 = vrot.lane.b32.xlu0 %v6830, 44
        %v7016 = vpop.permute.xlu0 %7015
        %7017 = vrot.lane.b32.xlu0 %v6831, 44
        %v7018 = vpop.permute.xlu0 %7017
        %7019 = vrot.lane.b32.xlu0 %v6813, 44
        %v7020 = vpop.permute.xlu0 %7019
        %7021 = vrot.lane.b32.xlu0 %v6815, 44
        %v7022 = vpop.permute.xlu0 %7021
        %7023 = vrot.lane.b32.xlu0 %v6832, 44
        %v7024 = vpop.permute.xlu0 %7023
        %7025 = vrot.lane.b32.xlu0 %v6833, 44
        %v7026 = vpop.permute.xlu0 %7025
        %7027 = vrot.lane.b32.xlu0 %v6834, 44
        %v7028 = vpop.permute.xlu0 %7027
        %7029 = vrot.lane.b32.xlu0 %v6821, 44
        %v7030 = vpop.permute.xlu0 %7029
        %v7031 = vsel %vm5957, %v6912, %v6914
        %v7032 = vsel %vm5957, %v6914, %v6916
        %v7033 = vsel %vm5957, %v6916, %v6918
        %v7034 = vsel %vm5957, %v6918, %v6920
        %v7035 = vsel %vm5957, %v6922, %v6924
        %v7036 = vsel %vm5957, %v6924, %v6926
        %v7037 = vsel %vm5957, %v6926, %v6928
        %v7038 = vsel %vm5957, %v6928, %v6930
        %v7039 = vsel %vm5957, %v6932, %v6934
        %v7040 = vsel %vm5957, %v6934, %v6936
        %v7041 = vsel %vm5957, %v6936, %v6938
        %v7042 = vsel %vm5957, %v6938, %v6940
        %v7043 = vsel %vm5957, %v6942, %v6944
        %v7044 = vsel %vm5957, %v6944, %v6946
        %v7045 = vsel %vm5957, %v6946, %v6948
        %v7046 = vsel %vm5957, %v6948, %v6950
        %v7047 = vsel %vm5957, %v6952, %v6954
        %v7048 = vsel %vm5957, %v6954, %v6956
        %v7049 = vsel %vm5957, %v6956, %v6958
        %v7050 = vsel %vm5957, %v6958, %v6960
        %v7051 = vsel %vm5957, %v6962, %v6964
        %v7052 = vsel %vm5957, %v6964, %v6966
        %v7053 = vsel %vm5957, %v6966, %v6968
        %v7054 = vsel %vm5957, %v6968, %v6970
        %v7055 = vsel %vm5957, %v6972, %v6974
        %v7056 = vsel %vm5957, %v6974, %v6976
        %v7057 = vsel %vm5957, %v6976, %v6978
        %v7058 = vsel %vm5957, %v6978, %v6980
        %v7059 = vsel %vm5957, %v6982, %v6984
        %v7060 = vsel %vm5957, %v6984, %v6986
        %v7061 = vsel %vm5957, %v6986, %v6988
        %v7062 = vsel %vm5957, %v6988, %v6990
        %v7063 = vsel %vm5957, %v6992, %v6994
        %v7064 = vsel %vm5957, %v6994, %v6996
        %v7065 = vsel %vm5957, %v6996, %v6998
        %v7066 = vsel %vm5957, %v6998, %v7000
        %v7067 = vsel %vm5957, %v7002, %v7004
        %v7068 = vsel %vm5957, %v7004, %v7006
        %v7069 = vsel %vm5957, %v7006, %v7008
        %v7070 = vsel %vm5957, %v7008, %v7010
        %v7071 = vsel %vm5957, %v7012, %v7014
        %v7072 = vsel %vm5957, %v7014, %v7016
        %v7073 = vsel %vm5957, %v7016, %v7018
        %v7074 = vsel %vm5957, %v7018, %v7020
        %v7075 = vsel %vm5957, %v7022, %v7024
        %v7076 = vsel %vm5957, %v7024, %v7026
        %v7077 = vsel %vm5957, %v7026, %v7028
        %v7078 = vsel %vm5957, %v7028, %v7030
        %v7128 = vsel %vm2420, %v6835, 0
        %v7131 = vsel %vm2420, %v6836, 0
        %v7134 = vsel %vm2420, %v6837, 0
        %v7137 = vsel %vm2420, %v6838, 0
        %v7140 = vsel %vm2420, %v6839, 0
        %v7143 = vsel %vm2420, %v6840, 0
        %v7146 = vsel %vm2420, %v6841, 0
        %v7149 = vsel %vm2420, %v6842, 0
        %7151 = vmatpush.msra.mxu0 0.0
        %7152 = vmatpush.msra.mxu0 0.0
        %7153 = vmatpush.msra.mxu0 0.0
        %7154 = vmatpush.msra.mxu0 0.0
        %7155 = vmatpush.msra.mxu0 %v7075
        %7156 = vmatpush.msra.mxu0 %v7071
        %7157 = vmatpush.msra.mxu0 %v7067
        %7158 = vmatpush.msra.mxu0 %v7063
        %7159 = vmatpush.msra.mxu0 %v7059
        %7160 = vmatpush.msra.mxu0 %v7055
        %7161 = vmatpush.msra.mxu0 %v7051
        %7162 = vmatpush.msra.mxu0 %v7047
        %7163 = vmatpush.msra.mxu0 %v7043
        %7164 = vmatpush.msra.mxu0 %v7039
        %7165 = vmatpush.msra.mxu0 %v7035
        %7166 = vmatpush.msra.mxu0 %v7031
        %7167 = vmatmul.f32.gmra.mxu0 %v7128
        %v7168 = vpop.f32.mrf.mxu0
        %v7169 = vadd.f32 %v6854, %v7168
        %7170 = vmatmul.f32.gmra.mxu0 %v7131
        %v7171 = vpop.f32.mrf.mxu0
        %v7172 = vadd.f32 %v6859, %v7171
        %7173 = vmatmul.f32.gmra.mxu0 %v7134
        %v7174 = vpop.f32.mrf.mxu0
        %v7175 = vadd.f32 %v6864, %v7174
        %7176 = vmatmul.f32.gmra.mxu0 %v7137
        %v7177 = vpop.f32.mrf.mxu0
        %v7178 = vadd.f32 %v6869, %v7177
        %7179 = vmatmul.f32.gmra.mxu0 %v7140
        %v7180 = vpop.f32.mrf.mxu0
        %v7181 = vadd.f32 %v6874, %v7180
        %7182 = vmatmul.f32.gmra.mxu0 %v7143
        %v7183 = vpop.f32.mrf.mxu0
        %v7184 = vadd.f32 %v6879, %v7183
        %7185 = vmatmul.f32.gmra.mxu0 %v7146
        %v7186 = vpop.f32.mrf.mxu0
        %v7187 = vadd.f32 %v6884, %v7186
        %7188 = vmatmul.f32.gmra.mxu0 %v7149
        %v7189 = vpop.f32.mrf.mxu0
        %v7190 = vadd.f32 %v6889, %v7189
        %7191 = vdwg.mxu0
        %7192 = vmatpush.msra.mxu0 0.0
        %7193 = vmatpush.msra.mxu0 0.0
        %7194 = vmatpush.msra.mxu0 0.0
        %7195 = vmatpush.msra.mxu0 0.0
        %7196 = vmatpush.msra.mxu0 %v7076
        %7197 = vmatpush.msra.mxu0 %v7072
        %7198 = vmatpush.msra.mxu0 %v7068
        %7199 = vmatpush.msra.mxu0 %v7064
        %7200 = vmatpush.msra.mxu0 %v7060
        %7201 = vmatpush.msra.mxu0 %v7056
        %7202 = vmatpush.msra.mxu0 %v7052
        %7203 = vmatpush.msra.mxu0 %v7048
        %7204 = vmatpush.msra.mxu0 %v7044
        %7205 = vmatpush.msra.mxu0 %v7040
        %7206 = vmatpush.msra.mxu0 %v7036
        %7207 = vmatpush.msra.mxu0 %v7032
        %7208 = vmatmul.f32.gmra.mxu0 %v7128
        %v7209 = vpop.f32.mrf.mxu0
        %v7210 = vadd.f32 %v6854, %v7209
        %7211 = vmatmul.f32.gmra.mxu0 %v7131
        %v7212 = vpop.f32.mrf.mxu0
        %v7213 = vadd.f32 %v6859, %v7212
        %7214 = vmatmul.f32.gmra.mxu0 %v7134
        %v7215 = vpop.f32.mrf.mxu0
        %v7216 = vadd.f32 %v6864, %v7215
        %7217 = vmatmul.f32.gmra.mxu0 %v7137
        %v7218 = vpop.f32.mrf.mxu0
        %v7219 = vadd.f32 %v6869, %v7218
        %7220 = vmatmul.f32.gmra.mxu0 %v7140
        %v7221 = vpop.f32.mrf.mxu0
        %v7222 = vadd.f32 %v6874, %v7221
        %7223 = vmatmul.f32.gmra.mxu0 %v7143
        %v7224 = vpop.f32.mrf.mxu0
        %v7225 = vadd.f32 %v6879, %v7224
        %7226 = vmatmul.f32.gmra.mxu0 %v7146
        %v7227 = vpop.f32.mrf.mxu0
        %v7228 = vadd.f32 %v6884, %v7227
        %7229 = vmatmul.f32.gmra.mxu0 %v7149
        %v7230 = vpop.f32.mrf.mxu0
        %v7231 = vadd.f32 %v6889, %v7230
        %7232 = vdwg.mxu0
        %7233 = vmatpush.msra.mxu0 0.0
        %7234 = vmatpush.msra.mxu0 0.0
        %7235 = vmatpush.msra.mxu0 0.0
        %7236 = vmatpush.msra.mxu0 0.0
        %7237 = vmatpush.msra.mxu0 %v7077
        %7238 = vmatpush.msra.mxu0 %v7073
        %7239 = vmatpush.msra.mxu0 %v7069
        %7240 = vmatpush.msra.mxu0 %v7065
        %7241 = vmatpush.msra.mxu0 %v7061
        %7242 = vmatpush.msra.mxu0 %v7057
        %7243 = vmatpush.msra.mxu0 %v7053
        %7244 = vmatpush.msra.mxu0 %v7049
        %7245 = vmatpush.msra.mxu0 %v7045
        %7246 = vmatpush.msra.mxu0 %v7041
        %7247 = vmatpush.msra.mxu0 %v7037
        %7248 = vmatpush.msra.mxu0 %v7033
        %7249 = vmatmul.f32.gmra.mxu0 %v7128
        %v7250 = vpop.f32.mrf.mxu0
        %v7251 = vadd.f32 %v6854, %v7250
        %7252 = vmatmul.f32.gmra.mxu0 %v7131
        %v7253 = vpop.f32.mrf.mxu0
        %v7254 = vadd.f32 %v6859, %v7253
        %7255 = vmatmul.f32.gmra.mxu0 %v7134
        %v7256 = vpop.f32.mrf.mxu0
        %v7257 = vadd.f32 %v6864, %v7256
        %7258 = vmatmul.f32.gmra.mxu0 %v7137
        %v7259 = vpop.f32.mrf.mxu0
        %v7260 = vadd.f32 %v6869, %v7259
        %7261 = vmatmul.f32.gmra.mxu0 %v7140
        %v7262 = vpop.f32.mrf.mxu0
        %v7263 = vadd.f32 %v6874, %v7262
        %7264 = vmatmul.f32.gmra.mxu0 %v7143
        %v7265 = vpop.f32.mrf.mxu0
        %v7266 = vadd.f32 %v6879, %v7265
        %7267 = vmatmul.f32.gmra.mxu0 %v7146
        %v7268 = vpop.f32.mrf.mxu0
        %v7269 = vadd.f32 %v6884, %v7268
        %7270 = vmatmul.f32.gmra.mxu0 %v7149
        %v7271 = vpop.f32.mrf.mxu0
        %v7272 = vadd.f32 %v6889, %v7271
        %7273 = vdwg.mxu0
        %7274 = vmatpush.msra.mxu0 0.0
        %7275 = vmatpush.msra.mxu0 0.0
        %7276 = vmatpush.msra.mxu0 0.0
        %7277 = vmatpush.msra.mxu0 0.0
        %7278 = vmatpush.msra.mxu0 %v7078
        %7279 = vmatpush.msra.mxu0 %v7074
        %7280 = vmatpush.msra.mxu0 %v7070
        %7281 = vmatpush.msra.mxu0 %v7066
        %7282 = vmatpush.msra.mxu0 %v7062
        %7283 = vmatpush.msra.mxu0 %v7058
        %7284 = vmatpush.msra.mxu0 %v7054
        %7285 = vmatpush.msra.mxu0 %v7050
        %7286 = vmatpush.msra.mxu0 %v7046
        %7287 = vmatpush.msra.mxu0 %v7042
        %7288 = vmatpush.msra.mxu0 %v7038
        %7289 = vmatpush.msra.mxu0 %v7034
        %7290 = vmatmul.f32.gmra.mxu0 %v7128
        %v7291 = vpop.f32.mrf.mxu0
        %v7292 = vadd.f32 %v6854, %v7291
        %7293 = vmatmul.f32.gmra.mxu0 %v7131
        %v7294 = vpop.f32.mrf.mxu0
        %v7295 = vadd.f32 %v6859, %v7294
        %7296 = vmatmul.f32.gmra.mxu0 %v7134
        %v7297 = vpop.f32.mrf.mxu0
        %v7298 = vadd.f32 %v6864, %v7297
        %7299 = vmatmul.f32.gmra.mxu0 %v7137
        %v7300 = vpop.f32.mrf.mxu0
        %v7301 = vadd.f32 %v6869, %v7300
        %7302 = vmatmul.f32.gmra.mxu0 %v7140
        %v7303 = vpop.f32.mrf.mxu0
        %v7304 = vadd.f32 %v6874, %v7303
        %7305 = vmatmul.f32.gmra.mxu0 %v7143
        %v7306 = vpop.f32.mrf.mxu0
        %v7307 = vadd.f32 %v6879, %v7306
        %7308 = vmatmul.f32.gmra.mxu0 %v7146
        %v7309 = vpop.f32.mrf.mxu0
        %v7310 = vadd.f32 %v6884, %v7309
        %7311 = vmatmul.f32.gmra.mxu0 %v7149
        %v7312 = vpop.f32.mrf.mxu0
        %v7313 = vadd.f32 %v6889, %v7312
        %7314 = vdwg.mxu0
        %s7315 = ssub.s32 1, %s1823
        %s7316 = smul.u32 %s7315, 28
        %v7317 = vstv %s7316
        %vm7318 = vcmp.ge.s32.totalorder %v1817, %v7317
        %vm7319 = vcmp.ge.s32.totalorder %v1818, %v7317
        %vm7320 = vcmp.ge.s32.totalorder %v1819, %v7317
        %vm7321 = vcmp.ge.s32.totalorder %v1820, %v7317
        %s7322 = sadd.s32 %s7316, 448
        %v7323 = vstv %s7322
        %vm7324 = vcmp.lt.s32.totalorder %v1817, %v7323
        %vm7325 = vcmp.lt.s32.totalorder %v1818, %v7323
        %vm7326 = vcmp.lt.s32.totalorder %v1819, %v7323
        %vm7327 = vcmp.lt.s32.totalorder %v1820, %v7323
        %vm7328 = vmand %vm7318, %vm7324
        %vm7329 = vmand %vm7319, %vm7325
        %vm7330 = vmand %vm7320, %vm7326
        %vm7331 = vmand %vm7321, %vm7327
        %v7332 = vsel %vm7328, %v1848, 0.0
        %v7333 = vsel %vm7329, %v1849, 0.0
        %v7334 = vsel %vm7330, %v1850, 0.0
        %v7335 = vsel %vm7331, %v1851, 0.0
        %v7336 = vperm.slane %v7332, 0
        %v7337 = vperm.slane %v7333, 0
        %v7338 = vperm.slane %v7334, 0
        %v7339 = vperm.slane %v7335, 0
        %v7340 = vmul.f32 %v7169, %v7336
        %v7341 = vmul.f32 %v7210, %v7337
        %v7342 = vmul.f32 %v7251, %v7338
        %v7343 = vmul.f32 %v7292, %v7339
        %v7344 = vmul.f32 %v7172, %v7336
        %v7345 = vmul.f32 %v7213, %v7337
        %v7346 = vmul.f32 %v7254, %v7338
        %v7347 = vmul.f32 %v7295, %v7339
        %v7348 = vmul.f32 %v7175, %v7336
        %v7349 = vmul.f32 %v7216, %v7337
        %v7350 = vmul.f32 %v7257, %v7338
        %v7351 = vmul.f32 %v7298, %v7339
        %v7352 = vmul.f32 %v7178, %v7336
        %v7353 = vmul.f32 %v7219, %v7337
        %v7354 = vmul.f32 %v7260, %v7338
        %v7355 = vmul.f32 %v7301, %v7339
        %v7356 = vmul.f32 %v7181, %v7336
        %v7357 = vmul.f32 %v7222, %v7337
        %v7358 = vmul.f32 %v7263, %v7338
        %v7359 = vmul.f32 %v7304, %v7339
        %v7360 = vmul.f32 %v7184, %v7336
        %v7361 = vmul.f32 %v7225, %v7337
        %v7362 = vmul.f32 %v7266, %v7338
        %v7363 = vmul.f32 %v7307, %v7339
        %v7364 = vmul.f32 %v7187, %v7336
        %v7365 = vmul.f32 %v7228, %v7337
        %v7366 = vmul.f32 %v7269, %v7338
        %v7367 = vmul.f32 %v7310, %v7339
        %v7368 = vmul.f32 %v7190, %v7336
        %v7369 = vmul.f32 %v7231, %v7337
        %v7370 = vmul.f32 %v7272, %v7338
        %v7371 = vmul.f32 %v7313, %v7339
        %v7372 = vld [vmem:[%s14] sm:$0xff]
        %v7373 = vld [vmem:[%s14 + $0x8] sm:$0xff]
        %v7374 = vld [vmem:[%s14 + $0x10] sm:$0xff]
        %v7375 = vld [vmem:[%s14 + $0x18] sm:$0xff]
        %v7376 = vld [vmem:[%s14 + $0x20] sm:$0xff]
        %v7377 = vld [vmem:[%s14 + $0x28] sm:$0xff]
        %v7378 = vld [vmem:[%s15] sm:$0xff]
        %7387 = vrot.lane.b32.xlu0 %v7343, 65
        %v7388 = vpop.permute.xlu0 %7387
        %7389 = vrot.lane.b32.xlu0 %v7347, 65
        %v7390 = vpop.permute.xlu0 %7389
        %7391 = vrot.lane.b32.xlu0 %v7351, 65
        %v7392 = vpop.permute.xlu0 %7391
        %7393 = vrot.lane.b32.xlu0 %v7355, 65
        %v7394 = vpop.permute.xlu0 %7393
        %7395 = vrot.lane.b32.xlu0 %v7359, 65
        %v7396 = vpop.permute.xlu0 %7395
        %7397 = vrot.lane.b32.xlu0 %v7363, 65
        %v7398 = vpop.permute.xlu0 %7397
        %7399 = vrot.lane.b32.xlu0 %v7367, 65
        %v7400 = vpop.permute.xlu0 %7399
        %7401 = vrot.lane.b32.xlu0 %v7371, 65
        %v7402 = vpop.permute.xlu0 %7401
        %7435 = vrot.lane.b32.xlu0 %v7340, 1
        %v7436 = vpop.permute.xlu0 %7435
        %7437 = vrot.lane.b32.xlu0 %v7341, 1
        %v7438 = vpop.permute.xlu0 %7437
        %7439 = vrot.lane.b32.xlu0 %v7342, 1
        %v7440 = vpop.permute.xlu0 %7439
        %7441 = vrot.lane.b32.xlu0 %v7343, 1
        %v7442 = vpop.permute.xlu0 %7441
        %7443 = vrot.lane.b32.xlu0 %v7344, 1
        %v7444 = vpop.permute.xlu0 %7443
        %7445 = vrot.lane.b32.xlu0 %v7345, 1
        %v7446 = vpop.permute.xlu0 %7445
        %7447 = vrot.lane.b32.xlu0 %v7346, 1
        %v7448 = vpop.permute.xlu0 %7447
        %7449 = vrot.lane.b32.xlu0 %v7347, 1
        %v7450 = vpop.permute.xlu0 %7449
        %7451 = vrot.lane.b32.xlu0 %v7348, 1
        %v7452 = vpop.permute.xlu0 %7451
        %7453 = vrot.lane.b32.xlu0 %v7349, 1
        %v7454 = vpop.permute.xlu0 %7453
        %7455 = vrot.lane.b32.xlu0 %v7350, 1
        %v7456 = vpop.permute.xlu0 %7455
        %7457 = vrot.lane.b32.xlu0 %v7351, 1
        %v7458 = vpop.permute.xlu0 %7457
        %7459 = vrot.lane.b32.xlu0 %v7352, 1
        %v7460 = vpop.permute.xlu0 %7459
        %7461 = vrot.lane.b32.xlu0 %v7353, 1
        %v7462 = vpop.permute.xlu0 %7461
        %7463 = vrot.lane.b32.xlu0 %v7354, 1
        %v7464 = vpop.permute.xlu0 %7463
        %7465 = vrot.lane.b32.xlu0 %v7355, 1
        %v7466 = vpop.permute.xlu0 %7465
        %7467 = vrot.lane.b32.xlu0 %v7356, 1
        %v7468 = vpop.permute.xlu0 %7467
        %7469 = vrot.lane.b32.xlu0 %v7357, 1
        %v7470 = vpop.permute.xlu0 %7469
        %7471 = vrot.lane.b32.xlu0 %v7358, 1
        %v7472 = vpop.permute.xlu0 %7471
        %7473 = vrot.lane.b32.xlu0 %v7359, 1
        %v7474 = vpop.permute.xlu0 %7473
        %7475 = vrot.lane.b32.xlu0 %v7360, 1
        %v7476 = vpop.permute.xlu0 %7475
        %7477 = vrot.lane.b32.xlu0 %v7361, 1
        %v7478 = vpop.permute.xlu0 %7477
        %7479 = vrot.lane.b32.xlu0 %v7362, 1
        %v7480 = vpop.permute.xlu0 %7479
        %7481 = vrot.lane.b32.xlu0 %v7363, 1
        %v7482 = vpop.permute.xlu0 %7481
        %7483 = vrot.lane.b32.xlu0 %v7364, 1
        %v7484 = vpop.permute.xlu0 %7483
        %7485 = vrot.lane.b32.xlu0 %v7365, 1
        %v7486 = vpop.permute.xlu0 %7485
        %7487 = vrot.lane.b32.xlu0 %v7366, 1
        %v7488 = vpop.permute.xlu0 %7487
        %7489 = vrot.lane.b32.xlu0 %v7367, 1
        %v7490 = vpop.permute.xlu0 %7489
        %7491 = vrot.lane.b32.xlu0 %v7368, 1
        %v7492 = vpop.permute.xlu0 %7491
        %7493 = vrot.lane.b32.xlu0 %v7369, 1
        %v7494 = vpop.permute.xlu0 %7493
        %7495 = vrot.lane.b32.xlu0 %v7370, 1
        %v7496 = vpop.permute.xlu0 %7495
        %7497 = vrot.lane.b32.xlu0 %v7371, 1
        %v7498 = vpop.permute.xlu0 %7497
        %v7499 = vsel %vm609, %v7436, %v7438
        %v7500 = vsel %vm609, %v7438, %v7440
        %v7501 = vsel %vm609, %v7440, %v7442
        %v7502 = vsel %vm609, %v7444, %v7446
        %v7503 = vsel %vm609, %v7446, %v7448
        %v7504 = vsel %vm609, %v7448, %v7450
        %v7505 = vsel %vm609, %v7452, %v7454
        %v7506 = vsel %vm609, %v7454, %v7456
        %v7507 = vsel %vm609, %v7456, %v7458
        %v7508 = vsel %vm609, %v7460, %v7462
        %v7509 = vsel %vm609, %v7462, %v7464
        %v7510 = vsel %vm609, %v7464, %v7466
        %v7511 = vsel %vm609, %v7468, %v7470
        %v7512 = vsel %vm609, %v7470, %v7472
        %v7513 = vsel %vm609, %v7472, %v7474
        %v7514 = vsel %vm609, %v7476, %v7478
        %v7515 = vsel %vm609, %v7478, %v7480
        %v7516 = vsel %vm609, %v7480, %v7482
        %v7517 = vsel %vm609, %v7484, %v7486
        %v7518 = vsel %vm609, %v7486, %v7488
        %v7519 = vsel %vm609, %v7488, %v7490
        %v7520 = vsel %vm609, %v7492, %v7494
        %v7521 = vsel %vm609, %v7494, %v7496
        %v7522 = vsel %vm609, %v7496, %v7498
        %v7555 = vsel %vm609, %v7388, %v7436
        %v7556 = vsel %vm609, %v7390, %v7444
        %v7557 = vsel %vm609, %v7392, %v7452
        %v7558 = vsel %vm609, %v7394, %v7460
        %v7559 = vsel %vm609, %v7396, %v7468
        %v7560 = vsel %vm609, %v7398, %v7476
        %v7561 = vsel %vm609, %v7400, %v7484
        %v7562 = vsel %vm609, %v7402, %v7492
        %7563 = vrot.lane.b32.xlu0 %v7340, 127
        %v7564 = vpop.permute.xlu0 %7563
        %7565 = vrot.lane.b32.xlu0 %v7341, 127
        %v7566 = vpop.permute.xlu0 %7565
        %7567 = vrot.lane.b32.xlu0 %v7342, 127
        %v7568 = vpop.permute.xlu0 %7567
        %7569 = vrot.lane.b32.xlu0 %v7343, 127
        %v7570 = vpop.permute.xlu0 %7569
        %7571 = vrot.lane.b32.xlu0 %v7344, 127
        %v7572 = vpop.permute.xlu0 %7571
        %7573 = vrot.lane.b32.xlu0 %v7345, 127
        %v7574 = vpop.permute.xlu0 %7573
        %7575 = vrot.lane.b32.xlu0 %v7346, 127
        %v7576 = vpop.permute.xlu0 %7575
        %7577 = vrot.lane.b32.xlu0 %v7347, 127
        %v7578 = vpop.permute.xlu0 %7577
        %7579 = vrot.lane.b32.xlu0 %v7348, 127
        %v7580 = vpop.permute.xlu0 %7579
        %7581 = vrot.lane.b32.xlu0 %v7349, 127
        %v7582 = vpop.permute.xlu0 %7581
        %7583 = vrot.lane.b32.xlu0 %v7350, 127
        %v7584 = vpop.permute.xlu0 %7583
        %7585 = vrot.lane.b32.xlu0 %v7351, 127
        %v7586 = vpop.permute.xlu0 %7585
        %7587 = vrot.lane.b32.xlu0 %v7352, 127
        %v7588 = vpop.permute.xlu0 %7587
        %7589 = vrot.lane.b32.xlu0 %v7353, 127
        %v7590 = vpop.permute.xlu0 %7589
        %7591 = vrot.lane.b32.xlu0 %v7354, 127
        %v7592 = vpop.permute.xlu0 %7591
        %7593 = vrot.lane.b32.xlu0 %v7355, 127
        %v7594 = vpop.permute.xlu0 %7593
        %7595 = vrot.lane.b32.xlu0 %v7356, 127
        %v7596 = vpop.permute.xlu0 %7595
        %7597 = vrot.lane.b32.xlu0 %v7357, 127
        %v7598 = vpop.permute.xlu0 %7597
        %7599 = vrot.lane.b32.xlu0 %v7358, 127
        %v7600 = vpop.permute.xlu0 %7599
        %7601 = vrot.lane.b32.xlu0 %v7359, 127
        %v7602 = vpop.permute.xlu0 %7601
        %7603 = vrot.lane.b32.xlu0 %v7360, 127
        %v7604 = vpop.permute.xlu0 %7603
        %7605 = vrot.lane.b32.xlu0 %v7361, 127
        %v7606 = vpop.permute.xlu0 %7605
        %7607 = vrot.lane.b32.xlu0 %v7362, 127
        %v7608 = vpop.permute.xlu0 %7607
        %7609 = vrot.lane.b32.xlu0 %v7363, 127
        %v7610 = vpop.permute.xlu0 %7609
        %7611 = vrot.lane.b32.xlu0 %v7364, 127
        %v7612 = vpop.permute.xlu0 %7611
        %7613 = vrot.lane.b32.xlu0 %v7365, 127
        %v7614 = vpop.permute.xlu0 %7613
        %7615 = vrot.lane.b32.xlu0 %v7366, 127
        %v7616 = vpop.permute.xlu0 %7615
        %7617 = vrot.lane.b32.xlu0 %v7367, 127
        %v7618 = vpop.permute.xlu0 %7617
        %7619 = vrot.lane.b32.xlu0 %v7368, 127
        %v7620 = vpop.permute.xlu0 %7619
        %7621 = vrot.lane.b32.xlu0 %v7369, 127
        %v7622 = vpop.permute.xlu0 %7621
        %7623 = vrot.lane.b32.xlu0 %v7370, 127
        %v7624 = vpop.permute.xlu0 %7623
        %7625 = vrot.lane.b32.xlu0 %v7371, 127
        %v7626 = vpop.permute.xlu0 %7625
        %v7627 = vsel %vm634, %v7564, %v7566
        %v7628 = vsel %vm634, %v7566, %v7568
        %v7629 = vsel %vm634, %v7568, %v7570
        %v7630 = vsel %vm634, %v7572, %v7574
        %v7631 = vsel %vm634, %v7574, %v7576
        %v7632 = vsel %vm634, %v7576, %v7578
        %v7633 = vsel %vm634, %v7580, %v7582
        %v7634 = vsel %vm634, %v7582, %v7584
        %v7635 = vsel %vm634, %v7584, %v7586
        %v7636 = vsel %vm634, %v7588, %v7590
        %v7637 = vsel %vm634, %v7590, %v7592
        %v7638 = vsel %vm634, %v7592, %v7594
        %v7639 = vsel %vm634, %v7596, %v7598
        %v7640 = vsel %vm634, %v7598, %v7600
        %v7641 = vsel %vm634, %v7600, %v7602
        %v7642 = vsel %vm634, %v7604, %v7606
        %v7643 = vsel %vm634, %v7606, %v7608
        %v7644 = vsel %vm634, %v7608, %v7610
        %v7645 = vsel %vm634, %v7612, %v7614
        %v7646 = vsel %vm634, %v7614, %v7616
        %v7647 = vsel %vm634, %v7616, %v7618
        %v7648 = vsel %vm634, %v7620, %v7622
        %v7649 = vsel %vm634, %v7622, %v7624
        %v7650 = vsel %vm634, %v7624, %v7626
        %7683 = vrot.lane.b32.xlu0 %v7340, 63
        %v7684 = vpop.permute.xlu0 %7683
        %7685 = vrot.lane.b32.xlu0 %v7344, 63
        %v7686 = vpop.permute.xlu0 %7685
        %7687 = vrot.lane.b32.xlu0 %v7348, 63
        %v7688 = vpop.permute.xlu0 %7687
        %7689 = vrot.lane.b32.xlu0 %v7352, 63
        %v7690 = vpop.permute.xlu0 %7689
        %7691 = vrot.lane.b32.xlu0 %v7356, 63
        %v7692 = vpop.permute.xlu0 %7691
        %7693 = vrot.lane.b32.xlu0 %v7360, 63
        %v7694 = vpop.permute.xlu0 %7693
        %7695 = vrot.lane.b32.xlu0 %v7364, 63
        %v7696 = vpop.permute.xlu0 %7695
        %7697 = vrot.lane.b32.xlu0 %v7368, 63
        %v7698 = vpop.permute.xlu0 %7697
        %vm7707 = vcmask 515072
        %v7708 = vsel %vm7707, %v7570, %v7684
        %v7709 = vsel %vm7707, %v7578, %v7686
        %v7710 = vsel %vm7707, %v7586, %v7688
        %v7711 = vsel %vm7707, %v7594, %v7690
        %v7712 = vsel %vm7707, %v7602, %v7692
        %v7713 = vsel %vm7707, %v7610, %v7694
        %v7714 = vsel %vm7707, %v7618, %v7696
        %v7715 = vsel %vm7707, %v7626, %v7698
        %7716 = vrot.lane.b32.xlu0 %v7343, 37
        %v7717 = vpop.permute.xlu0 %7716
        %7718 = vrot.lane.b32.xlu0 %v7347, 37
        %v7719 = vpop.permute.xlu0 %7718
        %7720 = vrot.lane.b32.xlu0 %v7351, 37
        %v7721 = vpop.permute.xlu0 %7720
        %7722 = vrot.lane.b32.xlu0 %v7355, 37
        %v7723 = vpop.permute.xlu0 %7722
        %7724 = vrot.lane.b32.xlu0 %v7359, 37
        %v7725 = vpop.permute.xlu0 %7724
        %7726 = vrot.lane.b32.xlu0 %v7363, 37
        %v7727 = vpop.permute.xlu0 %7726
        %7728 = vrot.lane.b32.xlu0 %v7367, 37
        %v7729 = vpop.permute.xlu0 %7728
        %7730 = vrot.lane.b32.xlu0 %v7371, 37
        %v7731 = vpop.permute.xlu0 %7730
        %7740 = vrot.lane.b32.xlu0 %v7340, 101
        %v7741 = vpop.permute.xlu0 %7740
        %7742 = vrot.lane.b32.xlu0 %v7341, 101
        %v7743 = vpop.permute.xlu0 %7742
        %7744 = vrot.lane.b32.xlu0 %v7342, 101
        %v7745 = vpop.permute.xlu0 %7744
        %7746 = vrot.lane.b32.xlu0 %v7343, 101
        %v7747 = vpop.permute.xlu0 %7746
        %7748 = vrot.lane.b32.xlu0 %v7344, 101
        %v7749 = vpop.permute.xlu0 %7748
        %7750 = vrot.lane.b32.xlu0 %v7345, 101
        %v7751 = vpop.permute.xlu0 %7750
        %7752 = vrot.lane.b32.xlu0 %v7346, 101
        %v7753 = vpop.permute.xlu0 %7752
        %7754 = vrot.lane.b32.xlu0 %v7347, 101
        %v7755 = vpop.permute.xlu0 %7754
        %7756 = vrot.lane.b32.xlu0 %v7348, 101
        %v7757 = vpop.permute.xlu0 %7756
        %7758 = vrot.lane.b32.xlu0 %v7349, 101
        %v7759 = vpop.permute.xlu0 %7758
        %7760 = vrot.lane.b32.xlu0 %v7350, 101
        %v7761 = vpop.permute.xlu0 %7760
        %7762 = vrot.lane.b32.xlu0 %v7351, 101
        %v7763 = vpop.permute.xlu0 %7762
        %7764 = vrot.lane.b32.xlu0 %v7352, 101
        %v7765 = vpop.permute.xlu0 %7764
        %7766 = vrot.lane.b32.xlu0 %v7353, 101
        %v7767 = vpop.permute.xlu0 %7766
        %7768 = vrot.lane.b32.xlu0 %v7354, 101
        %v7769 = vpop.permute.xlu0 %7768
        %7770 = vrot.lane.b32.xlu0 %v7355, 101
        %v7771 = vpop.permute.xlu0 %7770
        %7772 = vrot.lane.b32.xlu0 %v7356, 101
        %v7773 = vpop.permute.xlu0 %7772
        %7774 = vrot.lane.b32.xlu0 %v7357, 101
        %v7775 = vpop.permute.xlu0 %7774
        %7776 = vrot.lane.b32.xlu0 %v7358, 101
        %v7777 = vpop.permute.xlu0 %7776
        %7778 = vrot.lane.b32.xlu0 %v7359, 101
        %v7779 = vpop.permute.xlu0 %7778
        %7780 = vrot.lane.b32.xlu0 %v7360, 101
        %v7781 = vpop.permute.xlu0 %7780
        %7782 = vrot.lane.b32.xlu0 %v7361, 101
        %v7783 = vpop.permute.xlu0 %7782
        %7784 = vrot.lane.b32.xlu0 %v7362, 101
        %v7785 = vpop.permute.xlu0 %7784
        %7786 = vrot.lane.b32.xlu0 %v7363, 101
        %v7787 = vpop.permute.xlu0 %7786
        %7788 = vrot.lane.b32.xlu0 %v7364, 101
        %v7789 = vpop.permute.xlu0 %7788
        %7790 = vrot.lane.b32.xlu0 %v7365, 101
        %v7791 = vpop.permute.xlu0 %7790
        %7792 = vrot.lane.b32.xlu0 %v7366, 101
        %v7793 = vpop.permute.xlu0 %7792
        %7794 = vrot.lane.b32.xlu0 %v7367, 101
        %v7795 = vpop.permute.xlu0 %7794
        %7796 = vrot.lane.b32.xlu0 %v7368, 101
        %v7797 = vpop.permute.xlu0 %7796
        %7798 = vrot.lane.b32.xlu0 %v7369, 101
        %v7799 = vpop.permute.xlu0 %7798
        %7800 = vrot.lane.b32.xlu0 %v7370, 101
        %v7801 = vpop.permute.xlu0 %7800
        %7802 = vrot.lane.b32.xlu0 %v7371, 101
        %v7803 = vpop.permute.xlu0 %7802
        %v7804 = vsel %vm666, %v7741, %v7743
        %v7805 = vsel %vm666, %v7743, %v7745
        %v7806 = vsel %vm666, %v7745, %v7747
        %v7807 = vsel %vm666, %v7749, %v7751
        %v7808 = vsel %vm666, %v7751, %v7753
        %v7809 = vsel %vm666, %v7753, %v7755
        %v7810 = vsel %vm666, %v7757, %v7759
        %v7811 = vsel %vm666, %v7759, %v7761
        %v7812 = vsel %vm666, %v7761, %v7763
        %v7813 = vsel %vm666, %v7765, %v7767
        %v7814 = vsel %vm666, %v7767, %v7769
        %v7815 = vsel %vm666, %v7769, %v7771
        %v7816 = vsel %vm666, %v7773, %v7775
        %v7817 = vsel %vm666, %v7775, %v7777
        %v7818 = vsel %vm666, %v7777, %v7779
        %v7819 = vsel %vm666, %v7781, %v7783
        %v7820 = vsel %vm666, %v7783, %v7785
        %v7821 = vsel %vm666, %v7785, %v7787
        %v7822 = vsel %vm666, %v7789, %v7791
        %v7823 = vsel %vm666, %v7791, %v7793
        %v7824 = vsel %vm666, %v7793, %v7795
        %v7825 = vsel %vm666, %v7797, %v7799
        %v7826 = vsel %vm666, %v7799, %v7801
        %v7827 = vsel %vm666, %v7801, %v7803
        %v7860 = vsel %vm609, %v7717, %v7804
        %v7861 = vsel %vm609, %v7719, %v7807
        %v7862 = vsel %vm609, %v7721, %v7810
        %v7863 = vsel %vm609, %v7723, %v7813
        %v7864 = vsel %vm609, %v7725, %v7816
        %v7865 = vsel %vm609, %v7727, %v7819
        %v7866 = vsel %vm609, %v7729, %v7822
        %v7867 = vsel %vm609, %v7731, %v7825
        %7868 = vrot.lane.b32.xlu0 %v7340, 99
        %v7869 = vpop.permute.xlu0 %7868
        %7870 = vrot.lane.b32.xlu0 %v7341, 99
        %v7871 = vpop.permute.xlu0 %7870
        %7872 = vrot.lane.b32.xlu0 %v7342, 99
        %v7873 = vpop.permute.xlu0 %7872
        %7874 = vrot.lane.b32.xlu0 %v7343, 99
        %v7875 = vpop.permute.xlu0 %7874
        %7876 = vrot.lane.b32.xlu0 %v7344, 99
        %v7877 = vpop.permute.xlu0 %7876
        %7878 = vrot.lane.b32.xlu0 %v7345, 99
        %v7879 = vpop.permute.xlu0 %7878
        %7880 = vrot.lane.b32.xlu0 %v7346, 99
        %v7881 = vpop.permute.xlu0 %7880
        %7882 = vrot.lane.b32.xlu0 %v7347, 99
        %v7883 = vpop.permute.xlu0 %7882
        %7884 = vrot.lane.b32.xlu0 %v7348, 99
        %v7885 = vpop.permute.xlu0 %7884
        %7886 = vrot.lane.b32.xlu0 %v7349, 99
        %v7887 = vpop.permute.xlu0 %7886
        %7888 = vrot.lane.b32.xlu0 %v7350, 99
        %v7889 = vpop.permute.xlu0 %7888
        %7890 = vrot.lane.b32.xlu0 %v7351, 99
        %v7891 = vpop.permute.xlu0 %7890
        %7892 = vrot.lane.b32.xlu0 %v7352, 99
        %v7893 = vpop.permute.xlu0 %7892
        %7894 = vrot.lane.b32.xlu0 %v7353, 99
        %v7895 = vpop.permute.xlu0 %7894
        %7896 = vrot.lane.b32.xlu0 %v7354, 99
        %v7897 = vpop.permute.xlu0 %7896
        %7898 = vrot.lane.b32.xlu0 %v7355, 99
        %v7899 = vpop.permute.xlu0 %7898
        %7900 = vrot.lane.b32.xlu0 %v7356, 99
        %v7901 = vpop.permute.xlu0 %7900
        %7902 = vrot.lane.b32.xlu0 %v7357, 99
        %v7903 = vpop.permute.xlu0 %7902
        %7904 = vrot.lane.b32.xlu0 %v7358, 99
        %v7905 = vpop.permute.xlu0 %7904
        %7906 = vrot.lane.b32.xlu0 %v7359, 99
        %v7907 = vpop.permute.xlu0 %7906
        %7908 = vrot.lane.b32.xlu0 %v7360, 99
        %v7909 = vpop.permute.xlu0 %7908
        %7910 = vrot.lane.b32.xlu0 %v7361, 99
        %v7911 = vpop.permute.xlu0 %7910
        %7912 = vrot.lane.b32.xlu0 %v7362, 99
        %v7913 = vpop.permute.xlu0 %7912
        %7914 = vrot.lane.b32.xlu0 %v7363, 99
        %v7915 = vpop.permute.xlu0 %7914
        %7916 = vrot.lane.b32.xlu0 %v7364, 99
        %v7917 = vpop.permute.xlu0 %7916
        %7918 = vrot.lane.b32.xlu0 %v7365, 99
        %v7919 = vpop.permute.xlu0 %7918
        %7920 = vrot.lane.b32.xlu0 %v7366, 99
        %v7921 = vpop.permute.xlu0 %7920
        %7922 = vrot.lane.b32.xlu0 %v7367, 99
        %v7923 = vpop.permute.xlu0 %7922
        %7924 = vrot.lane.b32.xlu0 %v7368, 99
        %v7925 = vpop.permute.xlu0 %7924
        %7926 = vrot.lane.b32.xlu0 %v7369, 99
        %v7927 = vpop.permute.xlu0 %7926
        %7928 = vrot.lane.b32.xlu0 %v7370, 99
        %v7929 = vpop.permute.xlu0 %7928
        %7930 = vrot.lane.b32.xlu0 %v7371, 99
        %v7931 = vpop.permute.xlu0 %7930
        %v7932 = vsel %vm691, %v7869, %v7871
        %v7933 = vsel %vm691, %v7871, %v7873
        %v7934 = vsel %vm691, %v7873, %v7875
        %v7935 = vsel %vm691, %v7877, %v7879
        %v7936 = vsel %vm691, %v7879, %v7881
        %v7937 = vsel %vm691, %v7881, %v7883
        %v7938 = vsel %vm691, %v7885, %v7887
        %v7939 = vsel %vm691, %v7887, %v7889
        %v7940 = vsel %vm691, %v7889, %v7891
        %v7941 = vsel %vm691, %v7893, %v7895
        %v7942 = vsel %vm691, %v7895, %v7897
        %v7943 = vsel %vm691, %v7897, %v7899
        %v7944 = vsel %vm691, %v7901, %v7903
        %v7945 = vsel %vm691, %v7903, %v7905
        %v7946 = vsel %vm691, %v7905, %v7907
        %v7947 = vsel %vm691, %v7909, %v7911
        %v7948 = vsel %vm691, %v7911, %v7913
        %v7949 = vsel %vm691, %v7913, %v7915
        %v7950 = vsel %vm691, %v7917, %v7919
        %v7951 = vsel %vm691, %v7919, %v7921
        %v7952 = vsel %vm691, %v7921, %v7923
        %v7953 = vsel %vm691, %v7925, %v7927
        %v7954 = vsel %vm691, %v7927, %v7929
        %v7955 = vsel %vm691, %v7929, %v7931
        %7988 = vrot.lane.b32.xlu0 %v7340, 35
        %v7989 = vpop.permute.xlu0 %7988
        %7990 = vrot.lane.b32.xlu0 %v7344, 35
        %v7991 = vpop.permute.xlu0 %7990
        %7992 = vrot.lane.b32.xlu0 %v7348, 35
        %v7993 = vpop.permute.xlu0 %7992
        %7994 = vrot.lane.b32.xlu0 %v7352, 35
        %v7995 = vpop.permute.xlu0 %7994
        %7996 = vrot.lane.b32.xlu0 %v7356, 35
        %v7997 = vpop.permute.xlu0 %7996
        %7998 = vrot.lane.b32.xlu0 %v7360, 35
        %v7999 = vpop.permute.xlu0 %7998
        %8000 = vrot.lane.b32.xlu0 %v7364, 35
        %v8001 = vpop.permute.xlu0 %8000
        %8002 = vrot.lane.b32.xlu0 %v7368, 35
        %v8003 = vpop.permute.xlu0 %8002
        %v8012 = vsel %vm7707, %v7875, %v7989
        %v8013 = vsel %vm7707, %v7883, %v7991
        %v8014 = vsel %vm7707, %v7891, %v7993
        %v8015 = vsel %vm7707, %v7899, %v7995
        %v8016 = vsel %vm7707, %v7907, %v7997
        %v8017 = vsel %vm7707, %v7915, %v7999
        %v8018 = vsel %vm7707, %v7923, %v8001
        %v8019 = vsel %vm7707, %v7931, %v8003
        %8020 = vrot.lane.b32.xlu0 %v7340, 100
        %v8021 = vpop.permute.xlu0 %8020
        %8022 = vrot.lane.b32.xlu0 %v7341, 100
        %v8023 = vpop.permute.xlu0 %8022
        %8024 = vrot.lane.b32.xlu0 %v7342, 100
        %v8025 = vpop.permute.xlu0 %8024
        %8026 = vrot.lane.b32.xlu0 %v7343, 100
        %v8027 = vpop.permute.xlu0 %8026
        %8028 = vrot.lane.b32.xlu0 %v7344, 100
        %v8029 = vpop.permute.xlu0 %8028
        %8030 = vrot.lane.b32.xlu0 %v7345, 100
        %v8031 = vpop.permute.xlu0 %8030
        %8032 = vrot.lane.b32.xlu0 %v7346, 100
        %v8033 = vpop.permute.xlu0 %8032
        %8034 = vrot.lane.b32.xlu0 %v7347, 100
        %v8035 = vpop.permute.xlu0 %8034
        %8036 = vrot.lane.b32.xlu0 %v7348, 100
        %v8037 = vpop.permute.xlu0 %8036
        %8038 = vrot.lane.b32.xlu0 %v7349, 100
        %v8039 = vpop.permute.xlu0 %8038
        %8040 = vrot.lane.b32.xlu0 %v7350, 100
        %v8041 = vpop.permute.xlu0 %8040
        %8042 = vrot.lane.b32.xlu0 %v7351, 100
        %v8043 = vpop.permute.xlu0 %8042
        %8044 = vrot.lane.b32.xlu0 %v7352, 100
        %v8045 = vpop.permute.xlu0 %8044
        %8046 = vrot.lane.b32.xlu0 %v7353, 100
        %v8047 = vpop.permute.xlu0 %8046
        %8048 = vrot.lane.b32.xlu0 %v7354, 100
        %v8049 = vpop.permute.xlu0 %8048
        %8050 = vrot.lane.b32.xlu0 %v7355, 100
        %v8051 = vpop.permute.xlu0 %8050
        %8052 = vrot.lane.b32.xlu0 %v7356, 100
        %v8053 = vpop.permute.xlu0 %8052
        %8054 = vrot.lane.b32.xlu0 %v7357, 100
        %v8055 = vpop.permute.xlu0 %8054
        %8056 = vrot.lane.b32.xlu0 %v7358, 100
        %v8057 = vpop.permute.xlu0 %8056
        %8058 = vrot.lane.b32.xlu0 %v7359, 100
        %v8059 = vpop.permute.xlu0 %8058
        %8060 = vrot.lane.b32.xlu0 %v7360, 100
        %v8061 = vpop.permute.xlu0 %8060
        %8062 = vrot.lane.b32.xlu0 %v7361, 100
        %v8063 = vpop.permute.xlu0 %8062
        %8064 = vrot.lane.b32.xlu0 %v7362, 100
        %v8065 = vpop.permute.xlu0 %8064
        %8066 = vrot.lane.b32.xlu0 %v7363, 100
        %v8067 = vpop.permute.xlu0 %8066
        %8068 = vrot.lane.b32.xlu0 %v7364, 100
        %v8069 = vpop.permute.xlu0 %8068
        %8070 = vrot.lane.b32.xlu0 %v7365, 100
        %v8071 = vpop.permute.xlu0 %8070
        %8072 = vrot.lane.b32.xlu0 %v7366, 100
        %v8073 = vpop.permute.xlu0 %8072
        %8074 = vrot.lane.b32.xlu0 %v7367, 100
        %v8075 = vpop.permute.xlu0 %8074
        %8076 = vrot.lane.b32.xlu0 %v7368, 100
        %v8077 = vpop.permute.xlu0 %8076
        %8078 = vrot.lane.b32.xlu0 %v7369, 100
        %v8079 = vpop.permute.xlu0 %8078
        %8080 = vrot.lane.b32.xlu0 %v7370, 100
        %v8081 = vpop.permute.xlu0 %8080
        %8082 = vrot.lane.b32.xlu0 %v7371, 100
        %v8083 = vpop.permute.xlu0 %8082
        %v8084 = vsel %vm719, %v8021, %v8023
        %v8085 = vsel %vm719, %v8023, %v8025
        %v8086 = vsel %vm719, %v8025, %v8027
        %v8087 = vsel %vm719, %v8029, %v8031
        %v8088 = vsel %vm719, %v8031, %v8033
        %v8089 = vsel %vm719, %v8033, %v8035
        %v8090 = vsel %vm719, %v8037, %v8039
        %v8091 = vsel %vm719, %v8039, %v8041
        %v8092 = vsel %vm719, %v8041, %v8043
        %v8093 = vsel %vm719, %v8045, %v8047
        %v8094 = vsel %vm719, %v8047, %v8049
        %v8095 = vsel %vm719, %v8049, %v8051
        %v8096 = vsel %vm719, %v8053, %v8055
        %v8097 = vsel %vm719, %v8055, %v8057
        %v8098 = vsel %vm719, %v8057, %v8059
        %v8099 = vsel %vm719, %v8061, %v8063
        %v8100 = vsel %vm719, %v8063, %v8065
        %v8101 = vsel %vm719, %v8065, %v8067
        %v8102 = vsel %vm719, %v8069, %v8071
        %v8103 = vsel %vm719, %v8071, %v8073
        %v8104 = vsel %vm719, %v8073, %v8075
        %v8105 = vsel %vm719, %v8077, %v8079
        %v8106 = vsel %vm719, %v8079, %v8081
        %v8107 = vsel %vm719, %v8081, %v8083
        %vm8140 = vcmask 523264
        %v8142 = vsel %vm8140, %v7375, 0
        %8144 = vmatpush.msra.mxu0 %v8105
        %8145 = vmatpush.msra.mxu0 %v8102
        %8146 = vmatpush.msra.mxu0 %v8099
        %8147 = vmatpush.msra.mxu0 %v8096
        %8148 = vmatpush.msra.mxu0 %v8093
        %8149 = vmatpush.msra.mxu0 %v8090
        %8150 = vmatpush.msra.mxu0 %v8087
        %8151 = vmatpush.msra.mxu0 %v8084
        %8152 = vmatpush.msra.mxu0 %v7867
        %8153 = vmatpush.msra.mxu0 %v7866
        %8154 = vmatpush.msra.mxu0 %v7865
        %8155 = vmatpush.msra.mxu0 %v7864
        %8156 = vmatpush.msra.mxu0 %v7863
        %8157 = vmatpush.msra.mxu0 %v7862
        %8158 = vmatpush.msra.mxu0 %v7861
        %8159 = vmatpush.msra.mxu0 %v7860
        %8160 = vmatmul.f32.gmra.mxu0 %v7374
        %v8161 = vpop.f32.mrf.mxu0
        %v8162 = vadd.f32 0.0, %v8161
        %8163 = vdwg.mxu0
        %8164 = vmatpush.msra.mxu0 0.0
        %8165 = vmatpush.msra.mxu0 0.0
        %8166 = vmatpush.msra.mxu0 0.0
        %8167 = vmatpush.msra.mxu0 0.0
        %8168 = vmatpush.msra.mxu0 0.0
        %8169 = vmatpush.msra.mxu0 0.0
        %8170 = vmatpush.msra.mxu0 0.0
        %8171 = vmatpush.msra.mxu0 0.0
        %8172 = vmatpush.msra.mxu0 %v7953
        %8173 = vmatpush.msra.mxu0 %v7950
        %8174 = vmatpush.msra.mxu0 %v7947
        %8175 = vmatpush.msra.mxu0 %v7944
        %8176 = vmatpush.msra.mxu0 %v7941
        %8177 = vmatpush.msra.mxu0 %v7938
        %8178 = vmatpush.msra.mxu0 %v7935
        %8179 = vmatpush.msra.mxu0 %v7932
        %8180 = vmatmul.f32.gmra.mxu0 %v8142
        %v8181 = vpop.f32.mrf.mxu0
        %v8182 = vadd.f32 %v8162, %v8181
        %8183 = vdwg.mxu0
        %8184 = vmatpush.msra.mxu0 %v8106
        %8185 = vmatpush.msra.mxu0 %v8103
        %8186 = vmatpush.msra.mxu0 %v8100
        %8187 = vmatpush.msra.mxu0 %v8097
        %8188 = vmatpush.msra.mxu0 %v8094
        %8189 = vmatpush.msra.mxu0 %v8091
        %8190 = vmatpush.msra.mxu0 %v8088
        %8191 = vmatpush.msra.mxu0 %v8085
        %8192 = vmatpush.msra.mxu0 %v7826
        %8193 = vmatpush.msra.mxu0 %v7823
        %8194 = vmatpush.msra.mxu0 %v7820
        %8195 = vmatpush.msra.mxu0 %v7817
        %8196 = vmatpush.msra.mxu0 %v7814
        %8197 = vmatpush.msra.mxu0 %v7811
        %8198 = vmatpush.msra.mxu0 %v7808
        %8199 = vmatpush.msra.mxu0 %v7805
        %8200 = vmatmul.f32.gmra.mxu0 %v7374
        %v8201 = vpop.f32.mrf.mxu0
        %v8202 = vadd.f32 0.0, %v8201
        %8203 = vdwg.mxu0
        %8204 = vmatpush.msra.mxu0 0.0
        %8205 = vmatpush.msra.mxu0 0.0
        %8206 = vmatpush.msra.mxu0 0.0
        %8207 = vmatpush.msra.mxu0 0.0
        %8208 = vmatpush.msra.mxu0 0.0
        %8209 = vmatpush.msra.mxu0 0.0
        %8210 = vmatpush.msra.mxu0 0.0
        %8211 = vmatpush.msra.mxu0 0.0
        %8212 = vmatpush.msra.mxu0 %v7954
        %8213 = vmatpush.msra.mxu0 %v7951
        %8214 = vmatpush.msra.mxu0 %v7948
        %8215 = vmatpush.msra.mxu0 %v7945
        %8216 = vmatpush.msra.mxu0 %v7942
        %8217 = vmatpush.msra.mxu0 %v7939
        %8218 = vmatpush.msra.mxu0 %v7936
        %8219 = vmatpush.msra.mxu0 %v7933
        %8220 = vmatmul.f32.gmra.mxu0 %v8142
        %v8221 = vpop.f32.mrf.mxu0
        %v8222 = vadd.f32 %v8202, %v8221
        %8223 = vdwg.mxu0
        %8224 = vmatpush.msra.mxu0 %v8107
        %8225 = vmatpush.msra.mxu0 %v8104
        %8226 = vmatpush.msra.mxu0 %v8101
        %8227 = vmatpush.msra.mxu0 %v8098
        %8228 = vmatpush.msra.mxu0 %v8095
        %8229 = vmatpush.msra.mxu0 %v8092
        %8230 = vmatpush.msra.mxu0 %v8089
        %8231 = vmatpush.msra.mxu0 %v8086
        %8232 = vmatpush.msra.mxu0 %v7827
        %8233 = vmatpush.msra.mxu0 %v7824
        %8234 = vmatpush.msra.mxu0 %v7821
        %8235 = vmatpush.msra.mxu0 %v7818
        %8236 = vmatpush.msra.mxu0 %v7815
        %8237 = vmatpush.msra.mxu0 %v7812
        %8238 = vmatpush.msra.mxu0 %v7809
        %8239 = vmatpush.msra.mxu0 %v7806
        %8240 = vmatmul.f32.gmra.mxu0 %v7374
        %v8241 = vpop.f32.mrf.mxu0
        %v8242 = vadd.f32 0.0, %v8241
        %8243 = vdwg.mxu0
        %8244 = vmatpush.msra.mxu0 0.0
        %8245 = vmatpush.msra.mxu0 0.0
        %8246 = vmatpush.msra.mxu0 0.0
        %8247 = vmatpush.msra.mxu0 0.0
        %8248 = vmatpush.msra.mxu0 0.0
        %8249 = vmatpush.msra.mxu0 0.0
        %8250 = vmatpush.msra.mxu0 0.0
        %8251 = vmatpush.msra.mxu0 0.0
        %8252 = vmatpush.msra.mxu0 %v7955
        %8253 = vmatpush.msra.mxu0 %v7952
        %8254 = vmatpush.msra.mxu0 %v7949
        %8255 = vmatpush.msra.mxu0 %v7946
        %8256 = vmatpush.msra.mxu0 %v7943
        %8257 = vmatpush.msra.mxu0 %v7940
        %8258 = vmatpush.msra.mxu0 %v7937
        %8259 = vmatpush.msra.mxu0 %v7934
        %8260 = vmatmul.f32.gmra.mxu0 %v8142
        %v8261 = vpop.f32.mrf.mxu0
        %v8262 = vadd.f32 %v8242, %v8261
        %8263 = vdwg.mxu0
        %8264 = vmatpush.msra.mxu0 %v8083
        %8265 = vmatpush.msra.mxu0 %v8075
        %8266 = vmatpush.msra.mxu0 %v8067
        %8267 = vmatpush.msra.mxu0 %v8059
        %8268 = vmatpush.msra.mxu0 %v8051
        %8269 = vmatpush.msra.mxu0 %v8043
        %8270 = vmatpush.msra.mxu0 %v8035
        %8271 = vmatpush.msra.mxu0 %v8027
        %8272 = vmatpush.msra.mxu0 %v7803
        %8273 = vmatpush.msra.mxu0 %v7795
        %8274 = vmatpush.msra.mxu0 %v7787
        %8275 = vmatpush.msra.mxu0 %v7779
        %8276 = vmatpush.msra.mxu0 %v7771
        %8277 = vmatpush.msra.mxu0 %v7763
        %8278 = vmatpush.msra.mxu0 %v7755
        %8279 = vmatpush.msra.mxu0 %v7747
        %8280 = vmatmul.f32.gmra.mxu0 %v7374
        %v8281 = vpop.f32.mrf.mxu0
        %v8282 = vadd.f32 0.0, %v8281
        %8283 = vdwg.mxu0
        %8284 = vmatpush.msra.mxu0 0.0
        %8285 = vmatpush.msra.mxu0 0.0
        %8286 = vmatpush.msra.mxu0 0.0
        %8287 = vmatpush.msra.mxu0 0.0
        %8288 = vmatpush.msra.mxu0 0.0
        %8289 = vmatpush.msra.mxu0 0.0
        %8290 = vmatpush.msra.mxu0 0.0
        %8291 = vmatpush.msra.mxu0 0.0
        %8292 = vmatpush.msra.mxu0 %v8019
        %8293 = vmatpush.msra.mxu0 %v8018
        %8294 = vmatpush.msra.mxu0 %v8017
        %8295 = vmatpush.msra.mxu0 %v8016
        %8296 = vmatpush.msra.mxu0 %v8015
        %8297 = vmatpush.msra.mxu0 %v8014
        %8298 = vmatpush.msra.mxu0 %v8013
        %8299 = vmatpush.msra.mxu0 %v8012
        %8300 = vmatmul.f32.gmra.mxu0 %v8142
        %v8301 = vpop.f32.mrf.mxu0
        %v8302 = vadd.f32 %v8282, %v8301
        %8303 = vdwg.mxu0
        %v8305 = vsel %vm8140, %v7373, 0
        %8307 = vmatpush.msra.mxu0 %v7368
        %8308 = vmatpush.msra.mxu0 %v7364
        %8309 = vmatpush.msra.mxu0 %v7360
        %8310 = vmatpush.msra.mxu0 %v7356
        %8311 = vmatpush.msra.mxu0 %v7352
        %8312 = vmatpush.msra.mxu0 %v7348
        %8313 = vmatpush.msra.mxu0 %v7344
        %8314 = vmatpush.msra.mxu0 %v7340
        %8315 = vmatpush.msra.mxu0 %v7562
        %8316 = vmatpush.msra.mxu0 %v7561
        %8317 = vmatpush.msra.mxu0 %v7560
        %8318 = vmatpush.msra.mxu0 %v7559
        %8319 = vmatpush.msra.mxu0 %v7558
        %8320 = vmatpush.msra.mxu0 %v7557
        %8321 = vmatpush.msra.mxu0 %v7556
        %8322 = vmatpush.msra.mxu0 %v7555
        %8323 = vmatmul.f32.gmra.mxu0 %v7372
        %v8324 = vpop.f32.mrf.mxu0
        %v8325 = vadd.f32 %v8182, %v8324
        %8326 = vdwg.mxu0
        %8327 = vmatpush.msra.mxu0 0.0
        %8328 = vmatpush.msra.mxu0 0.0
        %8329 = vmatpush.msra.mxu0 0.0
        %8330 = vmatpush.msra.mxu0 0.0
        %8331 = vmatpush.msra.mxu0 0.0
        %8332 = vmatpush.msra.mxu0 0.0
        %8333 = vmatpush.msra.mxu0 0.0
        %8334 = vmatpush.msra.mxu0 0.0
        %8335 = vmatpush.msra.mxu0 %v7648
        %8336 = vmatpush.msra.mxu0 %v7645
        %8337 = vmatpush.msra.mxu0 %v7642
        %8338 = vmatpush.msra.mxu0 %v7639
        %8339 = vmatpush.msra.mxu0 %v7636
        %8340 = vmatpush.msra.mxu0 %v7633
        %8341 = vmatpush.msra.mxu0 %v7630
        %8342 = vmatpush.msra.mxu0 %v7627
        %8343 = vmatmul.f32.gmra.mxu0 %v8305
        %v8344 = vpop.f32.mrf.mxu0
        %v8345 = vadd.f32 %v8325, %v8344
        %8346 = vdwg.mxu0
        %8347 = vmatpush.msra.mxu0 %v7369
        %8348 = vmatpush.msra.mxu0 %v7365
        %8349 = vmatpush.msra.mxu0 %v7361
        %8350 = vmatpush.msra.mxu0 %v7357
        %8351 = vmatpush.msra.mxu0 %v7353
        %8352 = vmatpush.msra.mxu0 %v7349
        %8353 = vmatpush.msra.mxu0 %v7345
        %8354 = vmatpush.msra.mxu0 %v7341
        %8355 = vmatpush.msra.mxu0 %v7520
        %8356 = vmatpush.msra.mxu0 %v7517
        %8357 = vmatpush.msra.mxu0 %v7514
        %8358 = vmatpush.msra.mxu0 %v7511
        %8359 = vmatpush.msra.mxu0 %v7508
        %8360 = vmatpush.msra.mxu0 %v7505
        %8361 = vmatpush.msra.mxu0 %v7502
        %8362 = vmatpush.msra.mxu0 %v7499
        %8363 = vmatmul.f32.gmra.mxu0 %v7372
        %v8364 = vpop.f32.mrf.mxu0
        %v8365 = vadd.f32 %v8222, %v8364
        %8366 = vdwg.mxu0
        %8367 = vmatpush.msra.mxu0 0.0
        %8368 = vmatpush.msra.mxu0 0.0
        %8369 = vmatpush.msra.mxu0 0.0
        %8370 = vmatpush.msra.mxu0 0.0
        %8371 = vmatpush.msra.mxu0 0.0
        %8372 = vmatpush.msra.mxu0 0.0
        %8373 = vmatpush.msra.mxu0 0.0
        %8374 = vmatpush.msra.mxu0 0.0
        %8375 = vmatpush.msra.mxu0 %v7649
        %8376 = vmatpush.msra.mxu0 %v7646
        %8377 = vmatpush.msra.mxu0 %v7643
        %8378 = vmatpush.msra.mxu0 %v7640
        %8379 = vmatpush.msra.mxu0 %v7637
        %8380 = vmatpush.msra.mxu0 %v7634
        %8381 = vmatpush.msra.mxu0 %v7631
        %8382 = vmatpush.msra.mxu0 %v7628
        %8383 = vmatmul.f32.gmra.mxu0 %v8305
        %v8384 = vpop.f32.mrf.mxu0
        %v8385 = vadd.f32 %v8365, %v8384
        %8386 = vdwg.mxu0
        %8387 = vmatpush.msra.mxu0 %v7370
        %8388 = vmatpush.msra.mxu0 %v7366
        %8389 = vmatpush.msra.mxu0 %v7362
        %8390 = vmatpush.msra.mxu0 %v7358
        %8391 = vmatpush.msra.mxu0 %v7354
        %8392 = vmatpush.msra.mxu0 %v7350
        %8393 = vmatpush.msra.mxu0 %v7346
        %8394 = vmatpush.msra.mxu0 %v7342
        %8395 = vmatpush.msra.mxu0 %v7521
        %8396 = vmatpush.msra.mxu0 %v7518
        %8397 = vmatpush.msra.mxu0 %v7515
        %8398 = vmatpush.msra.mxu0 %v7512
        %8399 = vmatpush.msra.mxu0 %v7509
        %8400 = vmatpush.msra.mxu0 %v7506
        %8401 = vmatpush.msra.mxu0 %v7503
        %8402 = vmatpush.msra.mxu0 %v7500
        %8403 = vmatmul.f32.gmra.mxu0 %v7372
        %v8404 = vpop.f32.mrf.mxu0
        %v8405 = vadd.f32 %v8262, %v8404
        %8406 = vdwg.mxu0
        %8407 = vmatpush.msra.mxu0 0.0
        %8408 = vmatpush.msra.mxu0 0.0
        %8409 = vmatpush.msra.mxu0 0.0
        %8410 = vmatpush.msra.mxu0 0.0
        %8411 = vmatpush.msra.mxu0 0.0
        %8412 = vmatpush.msra.mxu0 0.0
        %8413 = vmatpush.msra.mxu0 0.0
        %8414 = vmatpush.msra.mxu0 0.0
        %8415 = vmatpush.msra.mxu0 %v7650
        %8416 = vmatpush.msra.mxu0 %v7647
        %8417 = vmatpush.msra.mxu0 %v7644
        %8418 = vmatpush.msra.mxu0 %v7641
        %8419 = vmatpush.msra.mxu0 %v7638
        %8420 = vmatpush.msra.mxu0 %v7635
        %8421 = vmatpush.msra.mxu0 %v7632
        %8422 = vmatpush.msra.mxu0 %v7629
        %8423 = vmatmul.f32.gmra.mxu0 %v8305
        %v8424 = vpop.f32.mrf.mxu0
        %v8425 = vadd.f32 %v8405, %v8424
        %8426 = vdwg.mxu0
        %8427 = vmatpush.msra.mxu0 %v7371
        %8428 = vmatpush.msra.mxu0 %v7367
        %8429 = vmatpush.msra.mxu0 %v7363
        %8430 = vmatpush.msra.mxu0 %v7359
        %8431 = vmatpush.msra.mxu0 %v7355
        %8432 = vmatpush.msra.mxu0 %v7351
        %8433 = vmatpush.msra.mxu0 %v7347
        %8434 = vmatpush.msra.mxu0 %v7343
        %8435 = vmatpush.msra.mxu0 %v7522
        %8436 = vmatpush.msra.mxu0 %v7519
        %8437 = vmatpush.msra.mxu0 %v7516
        %8438 = vmatpush.msra.mxu0 %v7513
        %8439 = vmatpush.msra.mxu0 %v7510
        %8440 = vmatpush.msra.mxu0 %v7507
        %8441 = vmatpush.msra.mxu0 %v7504
        %8442 = vmatpush.msra.mxu0 %v7501
        %8443 = vmatmul.f32.gmra.mxu0 %v7372
        %v8444 = vpop.f32.mrf.mxu0
        %v8445 = vadd.f32 %v8302, %v8444
        %8446 = vdwg.mxu0
        %8447 = vmatpush.msra.mxu0 0.0
        %8448 = vmatpush.msra.mxu0 0.0
        %8449 = vmatpush.msra.mxu0 0.0
        %8450 = vmatpush.msra.mxu0 0.0
        %8451 = vmatpush.msra.mxu0 0.0
        %8452 = vmatpush.msra.mxu0 0.0
        %8453 = vmatpush.msra.mxu0 0.0
        %8454 = vmatpush.msra.mxu0 0.0
        %8455 = vmatpush.msra.mxu0 %v7715
        %8456 = vmatpush.msra.mxu0 %v7714
        %8457 = vmatpush.msra.mxu0 %v7713
        %8458 = vmatpush.msra.mxu0 %v7712
        %8459 = vmatpush.msra.mxu0 %v7711
        %8460 = vmatpush.msra.mxu0 %v7710
        %8461 = vmatpush.msra.mxu0 %v7709
        %8462 = vmatpush.msra.mxu0 %v7708
        %8463 = vmatmul.f32.gmra.mxu0 %v8305
        %v8464 = vpop.f32.mrf.mxu0
        %v8465 = vadd.f32 %v8445, %v8464
        %8466 = vdwg.mxu0
        %8467 = vrot.lane.b32.xlu0 %v7343, 9
        %v8468 = vpop.permute.xlu0 %8467
        %8469 = vrot.lane.b32.xlu0 %v7347, 9
        %v8470 = vpop.permute.xlu0 %8469
        %8471 = vrot.lane.b32.xlu0 %v7351, 9
        %v8472 = vpop.permute.xlu0 %8471
        %8473 = vrot.lane.b32.xlu0 %v7355, 9
        %v8474 = vpop.permute.xlu0 %8473
        %8475 = vrot.lane.b32.xlu0 %v7359, 9
        %v8476 = vpop.permute.xlu0 %8475
        %8477 = vrot.lane.b32.xlu0 %v7363, 9
        %v8478 = vpop.permute.xlu0 %8477
        %8479 = vrot.lane.b32.xlu0 %v7367, 9
        %v8480 = vpop.permute.xlu0 %8479
        %8481 = vrot.lane.b32.xlu0 %v7371, 9
        %v8482 = vpop.permute.xlu0 %8481
        %8491 = vrot.lane.b32.xlu0 %v7340, 73
        %v8492 = vpop.permute.xlu0 %8491
        %8493 = vrot.lane.b32.xlu0 %v7341, 73
        %v8494 = vpop.permute.xlu0 %8493
        %8495 = vrot.lane.b32.xlu0 %v7342, 73
        %v8496 = vpop.permute.xlu0 %8495
        %8497 = vrot.lane.b32.xlu0 %v7343, 73
        %v8498 = vpop.permute.xlu0 %8497
        %8499 = vrot.lane.b32.xlu0 %v7344, 73
        %v8500 = vpop.permute.xlu0 %8499
        %8501 = vrot.lane.b32.xlu0 %v7345, 73
        %v8502 = vpop.permute.xlu0 %8501
        %8503 = vrot.lane.b32.xlu0 %v7346, 73
        %v8504 = vpop.permute.xlu0 %8503
        %8505 = vrot.lane.b32.xlu0 %v7347, 73
        %v8506 = vpop.permute.xlu0 %8505
        %8507 = vrot.lane.b32.xlu0 %v7348, 73
        %v8508 = vpop.permute.xlu0 %8507
        %8509 = vrot.lane.b32.xlu0 %v7349, 73
        %v8510 = vpop.permute.xlu0 %8509
        %8511 = vrot.lane.b32.xlu0 %v7350, 73
        %v8512 = vpop.permute.xlu0 %8511
        %8513 = vrot.lane.b32.xlu0 %v7351, 73
        %v8514 = vpop.permute.xlu0 %8513
        %8515 = vrot.lane.b32.xlu0 %v7352, 73
        %v8516 = vpop.permute.xlu0 %8515
        %8517 = vrot.lane.b32.xlu0 %v7353, 73
        %v8518 = vpop.permute.xlu0 %8517
        %8519 = vrot.lane.b32.xlu0 %v7354, 73
        %v8520 = vpop.permute.xlu0 %8519
        %8521 = vrot.lane.b32.xlu0 %v7355, 73
        %v8522 = vpop.permute.xlu0 %8521
        %8523 = vrot.lane.b32.xlu0 %v7356, 73
        %v8524 = vpop.permute.xlu0 %8523
        %8525 = vrot.lane.b32.xlu0 %v7357, 73
        %v8526 = vpop.permute.xlu0 %8525
        %8527 = vrot.lane.b32.xlu0 %v7358, 73
        %v8528 = vpop.permute.xlu0 %8527
        %8529 = vrot.lane.b32.xlu0 %v7359, 73
        %v8530 = vpop.permute.xlu0 %8529
        %8531 = vrot.lane.b32.xlu0 %v7360, 73
        %v8532 = vpop.permute.xlu0 %8531
        %8533 = vrot.lane.b32.xlu0 %v7361, 73
        %v8534 = vpop.permute.xlu0 %8533
        %8535 = vrot.lane.b32.xlu0 %v7362, 73
        %v8536 = vpop.permute.xlu0 %8535
        %8537 = vrot.lane.b32.xlu0 %v7363, 73
        %v8538 = vpop.permute.xlu0 %8537
        %8539 = vrot.lane.b32.xlu0 %v7364, 73
        %v8540 = vpop.permute.xlu0 %8539
        %8541 = vrot.lane.b32.xlu0 %v7365, 73
        %v8542 = vpop.permute.xlu0 %8541
        %8543 = vrot.lane.b32.xlu0 %v7366, 73
        %v8544 = vpop.permute.xlu0 %8543
        %8545 = vrot.lane.b32.xlu0 %v7367, 73
        %v8546 = vpop.permute.xlu0 %8545
        %8547 = vrot.lane.b32.xlu0 %v7368, 73
        %v8548 = vpop.permute.xlu0 %8547
        %8549 = vrot.lane.b32.xlu0 %v7369, 73
        %v8550 = vpop.permute.xlu0 %8549
        %8551 = vrot.lane.b32.xlu0 %v7370, 73
        %v8552 = vpop.permute.xlu0 %8551
        %8553 = vrot.lane.b32.xlu0 %v7371, 73
        %v8554 = vpop.permute.xlu0 %8553
        %v8555 = vsel %vm1290, %v8492, %v8494
        %v8556 = vsel %vm1290, %v8494, %v8496
        %v8557 = vsel %vm1290, %v8496, %v8498
        %v8558 = vsel %vm1290, %v8500, %v8502
        %v8559 = vsel %vm1290, %v8502, %v8504
        %v8560 = vsel %vm1290, %v8504, %v8506
        %v8561 = vsel %vm1290, %v8508, %v8510
        %v8562 = vsel %vm1290, %v8510, %v8512
        %v8563 = vsel %vm1290, %v8512, %v8514
        %v8564 = vsel %vm1290, %v8516, %v8518
        %v8565 = vsel %vm1290, %v8518, %v8520
        %v8566 = vsel %vm1290, %v8520, %v8522
        %v8567 = vsel %vm1290, %v8524, %v8526
        %v8568 = vsel %vm1290, %v8526, %v8528
        %v8569 = vsel %vm1290, %v8528, %v8530
        %v8570 = vsel %vm1290, %v8532, %v8534
        %v8571 = vsel %vm1290, %v8534, %v8536
        %v8572 = vsel %vm1290, %v8536, %v8538
        %v8573 = vsel %vm1290, %v8540, %v8542
        %v8574 = vsel %vm1290, %v8542, %v8544
        %v8575 = vsel %vm1290, %v8544, %v8546
        %v8576 = vsel %vm1290, %v8548, %v8550
        %v8577 = vsel %vm1290, %v8550, %v8552
        %v8578 = vsel %vm1290, %v8552, %v8554
        %v8611 = vsel %vm609, %v8468, %v8555
        %v8612 = vsel %vm609, %v8470, %v8558
        %v8613 = vsel %vm609, %v8472, %v8561
        %v8614 = vsel %vm609, %v8474, %v8564
        %v8615 = vsel %vm609, %v8476, %v8567
        %v8616 = vsel %vm609, %v8478, %v8570
        %v8617 = vsel %vm609, %v8480, %v8573
        %v8618 = vsel %vm609, %v8482, %v8576
        %8619 = vrot.lane.b32.xlu0 %v7340, 71
        %v8620 = vpop.permute.xlu0 %8619
        %8621 = vrot.lane.b32.xlu0 %v7341, 71
        %v8622 = vpop.permute.xlu0 %8621
        %8623 = vrot.lane.b32.xlu0 %v7342, 71
        %v8624 = vpop.permute.xlu0 %8623
        %8625 = vrot.lane.b32.xlu0 %v7343, 71
        %v8626 = vpop.permute.xlu0 %8625
        %8627 = vrot.lane.b32.xlu0 %v7344, 71
        %v8628 = vpop.permute.xlu0 %8627
        %8629 = vrot.lane.b32.xlu0 %v7345, 71
        %v8630 = vpop.permute.xlu0 %8629
        %8631 = vrot.lane.b32.xlu0 %v7346, 71
        %v8632 = vpop.permute.xlu0 %8631
        %8633 = vrot.lane.b32.xlu0 %v7347, 71
        %v8634 = vpop.permute.xlu0 %8633
        %8635 = vrot.lane.b32.xlu0 %v7348, 71
        %v8636 = vpop.permute.xlu0 %8635
        %8637 = vrot.lane.b32.xlu0 %v7349, 71
        %v8638 = vpop.permute.xlu0 %8637
        %8639 = vrot.lane.b32.xlu0 %v7350, 71
        %v8640 = vpop.permute.xlu0 %8639
        %8641 = vrot.lane.b32.xlu0 %v7351, 71
        %v8642 = vpop.permute.xlu0 %8641
        %8643 = vrot.lane.b32.xlu0 %v7352, 71
        %v8644 = vpop.permute.xlu0 %8643
        %8645 = vrot.lane.b32.xlu0 %v7353, 71
        %v8646 = vpop.permute.xlu0 %8645
        %8647 = vrot.lane.b32.xlu0 %v7354, 71
        %v8648 = vpop.permute.xlu0 %8647
        %8649 = vrot.lane.b32.xlu0 %v7355, 71
        %v8650 = vpop.permute.xlu0 %8649
        %8651 = vrot.lane.b32.xlu0 %v7356, 71
        %v8652 = vpop.permute.xlu0 %8651
        %8653 = vrot.lane.b32.xlu0 %v7357, 71
        %v8654 = vpop.permute.xlu0 %8653
        %8655 = vrot.lane.b32.xlu0 %v7358, 71
        %v8656 = vpop.permute.xlu0 %8655
        %8657 = vrot.lane.b32.xlu0 %v7359, 71
        %v8658 = vpop.permute.xlu0 %8657
        %8659 = vrot.lane.b32.xlu0 %v7360, 71
        %v8660 = vpop.permute.xlu0 %8659
        %8661 = vrot.lane.b32.xlu0 %v7361, 71
        %v8662 = vpop.permute.xlu0 %8661
        %8663 = vrot.lane.b32.xlu0 %v7362, 71
        %v8664 = vpop.permute.xlu0 %8663
        %8665 = vrot.lane.b32.xlu0 %v7363, 71
        %v8666 = vpop.permute.xlu0 %8665
        %8667 = vrot.lane.b32.xlu0 %v7364, 71
        %v8668 = vpop.permute.xlu0 %8667
        %8669 = vrot.lane.b32.xlu0 %v7365, 71
        %v8670 = vpop.permute.xlu0 %8669
        %8671 = vrot.lane.b32.xlu0 %v7366, 71
        %v8672 = vpop.permute.xlu0 %8671
        %8673 = vrot.lane.b32.xlu0 %v7367, 71
        %v8674 = vpop.permute.xlu0 %8673
        %8675 = vrot.lane.b32.xlu0 %v7368, 71
        %v8676 = vpop.permute.xlu0 %8675
        %8677 = vrot.lane.b32.xlu0 %v7369, 71
        %v8678 = vpop.permute.xlu0 %8677
        %8679 = vrot.lane.b32.xlu0 %v7370, 71
        %v8680 = vpop.permute.xlu0 %8679
        %8681 = vrot.lane.b32.xlu0 %v7371, 71
        %v8682 = vpop.permute.xlu0 %8681
        %v8683 = vsel %vm1318, %v8620, %v8622
        %v8684 = vsel %vm1318, %v8622, %v8624
        %v8685 = vsel %vm1318, %v8624, %v8626
        %v8686 = vsel %vm1318, %v8628, %v8630
        %v8687 = vsel %vm1318, %v8630, %v8632
        %v8688 = vsel %vm1318, %v8632, %v8634
        %v8689 = vsel %vm1318, %v8636, %v8638
        %v8690 = vsel %vm1318, %v8638, %v8640
        %v8691 = vsel %vm1318, %v8640, %v8642
        %v8692 = vsel %vm1318, %v8644, %v8646
        %v8693 = vsel %vm1318, %v8646, %v8648
        %v8694 = vsel %vm1318, %v8648, %v8650
        %v8695 = vsel %vm1318, %v8652, %v8654
        %v8696 = vsel %vm1318, %v8654, %v8656
        %v8697 = vsel %vm1318, %v8656, %v8658
        %v8698 = vsel %vm1318, %v8660, %v8662
        %v8699 = vsel %vm1318, %v8662, %v8664
        %v8700 = vsel %vm1318, %v8664, %v8666
        %v8701 = vsel %vm1318, %v8668, %v8670
        %v8702 = vsel %vm1318, %v8670, %v8672
        %v8703 = vsel %vm1318, %v8672, %v8674
        %v8704 = vsel %vm1318, %v8676, %v8678
        %v8705 = vsel %vm1318, %v8678, %v8680
        %v8706 = vsel %vm1318, %v8680, %v8682
        %8739 = vrot.lane.b32.xlu0 %v7340, 7
        %v8740 = vpop.permute.xlu0 %8739
        %8741 = vrot.lane.b32.xlu0 %v7344, 7
        %v8742 = vpop.permute.xlu0 %8741
        %8743 = vrot.lane.b32.xlu0 %v7348, 7
        %v8744 = vpop.permute.xlu0 %8743
        %8745 = vrot.lane.b32.xlu0 %v7352, 7
        %v8746 = vpop.permute.xlu0 %8745
        %8747 = vrot.lane.b32.xlu0 %v7356, 7
        %v8748 = vpop.permute.xlu0 %8747
        %8749 = vrot.lane.b32.xlu0 %v7360, 7
        %v8750 = vpop.permute.xlu0 %8749
        %8751 = vrot.lane.b32.xlu0 %v7364, 7
        %v8752 = vpop.permute.xlu0 %8751
        %8753 = vrot.lane.b32.xlu0 %v7368, 7
        %v8754 = vpop.permute.xlu0 %8753
        %v8763 = vsel %vm7707, %v8626, %v8740
        %v8764 = vsel %vm7707, %v8634, %v8742
        %v8765 = vsel %vm7707, %v8642, %v8744
        %v8766 = vsel %vm7707, %v8650, %v8746
        %v8767 = vsel %vm7707, %v8658, %v8748
        %v8768 = vsel %vm7707, %v8666, %v8750
        %v8769 = vsel %vm7707, %v8674, %v8752
        %v8770 = vsel %vm7707, %v8682, %v8754
        %8771 = vrot.lane.b32.xlu0 %v7340, 72
        %v8772 = vpop.permute.xlu0 %8771
        %8773 = vrot.lane.b32.xlu0 %v7341, 72
        %v8774 = vpop.permute.xlu0 %8773
        %8775 = vrot.lane.b32.xlu0 %v7342, 72
        %v8776 = vpop.permute.xlu0 %8775
        %8777 = vrot.lane.b32.xlu0 %v7343, 72
        %v8778 = vpop.permute.xlu0 %8777
        %8779 = vrot.lane.b32.xlu0 %v7344, 72
        %v8780 = vpop.permute.xlu0 %8779
        %8781 = vrot.lane.b32.xlu0 %v7345, 72
        %v8782 = vpop.permute.xlu0 %8781
        %8783 = vrot.lane.b32.xlu0 %v7346, 72
        %v8784 = vpop.permute.xlu0 %8783
        %8785 = vrot.lane.b32.xlu0 %v7347, 72
        %v8786 = vpop.permute.xlu0 %8785
        %8787 = vrot.lane.b32.xlu0 %v7348, 72
        %v8788 = vpop.permute.xlu0 %8787
        %8789 = vrot.lane.b32.xlu0 %v7349, 72
        %v8790 = vpop.permute.xlu0 %8789
        %8791 = vrot.lane.b32.xlu0 %v7350, 72
        %v8792 = vpop.permute.xlu0 %8791
        %8793 = vrot.lane.b32.xlu0 %v7351, 72
        %v8794 = vpop.permute.xlu0 %8793
        %8795 = vrot.lane.b32.xlu0 %v7352, 72
        %v8796 = vpop.permute.xlu0 %8795
        %8797 = vrot.lane.b32.xlu0 %v7353, 72
        %v8798 = vpop.permute.xlu0 %8797
        %8799 = vrot.lane.b32.xlu0 %v7354, 72
        %v8800 = vpop.permute.xlu0 %8799
        %8801 = vrot.lane.b32.xlu0 %v7355, 72
        %v8802 = vpop.permute.xlu0 %8801
        %8803 = vrot.lane.b32.xlu0 %v7356, 72
        %v8804 = vpop.permute.xlu0 %8803
        %8805 = vrot.lane.b32.xlu0 %v7357, 72
        %v8806 = vpop.permute.xlu0 %8805
        %8807 = vrot.lane.b32.xlu0 %v7358, 72
        %v8808 = vpop.permute.xlu0 %8807
        %8809 = vrot.lane.b32.xlu0 %v7359, 72
        %v8810 = vpop.permute.xlu0 %8809
        %8811 = vrot.lane.b32.xlu0 %v7360, 72
        %v8812 = vpop.permute.xlu0 %8811
        %8813 = vrot.lane.b32.xlu0 %v7361, 72
        %v8814 = vpop.permute.xlu0 %8813
        %8815 = vrot.lane.b32.xlu0 %v7362, 72
        %v8816 = vpop.permute.xlu0 %8815
        %8817 = vrot.lane.b32.xlu0 %v7363, 72
        %v8818 = vpop.permute.xlu0 %8817
        %8819 = vrot.lane.b32.xlu0 %v7364, 72
        %v8820 = vpop.permute.xlu0 %8819
        %8821 = vrot.lane.b32.xlu0 %v7365, 72
        %v8822 = vpop.permute.xlu0 %8821
        %8823 = vrot.lane.b32.xlu0 %v7366, 72
        %v8824 = vpop.permute.xlu0 %8823
        %8825 = vrot.lane.b32.xlu0 %v7367, 72
        %v8826 = vpop.permute.xlu0 %8825
        %8827 = vrot.lane.b32.xlu0 %v7368, 72
        %v8828 = vpop.permute.xlu0 %8827
        %8829 = vrot.lane.b32.xlu0 %v7369, 72
        %v8830 = vpop.permute.xlu0 %8829
        %8831 = vrot.lane.b32.xlu0 %v7370, 72
        %v8832 = vpop.permute.xlu0 %8831
        %8833 = vrot.lane.b32.xlu0 %v7371, 72
        %v8834 = vpop.permute.xlu0 %8833
        %v8835 = vsel %vm1349, %v8772, %v8774
        %v8836 = vsel %vm1349, %v8774, %v8776
        %v8837 = vsel %vm1349, %v8776, %v8778
        %v8838 = vsel %vm1349, %v8780, %v8782
        %v8839 = vsel %vm1349, %v8782, %v8784
        %v8840 = vsel %vm1349, %v8784, %v8786
        %v8841 = vsel %vm1349, %v8788, %v8790
        %v8842 = vsel %vm1349, %v8790, %v8792
        %v8843 = vsel %vm1349, %v8792, %v8794
        %v8844 = vsel %vm1349, %v8796, %v8798
        %v8845 = vsel %vm1349, %v8798, %v8800
        %v8846 = vsel %vm1349, %v8800, %v8802
        %v8847 = vsel %vm1349, %v8804, %v8806
        %v8848 = vsel %vm1349, %v8806, %v8808
        %v8849 = vsel %vm1349, %v8808, %v8810
        %v8850 = vsel %vm1349, %v8812, %v8814
        %v8851 = vsel %vm1349, %v8814, %v8816
        %v8852 = vsel %vm1349, %v8816, %v8818
        %v8853 = vsel %vm1349, %v8820, %v8822
        %v8854 = vsel %vm1349, %v8822, %v8824
        %v8855 = vsel %vm1349, %v8824, %v8826
        %v8856 = vsel %vm1349, %v8828, %v8830
        %v8857 = vsel %vm1349, %v8830, %v8832
        %v8858 = vsel %vm1349, %v8832, %v8834
        %v8892 = vsel %vm8140, %v7377, 0
        %8894 = vmatpush.msra.mxu0 %v8856
        %8895 = vmatpush.msra.mxu0 %v8853
        %8896 = vmatpush.msra.mxu0 %v8850
        %8897 = vmatpush.msra.mxu0 %v8847
        %8898 = vmatpush.msra.mxu0 %v8844
        %8899 = vmatpush.msra.mxu0 %v8841
        %8900 = vmatpush.msra.mxu0 %v8838
        %8901 = vmatpush.msra.mxu0 %v8835
        %8902 = vmatpush.msra.mxu0 %v8618
        %8903 = vmatpush.msra.mxu0 %v8617
        %8904 = vmatpush.msra.mxu0 %v8616
        %8905 = vmatpush.msra.mxu0 %v8615
        %8906 = vmatpush.msra.mxu0 %v8614
        %8907 = vmatpush.msra.mxu0 %v8613
        %8908 = vmatpush.msra.mxu0 %v8612
        %8909 = vmatpush.msra.mxu0 %v8611
        %8910 = vmatmul.f32.gmra.mxu0 %v7376
        %v8911 = vpop.f32.mrf.mxu0
        %v8912 = vadd.f32 0.0, %v8911
        %8913 = vdwg.mxu0
        %8914 = vmatpush.msra.mxu0 0.0
        %8915 = vmatpush.msra.mxu0 0.0
        %8916 = vmatpush.msra.mxu0 0.0
        %8917 = vmatpush.msra.mxu0 0.0
        %8918 = vmatpush.msra.mxu0 0.0
        %8919 = vmatpush.msra.mxu0 0.0
        %8920 = vmatpush.msra.mxu0 0.0
        %8921 = vmatpush.msra.mxu0 0.0
        %8922 = vmatpush.msra.mxu0 %v8704
        %8923 = vmatpush.msra.mxu0 %v8701
        %8924 = vmatpush.msra.mxu0 %v8698
        %8925 = vmatpush.msra.mxu0 %v8695
        %8926 = vmatpush.msra.mxu0 %v8692
        %8927 = vmatpush.msra.mxu0 %v8689
        %8928 = vmatpush.msra.mxu0 %v8686
        %8929 = vmatpush.msra.mxu0 %v8683
        %8930 = vmatmul.f32.gmra.mxu0 %v8892
        %v8931 = vpop.f32.mrf.mxu0
        %v8932 = vadd.f32 %v8912, %v8931
        %8933 = vdwg.mxu0
        %8934 = vmatpush.msra.mxu0 %v8857
        %8935 = vmatpush.msra.mxu0 %v8854
        %8936 = vmatpush.msra.mxu0 %v8851
        %8937 = vmatpush.msra.mxu0 %v8848
        %8938 = vmatpush.msra.mxu0 %v8845
        %8939 = vmatpush.msra.mxu0 %v8842
        %8940 = vmatpush.msra.mxu0 %v8839
        %8941 = vmatpush.msra.mxu0 %v8836
        %8942 = vmatpush.msra.mxu0 %v8577
        %8943 = vmatpush.msra.mxu0 %v8574
        %8944 = vmatpush.msra.mxu0 %v8571
        %8945 = vmatpush.msra.mxu0 %v8568
        %8946 = vmatpush.msra.mxu0 %v8565
        %8947 = vmatpush.msra.mxu0 %v8562
        %8948 = vmatpush.msra.mxu0 %v8559
        %8949 = vmatpush.msra.mxu0 %v8556
        %8950 = vmatmul.f32.gmra.mxu0 %v7376
        %v8951 = vpop.f32.mrf.mxu0
        %v8952 = vadd.f32 0.0, %v8951
        %8953 = vdwg.mxu0
        %8954 = vmatpush.msra.mxu0 0.0
        %8955 = vmatpush.msra.mxu0 0.0
        %8956 = vmatpush.msra.mxu0 0.0
        %8957 = vmatpush.msra.mxu0 0.0
        %8958 = vmatpush.msra.mxu0 0.0
        %8959 = vmatpush.msra.mxu0 0.0
        %8960 = vmatpush.msra.mxu0 0.0
        %8961 = vmatpush.msra.mxu0 0.0
        %8962 = vmatpush.msra.mxu0 %v8705
        %8963 = vmatpush.msra.mxu0 %v8702
        %8964 = vmatpush.msra.mxu0 %v8699
        %8965 = vmatpush.msra.mxu0 %v8696
        %8966 = vmatpush.msra.mxu0 %v8693
        %8967 = vmatpush.msra.mxu0 %v8690
        %8968 = vmatpush.msra.mxu0 %v8687
        %8969 = vmatpush.msra.mxu0 %v8684
        %8970 = vmatmul.f32.gmra.mxu0 %v8892
        %v8971 = vpop.f32.mrf.mxu0
        %v8972 = vadd.f32 %v8952, %v8971
        %8973 = vdwg.mxu0
        %8974 = vmatpush.msra.mxu0 %v8858
        %8975 = vmatpush.msra.mxu0 %v8855
        %8976 = vmatpush.msra.mxu0 %v8852
        %8977 = vmatpush.msra.mxu0 %v8849
        %8978 = vmatpush.msra.mxu0 %v8846
        %8979 = vmatpush.msra.mxu0 %v8843
        %8980 = vmatpush.msra.mxu0 %v8840
        %8981 = vmatpush.msra.mxu0 %v8837
        %8982 = vmatpush.msra.mxu0 %v8578
        %8983 = vmatpush.msra.mxu0 %v8575
        %8984 = vmatpush.msra.mxu0 %v8572
        %8985 = vmatpush.msra.mxu0 %v8569
        %8986 = vmatpush.msra.mxu0 %v8566
        %8987 = vmatpush.msra.mxu0 %v8563
        %8988 = vmatpush.msra.mxu0 %v8560
        %8989 = vmatpush.msra.mxu0 %v8557
        %8990 = vmatmul.f32.gmra.mxu0 %v7376
        %v8991 = vpop.f32.mrf.mxu0
        %v8992 = vadd.f32 0.0, %v8991
        %8993 = vdwg.mxu0
        %8994 = vmatpush.msra.mxu0 0.0
        %8995 = vmatpush.msra.mxu0 0.0
        %8996 = vmatpush.msra.mxu0 0.0
        %8997 = vmatpush.msra.mxu0 0.0
        %8998 = vmatpush.msra.mxu0 0.0
        %8999 = vmatpush.msra.mxu0 0.0
        %9000 = vmatpush.msra.mxu0 0.0
        %9001 = vmatpush.msra.mxu0 0.0
        %9002 = vmatpush.msra.mxu0 %v8706
        %9003 = vmatpush.msra.mxu0 %v8703
        %9004 = vmatpush.msra.mxu0 %v8700
        %9005 = vmatpush.msra.mxu0 %v8697
        %9006 = vmatpush.msra.mxu0 %v8694
        %9007 = vmatpush.msra.mxu0 %v8691
        %9008 = vmatpush.msra.mxu0 %v8688
        %9009 = vmatpush.msra.mxu0 %v8685
        %9010 = vmatmul.f32.gmra.mxu0 %v8892
        %v9011 = vpop.f32.mrf.mxu0
        %v9012 = vadd.f32 %v8992, %v9011
        %9013 = vdwg.mxu0
        %9014 = vmatpush.msra.mxu0 %v8834
        %9015 = vmatpush.msra.mxu0 %v8826
        %9016 = vmatpush.msra.mxu0 %v8818
        %9017 = vmatpush.msra.mxu0 %v8810
        %9018 = vmatpush.msra.mxu0 %v8802
        %9019 = vmatpush.msra.mxu0 %v8794
        %9020 = vmatpush.msra.mxu0 %v8786
        %9021 = vmatpush.msra.mxu0 %v8778
        %9022 = vmatpush.msra.mxu0 %v8554
        %9023 = vmatpush.msra.mxu0 %v8546
        %9024 = vmatpush.msra.mxu0 %v8538
        %9025 = vmatpush.msra.mxu0 %v8530
        %9026 = vmatpush.msra.mxu0 %v8522
        %9027 = vmatpush.msra.mxu0 %v8514
        %9028 = vmatpush.msra.mxu0 %v8506
        %9029 = vmatpush.msra.mxu0 %v8498
        %9030 = vmatmul.f32.gmra.mxu0 %v7376
        %v9031 = vpop.f32.mrf.mxu0
        %v9032 = vadd.f32 0.0, %v9031
        %9033 = vdwg.mxu0
        %9034 = vmatpush.msra.mxu0 0.0
        %9035 = vmatpush.msra.mxu0 0.0
        %9036 = vmatpush.msra.mxu0 0.0
        %9037 = vmatpush.msra.mxu0 0.0
        %9038 = vmatpush.msra.mxu0 0.0
        %9039 = vmatpush.msra.mxu0 0.0
        %9040 = vmatpush.msra.mxu0 0.0
        %9041 = vmatpush.msra.mxu0 0.0
        %9042 = vmatpush.msra.mxu0 %v8770
        %9043 = vmatpush.msra.mxu0 %v8769
        %9044 = vmatpush.msra.mxu0 %v8768
        %9045 = vmatpush.msra.mxu0 %v8767
        %9046 = vmatpush.msra.mxu0 %v8766
        %9047 = vmatpush.msra.mxu0 %v8765
        %9048 = vmatpush.msra.mxu0 %v8764
        %9049 = vmatpush.msra.mxu0 %v8763
        %9050 = vmatmul.f32.gmra.mxu0 %v8892
        %v9051 = vpop.f32.mrf.mxu0
        %v9052 = vadd.f32 %v9032, %v9051
        %9053 = vdwg.mxu0
        %v9054 = vadd.f32 %v8345, %v8932
        %v9055 = vadd.f32 %v8385, %v8972
        %v9056 = vadd.f32 %v8425, %v9012
        %v9057 = vadd.f32 %v8465, %v9052
        %9059 = vset.pattern.permute.xlu0 0
        %9060 = vperm.xlu0 %9059, %v7378
        %v9061 = vpop.permute.xlu0 %9060
        %v9063 = vadd.f32 %v9054, %v9061
        %v9064 = vadd.f32 %v9055, %v9061
        %v9065 = vadd.f32 %v9056, %v9061
        %v9066 = vadd.f32 %v9057, %v9061
        %v9067 = vxor.u32 %v9063, 2147483648
        %v9068 = vxor.u32 %v9064, 2147483648
        %v9069 = vxor.u32 %v9065, 2147483648
        %v9070 = vxor.u32 %v9066, 2147483648
        %v9071 = vmul.f32 %v9067, 1.442695
        %v9072 = vpow.pop %v9071
        %v9073 = vmul.f32 %v9068, 1.442695
        %v9074 = vpow.pop %v9073
        %v9075 = vmul.f32 %v9069, 1.442695
        %v9076 = vpow.pop %v9075
        %v9077 = vmul.f32 %v9070, 1.442695
        %v9078 = vpow.pop %v9077
        %v9079 = vadd.f32 %v9072, 1.0
        %v9080 = vadd.f32 %v9074, 1.0
        %v9081 = vadd.f32 %v9076, 1.0
        %v9082 = vadd.f32 %v9078, 1.0
        %v9083 = vrcp.pop %v9079
        %v9084 = vmul.f32 %v9079, %v9083
        %v9085 = vsub.f32 1.0, %v9084
        %v9086 = vmul.f32 %v9083, %v9085
        %v9087 = vadd.f32 %v9083, %v9086
        %vm9088 = vweird.f32 %v9079
        %vm9089 = vweird.f32 %v9083
        %vm9090 = vmor %vm9088, %vm9089
        %v9091 = vsel %vm9090, %v9083, %v9087
        %v9092 = vand.u32 2147483647, %v9079
        %vm9093 = vcmp.eq.f32.partialorder %v9092, 8.507059e+37
        %v9094 = vand.u32 %v9079, 2147483648
        %v9095 = vor.u32 1.1754944e-38, %v9094
        %v9096 = vsel %vm9093, %v9095, %v9091
        %v9097 = vmul.f32 1.0, %v9096
        %v9098 = vrcp.pop %v9080
        %v9099 = vmul.f32 %v9080, %v9098
        %v9100 = vsub.f32 1.0, %v9099
        %v9101 = vmul.f32 %v9098, %v9100
        %v9102 = vadd.f32 %v9098, %v9101
        %vm9103 = vweird.f32 %v9080
        %vm9104 = vweird.f32 %v9098
        %vm9105 = vmor %vm9103, %vm9104
        %v9106 = vsel %vm9105, %v9098, %v9102
        %v9107 = vand.u32 2147483647, %v9080
        %vm9108 = vcmp.eq.f32.partialorder %v9107, 8.507059e+37
        %v9109 = vand.u32 %v9080, 2147483648
        %v9110 = vor.u32 1.1754944e-38, %v9109
        %v9111 = vsel %vm9108, %v9110, %v9106
        %v9112 = vmul.f32 1.0, %v9111
        %v9113 = vrcp.pop %v9081
        %v9114 = vmul.f32 %v9081, %v9113
        %v9115 = vsub.f32 1.0, %v9114
        %v9116 = vmul.f32 %v9113, %v9115
        %v9117 = vadd.f32 %v9113, %v9116
        %vm9118 = vweird.f32 %v9081
        %vm9119 = vweird.f32 %v9113
        %vm9120 = vmor %vm9118, %vm9119
        %v9121 = vsel %vm9120, %v9113, %v9117
        %v9122 = vand.u32 2147483647, %v9081
        %vm9123 = vcmp.eq.f32.partialorder %v9122, 8.507059e+37
        %v9124 = vand.u32 %v9081, 2147483648
        %v9125 = vor.u32 1.1754944e-38, %v9124
        %v9126 = vsel %vm9123, %v9125, %v9121
        %v9127 = vmul.f32 1.0, %v9126
        %v9128 = vrcp.pop %v9082
        %v9129 = vmul.f32 %v9082, %v9128
        %v9130 = vsub.f32 1.0, %v9129
        %v9131 = vmul.f32 %v9128, %v9130
        %v9132 = vadd.f32 %v9128, %v9131
        %vm9133 = vweird.f32 %v9082
        %vm9134 = vweird.f32 %v9128
        %vm9135 = vmor %vm9133, %vm9134
        %v9136 = vsel %vm9135, %v9128, %v9132
        %v9137 = vand.u32 2147483647, %v9082
        %vm9138 = vcmp.eq.f32.partialorder %v9137, 8.507059e+37
        %v9139 = vand.u32 %v9082, 2147483648
        %v9140 = vor.u32 1.1754944e-38, %v9139
        %v9141 = vsel %vm9138, %v9140, %v9136
        %v9142 = vmul.f32 1.0, %v9141
        %v9147 = vrot.slane %v9112, 7
        %v9148 = vrot.slane %v9127, 6
        %v9149 = vrot.slane %v9142, 5
        %vm9150 = vcmask 1040384
        %v9151 = vsel %vm9150, %v9097, %v9147
        %vm9152 = vcmask 1042434
        %v9153 = vsel %vm9152, %v9148, %v9149
        %vm9154 = vcmask 1041408
        %v9155 = vsel %vm9154, %v9151, %v9153
        %v9157 = vlaneseq
        %vm9158 = vcmp.ge.s32.totalorder %v9157, 0
        %vm9159 = vcmp.lt.s32.totalorder %v9157, 448
        %vm9160 = vmand %vm9158, %vm9159
        %9161 = vst.msk [vmem:[%s538] sm:$0xf] %vm9160, %v9155
        %s9162 = sand.u32 %s395, 1
        %s9163 = scalar_lea.sflag [#allocation3], %s9162
        %s9164 = sand.u32 %s395, 1
        %s9165 = smul.addr %s9164, 4
        %s9166 = scalar_lea.vmem [#allocation2], %s9165
        // Predicated region
        $region85: #{tpu_custom_call.1} parent=83 // pred_check
          %p9167 = pneg %p405
        $region86: #{tpu_custom_call.1} parent=83 // pred_check_branch
          %9169 = sbr.rel (%p9167) target = $region88
        $region87: #{tpu_custom_call.1} parent=83 // pred_region
          %9171 = vsyncadd %s9163, 0
          %s9172 = smul.addr %s35, 4
          %s9173 = smul.addr %s34, 4
          %s9174 = sadd.s32 %s9172, %s9173
          %s9175 = scalar_lea.hbm %s16, %s9174
          %s9177 = sshll.u32 %s9166, 4
          %s9178 = int_to_ptr.vmem [resolvable:$true] %s9177
          %s9179 = sshll.u32 %s9175, 4
          %s9180 = int_to_ptr.hbm [resolvable:$true] %s9179
          %9182 = dma.vmem_to_hbm [thread:$0]  %s9178, 64, %s9180, %s9163
        $region88: #{tpu_custom_call.1} parent=83 // pred_fallthru
          _
      $region84: #{tpu_custom_call.1} parent=5 // pred_fallthru
        _
      %p9183 = scmp.le.s32.totalorder 2, %s25
      // Predicated region
      $region89: #{tpu_custom_call.1} parent=5 // pred_check
        %p9184 = pneg %p9183
      $region90: #{tpu_custom_call.1} parent=5 // pred_check_branch
        %9186 = sbr.rel (%p9184) target = $region92
      $region91: #{tpu_custom_call.1} parent=5 // pred_region
        %s9187 = ssub.s32 %s25, 2
        // Predicated region
        $region93: #{tpu_custom_call.1} parent=91 // pred_check
          %p9188 = pneg %p411
        $region94: #{tpu_custom_call.1} parent=91 // pred_check_branch
          %9190 = sbr.rel (%p9188) target = $region96
        $region95: #{tpu_custom_call.1} parent=91 // pred_region
          %s9191 = sand.u32 %s396, 1
          %s9192 = scalar_lea.sflag [#allocation3], %s9191
          %s9193 = sand.u32 %s396, 1
          %s9194 = smul.addr %s9193, 4
          %s9195 = scalar_lea.vmem [#allocation2], %s9194
          %9197 = dma.done %s9192, 64
        $region96: #{tpu_custom_call.1} parent=91 // pred_fallthru
          _
      $region92: #{tpu_custom_call.1} parent=5 // pred_fallthru
        _
    $region6: #{tpu_custom_call.1} parent=1 // loop_footer
      %s29 = sadd.s32 1, %s25
    $region7: #{tpu_custom_call.1} parent=1 // loop_footer_branch
      %24 = sbr.rel target = $region3
    $region8: #{tpu_custom_call.1} parent=1 // loop_exit
      _
    %9198 = vsyncpa [#allocation3], 1
    %s9199 = scalar_lea.sflag [#allocation3], 1
    %9200 = vsyncpa %s9199, 1

</llo_original>
